<compile_context>
chip_gen: v7x
topology: tpu7x:2x2x1
jax: 0.10.0
libtpu: 0.0.40
codegen_flags: <defaults>
</compile_context>

<pallas_src>
import jax
import jax.numpy as jnp
from jax.experimental import pallas as pl
from jax.experimental.pallas import tpu as pltpu

B, NB, T, CE = 2, 5, 30, 25     # batch, freq bands, time samples, electrodes
TH = T // 2                     # temporal-attention hidden size (15)
CH = 3                          # channel-attention hidden size
T2 = T // 2                     # time after MaxPool2d((2,1),(2,1)) = 15
KH = 16                         # depthwise conv kernel height
TP = T2 + KH - 1                # padded conv-input length ('same': 7 left / 8 right) = 30
FLAT = T2 * CE                  # 375
H1, H2, NOUT = 100, 10, 2       # classification head sizes
EPS = 1e-5                      # BatchNorm eps


def _elu(x):
    # clamp the exp argument so the unselected branch can't overflow
    return jnp.where(x > 0, x, jnp.exp(jnp.minimum(x, 0.0)) - 1.0)


def _sigmoid(x):
    return 1.0 / (1.0 + jnp.exp(-x))


# --------------------------------------------------------------------------
# Single fused kernel: whole forward pass, everything resident in VMEM.
# --------------------------------------------------------------------------
def fused_kernel(scal_ref, x_ref,
                 ta_w1_ref, ta_b1_ref, ta_w2_ref, ta_b2_ref,
                 ca_w1_ref, ca_b1_ref, ca_w2_ref, ca_b2_ref,
                 conv_w_ref,
                 fc1_w_ref, fc1_b_ref, fc2_w_ref, fc2_b_ref, fc3_w_ref, fc3_b_ref,
                 out_ref,
                 xpad_scr, stat_scr):
    f32 = jnp.float32

    # Zero the padded depthwise-conv input once; rows [7, 7+T2) are filled below,
    # rows 0..6 / 22..29 stay zero == Conv2d(padding='same') left/right zero pad.
    xpad_scr[...] = jnp.zeros_like(xpad_scr)

    # ---- Stage 1: per-band TemporalAttention -> scale -> BatchNorm2d(1) + ELU ----
    # (Dropout(0.3) is identity in eval mode; BN folded to scale/shift in SMEM.)
    y_bands = []
    for n in range(NB):                                           # unrolled, no grid
        xb = x_ref[:, n, :, :]                                    # [B, T, CE]
        zb = jnp.mean(xb, axis=-1)                                # [B, T]
        h = _elu(jnp.dot(zb, ta_w1_ref[n], preferred_element_type=f32) + ta_b1_ref[n])
        a = _sigmoid(jnp.dot(h, ta_w2_ref[n], preferred_element_type=f32) + ta_b2_ref[n])
        yb = xb * a[:, :, None]                                   # scale_TA_Block_n
        yb = _elu(yb * scal_ref[n] + scal_ref[NB + n])            # BN_ELU_n (eval folded)
        y_bands.append(yb)
        # ChannelAttention squeeze statistic: global average over (time, electrodes)
        stat_scr[:, n:n + 1] = jnp.mean(jnp.mean(yb, axis=-1), axis=-1, keepdims=True)

    # ---- Stage 2: ChannelAttention gate over the 5 concatenated bands ----
    s = stat_scr[...]                                             # [B, NB]
    hc = _elu(jnp.dot(s, ca_w1_ref[...], preferred_element_type=f32) + ca_b1_ref[...])
    a_ca = _sigmoid(jnp.dot(hc, ca_w2_ref[...], preferred_element_type=f32) + ca_b2_ref[...])

    # ---- scale_CA -> BatchNorm2d(5)+ELU -> MaxPool2d((2,1),(2,1)) -> padded scratch ----
    for n in range(NB):
        gate = a_ca[:, n:n + 1, None] * scal_ref[2 * NB + n]      # CA gate * folded BN5 scale
        y2 = _elu(y_bands[n] * gate + scal_ref[3 * NB + n])       # [B, T, CE]
        for t in range(T2):                                       # max over adjacent time rows
            xpad_scr[:, n, 7 + t:8 + t, :] = jnp.maximum(
                y2[:, 2 * t:2 * t + 1, :], y2[:, 2 * t + 1:2 * t + 2, :])

    # ---- Stage 3: depthwise Conv2d((16,1), groups=5) + pointwise 1x1 (5->1) + BN(1)+ELU ----
    # Pointwise weights, both conv biases and the BN are folded at init into the
    # lane-replicated taps conv_w[NB, KH, CE] and two scalars -> pure vector MACs.
    acc = jnp.zeros((B, T2, CE), f32)
    for n in range(NB):
        xb = xpad_scr[:, n, :, :]                                 # [B, TP, CE]
        wb = conv_w_ref[n]                                        # [KH, CE]
        for k in range(KH):
            acc = acc + wb[k:k + 1, :] * xb[:, k:k + T2, :]
    conv = _elu(acc * scal_ref[4 * NB] + scal_ref[4 * NB + 1])    # [B, T2, CE]

    # ---- Stage 4: Flatten(375) -> Linear(100)+ELU -> Linear(10)+ELU -> Linear(2)+ELU ----
    # Flatten realized as 15 accumulating row-matmuls against row-slices of fc1_w
    # (flat index = t*CE + e), avoiding an in-kernel sublane/lane-merging reshape.
    h1 = jnp.zeros((B, H1), f32)
    for t in range(T2):
        row = jnp.sum(conv[:, t:t + 1, :], axis=1)                # [B, CE]
        h1 = h1 + jnp.dot(row, fc1_w_ref[t * CE:(t + 1) * CE, :],
                          preferred_element_type=f32)
    h1 = _elu(h1 + fc1_b_ref[...])
    h2 = _elu(jnp.dot(h1, fc2_w_ref[...], preferred_element_type=f32) + fc2_b_ref[...])
    out_ref[...] = _elu(jnp.dot(h2, fc3_w_ref[...], preferred_element_type=f32)
                        + fc3_b_ref[...])


def _fused_call():
    vmem = pl.BlockSpec(memory_space=pltpu.MemorySpace.VMEM)
    smem = pl.BlockSpec(memory_space=pltpu.MemorySpace.SMEM)
    return pl.pallas_call(
        fused_kernel,
        out_shape=jax.ShapeDtypeStruct((B, NOUT), jnp.float32),
        in_specs=[smem] + [vmem] * 16,
        out_specs=vmem,
        scratch_shapes=[
            pltpu.VMEM((B, NB, TP, CE), jnp.float32),   # pooled + 'same'-padded conv input
            pltpu.VMEM((B, NB), jnp.float32),           # per-band channel-attention stats
        ],
    )


@jax.jit
def forward(x, p):
    # x: [B, NB, T, CE]  (PyTorch NCHW: batch, band-channel, time, electrode)
    return _fused_call()(
        p["scal"], x,
        p["ta_w1"], p["ta_b1"], p["ta_w2"], p["ta_b2"],
        p["ca_w1"], p["ca_b1"], p["ca_w2"], p["ca_b2"],
        p["conv_w"],
        p["fc1_w"], p["fc1_b"], p["fc2_w"], p["fc2_b"], p["fc3_w"], p["fc3_b"],
    )


# --------------------------------------------------------------------------
# Parameters (deterministic synthetic init), with eval-mode BN / conv folding.
# --------------------------------------------------------------------------
def init_params(key):
    ks = jax.random.split(key, 30)
    f32 = jnp.float32
    p = {}
    # 5x TemporalAttention (SE over time)
    p["ta_w1"] = (jax.random.normal(ks[0], (NB, T, TH)) * 0.2).astype(f32)
    p["ta_b1"] = (jax.random.normal(ks[1], (NB, 1, TH)) * 0.1).astype(f32)
    p["ta_w2"] = (jax.random.normal(ks[2], (NB, TH, T)) * 0.2).astype(f32)
    p["ta_b2"] = (jax.random.normal(ks[3], (NB, 1, T)) * 0.1).astype(f32)
    # 5x BN_ELU: BatchNorm2d(1) eval-mode folded to per-band [scale, shift]
    g = jax.random.uniform(ks[4], (NB,), minval=0.5, maxval=1.5)
    bb = jax.random.normal(ks[5], (NB,)) * 0.1
    m = jax.random.normal(ks[6], (NB,)) * 0.1
    v = jax.random.uniform(ks[7], (NB,), minval=0.5, maxval=1.5)
    band_scale = g * jax.lax.rsqrt(v + EPS)
    band_shift = bb - m * band_scale
    # ChannelAttention (SE over the 5 bands)
    p["ca_w1"] = (jax.random.normal(ks[8], (NB, CH)) * 0.3).astype(f32)
    p["ca_b1"] = (jax.random.normal(ks[9], (1, CH)) * 0.1).astype(f32)
    p["ca_w2"] = (jax.random.normal(ks[10], (CH, NB)) * 0.3).astype(f32)
    p["ca_b2"] = (jax.random.normal(ks[11], (1, NB)) * 0.1).astype(f32)
    # Avg_pool_1: BatchNorm2d(5) eval-mode folded (ELU + MaxPool done in kernel)
    g5 = jax.random.uniform(ks[12], (NB,), minval=0.5, maxval=1.5)
    b5 = jax.random.normal(ks[13], (NB,)) * 0.1
    m5 = jax.random.normal(ks[14], (NB,)) * 0.1
    v5 = jax.random.uniform(ks[15], (NB,), minval=0.5, maxval=1.5)
    s5 = g5 * jax.lax.rsqrt(v5 + EPS)
    sh5 = b5 - m5 * s5
    # DW_PW_Conv: depthwise (16,1) groups=5 + pointwise 1x1 (5->1) + BatchNorm2d(1)
    dw_w = jax.random.normal(ks[16], (NB, KH)) * 0.2
    dw_b = jax.random.normal(ks[17], (NB,)) * 0.1
    pw_w = jax.random.normal(ks[18], (NB,)) * 0.3
    pw_b = jax.random.normal(ks[19], ()) * 0.1
    g1 = jax.random.uniform(ks[20], (), minval=0.5, maxval=1.5)
    b1 = jax.random.normal(ks[21], ()) * 0.1
    m1 = jax.random.normal(ks[22], ()) * 0.1
    v1 = jax.random.uniform(ks[23], (), minval=0.5, maxval=1.5)
    s1 = g1 * jax.lax.rsqrt(v1 + EPS)
    sh1 = b1 - m1 * s1
    # fold pointwise into the depthwise taps (lane-replicated for vector MACs),
    # and fold both conv biases + final BN into two scalars.
    eff_w = pw_w[:, None] * dw_w                                   # [NB, KH]
    p["conv_w"] = jnp.broadcast_to(eff_w[:, :, None], (NB, KH, CE)).astype(f32)
    post_scale = s1
    post_shift = (pw_b + jnp.dot(pw_w, dw_b)) * s1 + sh1
    # consolidated small per-band scalars for SMEM:
    # [0:5] band BN scale, [5:10] band BN shift, [10:15] BN5 scale, [15:20] BN5 shift,
    # [20] conv post-scale, [21] conv post-shift
    p["scal"] = jnp.concatenate(
        [band_scale, band_shift, s5, sh5, jnp.stack([post_scale, post_shift])]
    ).astype(f32)
    # classification head
    p["fc1_w"] = (jax.random.normal(ks[24], (FLAT, H1)) * 0.05).astype(f32)
    p["fc1_b"] = (jax.random.normal(ks[25], (1, H1)) * 0.05).astype(f32)
    p["fc2_w"] = (jax.random.normal(ks[26], (H1, H2)) * 0.1).astype(f32)
    p["fc2_b"] = (jax.random.normal(ks[27], (1, H2)) * 0.05).astype(f32)
    p["fc3_w"] = (jax.random.normal(ks[28], (H2, NOUT)) * 0.2).astype(f32)
    p["fc3_b"] = (jax.random.normal(ks[29], (1, NOUT)) * 0.05).astype(f32)
    return p


if __name__ == "__main__":
    key = jax.random.PRNGKey(0)
    pkey, xkey = jax.random.split(key)
    params = init_params(pkey)
    x = jax.random.normal(xkey, (B, NB, T, CE), dtype=jnp.float32)
    out = forward(x, params)
    out = jax.block_until_ready(out)
    assert out.shape == (B, NOUT), out.shape
    assert bool(jnp.all(jnp.isfinite(out)))
    print("KERNEL_OK")
</pallas_src>

<mosaic_0001>
module attributes {stable_mosaic.version = 11 : i64} {
  func.func @fused_kernel(%arg0: memref<22xf32, #tpu.memory_space<smem>>, %arg1: memref<2x5x30x25xf32, #tpu.memory_space<vmem>>, %arg2: memref<5x30x15xf32, #tpu.memory_space<vmem>>, %arg3: memref<5x1x15xf32, #tpu.memory_space<vmem>>, %arg4: memref<5x15x30xf32, #tpu.memory_space<vmem>>, %arg5: memref<5x1x30xf32, #tpu.memory_space<vmem>>, %arg6: memref<5x3xf32, #tpu.memory_space<vmem>>, %arg7: memref<1x3xf32, #tpu.memory_space<vmem>>, %arg8: memref<3x5xf32, #tpu.memory_space<vmem>>, %arg9: memref<1x5xf32, #tpu.memory_space<vmem>>, %arg10: memref<5x16x25xf32, #tpu.memory_space<vmem>>, %arg11: memref<375x100xf32, #tpu.memory_space<vmem>>, %arg12: memref<1x100xf32, #tpu.memory_space<vmem>>, %arg13: memref<100x10xf32, #tpu.memory_space<vmem>>, %arg14: memref<1x10xf32, #tpu.memory_space<vmem>>, %arg15: memref<10x2xf32, #tpu.memory_space<vmem>>, %arg16: memref<1x2xf32, #tpu.memory_space<vmem>>, %arg17: memref<2x2xf32, #tpu.memory_space<vmem>>, %arg18: memref<2x5x30x25xf32, #tpu.memory_space<vmem>>, %arg19: memref<2x5xf32, #tpu.memory_space<vmem>>) attributes {dimension_semantics = [], scalar_prefetch = 0 : i64, scratch_operands = 2 : i64, tpu.core_type = #tpu.core_type<tc>} {
    %cst = arith.constant 0.000000e+00 : f32
    %0 = vector.broadcast %cst : f32 to vector<2x5x30x25xf32>
    %c0 = arith.constant 0 : index
    %c0_0 = arith.constant 0 : index
    %c0_1 = arith.constant 0 : index
    %c0_2 = arith.constant 0 : index
    %1 = vector.load %arg18[%c0, %c0_0, %c0_1, %c0_2] : memref<2x5x30x25xf32, #tpu.memory_space<vmem>>, vector<2x5x30x25xf32>
    tpu.vector_store %arg18[%c0, %c0_0, %c0_1, %c0_2], %0 {strides = array<i32>} : memref<2x5x30x25xf32, #tpu.memory_space<vmem>>, vector<2x5x30x25xf32>,
    %c0_3 = arith.constant 0 : index
    %c0_4 = arith.constant 0 : index
    %c0_5 = arith.constant 0 : index
    %c0_6 = arith.constant 0 : index
    %2 = vector.load %arg1[%c0_3, %c0_4, %c0_5, %c0_6] : memref<2x5x30x25xf32, #tpu.memory_space<vmem>>, vector<2x1x30x25xf32>
    %3 = vector.shape_cast %2 : vector<2x1x30x25xf32> to vector<2x30x25xf32>
    %cst_7 = arith.constant dense<0.000000e+00> : vector<2x30xf32>
    %4 = vector.multi_reduction <add>, %3, %cst_7 [2] : vector<2x30x25xf32> to vector<2x30xf32>
    %cst_8 = arith.constant 2.500000e+01 : f32
    %5 = vector.broadcast %cst_8 : f32 to vector<2x30xf32>
    %6 = arith.divf %4, %5 : vector<2x30xf32>
    %c0_9 = arith.constant 0 : index
    %c0_10 = arith.constant 0 : index
    %c0_11 = arith.constant 0 : index
    %7 = vector.load %arg2[%c0_9, %c0_10, %c0_11] : memref<5x30x15xf32, #tpu.memory_space<vmem>>, vector<1x30x15xf32>
    %8 = vector.shape_cast %7 : vector<1x30x15xf32> to vector<30x15xf32>
    %cst_12 = arith.constant dense<0.000000e+00> : vector<2x15xf32>
    %9 = tpu.matmul %6, %8, %cst_12 {dimension_numbers = #tpu.dot_dimension_numbers<[1], [0], [0], [1], [0, 0, 1, 1], [], []>} : vector<2x30xf32>, vector<30x15xf32>, vector<2x15xf32> -> vector<2x15xf32>
    %c0_13 = arith.constant 0 : index
    %c0_14 = arith.constant 0 : index
    %c0_15 = arith.constant 0 : index
    %10 = vector.load %arg3[%c0_13, %c0_14, %c0_15] : memref<5x1x15xf32, #tpu.memory_space<vmem>>, vector<1x1x15xf32>
    %11 = vector.shape_cast %10 : vector<1x1x15xf32> to vector<1x15xf32>
    %12 = vector.broadcast %11 : vector<1x15xf32> to vector<2x15xf32>
    %13 = arith.addf %9, %12 : vector<2x15xf32>
    %cst_16 = arith.constant 0.000000e+00 : f32
    %14 = vector.broadcast %cst_16 : f32 to vector<2x15xf32>
    %15 = arith.cmpf ogt, %13, %14 : vector<2x15xf32>
    %cst_17 = arith.constant 0.000000e+00 : f32
    %16 = vector.broadcast %cst_17 : f32 to vector<2x15xf32>
    %17 = arith.minimumf %13, %16 : vector<2x15xf32>
    %18 = math.exp %17 : vector<2x15xf32>
    %cst_18 = arith.constant 1.000000e+00 : f32
    %19 = vector.broadcast %cst_18 : f32 to vector<2x15xf32>
    %20 = arith.subf %18, %19 : vector<2x15xf32>
    %21 = arith.select %15, %13, %20 : vector<2x15xi1>, vector<2x15xf32>
    %c0_19 = arith.constant 0 : index
    %c0_20 = arith.constant 0 : index
    %c0_21 = arith.constant 0 : index
    %22 = vector.load %arg4[%c0_19, %c0_20, %c0_21] : memref<5x15x30xf32, #tpu.memory_space<vmem>>, vector<1x15x30xf32>
    %23 = vector.shape_cast %22 : vector<1x15x30xf32> to vector<15x30xf32>
    %cst_22 = arith.constant dense<0.000000e+00> : vector<2x30xf32>
    %24 = tpu.matmul %21, %23, %cst_22 {dimension_numbers = #tpu.dot_dimension_numbers<[1], [0], [0], [1], [0, 0, 1, 1], [], []>} : vector<2x15xf32>, vector<15x30xf32>, vector<2x30xf32> -> vector<2x30xf32>
    %c0_23 = arith.constant 0 : index
    %c0_24 = arith.constant 0 : index
    %c0_25 = arith.constant 0 : index
    %25 = vector.load %arg5[%c0_23, %c0_24, %c0_25] : memref<5x1x30xf32, #tpu.memory_space<vmem>>, vector<1x1x30xf32>
    %26 = vector.shape_cast %25 : vector<1x1x30xf32> to vector<1x30xf32>
    %27 = vector.broadcast %26 : vector<1x30xf32> to vector<2x30xf32>
    %28 = arith.addf %24, %27 : vector<2x30xf32>
    %cst_26 = arith.constant 0.000000e+00 : f32
    %29 = vector.broadcast %cst_26 : f32 to vector<2x30xf32>
    %30 = arith.subf %29, %28 : vector<2x30xf32>
    %31 = math.exp %30 : vector<2x30xf32>
    %cst_27 = arith.constant 1.000000e+00 : f32
    %32 = vector.broadcast %cst_27 : f32 to vector<2x30xf32>
    %33 = arith.addf %32, %31 : vector<2x30xf32>
    %cst_28 = arith.constant 1.000000e+00 : f32
    %34 = vector.broadcast %cst_28 : f32 to vector<2x30xf32>
    %35 = arith.divf %34, %33 : vector<2x30xf32>
    %36 = vector.shape_cast %35 : vector<2x30xf32> to vector<2x30x1xf32>
    %37 = vector.broadcast %36 : vector<2x30x1xf32> to vector<2x30x25xf32>
    %38 = arith.mulf %3, %37 : vector<2x30x25xf32>
    %c0_29 = arith.constant 0 : index
    %39 = memref.load %arg0[%c0_29] : memref<22xf32, #tpu.memory_space<smem>>
    %40 = vector.broadcast %39 : f32 to vector<2x30x25xf32>
    %41 = arith.mulf %38, %40 : vector<2x30x25xf32>
    %c5 = arith.constant 5 : index
    %42 = memref.load %arg0[%c5] : memref<22xf32, #tpu.memory_space<smem>>
    %43 = vector.broadcast %42 : f32 to vector<2x30x25xf32>
    %44 = arith.addf %41, %43 : vector<2x30x25xf32>
    %cst_30 = arith.constant 0.000000e+00 : f32
    %45 = vector.broadcast %cst_30 : f32 to vector<2x30x25xf32>
    %46 = arith.cmpf ogt, %44, %45 : vector<2x30x25xf32>
    %cst_31 = arith.constant 0.000000e+00 : f32
    %47 = vector.broadcast %cst_31 : f32 to vector<2x30x25xf32>
    %48 = arith.minimumf %44, %47 : vector<2x30x25xf32>
    %49 = math.exp %48 : vector<2x30x25xf32>
    %cst_32 = arith.constant 1.000000e+00 : f32
    %50 = vector.broadcast %cst_32 : f32 to vector<2x30x25xf32>
    %51 = arith.subf %49, %50 : vector<2x30x25xf32>
    %52 = arith.select %46, %44, %51 : vector<2x30x25xi1>, vector<2x30x25xf32>
    %cst_33 = arith.constant dense<0.000000e+00> : vector<2x30xf32>
    %53 = vector.multi_reduction <add>, %52, %cst_33 [2] : vector<2x30x25xf32> to vector<2x30xf32>
    %cst_34 = arith.constant 2.500000e+01 : f32
    %54 = vector.broadcast %cst_34 : f32 to vector<2x30xf32>
    %55 = arith.divf %53, %54 : vector<2x30xf32>
    %cst_35 = arith.constant dense<0.000000e+00> : vector<2xf32>
    %56 = vector.multi_reduction <add>, %55, %cst_35 [1] : vector<2x30xf32> to vector<2xf32>
    %57 = vector.shape_cast %56 : vector<2xf32> to vector<2x1xf32>
    %cst_36 = arith.constant 3.000000e+01 : f32
    %58 = vector.broadcast %cst_36 : f32 to vector<2x1xf32>
    %59 = arith.divf %57, %58 : vector<2x1xf32>
    %c0_37 = arith.constant 0 : index
    %c0_38 = arith.constant 0 : index
    %60 = vector.load %arg19[%c0_37, %c0_38] : memref<2x5xf32, #tpu.memory_space<vmem>>, vector<2x1xf32>
    tpu.vector_store %arg19[%c0_37, %c0_38], %59 {strides = array<i32>} : memref<2x5xf32, #tpu.memory_space<vmem>>, vector<2x1xf32>,
    %c0_39 = arith.constant 0 : index
    %c1 = arith.constant 1 : index
    %c0_40 = arith.constant 0 : index
    %c0_41 = arith.constant 0 : index
    %61 = vector.load %arg1[%c0_39, %c1, %c0_40, %c0_41] : memref<2x5x30x25xf32, #tpu.memory_space<vmem>>, vector<2x1x30x25xf32>
    %62 = vector.shape_cast %61 : vector<2x1x30x25xf32> to vector<2x30x25xf32>
    %cst_42 = arith.constant dense<0.000000e+00> : vector<2x30xf32>
    %63 = vector.multi_reduction <add>, %62, %cst_42 [2] : vector<2x30x25xf32> to vector<2x30xf32>
    %cst_43 = arith.constant 2.500000e+01 : f32
    %64 = vector.broadcast %cst_43 : f32 to vector<2x30xf32>
    %65 = arith.divf %63, %64 : vector<2x30xf32>
    %c1_44 = arith.constant 1 : index
    %c0_45 = arith.constant 0 : index
    %c0_46 = arith.constant 0 : index
    %66 = vector.load %arg2[%c1_44, %c0_45, %c0_46] : memref<5x30x15xf32, #tpu.memory_space<vmem>>, vector<1x30x15xf32>
    %67 = vector.shape_cast %66 : vector<1x30x15xf32> to vector<30x15xf32>
    %cst_47 = arith.constant dense<0.000000e+00> : vector<2x15xf32>
    %68 = tpu.matmul %65, %67, %cst_47 {dimension_numbers = #tpu.dot_dimension_numbers<[1], [0], [0], [1], [0, 0, 1, 1], [], []>} : vector<2x30xf32>, vector<30x15xf32>, vector<2x15xf32> -> vector<2x15xf32>
    %c1_48 = arith.constant 1 : index
    %c0_49 = arith.constant 0 : index
    %c0_50 = arith.constant 0 : index
    %69 = vector.load %arg3[%c1_48, %c0_49, %c0_50] : memref<5x1x15xf32, #tpu.memory_space<vmem>>, vector<1x1x15xf32>
    %70 = vector.shape_cast %69 : vector<1x1x15xf32> to vector<1x15xf32>
    %71 = vector.broadcast %70 : vector<1x15xf32> to vector<2x15xf32>
    %72 = arith.addf %68, %71 : vector<2x15xf32>
    %cst_51 = arith.constant 0.000000e+00 : f32
    %73 = vector.broadcast %cst_51 : f32 to vector<2x15xf32>
    %74 = arith.cmpf ogt, %72, %73 : vector<2x15xf32>
    %cst_52 = arith.constant 0.000000e+00 : f32
    %75 = vector.broadcast %cst_52 : f32 to vector<2x15xf32>
    %76 = arith.minimumf %72, %75 : vector<2x15xf32>
    %77 = math.exp %76 : vector<2x15xf32>
    %cst_53 = arith.constant 1.000000e+00 : f32
    %78 = vector.broadcast %cst_53 : f32 to vector<2x15xf32>
    %79 = arith.subf %77, %78 : vector<2x15xf32>
    %80 = arith.select %74, %72, %79 : vector<2x15xi1>, vector<2x15xf32>
    %c1_54 = arith.constant 1 : index
    %c0_55 = arith.constant 0 : index
    %c0_56 = arith.constant 0 : index
    %81 = vector.load %arg4[%c1_54, %c0_55, %c0_56] : memref<5x15x30xf32, #tpu.memory_space<vmem>>, vector<1x15x30xf32>
    %82 = vector.shape_cast %81 : vector<1x15x30xf32> to vector<15x30xf32>
    %cst_57 = arith.constant dense<0.000000e+00> : vector<2x30xf32>
    %83 = tpu.matmul %80, %82, %cst_57 {dimension_numbers = #tpu.dot_dimension_numbers<[1], [0], [0], [1], [0, 0, 1, 1], [], []>} : vector<2x15xf32>, vector<15x30xf32>, vector<2x30xf32> -> vector<2x30xf32>
    %c1_58 = arith.constant 1 : index
    %c0_59 = arith.constant 0 : index
    %c0_60 = arith.constant 0 : index
    %84 = vector.load %arg5[%c1_58, %c0_59, %c0_60] : memref<5x1x30xf32, #tpu.memory_space<vmem>>, vector<1x1x30xf32>
    %85 = vector.shape_cast %84 : vector<1x1x30xf32> to vector<1x30xf32>
    %86 = vector.broadcast %85 : vector<1x30xf32> to vector<2x30xf32>
    %87 = arith.addf %83, %86 : vector<2x30xf32>
    %cst_61 = arith.constant 0.000000e+00 : f32
    %88 = vector.broadcast %cst_61 : f32 to vector<2x30xf32>
    %89 = arith.subf %88, %87 : vector<2x30xf32>
    %90 = math.exp %89 : vector<2x30xf32>
    %cst_62 = arith.constant 1.000000e+00 : f32
    %91 = vector.broadcast %cst_62 : f32 to vector<2x30xf32>
    %92 = arith.addf %91, %90 : vector<2x30xf32>
    %cst_63 = arith.constant 1.000000e+00 : f32
    %93 = vector.broadcast %cst_63 : f32 to vector<2x30xf32>
    %94 = arith.divf %93, %92 : vector<2x30xf32>
    %95 = vector.shape_cast %94 : vector<2x30xf32> to vector<2x30x1xf32>
    %96 = vector.broadcast %95 : vector<2x30x1xf32> to vector<2x30x25xf32>
    %97 = arith.mulf %62, %96 : vector<2x30x25xf32>
    %c1_64 = arith.constant 1 : index
    %98 = memref.load %arg0[%c1_64] : memref<22xf32, #tpu.memory_space<smem>>
    %99 = vector.broadcast %98 : f32 to vector<2x30x25xf32>
    %100 = arith.mulf %97, %99 : vector<2x30x25xf32>
    %c6 = arith.constant 6 : index
    %101 = memref.load %arg0[%c6] : memref<22xf32, #tpu.memory_space<smem>>
    %102 = vector.broadcast %101 : f32 to vector<2x30x25xf32>
    %103 = arith.addf %100, %102 : vector<2x30x25xf32>
    %cst_65 = arith.constant 0.000000e+00 : f32
    %104 = vector.broadcast %cst_65 : f32 to vector<2x30x25xf32>
    %105 = arith.cmpf ogt, %103, %104 : vector<2x30x25xf32>
    %cst_66 = arith.constant 0.000000e+00 : f32
    %106 = vector.broadcast %cst_66 : f32 to vector<2x30x25xf32>
    %107 = arith.minimumf %103, %106 : vector<2x30x25xf32>
    %108 = math.exp %107 : vector<2x30x25xf32>
    %cst_67 = arith.constant 1.000000e+00 : f32
    %109 = vector.broadcast %cst_67 : f32 to vector<2x30x25xf32>
    %110 = arith.subf %108, %109 : vector<2x30x25xf32>
    %111 = arith.select %105, %103, %110 : vector<2x30x25xi1>, vector<2x30x25xf32>
    %cst_68 = arith.constant dense<0.000000e+00> : vector<2x30xf32>
    %112 = vector.multi_reduction <add>, %111, %cst_68 [2] : vector<2x30x25xf32> to vector<2x30xf32>
    %cst_69 = arith.constant 2.500000e+01 : f32
    %113 = vector.broadcast %cst_69 : f32 to vector<2x30xf32>
    %114 = arith.divf %112, %113 : vector<2x30xf32>
    %cst_70 = arith.constant dense<0.000000e+00> : vector<2xf32>
    %115 = vector.multi_reduction <add>, %114, %cst_70 [1] : vector<2x30xf32> to vector<2xf32>
    %116 = vector.shape_cast %115 : vector<2xf32> to vector<2x1xf32>
    %cst_71 = arith.constant 3.000000e+01 : f32
    %117 = vector.broadcast %cst_71 : f32 to vector<2x1xf32>
    %118 = arith.divf %116, %117 : vector<2x1xf32>
    %c0_72 = arith.constant 0 : index
    %c1_73 = arith.constant 1 : index
    %119 = vector.load %arg19[%c0_72, %c1_73] : memref<2x5xf32, #tpu.memory_space<vmem>>, vector<2x1xf32>
    tpu.vector_store %arg19[%c0_72, %c1_73], %118 {strides = array<i32>} : memref<2x5xf32, #tpu.memory_space<vmem>>, vector<2x1xf32>,
    %c0_74 = arith.constant 0 : index
    %c2 = arith.constant 2 : index
    %c0_75 = arith.constant 0 : index
    %c0_76 = arith.constant 0 : index
    %120 = vector.load %arg1[%c0_74, %c2, %c0_75, %c0_76] : memref<2x5x30x25xf32, #tpu.memory_space<vmem>>, vector<2x1x30x25xf32>
    %121 = vector.shape_cast %120 : vector<2x1x30x25xf32> to vector<2x30x25xf32>
    %cst_77 = arith.constant dense<0.000000e+00> : vector<2x30xf32>
    %122 = vector.multi_reduction <add>, %121, %cst_77 [2] : vector<2x30x25xf32> to vector<2x30xf32>
    %cst_78 = arith.constant 2.500000e+01 : f32
    %123 = vector.broadcast %cst_78 : f32 to vector<2x30xf32>
    %124 = arith.divf %122, %123 : vector<2x30xf32>
    %c2_79 = arith.constant 2 : index
    %c0_80 = arith.constant 0 : index
    %c0_81 = arith.constant 0 : index
    %125 = vector.load %arg2[%c2_79, %c0_80, %c0_81] : memref<5x30x15xf32, #tpu.memory_space<vmem>>, vector<1x30x15xf32>
    %126 = vector.shape_cast %125 : vector<1x30x15xf32> to vector<30x15xf32>
    %cst_82 = arith.constant dense<0.000000e+00> : vector<2x15xf32>
    %127 = tpu.matmul %124, %126, %cst_82 {dimension_numbers = #tpu.dot_dimension_numbers<[1], [0], [0], [1], [0, 0, 1, 1], [], []>} : vector<2x30xf32>, vector<30x15xf32>, vector<2x15xf32> -> vector<2x15xf32>
    %c2_83 = arith.constant 2 : index
    %c0_84 = arith.constant 0 : index
    %c0_85 = arith.constant 0 : index
    %128 = vector.load %arg3[%c2_83, %c0_84, %c0_85] : memref<5x1x15xf32, #tpu.memory_space<vmem>>, vector<1x1x15xf32>
    %129 = vector.shape_cast %128 : vector<1x1x15xf32> to vector<1x15xf32>
    %130 = vector.broadcast %129 : vector<1x15xf32> to vector<2x15xf32>
    %131 = arith.addf %127, %130 : vector<2x15xf32>
    %cst_86 = arith.constant 0.000000e+00 : f32
    %132 = vector.broadcast %cst_86 : f32 to vector<2x15xf32>
    %133 = arith.cmpf ogt, %131, %132 : vector<2x15xf32>
    %cst_87 = arith.constant 0.000000e+00 : f32
    %134 = vector.broadcast %cst_87 : f32 to vector<2x15xf32>
    %135 = arith.minimumf %131, %134 : vector<2x15xf32>
    %136 = math.exp %135 : vector<2x15xf32>
    %cst_88 = arith.constant 1.000000e+00 : f32
    %137 = vector.broadcast %cst_88 : f32 to vector<2x15xf32>
    %138 = arith.subf %136, %137 : vector<2x15xf32>
    %139 = arith.select %133, %131, %138 : vector<2x15xi1>, vector<2x15xf32>
    %c2_89 = arith.constant 2 : index
    %c0_90 = arith.constant 0 : index
    %c0_91 = arith.constant 0 : index
    %140 = vector.load %arg4[%c2_89, %c0_90, %c0_91] : memref<5x15x30xf32, #tpu.memory_space<vmem>>, vector<1x15x30xf32>
    %141 = vector.shape_cast %140 : vector<1x15x30xf32> to vector<15x30xf32>
    %cst_92 = arith.constant dense<0.000000e+00> : vector<2x30xf32>
    %142 = tpu.matmul %139, %141, %cst_92 {dimension_numbers = #tpu.dot_dimension_numbers<[1], [0], [0], [1], [0, 0, 1, 1], [], []>} : vector<2x15xf32>, vector<15x30xf32>, vector<2x30xf32> -> vector<2x30xf32>
    %c2_93 = arith.constant 2 : index
    %c0_94 = arith.constant 0 : index
    %c0_95 = arith.constant 0 : index
    %143 = vector.load %arg5[%c2_93, %c0_94, %c0_95] : memref<5x1x30xf32, #tpu.memory_space<vmem>>, vector<1x1x30xf32>
    %144 = vector.shape_cast %143 : vector<1x1x30xf32> to vector<1x30xf32>
    %145 = vector.broadcast %144 : vector<1x30xf32> to vector<2x30xf32>
    %146 = arith.addf %142, %145 : vector<2x30xf32>
    %cst_96 = arith.constant 0.000000e+00 : f32
    %147 = vector.broadcast %cst_96 : f32 to vector<2x30xf32>
    %148 = arith.subf %147, %146 : vector<2x30xf32>
    %149 = math.exp %148 : vector<2x30xf32>
    %cst_97 = arith.constant 1.000000e+00 : f32
    %150 = vector.broadcast %cst_97 : f32 to vector<2x30xf32>
    %151 = arith.addf %150, %149 : vector<2x30xf32>
    %cst_98 = arith.constant 1.000000e+00 : f32
    %152 = vector.broadcast %cst_98 : f32 to vector<2x30xf32>
    %153 = arith.divf %152, %151 : vector<2x30xf32>
    %154 = vector.shape_cast %153 : vector<2x30xf32> to vector<2x30x1xf32>
    %155 = vector.broadcast %154 : vector<2x30x1xf32> to vector<2x30x25xf32>
    %156 = arith.mulf %121, %155 : vector<2x30x25xf32>
    %c2_99 = arith.constant 2 : index
    %157 = memref.load %arg0[%c2_99] : memref<22xf32, #tpu.memory_space<smem>>
    %158 = vector.broadcast %157 : f32 to vector<2x30x25xf32>
    %159 = arith.mulf %156, %158 : vector<2x30x25xf32>
    %c7 = arith.constant 7 : index
    %160 = memref.load %arg0[%c7] : memref<22xf32, #tpu.memory_space<smem>>
    %161 = vector.broadcast %160 : f32 to vector<2x30x25xf32>
    %162 = arith.addf %159, %161 : vector<2x30x25xf32>
    %cst_100 = arith.constant 0.000000e+00 : f32
    %163 = vector.broadcast %cst_100 : f32 to vector<2x30x25xf32>
    %164 = arith.cmpf ogt, %162, %163 : vector<2x30x25xf32>
    %cst_101 = arith.constant 0.000000e+00 : f32
    %165 = vector.broadcast %cst_101 : f32 to vector<2x30x25xf32>
    %166 = arith.minimumf %162, %165 : vector<2x30x25xf32>
    %167 = math.exp %166 : vector<2x30x25xf32>
    %cst_102 = arith.constant 1.000000e+00 : f32
    %168 = vector.broadcast %cst_102 : f32 to vector<2x30x25xf32>
    %169 = arith.subf %167, %168 : vector<2x30x25xf32>
    %170 = arith.select %164, %162, %169 : vector<2x30x25xi1>, vector<2x30x25xf32>
    %cst_103 = arith.constant dense<0.000000e+00> : vector<2x30xf32>
    %171 = vector.multi_reduction <add>, %170, %cst_103 [2] : vector<2x30x25xf32> to vector<2x30xf32>
    %cst_104 = arith.constant 2.500000e+01 : f32
    %172 = vector.broadcast %cst_104 : f32 to vector<2x30xf32>
    %173 = arith.divf %171, %172 : vector<2x30xf32>
    %cst_105 = arith.constant dense<0.000000e+00> : vector<2xf32>
    %174 = vector.multi_reduction <add>, %173, %cst_105 [1] : vector<2x30xf32> to vector<2xf32>
    %175 = vector.shape_cast %174 : vector<2xf32> to vector<2x1xf32>
    %cst_106 = arith.constant 3.000000e+01 : f32
    %176 = vector.broadcast %cst_106 : f32 to vector<2x1xf32>
    %177 = arith.divf %175, %176 : vector<2x1xf32>
    %c0_107 = arith.constant 0 : index
    %c2_108 = arith.constant 2 : index
    %178 = vector.load %arg19[%c0_107, %c2_108] : memref<2x5xf32, #tpu.memory_space<vmem>>, vector<2x1xf32>
    tpu.vector_store %arg19[%c0_107, %c2_108], %177 {strides = array<i32>} : memref<2x5xf32, #tpu.memory_space<vmem>>, vector<2x1xf32>,
    %c0_109 = arith.constant 0 : index
    %c3 = arith.constant 3 : index
    %c0_110 = arith.constant 0 : index
    %c0_111 = arith.constant 0 : index
    %179 = vector.load %arg1[%c0_109, %c3, %c0_110, %c0_111] : memref<2x5x30x25xf32, #tpu.memory_space<vmem>>, vector<2x1x30x25xf32>
    %180 = vector.shape_cast %179 : vector<2x1x30x25xf32> to vector<2x30x25xf32>
    %cst_112 = arith.constant dense<0.000000e+00> : vector<2x30xf32>
    %181 = vector.multi_reduction <add>, %180, %cst_112 [2] : vector<2x30x25xf32> to vector<2x30xf32>
    %cst_113 = arith.constant 2.500000e+01 : f32
    %182 = vector.broadcast %cst_113 : f32 to vector<2x30xf32>
    %183 = arith.divf %181, %182 : vector<2x30xf32>
    %c3_114 = arith.constant 3 : index
    %c0_115 = arith.constant 0 : index
    %c0_116 = arith.constant 0 : index
    %184 = vector.load %arg2[%c3_114, %c0_115, %c0_116] : memref<5x30x15xf32, #tpu.memory_space<vmem>>, vector<1x30x15xf32>
    %185 = vector.shape_cast %184 : vector<1x30x15xf32> to vector<30x15xf32>
    %cst_117 = arith.constant dense<0.000000e+00> : vector<2x15xf32>
    %186 = tpu.matmul %183, %185, %cst_117 {dimension_numbers = #tpu.dot_dimension_numbers<[1], [0], [0], [1], [0, 0, 1, 1], [], []>} : vector<2x30xf32>, vector<30x15xf32>, vector<2x15xf32> -> vector<2x15xf32>
    %c3_118 = arith.constant 3 : index
    %c0_119 = arith.constant 0 : index
    %c0_120 = arith.constant 0 : index
    %187 = vector.load %arg3[%c3_118, %c0_119, %c0_120] : memref<5x1x15xf32, #tpu.memory_space<vmem>>, vector<1x1x15xf32>
    %188 = vector.shape_cast %187 : vector<1x1x15xf32> to vector<1x15xf32>
    %189 = vector.broadcast %188 : vector<1x15xf32> to vector<2x15xf32>
    %190 = arith.addf %186, %189 : vector<2x15xf32>
    %cst_121 = arith.constant 0.000000e+00 : f32
    %191 = vector.broadcast %cst_121 : f32 to vector<2x15xf32>
    %192 = arith.cmpf ogt, %190, %191 : vector<2x15xf32>
    %cst_122 = arith.constant 0.000000e+00 : f32
    %193 = vector.broadcast %cst_122 : f32 to vector<2x15xf32>
    %194 = arith.minimumf %190, %193 : vector<2x15xf32>
    %195 = math.exp %194 : vector<2x15xf32>
    %cst_123 = arith.constant 1.000000e+00 : f32
    %196 = vector.broadcast %cst_123 : f32 to vector<2x15xf32>
    %197 = arith.subf %195, %196 : vector<2x15xf32>
    %198 = arith.select %192, %190, %197 : vector<2x15xi1>, vector<2x15xf32>
    %c3_124 = arith.constant 3 : index
    %c0_125 = arith.constant 0 : index
    %c0_126 = arith.constant 0 : index
    %199 = vector.load %arg4[%c3_124, %c0_125, %c0_126] : memref<5x15x30xf32, #tpu.memory_space<vmem>>, vector<1x15x30xf32>
    %200 = vector.shape_cast %199 : vector<1x15x30xf32> to vector<15x30xf32>
    %cst_127 = arith.constant dense<0.000000e+00> : vector<2x30xf32>
    %201 = tpu.matmul %198, %200, %cst_127 {dimension_numbers = #tpu.dot_dimension_numbers<[1], [0], [0], [1], [0, 0, 1, 1], [], []>} : vector<2x15xf32>, vector<15x30xf32>, vector<2x30xf32> -> vector<2x30xf32>
    %c3_128 = arith.constant 3 : index
    %c0_129 = arith.constant 0 : index
    %c0_130 = arith.constant 0 : index
    %202 = vector.load %arg5[%c3_128, %c0_129, %c0_130] : memref<5x1x30xf32, #tpu.memory_space<vmem>>, vector<1x1x30xf32>
    %203 = vector.shape_cast %202 : vector<1x1x30xf32> to vector<1x30xf32>
    %204 = vector.broadcast %203 : vector<1x30xf32> to vector<2x30xf32>
    %205 = arith.addf %201, %204 : vector<2x30xf32>
    %cst_131 = arith.constant 0.000000e+00 : f32
    %206 = vector.broadcast %cst_131 : f32 to vector<2x30xf32>
    %207 = arith.subf %206, %205 : vector<2x30xf32>
    %208 = math.exp %207 : vector<2x30xf32>
    %cst_132 = arith.constant 1.000000e+00 : f32
    %209 = vector.broadcast %cst_132 : f32 to vector<2x30xf32>
    %210 = arith.addf %209, %208 : vector<2x30xf32>
    %cst_133 = arith.constant 1.000000e+00 : f32
    %211 = vector.broadcast %cst_133 : f32 to vector<2x30xf32>
    %212 = arith.divf %211, %210 : vector<2x30xf32>
    %213 = vector.shape_cast %212 : vector<2x30xf32> to vector<2x30x1xf32>
    %214 = vector.broadcast %213 : vector<2x30x1xf32> to vector<2x30x25xf32>
    %215 = arith.mulf %180, %214 : vector<2x30x25xf32>
    %c3_134 = arith.constant 3 : index
    %216 = memref.load %arg0[%c3_134] : memref<22xf32, #tpu.memory_space<smem>>
    %217 = vector.broadcast %216 : f32 to vector<2x30x25xf32>
    %218 = arith.mulf %215, %217 : vector<2x30x25xf32>
    %c8 = arith.constant 8 : index
    %219 = memref.load %arg0[%c8] : memref<22xf32, #tpu.memory_space<smem>>
    %220 = vector.broadcast %219 : f32 to vector<2x30x25xf32>
    %221 = arith.addf %218, %220 : vector<2x30x25xf32>
    %cst_135 = arith.constant 0.000000e+00 : f32
    %222 = vector.broadcast %cst_135 : f32 to vector<2x30x25xf32>
    %223 = arith.cmpf ogt, %221, %222 : vector<2x30x25xf32>
    %cst_136 = arith.constant 0.000000e+00 : f32
    %224 = vector.broadcast %cst_136 : f32 to vector<2x30x25xf32>
    %225 = arith.minimumf %221, %224 : vector<2x30x25xf32>
    %226 = math.exp %225 : vector<2x30x25xf32>
    %cst_137 = arith.constant 1.000000e+00 : f32
    %227 = vector.broadcast %cst_137 : f32 to vector<2x30x25xf32>
    %228 = arith.subf %226, %227 : vector<2x30x25xf32>
    %229 = arith.select %223, %221, %228 : vector<2x30x25xi1>, vector<2x30x25xf32>
    %cst_138 = arith.constant dense<0.000000e+00> : vector<2x30xf32>
    %230 = vector.multi_reduction <add>, %229, %cst_138 [2] : vector<2x30x25xf32> to vector<2x30xf32>
    %cst_139 = arith.constant 2.500000e+01 : f32
    %231 = vector.broadcast %cst_139 : f32 to vector<2x30xf32>
    %232 = arith.divf %230, %231 : vector<2x30xf32>
    %cst_140 = arith.constant dense<0.000000e+00> : vector<2xf32>
    %233 = vector.multi_reduction <add>, %232, %cst_140 [1] : vector<2x30xf32> to vector<2xf32>
    %234 = vector.shape_cast %233 : vector<2xf32> to vector<2x1xf32>
    %cst_141 = arith.constant 3.000000e+01 : f32
    %235 = vector.broadcast %cst_141 : f32 to vector<2x1xf32>
    %236 = arith.divf %234, %235 : vector<2x1xf32>
    %c0_142 = arith.constant 0 : index
    %c3_143 = arith.constant 3 : index
    %237 = vector.load %arg19[%c0_142, %c3_143] : memref<2x5xf32, #tpu.memory_space<vmem>>, vector<2x1xf32>
    tpu.vector_store %arg19[%c0_142, %c3_143], %236 {strides = array<i32>} : memref<2x5xf32, #tpu.memory_space<vmem>>, vector<2x1xf32>,
    %c0_144 = arith.constant 0 : index
    %c4 = arith.constant 4 : index
    %c0_145 = arith.constant 0 : index
    %c0_146 = arith.constant 0 : index
    %238 = vector.load %arg1[%c0_144, %c4, %c0_145, %c0_146] : memref<2x5x30x25xf32, #tpu.memory_space<vmem>>, vector<2x1x30x25xf32>
    %239 = vector.shape_cast %238 : vector<2x1x30x25xf32> to vector<2x30x25xf32>
    %cst_147 = arith.constant dense<0.000000e+00> : vector<2x30xf32>
    %240 = vector.multi_reduction <add>, %239, %cst_147 [2] : vector<2x30x25xf32> to vector<2x30xf32>
    %cst_148 = arith.constant 2.500000e+01 : f32
    %241 = vector.broadcast %cst_148 : f32 to vector<2x30xf32>
    %242 = arith.divf %240, %241 : vector<2x30xf32>
    %c4_149 = arith.constant 4 : index
    %c0_150 = arith.constant 0 : index
    %c0_151 = arith.constant 0 : index
    %243 = vector.load %arg2[%c4_149, %c0_150, %c0_151] : memref<5x30x15xf32, #tpu.memory_space<vmem>>, vector<1x30x15xf32>
    %244 = vector.shape_cast %243 : vector<1x30x15xf32> to vector<30x15xf32>
    %cst_152 = arith.constant dense<0.000000e+00> : vector<2x15xf32>
    %245 = tpu.matmul %242, %244, %cst_152 {dimension_numbers = #tpu.dot_dimension_numbers<[1], [0], [0], [1], [0, 0, 1, 1], [], []>} : vector<2x30xf32>, vector<30x15xf32>, vector<2x15xf32> -> vector<2x15xf32>
    %c4_153 = arith.constant 4 : index
    %c0_154 = arith.constant 0 : index
    %c0_155 = arith.constant 0 : index
    %246 = vector.load %arg3[%c4_153, %c0_154, %c0_155] : memref<5x1x15xf32, #tpu.memory_space<vmem>>, vector<1x1x15xf32>
    %247 = vector.shape_cast %246 : vector<1x1x15xf32> to vector<1x15xf32>
    %248 = vector.broadcast %247 : vector<1x15xf32> to vector<2x15xf32>
    %249 = arith.addf %245, %248 : vector<2x15xf32>
    %cst_156 = arith.constant 0.000000e+00 : f32
    %250 = vector.broadcast %cst_156 : f32 to vector<2x15xf32>
    %251 = arith.cmpf ogt, %249, %250 : vector<2x15xf32>
    %cst_157 = arith.constant 0.000000e+00 : f32
    %252 = vector.broadcast %cst_157 : f32 to vector<2x15xf32>
    %253 = arith.minimumf %249, %252 : vector<2x15xf32>
    %254 = math.exp %253 : vector<2x15xf32>
    %cst_158 = arith.constant 1.000000e+00 : f32
    %255 = vector.broadcast %cst_158 : f32 to vector<2x15xf32>
    %256 = arith.subf %254, %255 : vector<2x15xf32>
    %257 = arith.select %251, %249, %256 : vector<2x15xi1>, vector<2x15xf32>
    %c4_159 = arith.constant 4 : index
    %c0_160 = arith.constant 0 : index
    %c0_161 = arith.constant 0 : index
    %258 = vector.load %arg4[%c4_159, %c0_160, %c0_161] : memref<5x15x30xf32, #tpu.memory_space<vmem>>, vector<1x15x30xf32>
    %259 = vector.shape_cast %258 : vector<1x15x30xf32> to vector<15x30xf32>
    %cst_162 = arith.constant dense<0.000000e+00> : vector<2x30xf32>
    %260 = tpu.matmul %257, %259, %cst_162 {dimension_numbers = #tpu.dot_dimension_numbers<[1], [0], [0], [1], [0, 0, 1, 1], [], []>} : vector<2x15xf32>, vector<15x30xf32>, vector<2x30xf32> -> vector<2x30xf32>
    %c4_163 = arith.constant 4 : index
    %c0_164 = arith.constant 0 : index
    %c0_165 = arith.constant 0 : index
    %261 = vector.load %arg5[%c4_163, %c0_164, %c0_165] : memref<5x1x30xf32, #tpu.memory_space<vmem>>, vector<1x1x30xf32>
    %262 = vector.shape_cast %261 : vector<1x1x30xf32> to vector<1x30xf32>
    %263 = vector.broadcast %262 : vector<1x30xf32> to vector<2x30xf32>
    %264 = arith.addf %260, %263 : vector<2x30xf32>
    %cst_166 = arith.constant 0.000000e+00 : f32
    %265 = vector.broadcast %cst_166 : f32 to vector<2x30xf32>
    %266 = arith.subf %265, %264 : vector<2x30xf32>
    %267 = math.exp %266 : vector<2x30xf32>
    %cst_167 = arith.constant 1.000000e+00 : f32
    %268 = vector.broadcast %cst_167 : f32 to vector<2x30xf32>
    %269 = arith.addf %268, %267 : vector<2x30xf32>
    %cst_168 = arith.constant 1.000000e+00 : f32
    %270 = vector.broadcast %cst_168 : f32 to vector<2x30xf32>
    %271 = arith.divf %270, %269 : vector<2x30xf32>
    %272 = vector.shape_cast %271 : vector<2x30xf32> to vector<2x30x1xf32>
    %273 = vector.broadcast %272 : vector<2x30x1xf32> to vector<2x30x25xf32>
    %274 = arith.mulf %239, %273 : vector<2x30x25xf32>
    %c4_169 = arith.constant 4 : index
    %275 = memref.load %arg0[%c4_169] : memref<22xf32, #tpu.memory_space<smem>>
    %276 = vector.broadcast %275 : f32 to vector<2x30x25xf32>
    %277 = arith.mulf %274, %276 : vector<2x30x25xf32>
    %c9 = arith.constant 9 : index
    %278 = memref.load %arg0[%c9] : memref<22xf32, #tpu.memory_space<smem>>
    %279 = vector.broadcast %278 : f32 to vector<2x30x25xf32>
    %280 = arith.addf %277, %279 : vector<2x30x25xf32>
    %cst_170 = arith.constant 0.000000e+00 : f32
    %281 = vector.broadcast %cst_170 : f32 to vector<2x30x25xf32>
    %282 = arith.cmpf ogt, %280, %281 : vector<2x30x25xf32>
    %cst_171 = arith.constant 0.000000e+00 : f32
    %283 = vector.broadcast %cst_171 : f32 to vector<2x30x25xf32>
    %284 = arith.minimumf %280, %283 : vector<2x30x25xf32>
    %285 = math.exp %284 : vector<2x30x25xf32>
    %cst_172 = arith.constant 1.000000e+00 : f32
    %286 = vector.broadcast %cst_172 : f32 to vector<2x30x25xf32>
    %287 = arith.subf %285, %286 : vector<2x30x25xf32>
    %288 = arith.select %282, %280, %287 : vector<2x30x25xi1>, vector<2x30x25xf32>
    %cst_173 = arith.constant dense<0.000000e+00> : vector<2x30xf32>
    %289 = vector.multi_reduction <add>, %288, %cst_173 [2] : vector<2x30x25xf32> to vector<2x30xf32>
    %cst_174 = arith.constant 2.500000e+01 : f32
    %290 = vector.broadcast %cst_174 : f32 to vector<2x30xf32>
    %291 = arith.divf %289, %290 : vector<2x30xf32>
    %cst_175 = arith.constant dense<0.000000e+00> : vector<2xf32>
    %292 = vector.multi_reduction <add>, %291, %cst_175 [1] : vector<2x30xf32> to vector<2xf32>
    %293 = vector.shape_cast %292 : vector<2xf32> to vector<2x1xf32>
    %cst_176 = arith.constant 3.000000e+01 : f32
    %294 = vector.broadcast %cst_176 : f32 to vector<2x1xf32>
    %295 = arith.divf %293, %294 : vector<2x1xf32>
    %c0_177 = arith.constant 0 : index
    %c4_178 = arith.constant 4 : index
    %296 = vector.load %arg19[%c0_177, %c4_178] : memref<2x5xf32, #tpu.memory_space<vmem>>, vector<2x1xf32>
    tpu.vector_store %arg19[%c0_177, %c4_178], %295 {strides = array<i32>} : memref<2x5xf32, #tpu.memory_space<vmem>>, vector<2x1xf32>,
    %c0_179 = arith.constant 0 : index
    %c0_180 = arith.constant 0 : index
    %297 = vector.load %arg19[%c0_179, %c0_180] : memref<2x5xf32, #tpu.memory_space<vmem>>, vector<2x5xf32>
    %c0_181 = arith.constant 0 : index
    %c0_182 = arith.constant 0 : index
    %298 = vector.load %arg6[%c0_181, %c0_182] : memref<5x3xf32, #tpu.memory_space<vmem>>, vector<5x3xf32>
    %cst_183 = arith.constant dense<0.000000e+00> : vector<2x3xf32>
    %299 = tpu.matmul %297, %298, %cst_183 {dimension_numbers = #tpu.dot_dimension_numbers<[1], [0], [0], [1], [0, 0, 1, 1], [], []>} : vector<2x5xf32>, vector<5x3xf32>, vector<2x3xf32> -> vector<2x3xf32>
    %c0_184 = arith.constant 0 : index
    %c0_185 = arith.constant 0 : index
    %300 = vector.load %arg7[%c0_184, %c0_185] : memref<1x3xf32, #tpu.memory_space<vmem>>, vector<1x3xf32>
    %301 = vector.broadcast %300 : vector<1x3xf32> to vector<2x3xf32>
    %302 = arith.addf %299, %301 : vector<2x3xf32>
    %cst_186 = arith.constant 0.000000e+00 : f32
    %303 = vector.broadcast %cst_186 : f32 to vector<2x3xf32>
    %304 = arith.cmpf ogt, %302, %303 : vector<2x3xf32>
    %cst_187 = arith.constant 0.000000e+00 : f32
    %305 = vector.broadcast %cst_187 : f32 to vector<2x3xf32>
    %306 = arith.minimumf %302, %305 : vector<2x3xf32>
    %307 = math.exp %306 : vector<2x3xf32>
    %cst_188 = arith.constant 1.000000e+00 : f32
    %308 = vector.broadcast %cst_188 : f32 to vector<2x3xf32>
    %309 = arith.subf %307, %308 : vector<2x3xf32>
    %310 = arith.select %304, %302, %309 : vector<2x3xi1>, vector<2x3xf32>
    %c0_189 = arith.constant 0 : index
    %c0_190 = arith.constant 0 : index
    %311 = vector.load %arg8[%c0_189, %c0_190] : memref<3x5xf32, #tpu.memory_space<vmem>>, vector<3x5xf32>
    %cst_191 = arith.constant dense<0.000000e+00> : vector<2x5xf32>
    %312 = tpu.matmul %310, %311, %cst_191 {dimension_numbers = #tpu.dot_dimension_numbers<[1], [0], [0], [1], [0, 0, 1, 1], [], []>} : vector<2x3xf32>, vector<3x5xf32>, vector<2x5xf32> -> vector<2x5xf32>
    %c0_192 = arith.constant 0 : index
    %c0_193 = arith.constant 0 : index
    %313 = vector.load %arg9[%c0_192, %c0_193] : memref<1x5xf32, #tpu.memory_space<vmem>>, vector<1x5xf32>
    %314 = vector.broadcast %313 : vector<1x5xf32> to vector<2x5xf32>
    %315 = arith.addf %312, %314 : vector<2x5xf32>
    %cst_194 = arith.constant 0.000000e+00 : f32
    %316 = vector.broadcast %cst_194 : f32 to vector<2x5xf32>
    %317 = arith.subf %316, %315 : vector<2x5xf32>
    %318 = math.exp %317 : vector<2x5xf32>
    %cst_195 = arith.constant 1.000000e+00 : f32
    %319 = vector.broadcast %cst_195 : f32 to vector<2x5xf32>
    %320 = arith.addf %319, %318 : vector<2x5xf32>
    %cst_196 = arith.constant 1.000000e+00 : f32
    %321 = vector.broadcast %cst_196 : f32 to vector<2x5xf32>
    %322 = arith.divf %321, %320 : vector<2x5xf32>
    %323 = vector.extract_strided_slice %322 {offsets = [0, 0], sizes = [2, 1], strides = [1, 1]} : vector<2x5xf32> to vector<2x1xf32>
    %324 = vector.shape_cast %323 : vector<2x1xf32> to vector<2x1x1xf32>
    %c10 = arith.constant 10 : index
    %325 = memref.load %arg0[%c10] : memref<22xf32, #tpu.memory_space<smem>>
    %326 = vector.broadcast %325 : f32 to vector<2x1x1xf32>
    %327 = arith.mulf %324, %326 : vector<2x1x1xf32>
    %328 = vector.broadcast %327 : vector<2x1x1xf32> to vector<2x30x25xf32>
    %329 = arith.mulf %52, %328 : vector<2x30x25xf32>
    %c15 = arith.constant 15 : index
    %330 = memref.load %arg0[%c15] : memref<22xf32, #tpu.memory_space<smem>>
    %331 = vector.broadcast %330 : f32 to vector<2x30x25xf32>
    %332 = arith.addf %329, %331 : vector<2x30x25xf32>
    %cst_197 = arith.constant 0.000000e+00 : f32
    %333 = vector.broadcast %cst_197 : f32 to vector<2x30x25xf32>
    %334 = arith.cmpf ogt, %332, %333 : vector<2x30x25xf32>
    %cst_198 = arith.constant 0.000000e+00 : f32
    %335 = vector.broadcast %cst_198 : f32 to vector<2x30x25xf32>
    %336 = arith.minimumf %332, %335 : vector<2x30x25xf32>
    %337 = math.exp %336 : vector<2x30x25xf32>
    %cst_199 = arith.constant 1.000000e+00 : f32
    %338 = vector.broadcast %cst_199 : f32 to vector<2x30x25xf32>
    %339 = arith.subf %337, %338 : vector<2x30x25xf32>
    %340 = arith.select %334, %332, %339 : vector<2x30x25xi1>, vector<2x30x25xf32>
    %341 = vector.extract_strided_slice %340 {offsets = [0, 0, 0], sizes = [2, 1, 25], strides = [1, 1, 1]} : vector<2x30x25xf32> to vector<2x1x25xf32>
    %342 = vector.extract_strided_slice %340 {offsets = [0, 1, 0], sizes = [2, 1, 25], strides = [1, 1, 1]} : vector<2x30x25xf32> to vector<2x1x25xf32>
    %343 = arith.maximumf %341, %342 : vector<2x1x25xf32>
    %c0_200 = arith.constant 0 : index
    %c0_201 = arith.constant 0 : index
    %c7_202 = arith.constant 7 : index
    %c0_203 = arith.constant 0 : index
    %344 = vector.load %arg18[%c0_200, %c0_201, %c7_202, %c0_203] : memref<2x5x30x25xf32, #tpu.memory_space<vmem>>, vector<2x1x1x25xf32>
    %345 = vector.shape_cast %344 : vector<2x1x1x25xf32> to vector<2x1x25xf32>
    %346 = vector.shape_cast %343 : vector<2x1x25xf32> to vector<2x1x1x25xf32>
    tpu.vector_store %arg18[%c0_200, %c0_201, %c7_202, %c0_203], %346 {strides = array<i32>} : memref<2x5x30x25xf32, #tpu.memory_space<vmem>>, vector<2x1x1x25xf32>,
    %347 = vector.extract_strided_slice %340 {offsets = [0, 2, 0], sizes = [2, 1, 25], strides = [1, 1, 1]} : vector<2x30x25xf32> to vector<2x1x25xf32>
    %348 = vector.extract_strided_slice %340 {offsets = [0, 3, 0], sizes = [2, 1, 25], strides = [1, 1, 1]} : vector<2x30x25xf32> to vector<2x1x25xf32>
    %349 = arith.maximumf %347, %348 : vector<2x1x25xf32>
    %c0_204 = arith.constant 0 : index
    %c0_205 = arith.constant 0 : index
    %c8_206 = arith.constant 8 : index
    %c0_207 = arith.constant 0 : index
    %350 = vector.load %arg18[%c0_204, %c0_205, %c8_206, %c0_207] : memref<2x5x30x25xf32, #tpu.memory_space<vmem>>, vector<2x1x1x25xf32>
    %351 = vector.shape_cast %350 : vector<2x1x1x25xf32> to vector<2x1x25xf32>
    %352 = vector.shape_cast %349 : vector<2x1x25xf32> to vector<2x1x1x25xf32>
    tpu.vector_store %arg18[%c0_204, %c0_205, %c8_206, %c0_207], %352 {strides = array<i32>} : memref<2x5x30x25xf32, #tpu.memory_space<vmem>>, vector<2x1x1x25xf32>,
    %353 = vector.extract_strided_slice %340 {offsets = [0, 4, 0], sizes = [2, 1, 25], strides = [1, 1, 1]} : vector<2x30x25xf32> to vector<2x1x25xf32>
    %354 = vector.extract_strided_slice %340 {offsets = [0, 5, 0], sizes = [2, 1, 25], strides = [1, 1, 1]} : vector<2x30x25xf32> to vector<2x1x25xf32>
    %355 = arith.maximumf %353, %354 : vector<2x1x25xf32>
    %c0_208 = arith.constant 0 : index
    %c0_209 = arith.constant 0 : index
    %c9_210 = arith.constant 9 : index
    %c0_211 = arith.constant 0 : index
    %356 = vector.load %arg18[%c0_208, %c0_209, %c9_210, %c0_211] : memref<2x5x30x25xf32, #tpu.memory_space<vmem>>, vector<2x1x1x25xf32>
    %357 = vector.shape_cast %356 : vector<2x1x1x25xf32> to vector<2x1x25xf32>
    %358 = vector.shape_cast %355 : vector<2x1x25xf32> to vector<2x1x1x25xf32>
    tpu.vector_store %arg18[%c0_208, %c0_209, %c9_210, %c0_211], %358 {strides = array<i32>} : memref<2x5x30x25xf32, #tpu.memory_space<vmem>>, vector<2x1x1x25xf32>,
    %359 = vector.extract_strided_slice %340 {offsets = [0, 6, 0], sizes = [2, 1, 25], strides = [1, 1, 1]} : vector<2x30x25xf32> to vector<2x1x25xf32>
    %360 = vector.extract_strided_slice %340 {offsets = [0, 7, 0], sizes = [2, 1, 25], strides = [1, 1, 1]} : vector<2x30x25xf32> to vector<2x1x25xf32>
    %361 = arith.maximumf %359, %360 : vector<2x1x25xf32>
    %c0_212 = arith.constant 0 : index
    %c0_213 = arith.constant 0 : index
    %c10_214 = arith.constant 10 : index
    %c0_215 = arith.constant 0 : index
    %362 = vector.load %arg18[%c0_212, %c0_213, %c10_214, %c0_215] : memref<2x5x30x25xf32, #tpu.memory_space<vmem>>, vector<2x1x1x25xf32>
    %363 = vector.shape_cast %362 : vector<2x1x1x25xf32> to vector<2x1x25xf32>
    %364 = vector.shape_cast %361 : vector<2x1x25xf32> to vector<2x1x1x25xf32>
    tpu.vector_store %arg18[%c0_212, %c0_213, %c10_214, %c0_215], %364 {strides = array<i32>} : memref<2x5x30x25xf32, #tpu.memory_space<vmem>>, vector<2x1x1x25xf32>,
    %365 = vector.extract_strided_slice %340 {offsets = [0, 8, 0], sizes = [2, 1, 25], strides = [1, 1, 1]} : vector<2x30x25xf32> to vector<2x1x25xf32>
    %366 = vector.extract_strided_slice %340 {offsets = [0, 9, 0], sizes = [2, 1, 25], strides = [1, 1, 1]} : vector<2x30x25xf32> to vector<2x1x25xf32>
    %367 = arith.maximumf %365, %366 : vector<2x1x25xf32>
    %c0_216 = arith.constant 0 : index
    %c0_217 = arith.constant 0 : index
    %c11 = arith.constant 11 : index
    %c0_218 = arith.constant 0 : index
    %368 = vector.load %arg18[%c0_216, %c0_217, %c11, %c0_218] : memref<2x5x30x25xf32, #tpu.memory_space<vmem>>, vector<2x1x1x25xf32>
    %369 = vector.shape_cast %368 : vector<2x1x1x25xf32> to vector<2x1x25xf32>
    %370 = vector.shape_cast %367 : vector<2x1x25xf32> to vector<2x1x1x25xf32>
    tpu.vector_store %arg18[%c0_216, %c0_217, %c11, %c0_218], %370 {strides = array<i32>} : memref<2x5x30x25xf32, #tpu.memory_space<vmem>>, vector<2x1x1x25xf32>,
    %371 = vector.extract_strided_slice %340 {offsets = [0, 10, 0], sizes = [2, 1, 25], strides = [1, 1, 1]} : vector<2x30x25xf32> to vector<2x1x25xf32>
    %372 = vector.extract_strided_slice %340 {offsets = [0, 11, 0], sizes = [2, 1, 25], strides = [1, 1, 1]} : vector<2x30x25xf32> to vector<2x1x25xf32>
    %373 = arith.maximumf %371, %372 : vector<2x1x25xf32>
    %c0_219 = arith.constant 0 : index
    %c0_220 = arith.constant 0 : index
    %c12 = arith.constant 12 : index
    %c0_221 = arith.constant 0 : index
    %374 = vector.load %arg18[%c0_219, %c0_220, %c12, %c0_221] : memref<2x5x30x25xf32, #tpu.memory_space<vmem>>, vector<2x1x1x25xf32>
    %375 = vector.shape_cast %374 : vector<2x1x1x25xf32> to vector<2x1x25xf32>
    %376 = vector.shape_cast %373 : vector<2x1x25xf32> to vector<2x1x1x25xf32>
    tpu.vector_store %arg18[%c0_219, %c0_220, %c12, %c0_221], %376 {strides = array<i32>} : memref<2x5x30x25xf32, #tpu.memory_space<vmem>>, vector<2x1x1x25xf32>,
    %377 = vector.extract_strided_slice %340 {offsets = [0, 12, 0], sizes = [2, 1, 25], strides = [1, 1, 1]} : vector<2x30x25xf32> to vector<2x1x25xf32>
    %378 = vector.extract_strided_slice %340 {offsets = [0, 13, 0], sizes = [2, 1, 25], strides = [1, 1, 1]} : vector<2x30x25xf32> to vector<2x1x25xf32>
    %379 = arith.maximumf %377, %378 : vector<2x1x25xf32>
    %c0_222 = arith.constant 0 : index
    %c0_223 = arith.constant 0 : index
    %c13 = arith.constant 13 : index
    %c0_224 = arith.constant 0 : index
    %380 = vector.load %arg18[%c0_222, %c0_223, %c13, %c0_224] : memref<2x5x30x25xf32, #tpu.memory_space<vmem>>, vector<2x1x1x25xf32>
    %381 = vector.shape_cast %380 : vector<2x1x1x25xf32> to vector<2x1x25xf32>
    %382 = vector.shape_cast %379 : vector<2x1x25xf32> to vector<2x1x1x25xf32>
    tpu.vector_store %arg18[%c0_222, %c0_223, %c13, %c0_224], %382 {strides = array<i32>} : memref<2x5x30x25xf32, #tpu.memory_space<vmem>>, vector<2x1x1x25xf32>,
    %383 = vector.extract_strided_slice %340 {offsets = [0, 14, 0], sizes = [2, 1, 25], strides = [1, 1, 1]} : vector<2x30x25xf32> to vector<2x1x25xf32>
    %384 = vector.extract_strided_slice %340 {offsets = [0, 15, 0], sizes = [2, 1, 25], strides = [1, 1, 1]} : vector<2x30x25xf32> to vector<2x1x25xf32>
    %385 = arith.maximumf %383, %384 : vector<2x1x25xf32>
    %c0_225 = arith.constant 0 : index
    %c0_226 = arith.constant 0 : index
    %c14 = arith.constant 14 : index
    %c0_227 = arith.constant 0 : index
    %386 = vector.load %arg18[%c0_225, %c0_226, %c14, %c0_227] : memref<2x5x30x25xf32, #tpu.memory_space<vmem>>, vector<2x1x1x25xf32>
    %387 = vector.shape_cast %386 : vector<2x1x1x25xf32> to vector<2x1x25xf32>
    %388 = vector.shape_cast %385 : vector<2x1x25xf32> to vector<2x1x1x25xf32>
    tpu.vector_store %arg18[%c0_225, %c0_226, %c14, %c0_227], %388 {strides = array<i32>} : memref<2x5x30x25xf32, #tpu.memory_space<vmem>>, vector<2x1x1x25xf32>,
    %389 = vector.extract_strided_slice %340 {offsets = [0, 16, 0], sizes = [2, 1, 25], strides = [1, 1, 1]} : vector<2x30x25xf32> to vector<2x1x25xf32>
    %390 = vector.extract_strided_slice %340 {offsets = [0, 17, 0], sizes = [2, 1, 25], strides = [1, 1, 1]} : vector<2x30x25xf32> to vector<2x1x25xf32>
    %391 = arith.maximumf %389, %390 : vector<2x1x25xf32>
    %c0_228 = arith.constant 0 : index
    %c0_229 = arith.constant 0 : index
    %c15_230 = arith.constant 15 : index
    %c0_231 = arith.constant 0 : index
    %392 = vector.load %arg18[%c0_228, %c0_229, %c15_230, %c0_231] : memref<2x5x30x25xf32, #tpu.memory_space<vmem>>, vector<2x1x1x25xf32>
    %393 = vector.shape_cast %392 : vector<2x1x1x25xf32> to vector<2x1x25xf32>
    %394 = vector.shape_cast %391 : vector<2x1x25xf32> to vector<2x1x1x25xf32>
    tpu.vector_store %arg18[%c0_228, %c0_229, %c15_230, %c0_231], %394 {strides = array<i32>} : memref<2x5x30x25xf32, #tpu.memory_space<vmem>>, vector<2x1x1x25xf32>,
    %395 = vector.extract_strided_slice %340 {offsets = [0, 18, 0], sizes = [2, 1, 25], strides = [1, 1, 1]} : vector<2x30x25xf32> to vector<2x1x25xf32>
    %396 = vector.extract_strided_slice %340 {offsets = [0, 19, 0], sizes = [2, 1, 25], strides = [1, 1, 1]} : vector<2x30x25xf32> to vector<2x1x25xf32>
    %397 = arith.maximumf %395, %396 : vector<2x1x25xf32>
    %c0_232 = arith.constant 0 : index
    %c0_233 = arith.constant 0 : index
    %c16 = arith.constant 16 : index
    %c0_234 = arith.constant 0 : index
    %398 = vector.load %arg18[%c0_232, %c0_233, %c16, %c0_234] : memref<2x5x30x25xf32, #tpu.memory_space<vmem>>, vector<2x1x1x25xf32>
    %399 = vector.shape_cast %398 : vector<2x1x1x25xf32> to vector<2x1x25xf32>
    %400 = vector.shape_cast %397 : vector<2x1x25xf32> to vector<2x1x1x25xf32>
    tpu.vector_store %arg18[%c0_232, %c0_233, %c16, %c0_234], %400 {strides = array<i32>} : memref<2x5x30x25xf32, #tpu.memory_space<vmem>>, vector<2x1x1x25xf32>,
    %401 = vector.extract_strided_slice %340 {offsets = [0, 20, 0], sizes = [2, 1, 25], strides = [1, 1, 1]} : vector<2x30x25xf32> to vector<2x1x25xf32>
    %402 = vector.extract_strided_slice %340 {offsets = [0, 21, 0], sizes = [2, 1, 25], strides = [1, 1, 1]} : vector<2x30x25xf32> to vector<2x1x25xf32>
    %403 = arith.maximumf %401, %402 : vector<2x1x25xf32>
    %c0_235 = arith.constant 0 : index
    %c0_236 = arith.constant 0 : index
    %c17 = arith.constant 17 : index
    %c0_237 = arith.constant 0 : index
    %404 = vector.load %arg18[%c0_235, %c0_236, %c17, %c0_237] : memref<2x5x30x25xf32, #tpu.memory_space<vmem>>, vector<2x1x1x25xf32>
    %405 = vector.shape_cast %404 : vector<2x1x1x25xf32> to vector<2x1x25xf32>
    %406 = vector.shape_cast %403 : vector<2x1x25xf32> to vector<2x1x1x25xf32>
    tpu.vector_store %arg18[%c0_235, %c0_236, %c17, %c0_237], %406 {strides = array<i32>} : memref<2x5x30x25xf32, #tpu.memory_space<vmem>>, vector<2x1x1x25xf32>,
    %407 = vector.extract_strided_slice %340 {offsets = [0, 22, 0], sizes = [2, 1, 25], strides = [1, 1, 1]} : vector<2x30x25xf32> to vector<2x1x25xf32>
    %408 = vector.extract_strided_slice %340 {offsets = [0, 23, 0], sizes = [2, 1, 25], strides = [1, 1, 1]} : vector<2x30x25xf32> to vector<2x1x25xf32>
    %409 = arith.maximumf %407, %408 : vector<2x1x25xf32>
    %c0_238 = arith.constant 0 : index
    %c0_239 = arith.constant 0 : index
    %c18 = arith.constant 18 : index
    %c0_240 = arith.constant 0 : index
    %410 = vector.load %arg18[%c0_238, %c0_239, %c18, %c0_240] : memref<2x5x30x25xf32, #tpu.memory_space<vmem>>, vector<2x1x1x25xf32>
    %411 = vector.shape_cast %410 : vector<2x1x1x25xf32> to vector<2x1x25xf32>
    %412 = vector.shape_cast %409 : vector<2x1x25xf32> to vector<2x1x1x25xf32>
    tpu.vector_store %arg18[%c0_238, %c0_239, %c18, %c0_240], %412 {strides = array<i32>} : memref<2x5x30x25xf32, #tpu.memory_space<vmem>>, vector<2x1x1x25xf32>,
    %413 = vector.extract_strided_slice %340 {offsets = [0, 24, 0], sizes = [2, 1, 25], strides = [1, 1, 1]} : vector<2x30x25xf32> to vector<2x1x25xf32>
    %414 = vector.extract_strided_slice %340 {offsets = [0, 25, 0], sizes = [2, 1, 25], strides = [1, 1, 1]} : vector<2x30x25xf32> to vector<2x1x25xf32>
    %415 = arith.maximumf %413, %414 : vector<2x1x25xf32>
    %c0_241 = arith.constant 0 : index
    %c0_242 = arith.constant 0 : index
    %c19 = arith.constant 19 : index
    %c0_243 = arith.constant 0 : index
    %416 = vector.load %arg18[%c0_241, %c0_242, %c19, %c0_243] : memref<2x5x30x25xf32, #tpu.memory_space<vmem>>, vector<2x1x1x25xf32>
    %417 = vector.shape_cast %416 : vector<2x1x1x25xf32> to vector<2x1x25xf32>
    %418 = vector.shape_cast %415 : vector<2x1x25xf32> to vector<2x1x1x25xf32>
    tpu.vector_store %arg18[%c0_241, %c0_242, %c19, %c0_243], %418 {strides = array<i32>} : memref<2x5x30x25xf32, #tpu.memory_space<vmem>>, vector<2x1x1x25xf32>,
    %419 = vector.extract_strided_slice %340 {offsets = [0, 26, 0], sizes = [2, 1, 25], strides = [1, 1, 1]} : vector<2x30x25xf32> to vector<2x1x25xf32>
    %420 = vector.extract_strided_slice %340 {offsets = [0, 27, 0], sizes = [2, 1, 25], strides = [1, 1, 1]} : vector<2x30x25xf32> to vector<2x1x25xf32>
    %421 = arith.maximumf %419, %420 : vector<2x1x25xf32>
    %c0_244 = arith.constant 0 : index
    %c0_245 = arith.constant 0 : index
    %c20 = arith.constant 20 : index
    %c0_246 = arith.constant 0 : index
    %422 = vector.load %arg18[%c0_244, %c0_245, %c20, %c0_246] : memref<2x5x30x25xf32, #tpu.memory_space<vmem>>, vector<2x1x1x25xf32>
    %423 = vector.shape_cast %422 : vector<2x1x1x25xf32> to vector<2x1x25xf32>
    %424 = vector.shape_cast %421 : vector<2x1x25xf32> to vector<2x1x1x25xf32>
    tpu.vector_store %arg18[%c0_244, %c0_245, %c20, %c0_246], %424 {strides = array<i32>} : memref<2x5x30x25xf32, #tpu.memory_space<vmem>>, vector<2x1x1x25xf32>,
    %425 = vector.extract_strided_slice %340 {offsets = [0, 28, 0], sizes = [2, 1, 25], strides = [1, 1, 1]} : vector<2x30x25xf32> to vector<2x1x25xf32>
    %426 = vector.extract_strided_slice %340 {offsets = [0, 29, 0], sizes = [2, 1, 25], strides = [1, 1, 1]} : vector<2x30x25xf32> to vector<2x1x25xf32>
    %427 = arith.maximumf %425, %426 : vector<2x1x25xf32>
    %c0_247 = arith.constant 0 : index
    %c0_248 = arith.constant 0 : index
    %c21 = arith.constant 21 : index
    %c0_249 = arith.constant 0 : index
    %428 = vector.load %arg18[%c0_247, %c0_248, %c21, %c0_249] : memref<2x5x30x25xf32, #tpu.memory_space<vmem>>, vector<2x1x1x25xf32>
    %429 = vector.shape_cast %428 : vector<2x1x1x25xf32> to vector<2x1x25xf32>
    %430 = vector.shape_cast %427 : vector<2x1x25xf32> to vector<2x1x1x25xf32>
    tpu.vector_store %arg18[%c0_247, %c0_248, %c21, %c0_249], %430 {strides = array<i32>} : memref<2x5x30x25xf32, #tpu.memory_space<vmem>>, vector<2x1x1x25xf32>,
    %431 = vector.extract_strided_slice %322 {offsets = [0, 1], sizes = [2, 1], strides = [1, 1]} : vector<2x5xf32> to vector<2x1xf32>
    %432 = vector.shape_cast %431 : vector<2x1xf32> to vector<2x1x1xf32>
    %c11_250 = arith.constant 11 : index
    %433 = memref.load %arg0[%c11_250] : memref<22xf32, #tpu.memory_space<smem>>
    %434 = vector.broadcast %433 : f32 to vector<2x1x1xf32>
    %435 = arith.mulf %432, %434 : vector<2x1x1xf32>
    %436 = vector.broadcast %435 : vector<2x1x1xf32> to vector<2x30x25xf32>
    %437 = arith.mulf %111, %436 : vector<2x30x25xf32>
    %c16_251 = arith.constant 16 : index
    %438 = memref.load %arg0[%c16_251] : memref<22xf32, #tpu.memory_space<smem>>
    %439 = vector.broadcast %438 : f32 to vector<2x30x25xf32>
    %440 = arith.addf %437, %439 : vector<2x30x25xf32>
    %cst_252 = arith.constant 0.000000e+00 : f32
    %441 = vector.broadcast %cst_252 : f32 to vector<2x30x25xf32>
    %442 = arith.cmpf ogt, %440, %441 : vector<2x30x25xf32>
    %cst_253 = arith.constant 0.000000e+00 : f32
    %443 = vector.broadcast %cst_253 : f32 to vector<2x30x25xf32>
    %444 = arith.minimumf %440, %443 : vector<2x30x25xf32>
    %445 = math.exp %444 : vector<2x30x25xf32>
    %cst_254 = arith.constant 1.000000e+00 : f32
    %446 = vector.broadcast %cst_254 : f32 to vector<2x30x25xf32>
    %447 = arith.subf %445, %446 : vector<2x30x25xf32>
    %448 = arith.select %442, %440, %447 : vector<2x30x25xi1>, vector<2x30x25xf32>
    %449 = vector.extract_strided_slice %448 {offsets = [0, 0, 0], sizes = [2, 1, 25], strides = [1, 1, 1]} : vector<2x30x25xf32> to vector<2x1x25xf32>
    %450 = vector.extract_strided_slice %448 {offsets = [0, 1, 0], sizes = [2, 1, 25], strides = [1, 1, 1]} : vector<2x30x25xf32> to vector<2x1x25xf32>
    %451 = arith.maximumf %449, %450 : vector<2x1x25xf32>
    %c0_255 = arith.constant 0 : index
    %c1_256 = arith.constant 1 : index
    %c7_257 = arith.constant 7 : index
    %c0_258 = arith.constant 0 : index
    %452 = vector.load %arg18[%c0_255, %c1_256, %c7_257, %c0_258] : memref<2x5x30x25xf32, #tpu.memory_space<vmem>>, vector<2x1x1x25xf32>
    %453 = vector.shape_cast %452 : vector<2x1x1x25xf32> to vector<2x1x25xf32>
    %454 = vector.shape_cast %451 : vector<2x1x25xf32> to vector<2x1x1x25xf32>
    tpu.vector_store %arg18[%c0_255, %c1_256, %c7_257, %c0_258], %454 {strides = array<i32>} : memref<2x5x30x25xf32, #tpu.memory_space<vmem>>, vector<2x1x1x25xf32>,
    %455 = vector.extract_strided_slice %448 {offsets = [0, 2, 0], sizes = [2, 1, 25], strides = [1, 1, 1]} : vector<2x30x25xf32> to vector<2x1x25xf32>
    %456 = vector.extract_strided_slice %448 {offsets = [0, 3, 0], sizes = [2, 1, 25], strides = [1, 1, 1]} : vector<2x30x25xf32> to vector<2x1x25xf32>
    %457 = arith.maximumf %455, %456 : vector<2x1x25xf32>
    %c0_259 = arith.constant 0 : index
    %c1_260 = arith.constant 1 : index
    %c8_261 = arith.constant 8 : index
    %c0_262 = arith.constant 0 : index
    %458 = vector.load %arg18[%c0_259, %c1_260, %c8_261, %c0_262] : memref<2x5x30x25xf32, #tpu.memory_space<vmem>>, vector<2x1x1x25xf32>
    %459 = vector.shape_cast %458 : vector<2x1x1x25xf32> to vector<2x1x25xf32>
    %460 = vector.shape_cast %457 : vector<2x1x25xf32> to vector<2x1x1x25xf32>
    tpu.vector_store %arg18[%c0_259, %c1_260, %c8_261, %c0_262], %460 {strides = array<i32>} : memref<2x5x30x25xf32, #tpu.memory_space<vmem>>, vector<2x1x1x25xf32>,
    %461 = vector.extract_strided_slice %448 {offsets = [0, 4, 0], sizes = [2, 1, 25], strides = [1, 1, 1]} : vector<2x30x25xf32> to vector<2x1x25xf32>
    %462 = vector.extract_strided_slice %448 {offsets = [0, 5, 0], sizes = [2, 1, 25], strides = [1, 1, 1]} : vector<2x30x25xf32> to vector<2x1x25xf32>
    %463 = arith.maximumf %461, %462 : vector<2x1x25xf32>
    %c0_263 = arith.constant 0 : index
    %c1_264 = arith.constant 1 : index
    %c9_265 = arith.constant 9 : index
    %c0_266 = arith.constant 0 : index
    %464 = vector.load %arg18[%c0_263, %c1_264, %c9_265, %c0_266] : memref<2x5x30x25xf32, #tpu.memory_space<vmem>>, vector<2x1x1x25xf32>
    %465 = vector.shape_cast %464 : vector<2x1x1x25xf32> to vector<2x1x25xf32>
    %466 = vector.shape_cast %463 : vector<2x1x25xf32> to vector<2x1x1x25xf32>
    tpu.vector_store %arg18[%c0_263, %c1_264, %c9_265, %c0_266], %466 {strides = array<i32>} : memref<2x5x30x25xf32, #tpu.memory_space<vmem>>, vector<2x1x1x25xf32>,
    %467 = vector.extract_strided_slice %448 {offsets = [0, 6, 0], sizes = [2, 1, 25], strides = [1, 1, 1]} : vector<2x30x25xf32> to vector<2x1x25xf32>
    %468 = vector.extract_strided_slice %448 {offsets = [0, 7, 0], sizes = [2, 1, 25], strides = [1, 1, 1]} : vector<2x30x25xf32> to vector<2x1x25xf32>
    %469 = arith.maximumf %467, %468 : vector<2x1x25xf32>
    %c0_267 = arith.constant 0 : index
    %c1_268 = arith.constant 1 : index
    %c10_269 = arith.constant 10 : index
    %c0_270 = arith.constant 0 : index
    %470 = vector.load %arg18[%c0_267, %c1_268, %c10_269, %c0_270] : memref<2x5x30x25xf32, #tpu.memory_space<vmem>>, vector<2x1x1x25xf32>
    %471 = vector.shape_cast %470 : vector<2x1x1x25xf32> to vector<2x1x25xf32>
    %472 = vector.shape_cast %469 : vector<2x1x25xf32> to vector<2x1x1x25xf32>
    tpu.vector_store %arg18[%c0_267, %c1_268, %c10_269, %c0_270], %472 {strides = array<i32>} : memref<2x5x30x25xf32, #tpu.memory_space<vmem>>, vector<2x1x1x25xf32>,
    %473 = vector.extract_strided_slice %448 {offsets = [0, 8, 0], sizes = [2, 1, 25], strides = [1, 1, 1]} : vector<2x30x25xf32> to vector<2x1x25xf32>
    %474 = vector.extract_strided_slice %448 {offsets = [0, 9, 0], sizes = [2, 1, 25], strides = [1, 1, 1]} : vector<2x30x25xf32> to vector<2x1x25xf32>
    %475 = arith.maximumf %473, %474 : vector<2x1x25xf32>
    %c0_271 = arith.constant 0 : index
    %c1_272 = arith.constant 1 : index
    %c11_273 = arith.constant 11 : index
    %c0_274 = arith.constant 0 : index
    %476 = vector.load %arg18[%c0_271, %c1_272, %c11_273, %c0_274] : memref<2x5x30x25xf32, #tpu.memory_space<vmem>>, vector<2x1x1x25xf32>
    %477 = vector.shape_cast %476 : vector<2x1x1x25xf32> to vector<2x1x25xf32>
    %478 = vector.shape_cast %475 : vector<2x1x25xf32> to vector<2x1x1x25xf32>
    tpu.vector_store %arg18[%c0_271, %c1_272, %c11_273, %c0_274], %478 {strides = array<i32>} : memref<2x5x30x25xf32, #tpu.memory_space<vmem>>, vector<2x1x1x25xf32>,
    %479 = vector.extract_strided_slice %448 {offsets = [0, 10, 0], sizes = [2, 1, 25], strides = [1, 1, 1]} : vector<2x30x25xf32> to vector<2x1x25xf32>
    %480 = vector.extract_strided_slice %448 {offsets = [0, 11, 0], sizes = [2, 1, 25], strides = [1, 1, 1]} : vector<2x30x25xf32> to vector<2x1x25xf32>
    %481 = arith.maximumf %479, %480 : vector<2x1x25xf32>
    %c0_275 = arith.constant 0 : index
    %c1_276 = arith.constant 1 : index
    %c12_277 = arith.constant 12 : index
    %c0_278 = arith.constant 0 : index
    %482 = vector.load %arg18[%c0_275, %c1_276, %c12_277, %c0_278] : memref<2x5x30x25xf32, #tpu.memory_space<vmem>>, vector<2x1x1x25xf32>
    %483 = vector.shape_cast %482 : vector<2x1x1x25xf32> to vector<2x1x25xf32>
    %484 = vector.shape_cast %481 : vector<2x1x25xf32> to vector<2x1x1x25xf32>
    tpu.vector_store %arg18[%c0_275, %c1_276, %c12_277, %c0_278], %484 {strides = array<i32>} : memref<2x5x30x25xf32, #tpu.memory_space<vmem>>, vector<2x1x1x25xf32>,
    %485 = vector.extract_strided_slice %448 {offsets = [0, 12, 0], sizes = [2, 1, 25], strides = [1, 1, 1]} : vector<2x30x25xf32> to vector<2x1x25xf32>
    %486 = vector.extract_strided_slice %448 {offsets = [0, 13, 0], sizes = [2, 1, 25], strides = [1, 1, 1]} : vector<2x30x25xf32> to vector<2x1x25xf32>
    %487 = arith.maximumf %485, %486 : vector<2x1x25xf32>
    %c0_279 = arith.constant 0 : index
    %c1_280 = arith.constant 1 : index
    %c13_281 = arith.constant 13 : index
    %c0_282 = arith.constant 0 : index
    %488 = vector.load %arg18[%c0_279, %c1_280, %c13_281, %c0_282] : memref<2x5x30x25xf32, #tpu.memory_space<vmem>>, vector<2x1x1x25xf32>
    %489 = vector.shape_cast %488 : vector<2x1x1x25xf32> to vector<2x1x25xf32>
    %490 = vector.shape_cast %487 : vector<2x1x25xf32> to vector<2x1x1x25xf32>
    tpu.vector_store %arg18[%c0_279, %c1_280, %c13_281, %c0_282], %490 {strides = array<i32>} : memref<2x5x30x25xf32, #tpu.memory_space<vmem>>, vector<2x1x1x25xf32>,
    %491 = vector.extract_strided_slice %448 {offsets = [0, 14, 0], sizes = [2, 1, 25], strides = [1, 1, 1]} : vector<2x30x25xf32> to vector<2x1x25xf32>
    %492 = vector.extract_strided_slice %448 {offsets = [0, 15, 0], sizes = [2, 1, 25], strides = [1, 1, 1]} : vector<2x30x25xf32> to vector<2x1x25xf32>
    %493 = arith.maximumf %491, %492 : vector<2x1x25xf32>
    %c0_283 = arith.constant 0 : index
    %c1_284 = arith.constant 1 : index
    %c14_285 = arith.constant 14 : index
    %c0_286 = arith.constant 0 : index
    %494 = vector.load %arg18[%c0_283, %c1_284, %c14_285, %c0_286] : memref<2x5x30x25xf32, #tpu.memory_space<vmem>>, vector<2x1x1x25xf32>
    %495 = vector.shape_cast %494 : vector<2x1x1x25xf32> to vector<2x1x25xf32>
    %496 = vector.shape_cast %493 : vector<2x1x25xf32> to vector<2x1x1x25xf32>
    tpu.vector_store %arg18[%c0_283, %c1_284, %c14_285, %c0_286], %496 {strides = array<i32>} : memref<2x5x30x25xf32, #tpu.memory_space<vmem>>, vector<2x1x1x25xf32>,
    %497 = vector.extract_strided_slice %448 {offsets = [0, 16, 0], sizes = [2, 1, 25], strides = [1, 1, 1]} : vector<2x30x25xf32> to vector<2x1x25xf32>
    %498 = vector.extract_strided_slice %448 {offsets = [0, 17, 0], sizes = [2, 1, 25], strides = [1, 1, 1]} : vector<2x30x25xf32> to vector<2x1x25xf32>
    %499 = arith.maximumf %497, %498 : vector<2x1x25xf32>
    %c0_287 = arith.constant 0 : index
    %c1_288 = arith.constant 1 : index
    %c15_289 = arith.constant 15 : index
    %c0_290 = arith.constant 0 : index
    %500 = vector.load %arg18[%c0_287, %c1_288, %c15_289, %c0_290] : memref<2x5x30x25xf32, #tpu.memory_space<vmem>>, vector<2x1x1x25xf32>
    %501 = vector.shape_cast %500 : vector<2x1x1x25xf32> to vector<2x1x25xf32>
    %502 = vector.shape_cast %499 : vector<2x1x25xf32> to vector<2x1x1x25xf32>
    tpu.vector_store %arg18[%c0_287, %c1_288, %c15_289, %c0_290], %502 {strides = array<i32>} : memref<2x5x30x25xf32, #tpu.memory_space<vmem>>, vector<2x1x1x25xf32>,
    %503 = vector.extract_strided_slice %448 {offsets = [0, 18, 0], sizes = [2, 1, 25], strides = [1, 1, 1]} : vector<2x30x25xf32> to vector<2x1x25xf32>
    %504 = vector.extract_strided_slice %448 {offsets = [0, 19, 0], sizes = [2, 1, 25], strides = [1, 1, 1]} : vector<2x30x25xf32> to vector<2x1x25xf32>
    %505 = arith.maximumf %503, %504 : vector<2x1x25xf32>
    %c0_291 = arith.constant 0 : index
    %c1_292 = arith.constant 1 : index
    %c16_293 = arith.constant 16 : index
    %c0_294 = arith.constant 0 : index
    %506 = vector.load %arg18[%c0_291, %c1_292, %c16_293, %c0_294] : memref<2x5x30x25xf32, #tpu.memory_space<vmem>>, vector<2x1x1x25xf32>
    %507 = vector.shape_cast %506 : vector<2x1x1x25xf32> to vector<2x1x25xf32>
    %508 = vector.shape_cast %505 : vector<2x1x25xf32> to vector<2x1x1x25xf32>
    tpu.vector_store %arg18[%c0_291, %c1_292, %c16_293, %c0_294], %508 {strides = array<i32>} : memref<2x5x30x25xf32, #tpu.memory_space<vmem>>, vector<2x1x1x25xf32>,
    %509 = vector.extract_strided_slice %448 {offsets = [0, 20, 0], sizes = [2, 1, 25], strides = [1, 1, 1]} : vector<2x30x25xf32> to vector<2x1x25xf32>
    %510 = vector.extract_strided_slice %448 {offsets = [0, 21, 0], sizes = [2, 1, 25], strides = [1, 1, 1]} : vector<2x30x25xf32> to vector<2x1x25xf32>
    %511 = arith.maximumf %509, %510 : vector<2x1x25xf32>
    %c0_295 = arith.constant 0 : index
    %c1_296 = arith.constant 1 : index
    %c17_297 = arith.constant 17 : index
    %c0_298 = arith.constant 0 : index
    %512 = vector.load %arg18[%c0_295, %c1_296, %c17_297, %c0_298] : memref<2x5x30x25xf32, #tpu.memory_space<vmem>>, vector<2x1x1x25xf32>
    %513 = vector.shape_cast %512 : vector<2x1x1x25xf32> to vector<2x1x25xf32>
    %514 = vector.shape_cast %511 : vector<2x1x25xf32> to vector<2x1x1x25xf32>
    tpu.vector_store %arg18[%c0_295, %c1_296, %c17_297, %c0_298], %514 {strides = array<i32>} : memref<2x5x30x25xf32, #tpu.memory_space<vmem>>, vector<2x1x1x25xf32>,
    %515 = vector.extract_strided_slice %448 {offsets = [0, 22, 0], sizes = [2, 1, 25], strides = [1, 1, 1]} : vector<2x30x25xf32> to vector<2x1x25xf32>
    %516 = vector.extract_strided_slice %448 {offsets = [0, 23, 0], sizes = [2, 1, 25], strides = [1, 1, 1]} : vector<2x30x25xf32> to vector<2x1x25xf32>
    %517 = arith.maximumf %515, %516 : vector<2x1x25xf32>
    %c0_299 = arith.constant 0 : index
    %c1_300 = arith.constant 1 : index
    %c18_301 = arith.constant 18 : index
    %c0_302 = arith.constant 0 : index
    %518 = vector.load %arg18[%c0_299, %c1_300, %c18_301, %c0_302] : memref<2x5x30x25xf32, #tpu.memory_space<vmem>>, vector<2x1x1x25xf32>
    %519 = vector.shape_cast %518 : vector<2x1x1x25xf32> to vector<2x1x25xf32>
    %520 = vector.shape_cast %517 : vector<2x1x25xf32> to vector<2x1x1x25xf32>
    tpu.vector_store %arg18[%c0_299, %c1_300, %c18_301, %c0_302], %520 {strides = array<i32>} : memref<2x5x30x25xf32, #tpu.memory_space<vmem>>, vector<2x1x1x25xf32>,
    %521 = vector.extract_strided_slice %448 {offsets = [0, 24, 0], sizes = [2, 1, 25], strides = [1, 1, 1]} : vector<2x30x25xf32> to vector<2x1x25xf32>
    %522 = vector.extract_strided_slice %448 {offsets = [0, 25, 0], sizes = [2, 1, 25], strides = [1, 1, 1]} : vector<2x30x25xf32> to vector<2x1x25xf32>
    %523 = arith.maximumf %521, %522 : vector<2x1x25xf32>
    %c0_303 = arith.constant 0 : index
    %c1_304 = arith.constant 1 : index
    %c19_305 = arith.constant 19 : index
    %c0_306 = arith.constant 0 : index
    %524 = vector.load %arg18[%c0_303, %c1_304, %c19_305, %c0_306] : memref<2x5x30x25xf32, #tpu.memory_space<vmem>>, vector<2x1x1x25xf32>
    %525 = vector.shape_cast %524 : vector<2x1x1x25xf32> to vector<2x1x25xf32>
    %526 = vector.shape_cast %523 : vector<2x1x25xf32> to vector<2x1x1x25xf32>
    tpu.vector_store %arg18[%c0_303, %c1_304, %c19_305, %c0_306], %526 {strides = array<i32>} : memref<2x5x30x25xf32, #tpu.memory_space<vmem>>, vector<2x1x1x25xf32>,
    %527 = vector.extract_strided_slice %448 {offsets = [0, 26, 0], sizes = [2, 1, 25], strides = [1, 1, 1]} : vector<2x30x25xf32> to vector<2x1x25xf32>
    %528 = vector.extract_strided_slice %448 {offsets = [0, 27, 0], sizes = [2, 1, 25], strides = [1, 1, 1]} : vector<2x30x25xf32> to vector<2x1x25xf32>
    %529 = arith.maximumf %527, %528 : vector<2x1x25xf32>
    %c0_307 = arith.constant 0 : index
    %c1_308 = arith.constant 1 : index
    %c20_309 = arith.constant 20 : index
    %c0_310 = arith.constant 0 : index
    %530 = vector.load %arg18[%c0_307, %c1_308, %c20_309, %c0_310] : memref<2x5x30x25xf32, #tpu.memory_space<vmem>>, vector<2x1x1x25xf32>
    %531 = vector.shape_cast %530 : vector<2x1x1x25xf32> to vector<2x1x25xf32>
    %532 = vector.shape_cast %529 : vector<2x1x25xf32> to vector<2x1x1x25xf32>
    tpu.vector_store %arg18[%c0_307, %c1_308, %c20_309, %c0_310], %532 {strides = array<i32>} : memref<2x5x30x25xf32, #tpu.memory_space<vmem>>, vector<2x1x1x25xf32>,
    %533 = vector.extract_strided_slice %448 {offsets = [0, 28, 0], sizes = [2, 1, 25], strides = [1, 1, 1]} : vector<2x30x25xf32> to vector<2x1x25xf32>
    %534 = vector.extract_strided_slice %448 {offsets = [0, 29, 0], sizes = [2, 1, 25], strides = [1, 1, 1]} : vector<2x30x25xf32> to vector<2x1x25xf32>
    %535 = arith.maximumf %533, %534 : vector<2x1x25xf32>
    %c0_311 = arith.constant 0 : index
    %c1_312 = arith.constant 1 : index
    %c21_313 = arith.constant 21 : index
    %c0_314 = arith.constant 0 : index
    %536 = vector.load %arg18[%c0_311, %c1_312, %c21_313, %c0_314] : memref<2x5x30x25xf32, #tpu.memory_space<vmem>>, vector<2x1x1x25xf32>
    %537 = vector.shape_cast %536 : vector<2x1x1x25xf32> to vector<2x1x25xf32>
    %538 = vector.shape_cast %535 : vector<2x1x25xf32> to vector<2x1x1x25xf32>
    tpu.vector_store %arg18[%c0_311, %c1_312, %c21_313, %c0_314], %538 {strides = array<i32>} : memref<2x5x30x25xf32, #tpu.memory_space<vmem>>, vector<2x1x1x25xf32>,
    %539 = vector.extract_strided_slice %322 {offsets = [0, 2], sizes = [2, 1], strides = [1, 1]} : vector<2x5xf32> to vector<2x1xf32>
    %540 = vector.shape_cast %539 : vector<2x1xf32> to vector<2x1x1xf32>
    %c12_315 = arith.constant 12 : index
    %541 = memref.load %arg0[%c12_315] : memref<22xf32, #tpu.memory_space<smem>>
    %542 = vector.broadcast %541 : f32 to vector<2x1x1xf32>
    %543 = arith.mulf %540, %542 : vector<2x1x1xf32>
    %544 = vector.broadcast %543 : vector<2x1x1xf32> to vector<2x30x25xf32>
    %545 = arith.mulf %170, %544 : vector<2x30x25xf32>
    %c17_316 = arith.constant 17 : index
    %546 = memref.load %arg0[%c17_316] : memref<22xf32, #tpu.memory_space<smem>>
    %547 = vector.broadcast %546 : f32 to vector<2x30x25xf32>
    %548 = arith.addf %545, %547 : vector<2x30x25xf32>
    %cst_317 = arith.constant 0.000000e+00 : f32
    %549 = vector.broadcast %cst_317 : f32 to vector<2x30x25xf32>
    %550 = arith.cmpf ogt, %548, %549 : vector<2x30x25xf32>
    %cst_318 = arith.constant 0.000000e+00 : f32
    %551 = vector.broadcast %cst_318 : f32 to vector<2x30x25xf32>
    %552 = arith.minimumf %548, %551 : vector<2x30x25xf32>
    %553 = math.exp %552 : vector<2x30x25xf32>
    %cst_319 = arith.constant 1.000000e+00 : f32
    %554 = vector.broadcast %cst_319 : f32 to vector<2x30x25xf32>
    %555 = arith.subf %553, %554 : vector<2x30x25xf32>
    %556 = arith.select %550, %548, %555 : vector<2x30x25xi1>, vector<2x30x25xf32>
    %557 = vector.extract_strided_slice %556 {offsets = [0, 0, 0], sizes = [2, 1, 25], strides = [1, 1, 1]} : vector<2x30x25xf32> to vector<2x1x25xf32>
    %558 = vector.extract_strided_slice %556 {offsets = [0, 1, 0], sizes = [2, 1, 25], strides = [1, 1, 1]} : vector<2x30x25xf32> to vector<2x1x25xf32>
    %559 = arith.maximumf %557, %558 : vector<2x1x25xf32>
    %c0_320 = arith.constant 0 : index
    %c2_321 = arith.constant 2 : index
    %c7_322 = arith.constant 7 : index
    %c0_323 = arith.constant 0 : index
    %560 = vector.load %arg18[%c0_320, %c2_321, %c7_322, %c0_323] : memref<2x5x30x25xf32, #tpu.memory_space<vmem>>, vector<2x1x1x25xf32>
    %561 = vector.shape_cast %560 : vector<2x1x1x25xf32> to vector<2x1x25xf32>
    %562 = vector.shape_cast %559 : vector<2x1x25xf32> to vector<2x1x1x25xf32>
    tpu.vector_store %arg18[%c0_320, %c2_321, %c7_322, %c0_323], %562 {strides = array<i32>} : memref<2x5x30x25xf32, #tpu.memory_space<vmem>>, vector<2x1x1x25xf32>,
    %563 = vector.extract_strided_slice %556 {offsets = [0, 2, 0], sizes = [2, 1, 25], strides = [1, 1, 1]} : vector<2x30x25xf32> to vector<2x1x25xf32>
    %564 = vector.extract_strided_slice %556 {offsets = [0, 3, 0], sizes = [2, 1, 25], strides = [1, 1, 1]} : vector<2x30x25xf32> to vector<2x1x25xf32>
    %565 = arith.maximumf %563, %564 : vector<2x1x25xf32>
    %c0_324 = arith.constant 0 : index
    %c2_325 = arith.constant 2 : index
    %c8_326 = arith.constant 8 : index
    %c0_327 = arith.constant 0 : index
    %566 = vector.load %arg18[%c0_324, %c2_325, %c8_326, %c0_327] : memref<2x5x30x25xf32, #tpu.memory_space<vmem>>, vector<2x1x1x25xf32>
    %567 = vector.shape_cast %566 : vector<2x1x1x25xf32> to vector<2x1x25xf32>
    %568 = vector.shape_cast %565 : vector<2x1x25xf32> to vector<2x1x1x25xf32>
    tpu.vector_store %arg18[%c0_324, %c2_325, %c8_326, %c0_327], %568 {strides = array<i32>} : memref<2x5x30x25xf32, #tpu.memory_space<vmem>>, vector<2x1x1x25xf32>,
    %569 = vector.extract_strided_slice %556 {offsets = [0, 4, 0], sizes = [2, 1, 25], strides = [1, 1, 1]} : vector<2x30x25xf32> to vector<2x1x25xf32>
    %570 = vector.extract_strided_slice %556 {offsets = [0, 5, 0], sizes = [2, 1, 25], strides = [1, 1, 1]} : vector<2x30x25xf32> to vector<2x1x25xf32>
    %571 = arith.maximumf %569, %570 : vector<2x1x25xf32>
    %c0_328 = arith.constant 0 : index
    %c2_329 = arith.constant 2 : index
    %c9_330 = arith.constant 9 : index
    %c0_331 = arith.constant 0 : index
    %572 = vector.load %arg18[%c0_328, %c2_329, %c9_330, %c0_331] : memref<2x5x30x25xf32, #tpu.memory_space<vmem>>, vector<2x1x1x25xf32>
    %573 = vector.shape_cast %572 : vector<2x1x1x25xf32> to vector<2x1x25xf32>
    %574 = vector.shape_cast %571 : vector<2x1x25xf32> to vector<2x1x1x25xf32>
    tpu.vector_store %arg18[%c0_328, %c2_329, %c9_330, %c0_331], %574 {strides = array<i32>} : memref<2x5x30x25xf32, #tpu.memory_space<vmem>>, vector<2x1x1x25xf32>,
    %575 = vector.extract_strided_slice %556 {offsets = [0, 6, 0], sizes = [2, 1, 25], strides = [1, 1, 1]} : vector<2x30x25xf32> to vector<2x1x25xf32>
    %576 = vector.extract_strided_slice %556 {offsets = [0, 7, 0], sizes = [2, 1, 25], strides = [1, 1, 1]} : vector<2x30x25xf32> to vector<2x1x25xf32>
    %577 = arith.maximumf %575, %576 : vector<2x1x25xf32>
    %c0_332 = arith.constant 0 : index
    %c2_333 = arith.constant 2 : index
    %c10_334 = arith.constant 10 : index
    %c0_335 = arith.constant 0 : index
    %578 = vector.load %arg18[%c0_332, %c2_333, %c10_334, %c0_335] : memref<2x5x30x25xf32, #tpu.memory_space<vmem>>, vector<2x1x1x25xf32>
    %579 = vector.shape_cast %578 : vector<2x1x1x25xf32> to vector<2x1x25xf32>
    %580 = vector.shape_cast %577 : vector<2x1x25xf32> to vector<2x1x1x25xf32>
    tpu.vector_store %arg18[%c0_332, %c2_333, %c10_334, %c0_335], %580 {strides = array<i32>} : memref<2x5x30x25xf32, #tpu.memory_space<vmem>>, vector<2x1x1x25xf32>,
    %581 = vector.extract_strided_slice %556 {offsets = [0, 8, 0], sizes = [2, 1, 25], strides = [1, 1, 1]} : vector<2x30x25xf32> to vector<2x1x25xf32>
    %582 = vector.extract_strided_slice %556 {offsets = [0, 9, 0], sizes = [2, 1, 25], strides = [1, 1, 1]} : vector<2x30x25xf32> to vector<2x1x25xf32>
    %583 = arith.maximumf %581, %582 : vector<2x1x25xf32>
    %c0_336 = arith.constant 0 : index
    %c2_337 = arith.constant 2 : index
    %c11_338 = arith.constant 11 : index
    %c0_339 = arith.constant 0 : index
    %584 = vector.load %arg18[%c0_336, %c2_337, %c11_338, %c0_339] : memref<2x5x30x25xf32, #tpu.memory_space<vmem>>, vector<2x1x1x25xf32>
    %585 = vector.shape_cast %584 : vector<2x1x1x25xf32> to vector<2x1x25xf32>
    %586 = vector.shape_cast %583 : vector<2x1x25xf32> to vector<2x1x1x25xf32>
    tpu.vector_store %arg18[%c0_336, %c2_337, %c11_338, %c0_339], %586 {strides = array<i32>} : memref<2x5x30x25xf32, #tpu.memory_space<vmem>>, vector<2x1x1x25xf32>,
    %587 = vector.extract_strided_slice %556 {offsets = [0, 10, 0], sizes = [2, 1, 25], strides = [1, 1, 1]} : vector<2x30x25xf32> to vector<2x1x25xf32>
    %588 = vector.extract_strided_slice %556 {offsets = [0, 11, 0], sizes = [2, 1, 25], strides = [1, 1, 1]} : vector<2x30x25xf32> to vector<2x1x25xf32>
    %589 = arith.maximumf %587, %588 : vector<2x1x25xf32>
    %c0_340 = arith.constant 0 : index
    %c2_341 = arith.constant 2 : index
    %c12_342 = arith.constant 12 : index
    %c0_343 = arith.constant 0 : index
    %590 = vector.load %arg18[%c0_340, %c2_341, %c12_342, %c0_343] : memref<2x5x30x25xf32, #tpu.memory_space<vmem>>, vector<2x1x1x25xf32>
    %591 = vector.shape_cast %590 : vector<2x1x1x25xf32> to vector<2x1x25xf32>
    %592 = vector.shape_cast %589 : vector<2x1x25xf32> to vector<2x1x1x25xf32>
    tpu.vector_store %arg18[%c0_340, %c2_341, %c12_342, %c0_343], %592 {strides = array<i32>} : memref<2x5x30x25xf32, #tpu.memory_space<vmem>>, vector<2x1x1x25xf32>,
    %593 = vector.extract_strided_slice %556 {offsets = [0, 12, 0], sizes = [2, 1, 25], strides = [1, 1, 1]} : vector<2x30x25xf32> to vector<2x1x25xf32>
    %594 = vector.extract_strided_slice %556 {offsets = [0, 13, 0], sizes = [2, 1, 25], strides = [1, 1, 1]} : vector<2x30x25xf32> to vector<2x1x25xf32>
    %595 = arith.maximumf %593, %594 : vector<2x1x25xf32>
    %c0_344 = arith.constant 0 : index
    %c2_345 = arith.constant 2 : index
    %c13_346 = arith.constant 13 : index
    %c0_347 = arith.constant 0 : index
    %596 = vector.load %arg18[%c0_344, %c2_345, %c13_346, %c0_347] : memref<2x5x30x25xf32, #tpu.memory_space<vmem>>, vector<2x1x1x25xf32>
    %597 = vector.shape_cast %596 : vector<2x1x1x25xf32> to vector<2x1x25xf32>
    %598 = vector.shape_cast %595 : vector<2x1x25xf32> to vector<2x1x1x25xf32>
    tpu.vector_store %arg18[%c0_344, %c2_345, %c13_346, %c0_347], %598 {strides = array<i32>} : memref<2x5x30x25xf32, #tpu.memory_space<vmem>>, vector<2x1x1x25xf32>,
    %599 = vector.extract_strided_slice %556 {offsets = [0, 14, 0], sizes = [2, 1, 25], strides = [1, 1, 1]} : vector<2x30x25xf32> to vector<2x1x25xf32>
    %600 = vector.extract_strided_slice %556 {offsets = [0, 15, 0], sizes = [2, 1, 25], strides = [1, 1, 1]} : vector<2x30x25xf32> to vector<2x1x25xf32>
    %601 = arith.maximumf %599, %600 : vector<2x1x25xf32>
    %c0_348 = arith.constant 0 : index
    %c2_349 = arith.constant 2 : index
    %c14_350 = arith.constant 14 : index
    %c0_351 = arith.constant 0 : index
    %602 = vector.load %arg18[%c0_348, %c2_349, %c14_350, %c0_351] : memref<2x5x30x25xf32, #tpu.memory_space<vmem>>, vector<2x1x1x25xf32>
    %603 = vector.shape_cast %602 : vector<2x1x1x25xf32> to vector<2x1x25xf32>
    %604 = vector.shape_cast %601 : vector<2x1x25xf32> to vector<2x1x1x25xf32>
    tpu.vector_store %arg18[%c0_348, %c2_349, %c14_350, %c0_351], %604 {strides = array<i32>} : memref<2x5x30x25xf32, #tpu.memory_space<vmem>>, vector<2x1x1x25xf32>,
    %605 = vector.extract_strided_slice %556 {offsets = [0, 16, 0], sizes = [2, 1, 25], strides = [1, 1, 1]} : vector<2x30x25xf32> to vector<2x1x25xf32>
    %606 = vector.extract_strided_slice %556 {offsets = [0, 17, 0], sizes = [2, 1, 25], strides = [1, 1, 1]} : vector<2x30x25xf32> to vector<2x1x25xf32>
    %607 = arith.maximumf %605, %606 : vector<2x1x25xf32>
    %c0_352 = arith.constant 0 : index
    %c2_353 = arith.constant 2 : index
    %c15_354 = arith.constant 15 : index
    %c0_355 = arith.constant 0 : index
    %608 = vector.load %arg18[%c0_352, %c2_353, %c15_354, %c0_355] : memref<2x5x30x25xf32, #tpu.memory_space<vmem>>, vector<2x1x1x25xf32>
    %609 = vector.shape_cast %608 : vector<2x1x1x25xf32> to vector<2x1x25xf32>
    %610 = vector.shape_cast %607 : vector<2x1x25xf32> to vector<2x1x1x25xf32>
    tpu.vector_store %arg18[%c0_352, %c2_353, %c15_354, %c0_355], %610 {strides = array<i32>} : memref<2x5x30x25xf32, #tpu.memory_space<vmem>>, vector<2x1x1x25xf32>,
    %611 = vector.extract_strided_slice %556 {offsets = [0, 18, 0], sizes = [2, 1, 25], strides = [1, 1, 1]} : vector<2x30x25xf32> to vector<2x1x25xf32>
    %612 = vector.extract_strided_slice %556 {offsets = [0, 19, 0], sizes = [2, 1, 25], strides = [1, 1, 1]} : vector<2x30x25xf32> to vector<2x1x25xf32>
    %613 = arith.maximumf %611, %612 : vector<2x1x25xf32>
    %c0_356 = arith.constant 0 : index
    %c2_357 = arith.constant 2 : index
    %c16_358 = arith.constant 16 : index
    %c0_359 = arith.constant 0 : index
    %614 = vector.load %arg18[%c0_356, %c2_357, %c16_358, %c0_359] : memref<2x5x30x25xf32, #tpu.memory_space<vmem>>, vector<2x1x1x25xf32>
    %615 = vector.shape_cast %614 : vector<2x1x1x25xf32> to vector<2x1x25xf32>
    %616 = vector.shape_cast %613 : vector<2x1x25xf32> to vector<2x1x1x25xf32>
    tpu.vector_store %arg18[%c0_356, %c2_357, %c16_358, %c0_359], %616 {strides = array<i32>} : memref<2x5x30x25xf32, #tpu.memory_space<vmem>>, vector<2x1x1x25xf32>,
    %617 = vector.extract_strided_slice %556 {offsets = [0, 20, 0], sizes = [2, 1, 25], strides = [1, 1, 1]} : vector<2x30x25xf32> to vector<2x1x25xf32>
    %618 = vector.extract_strided_slice %556 {offsets = [0, 21, 0], sizes = [2, 1, 25], strides = [1, 1, 1]} : vector<2x30x25xf32> to vector<2x1x25xf32>
    %619 = arith.maximumf %617, %618 : vector<2x1x25xf32>
    %c0_360 = arith.constant 0 : index
    %c2_361 = arith.constant 2 : index
    %c17_362 = arith.constant 17 : index
    %c0_363 = arith.constant 0 : index
    %620 = vector.load %arg18[%c0_360, %c2_361, %c17_362, %c0_363] : memref<2x5x30x25xf32, #tpu.memory_space<vmem>>, vector<2x1x1x25xf32>
    %621 = vector.shape_cast %620 : vector<2x1x1x25xf32> to vector<2x1x25xf32>
    %622 = vector.shape_cast %619 : vector<2x1x25xf32> to vector<2x1x1x25xf32>
    tpu.vector_store %arg18[%c0_360, %c2_361, %c17_362, %c0_363], %622 {strides = array<i32>} : memref<2x5x30x25xf32, #tpu.memory_space<vmem>>, vector<2x1x1x25xf32>,
    %623 = vector.extract_strided_slice %556 {offsets = [0, 22, 0], sizes = [2, 1, 25], strides = [1, 1, 1]} : vector<2x30x25xf32> to vector<2x1x25xf32>
    %624 = vector.extract_strided_slice %556 {offsets = [0, 23, 0], sizes = [2, 1, 25], strides = [1, 1, 1]} : vector<2x30x25xf32> to vector<2x1x25xf32>
    %625 = arith.maximumf %623, %624 : vector<2x1x25xf32>
    %c0_364 = arith.constant 0 : index
    %c2_365 = arith.constant 2 : index
    %c18_366 = arith.constant 18 : index
    %c0_367 = arith.constant 0 : index
    %626 = vector.load %arg18[%c0_364, %c2_365, %c18_366, %c0_367] : memref<2x5x30x25xf32, #tpu.memory_space<vmem>>, vector<2x1x1x25xf32>
    %627 = vector.shape_cast %626 : vector<2x1x1x25xf32> to vector<2x1x25xf32>
    %628 = vector.shape_cast %625 : vector<2x1x25xf32> to vector<2x1x1x25xf32>
    tpu.vector_store %arg18[%c0_364, %c2_365, %c18_366, %c0_367], %628 {strides = array<i32>} : memref<2x5x30x25xf32, #tpu.memory_space<vmem>>, vector<2x1x1x25xf32>,
    %629 = vector.extract_strided_slice %556 {offsets = [0, 24, 0], sizes = [2, 1, 25], strides = [1, 1, 1]} : vector<2x30x25xf32> to vector<2x1x25xf32>
    %630 = vector.extract_strided_slice %556 {offsets = [0, 25, 0], sizes = [2, 1, 25], strides = [1, 1, 1]} : vector<2x30x25xf32> to vector<2x1x25xf32>
    %631 = arith.maximumf %629, %630 : vector<2x1x25xf32>
    %c0_368 = arith.constant 0 : index
    %c2_369 = arith.constant 2 : index
    %c19_370 = arith.constant 19 : index
    %c0_371 = arith.constant 0 : index
    %632 = vector.load %arg18[%c0_368, %c2_369, %c19_370, %c0_371] : memref<2x5x30x25xf32, #tpu.memory_space<vmem>>, vector<2x1x1x25xf32>
    %633 = vector.shape_cast %632 : vector<2x1x1x25xf32> to vector<2x1x25xf32>
    %634 = vector.shape_cast %631 : vector<2x1x25xf32> to vector<2x1x1x25xf32>
    tpu.vector_store %arg18[%c0_368, %c2_369, %c19_370, %c0_371], %634 {strides = array<i32>} : memref<2x5x30x25xf32, #tpu.memory_space<vmem>>, vector<2x1x1x25xf32>,
    %635 = vector.extract_strided_slice %556 {offsets = [0, 26, 0], sizes = [2, 1, 25], strides = [1, 1, 1]} : vector<2x30x25xf32> to vector<2x1x25xf32>
    %636 = vector.extract_strided_slice %556 {offsets = [0, 27, 0], sizes = [2, 1, 25], strides = [1, 1, 1]} : vector<2x30x25xf32> to vector<2x1x25xf32>
    %637 = arith.maximumf %635, %636 : vector<2x1x25xf32>
    %c0_372 = arith.constant 0 : index
    %c2_373 = arith.constant 2 : index
    %c20_374 = arith.constant 20 : index
    %c0_375 = arith.constant 0 : index
    %638 = vector.load %arg18[%c0_372, %c2_373, %c20_374, %c0_375] : memref<2x5x30x25xf32, #tpu.memory_space<vmem>>, vector<2x1x1x25xf32>
    %639 = vector.shape_cast %638 : vector<2x1x1x25xf32> to vector<2x1x25xf32>
    %640 = vector.shape_cast %637 : vector<2x1x25xf32> to vector<2x1x1x25xf32>
    tpu.vector_store %arg18[%c0_372, %c2_373, %c20_374, %c0_375], %640 {strides = array<i32>} : memref<2x5x30x25xf32, #tpu.memory_space<vmem>>, vector<2x1x1x25xf32>,
    %641 = vector.extract_strided_slice %556 {offsets = [0, 28, 0], sizes = [2, 1, 25], strides = [1, 1, 1]} : vector<2x30x25xf32> to vector<2x1x25xf32>
    %642 = vector.extract_strided_slice %556 {offsets = [0, 29, 0], sizes = [2, 1, 25], strides = [1, 1, 1]} : vector<2x30x25xf32> to vector<2x1x25xf32>
    %643 = arith.maximumf %641, %642 : vector<2x1x25xf32>
    %c0_376 = arith.constant 0 : index
    %c2_377 = arith.constant 2 : index
    %c21_378 = arith.constant 21 : index
    %c0_379 = arith.constant 0 : index
    %644 = vector.load %arg18[%c0_376, %c2_377, %c21_378, %c0_379] : memref<2x5x30x25xf32, #tpu.memory_space<vmem>>, vector<2x1x1x25xf32>
    %645 = vector.shape_cast %644 : vector<2x1x1x25xf32> to vector<2x1x25xf32>
    %646 = vector.shape_cast %643 : vector<2x1x25xf32> to vector<2x1x1x25xf32>
    tpu.vector_store %arg18[%c0_376, %c2_377, %c21_378, %c0_379], %646 {strides = array<i32>} : memref<2x5x30x25xf32, #tpu.memory_space<vmem>>, vector<2x1x1x25xf32>,
    %647 = vector.extract_strided_slice %322 {offsets = [0, 3], sizes = [2, 1], strides = [1, 1]} : vector<2x5xf32> to vector<2x1xf32>
    %648 = vector.shape_cast %647 : vector<2x1xf32> to vector<2x1x1xf32>
    %c13_380 = arith.constant 13 : index
    %649 = memref.load %arg0[%c13_380] : memref<22xf32, #tpu.memory_space<smem>>
    %650 = vector.broadcast %649 : f32 to vector<2x1x1xf32>
    %651 = arith.mulf %648, %650 : vector<2x1x1xf32>
    %652 = vector.broadcast %651 : vector<2x1x1xf32> to vector<2x30x25xf32>
    %653 = arith.mulf %229, %652 : vector<2x30x25xf32>
    %c18_381 = arith.constant 18 : index
    %654 = memref.load %arg0[%c18_381] : memref<22xf32, #tpu.memory_space<smem>>
    %655 = vector.broadcast %654 : f32 to vector<2x30x25xf32>
    %656 = arith.addf %653, %655 : vector<2x30x25xf32>
    %cst_382 = arith.constant 0.000000e+00 : f32
    %657 = vector.broadcast %cst_382 : f32 to vector<2x30x25xf32>
    %658 = arith.cmpf ogt, %656, %657 : vector<2x30x25xf32>
    %cst_383 = arith.constant 0.000000e+00 : f32
    %659 = vector.broadcast %cst_383 : f32 to vector<2x30x25xf32>
    %660 = arith.minimumf %656, %659 : vector<2x30x25xf32>
    %661 = math.exp %660 : vector<2x30x25xf32>
    %cst_384 = arith.constant 1.000000e+00 : f32
    %662 = vector.broadcast %cst_384 : f32 to vector<2x30x25xf32>
    %663 = arith.subf %661, %662 : vector<2x30x25xf32>
    %664 = arith.select %658, %656, %663 : vector<2x30x25xi1>, vector<2x30x25xf32>
    %665 = vector.extract_strided_slice %664 {offsets = [0, 0, 0], sizes = [2, 1, 25], strides = [1, 1, 1]} : vector<2x30x25xf32> to vector<2x1x25xf32>
    %666 = vector.extract_strided_slice %664 {offsets = [0, 1, 0], sizes = [2, 1, 25], strides = [1, 1, 1]} : vector<2x30x25xf32> to vector<2x1x25xf32>
    %667 = arith.maximumf %665, %666 : vector<2x1x25xf32>
    %c0_385 = arith.constant 0 : index
    %c3_386 = arith.constant 3 : index
    %c7_387 = arith.constant 7 : index
    %c0_388 = arith.constant 0 : index
    %668 = vector.load %arg18[%c0_385, %c3_386, %c7_387, %c0_388] : memref<2x5x30x25xf32, #tpu.memory_space<vmem>>, vector<2x1x1x25xf32>
    %669 = vector.shape_cast %668 : vector<2x1x1x25xf32> to vector<2x1x25xf32>
    %670 = vector.shape_cast %667 : vector<2x1x25xf32> to vector<2x1x1x25xf32>
    tpu.vector_store %arg18[%c0_385, %c3_386, %c7_387, %c0_388], %670 {strides = array<i32>} : memref<2x5x30x25xf32, #tpu.memory_space<vmem>>, vector<2x1x1x25xf32>,
    %671 = vector.extract_strided_slice %664 {offsets = [0, 2, 0], sizes = [2, 1, 25], strides = [1, 1, 1]} : vector<2x30x25xf32> to vector<2x1x25xf32>
    %672 = vector.extract_strided_slice %664 {offsets = [0, 3, 0], sizes = [2, 1, 25], strides = [1, 1, 1]} : vector<2x30x25xf32> to vector<2x1x25xf32>
    %673 = arith.maximumf %671, %672 : vector<2x1x25xf32>
    %c0_389 = arith.constant 0 : index
    %c3_390 = arith.constant 3 : index
    %c8_391 = arith.constant 8 : index
    %c0_392 = arith.constant 0 : index
    %674 = vector.load %arg18[%c0_389, %c3_390, %c8_391, %c0_392] : memref<2x5x30x25xf32, #tpu.memory_space<vmem>>, vector<2x1x1x25xf32>
    %675 = vector.shape_cast %674 : vector<2x1x1x25xf32> to vector<2x1x25xf32>
    %676 = vector.shape_cast %673 : vector<2x1x25xf32> to vector<2x1x1x25xf32>
    tpu.vector_store %arg18[%c0_389, %c3_390, %c8_391, %c0_392], %676 {strides = array<i32>} : memref<2x5x30x25xf32, #tpu.memory_space<vmem>>, vector<2x1x1x25xf32>,
    %677 = vector.extract_strided_slice %664 {offsets = [0, 4, 0], sizes = [2, 1, 25], strides = [1, 1, 1]} : vector<2x30x25xf32> to vector<2x1x25xf32>
    %678 = vector.extract_strided_slice %664 {offsets = [0, 5, 0], sizes = [2, 1, 25], strides = [1, 1, 1]} : vector<2x30x25xf32> to vector<2x1x25xf32>
    %679 = arith.maximumf %677, %678 : vector<2x1x25xf32>
    %c0_393 = arith.constant 0 : index
    %c3_394 = arith.constant 3 : index
    %c9_395 = arith.constant 9 : index
    %c0_396 = arith.constant 0 : index
    %680 = vector.load %arg18[%c0_393, %c3_394, %c9_395, %c0_396] : memref<2x5x30x25xf32, #tpu.memory_space<vmem>>, vector<2x1x1x25xf32>
    %681 = vector.shape_cast %680 : vector<2x1x1x25xf32> to vector<2x1x25xf32>
    %682 = vector.shape_cast %679 : vector<2x1x25xf32> to vector<2x1x1x25xf32>
    tpu.vector_store %arg18[%c0_393, %c3_394, %c9_395, %c0_396], %682 {strides = array<i32>} : memref<2x5x30x25xf32, #tpu.memory_space<vmem>>, vector<2x1x1x25xf32>,
    %683 = vector.extract_strided_slice %664 {offsets = [0, 6, 0], sizes = [2, 1, 25], strides = [1, 1, 1]} : vector<2x30x25xf32> to vector<2x1x25xf32>
    %684 = vector.extract_strided_slice %664 {offsets = [0, 7, 0], sizes = [2, 1, 25], strides = [1, 1, 1]} : vector<2x30x25xf32> to vector<2x1x25xf32>
    %685 = arith.maximumf %683, %684 : vector<2x1x25xf32>
    %c0_397 = arith.constant 0 : index
    %c3_398 = arith.constant 3 : index
    %c10_399 = arith.constant 10 : index
    %c0_400 = arith.constant 0 : index
    %686 = vector.load %arg18[%c0_397, %c3_398, %c10_399, %c0_400] : memref<2x5x30x25xf32, #tpu.memory_space<vmem>>, vector<2x1x1x25xf32>
    %687 = vector.shape_cast %686 : vector<2x1x1x25xf32> to vector<2x1x25xf32>
    %688 = vector.shape_cast %685 : vector<2x1x25xf32> to vector<2x1x1x25xf32>
    tpu.vector_store %arg18[%c0_397, %c3_398, %c10_399, %c0_400], %688 {strides = array<i32>} : memref<2x5x30x25xf32, #tpu.memory_space<vmem>>, vector<2x1x1x25xf32>,
    %689 = vector.extract_strided_slice %664 {offsets = [0, 8, 0], sizes = [2, 1, 25], strides = [1, 1, 1]} : vector<2x30x25xf32> to vector<2x1x25xf32>
    %690 = vector.extract_strided_slice %664 {offsets = [0, 9, 0], sizes = [2, 1, 25], strides = [1, 1, 1]} : vector<2x30x25xf32> to vector<2x1x25xf32>
    %691 = arith.maximumf %689, %690 : vector<2x1x25xf32>
    %c0_401 = arith.constant 0 : index
    %c3_402 = arith.constant 3 : index
    %c11_403 = arith.constant 11 : index
    %c0_404 = arith.constant 0 : index
    %692 = vector.load %arg18[%c0_401, %c3_402, %c11_403, %c0_404] : memref<2x5x30x25xf32, #tpu.memory_space<vmem>>, vector<2x1x1x25xf32>
    %693 = vector.shape_cast %692 : vector<2x1x1x25xf32> to vector<2x1x25xf32>
    %694 = vector.shape_cast %691 : vector<2x1x25xf32> to vector<2x1x1x25xf32>
    tpu.vector_store %arg18[%c0_401, %c3_402, %c11_403, %c0_404], %694 {strides = array<i32>} : memref<2x5x30x25xf32, #tpu.memory_space<vmem>>, vector<2x1x1x25xf32>,
    %695 = vector.extract_strided_slice %664 {offsets = [0, 10, 0], sizes = [2, 1, 25], strides = [1, 1, 1]} : vector<2x30x25xf32> to vector<2x1x25xf32>
    %696 = vector.extract_strided_slice %664 {offsets = [0, 11, 0], sizes = [2, 1, 25], strides = [1, 1, 1]} : vector<2x30x25xf32> to vector<2x1x25xf32>
    %697 = arith.maximumf %695, %696 : vector<2x1x25xf32>
    %c0_405 = arith.constant 0 : index
    %c3_406 = arith.constant 3 : index
    %c12_407 = arith.constant 12 : index
    %c0_408 = arith.constant 0 : index
    %698 = vector.load %arg18[%c0_405, %c3_406, %c12_407, %c0_408] : memref<2x5x30x25xf32, #tpu.memory_space<vmem>>, vector<2x1x1x25xf32>
    %699 = vector.shape_cast %698 : vector<2x1x1x25xf32> to vector<2x1x25xf32>
    %700 = vector.shape_cast %697 : vector<2x1x25xf32> to vector<2x1x1x25xf32>
    tpu.vector_store %arg18[%c0_405, %c3_406, %c12_407, %c0_408], %700 {strides = array<i32>} : memref<2x5x30x25xf32, #tpu.memory_space<vmem>>, vector<2x1x1x25xf32>,
    %701 = vector.extract_strided_slice %664 {offsets = [0, 12, 0], sizes = [2, 1, 25], strides = [1, 1, 1]} : vector<2x30x25xf32> to vector<2x1x25xf32>
    %702 = vector.extract_strided_slice %664 {offsets = [0, 13, 0], sizes = [2, 1, 25], strides = [1, 1, 1]} : vector<2x30x25xf32> to vector<2x1x25xf32>
    %703 = arith.maximumf %701, %702 : vector<2x1x25xf32>
    %c0_409 = arith.constant 0 : index
    %c3_410 = arith.constant 3 : index
    %c13_411 = arith.constant 13 : index
    %c0_412 = arith.constant 0 : index
    %704 = vector.load %arg18[%c0_409, %c3_410, %c13_411, %c0_412] : memref<2x5x30x25xf32, #tpu.memory_space<vmem>>, vector<2x1x1x25xf32>
    %705 = vector.shape_cast %704 : vector<2x1x1x25xf32> to vector<2x1x25xf32>
    %706 = vector.shape_cast %703 : vector<2x1x25xf32> to vector<2x1x1x25xf32>
    tpu.vector_store %arg18[%c0_409, %c3_410, %c13_411, %c0_412], %706 {strides = array<i32>} : memref<2x5x30x25xf32, #tpu.memory_space<vmem>>, vector<2x1x1x25xf32>,
    %707 = vector.extract_strided_slice %664 {offsets = [0, 14, 0], sizes = [2, 1, 25], strides = [1, 1, 1]} : vector<2x30x25xf32> to vector<2x1x25xf32>
    %708 = vector.extract_strided_slice %664 {offsets = [0, 15, 0], sizes = [2, 1, 25], strides = [1, 1, 1]} : vector<2x30x25xf32> to vector<2x1x25xf32>
    %709 = arith.maximumf %707, %708 : vector<2x1x25xf32>
    %c0_413 = arith.constant 0 : index
    %c3_414 = arith.constant 3 : index
    %c14_415 = arith.constant 14 : index
    %c0_416 = arith.constant 0 : index
    %710 = vector.load %arg18[%c0_413, %c3_414, %c14_415, %c0_416] : memref<2x5x30x25xf32, #tpu.memory_space<vmem>>, vector<2x1x1x25xf32>
    %711 = vector.shape_cast %710 : vector<2x1x1x25xf32> to vector<2x1x25xf32>
    %712 = vector.shape_cast %709 : vector<2x1x25xf32> to vector<2x1x1x25xf32>
    tpu.vector_store %arg18[%c0_413, %c3_414, %c14_415, %c0_416], %712 {strides = array<i32>} : memref<2x5x30x25xf32, #tpu.memory_space<vmem>>, vector<2x1x1x25xf32>,
    %713 = vector.extract_strided_slice %664 {offsets = [0, 16, 0], sizes = [2, 1, 25], strides = [1, 1, 1]} : vector<2x30x25xf32> to vector<2x1x25xf32>
    %714 = vector.extract_strided_slice %664 {offsets = [0, 17, 0], sizes = [2, 1, 25], strides = [1, 1, 1]} : vector<2x30x25xf32> to vector<2x1x25xf32>
    %715 = arith.maximumf %713, %714 : vector<2x1x25xf32>
    %c0_417 = arith.constant 0 : index
    %c3_418 = arith.constant 3 : index
    %c15_419 = arith.constant 15 : index
    %c0_420 = arith.constant 0 : index
    %716 = vector.load %arg18[%c0_417, %c3_418, %c15_419, %c0_420] : memref<2x5x30x25xf32, #tpu.memory_space<vmem>>, vector<2x1x1x25xf32>
    %717 = vector.shape_cast %716 : vector<2x1x1x25xf32> to vector<2x1x25xf32>
    %718 = vector.shape_cast %715 : vector<2x1x25xf32> to vector<2x1x1x25xf32>
    tpu.vector_store %arg18[%c0_417, %c3_418, %c15_419, %c0_420], %718 {strides = array<i32>} : memref<2x5x30x25xf32, #tpu.memory_space<vmem>>, vector<2x1x1x25xf32>,
    %719 = vector.extract_strided_slice %664 {offsets = [0, 18, 0], sizes = [2, 1, 25], strides = [1, 1, 1]} : vector<2x30x25xf32> to vector<2x1x25xf32>
    %720 = vector.extract_strided_slice %664 {offsets = [0, 19, 0], sizes = [2, 1, 25], strides = [1, 1, 1]} : vector<2x30x25xf32> to vector<2x1x25xf32>
    %721 = arith.maximumf %719, %720 : vector<2x1x25xf32>
    %c0_421 = arith.constant 0 : index
    %c3_422 = arith.constant 3 : index
    %c16_423 = arith.constant 16 : index
    %c0_424 = arith.constant 0 : index
    %722 = vector.load %arg18[%c0_421, %c3_422, %c16_423, %c0_424] : memref<2x5x30x25xf32, #tpu.memory_space<vmem>>, vector<2x1x1x25xf32>
    %723 = vector.shape_cast %722 : vector<2x1x1x25xf32> to vector<2x1x25xf32>
    %724 = vector.shape_cast %721 : vector<2x1x25xf32> to vector<2x1x1x25xf32>
    tpu.vector_store %arg18[%c0_421, %c3_422, %c16_423, %c0_424], %724 {strides = array<i32>} : memref<2x5x30x25xf32, #tpu.memory_space<vmem>>, vector<2x1x1x25xf32>,
    %725 = vector.extract_strided_slice %664 {offsets = [0, 20, 0], sizes = [2, 1, 25], strides = [1, 1, 1]} : vector<2x30x25xf32> to vector<2x1x25xf32>
    %726 = vector.extract_strided_slice %664 {offsets = [0, 21, 0], sizes = [2, 1, 25], strides = [1, 1, 1]} : vector<2x30x25xf32> to vector<2x1x25xf32>
    %727 = arith.maximumf %725, %726 : vector<2x1x25xf32>
    %c0_425 = arith.constant 0 : index
    %c3_426 = arith.constant 3 : index
    %c17_427 = arith.constant 17 : index
    %c0_428 = arith.constant 0 : index
    %728 = vector.load %arg18[%c0_425, %c3_426, %c17_427, %c0_428] : memref<2x5x30x25xf32, #tpu.memory_space<vmem>>, vector<2x1x1x25xf32>
    %729 = vector.shape_cast %728 : vector<2x1x1x25xf32> to vector<2x1x25xf32>
    %730 = vector.shape_cast %727 : vector<2x1x25xf32> to vector<2x1x1x25xf32>
    tpu.vector_store %arg18[%c0_425, %c3_426, %c17_427, %c0_428], %730 {strides = array<i32>} : memref<2x5x30x25xf32, #tpu.memory_space<vmem>>, vector<2x1x1x25xf32>,
    %731 = vector.extract_strided_slice %664 {offsets = [0, 22, 0], sizes = [2, 1, 25], strides = [1, 1, 1]} : vector<2x30x25xf32> to vector<2x1x25xf32>
    %732 = vector.extract_strided_slice %664 {offsets = [0, 23, 0], sizes = [2, 1, 25], strides = [1, 1, 1]} : vector<2x30x25xf32> to vector<2x1x25xf32>
    %733 = arith.maximumf %731, %732 : vector<2x1x25xf32>
    %c0_429 = arith.constant 0 : index
    %c3_430 = arith.constant 3 : index
    %c18_431 = arith.constant 18 : index
    %c0_432 = arith.constant 0 : index
    %734 = vector.load %arg18[%c0_429, %c3_430, %c18_431, %c0_432] : memref<2x5x30x25xf32, #tpu.memory_space<vmem>>, vector<2x1x1x25xf32>
    %735 = vector.shape_cast %734 : vector<2x1x1x25xf32> to vector<2x1x25xf32>
    %736 = vector.shape_cast %733 : vector<2x1x25xf32> to vector<2x1x1x25xf32>
    tpu.vector_store %arg18[%c0_429, %c3_430, %c18_431, %c0_432], %736 {strides = array<i32>} : memref<2x5x30x25xf32, #tpu.memory_space<vmem>>, vector<2x1x1x25xf32>,
    %737 = vector.extract_strided_slice %664 {offsets = [0, 24, 0], sizes = [2, 1, 25], strides = [1, 1, 1]} : vector<2x30x25xf32> to vector<2x1x25xf32>
    %738 = vector.extract_strided_slice %664 {offsets = [0, 25, 0], sizes = [2, 1, 25], strides = [1, 1, 1]} : vector<2x30x25xf32> to vector<2x1x25xf32>
    %739 = arith.maximumf %737, %738 : vector<2x1x25xf32>
    %c0_433 = arith.constant 0 : index
    %c3_434 = arith.constant 3 : index
    %c19_435 = arith.constant 19 : index
    %c0_436 = arith.constant 0 : index
    %740 = vector.load %arg18[%c0_433, %c3_434, %c19_435, %c0_436] : memref<2x5x30x25xf32, #tpu.memory_space<vmem>>, vector<2x1x1x25xf32>
    %741 = vector.shape_cast %740 : vector<2x1x1x25xf32> to vector<2x1x25xf32>
    %742 = vector.shape_cast %739 : vector<2x1x25xf32> to vector<2x1x1x25xf32>
    tpu.vector_store %arg18[%c0_433, %c3_434, %c19_435, %c0_436], %742 {strides = array<i32>} : memref<2x5x30x25xf32, #tpu.memory_space<vmem>>, vector<2x1x1x25xf32>,
    %743 = vector.extract_strided_slice %664 {offsets = [0, 26, 0], sizes = [2, 1, 25], strides = [1, 1, 1]} : vector<2x30x25xf32> to vector<2x1x25xf32>
    %744 = vector.extract_strided_slice %664 {offsets = [0, 27, 0], sizes = [2, 1, 25], strides = [1, 1, 1]} : vector<2x30x25xf32> to vector<2x1x25xf32>
    %745 = arith.maximumf %743, %744 : vector<2x1x25xf32>
    %c0_437 = arith.constant 0 : index
    %c3_438 = arith.constant 3 : index
    %c20_439 = arith.constant 20 : index
    %c0_440 = arith.constant 0 : index
    %746 = vector.load %arg18[%c0_437, %c3_438, %c20_439, %c0_440] : memref<2x5x30x25xf32, #tpu.memory_space<vmem>>, vector<2x1x1x25xf32>
    %747 = vector.shape_cast %746 : vector<2x1x1x25xf32> to vector<2x1x25xf32>
    %748 = vector.shape_cast %745 : vector<2x1x25xf32> to vector<2x1x1x25xf32>
    tpu.vector_store %arg18[%c0_437, %c3_438, %c20_439, %c0_440], %748 {strides = array<i32>} : memref<2x5x30x25xf32, #tpu.memory_space<vmem>>, vector<2x1x1x25xf32>,
    %749 = vector.extract_strided_slice %664 {offsets = [0, 28, 0], sizes = [2, 1, 25], strides = [1, 1, 1]} : vector<2x30x25xf32> to vector<2x1x25xf32>
    %750 = vector.extract_strided_slice %664 {offsets = [0, 29, 0], sizes = [2, 1, 25], strides = [1, 1, 1]} : vector<2x30x25xf32> to vector<2x1x25xf32>
    %751 = arith.maximumf %749, %750 : vector<2x1x25xf32>
    %c0_441 = arith.constant 0 : index
    %c3_442 = arith.constant 3 : index
    %c21_443 = arith.constant 21 : index
    %c0_444 = arith.constant 0 : index
    %752 = vector.load %arg18[%c0_441, %c3_442, %c21_443, %c0_444] : memref<2x5x30x25xf32, #tpu.memory_space<vmem>>, vector<2x1x1x25xf32>
    %753 = vector.shape_cast %752 : vector<2x1x1x25xf32> to vector<2x1x25xf32>
    %754 = vector.shape_cast %751 : vector<2x1x25xf32> to vector<2x1x1x25xf32>
    tpu.vector_store %arg18[%c0_441, %c3_442, %c21_443, %c0_444], %754 {strides = array<i32>} : memref<2x5x30x25xf32, #tpu.memory_space<vmem>>, vector<2x1x1x25xf32>,
    %755 = vector.extract_strided_slice %322 {offsets = [0, 4], sizes = [2, 1], strides = [1, 1]} : vector<2x5xf32> to vector<2x1xf32>
    %756 = vector.shape_cast %755 : vector<2x1xf32> to vector<2x1x1xf32>
    %c14_445 = arith.constant 14 : index
    %757 = memref.load %arg0[%c14_445] : memref<22xf32, #tpu.memory_space<smem>>
    %758 = vector.broadcast %757 : f32 to vector<2x1x1xf32>
    %759 = arith.mulf %756, %758 : vector<2x1x1xf32>
    %760 = vector.broadcast %759 : vector<2x1x1xf32> to vector<2x30x25xf32>
    %761 = arith.mulf %288, %760 : vector<2x30x25xf32>
    %c19_446 = arith.constant 19 : index
    %762 = memref.load %arg0[%c19_446] : memref<22xf32, #tpu.memory_space<smem>>
    %763 = vector.broadcast %762 : f32 to vector<2x30x25xf32>
    %764 = arith.addf %761, %763 : vector<2x30x25xf32>
    %cst_447 = arith.constant 0.000000e+00 : f32
    %765 = vector.broadcast %cst_447 : f32 to vector<2x30x25xf32>
    %766 = arith.cmpf ogt, %764, %765 : vector<2x30x25xf32>
    %cst_448 = arith.constant 0.000000e+00 : f32
    %767 = vector.broadcast %cst_448 : f32 to vector<2x30x25xf32>
    %768 = arith.minimumf %764, %767 : vector<2x30x25xf32>
    %769 = math.exp %768 : vector<2x30x25xf32>
    %cst_449 = arith.constant 1.000000e+00 : f32
    %770 = vector.broadcast %cst_449 : f32 to vector<2x30x25xf32>
    %771 = arith.subf %769, %770 : vector<2x30x25xf32>
    %772 = arith.select %766, %764, %771 : vector<2x30x25xi1>, vector<2x30x25xf32>
    %773 = vector.extract_strided_slice %772 {offsets = [0, 0, 0], sizes = [2, 1, 25], strides = [1, 1, 1]} : vector<2x30x25xf32> to vector<2x1x25xf32>
    %774 = vector.extract_strided_slice %772 {offsets = [0, 1, 0], sizes = [2, 1, 25], strides = [1, 1, 1]} : vector<2x30x25xf32> to vector<2x1x25xf32>
    %775 = arith.maximumf %773, %774 : vector<2x1x25xf32>
    %c0_450 = arith.constant 0 : index
    %c4_451 = arith.constant 4 : index
    %c7_452 = arith.constant 7 : index
    %c0_453 = arith.constant 0 : index
    %776 = vector.load %arg18[%c0_450, %c4_451, %c7_452, %c0_453] : memref<2x5x30x25xf32, #tpu.memory_space<vmem>>, vector<2x1x1x25xf32>
    %777 = vector.shape_cast %776 : vector<2x1x1x25xf32> to vector<2x1x25xf32>
    %778 = vector.shape_cast %775 : vector<2x1x25xf32> to vector<2x1x1x25xf32>
    tpu.vector_store %arg18[%c0_450, %c4_451, %c7_452, %c0_453], %778 {strides = array<i32>} : memref<2x5x30x25xf32, #tpu.memory_space<vmem>>, vector<2x1x1x25xf32>,
    %779 = vector.extract_strided_slice %772 {offsets = [0, 2, 0], sizes = [2, 1, 25], strides = [1, 1, 1]} : vector<2x30x25xf32> to vector<2x1x25xf32>
    %780 = vector.extract_strided_slice %772 {offsets = [0, 3, 0], sizes = [2, 1, 25], strides = [1, 1, 1]} : vector<2x30x25xf32> to vector<2x1x25xf32>
    %781 = arith.maximumf %779, %780 : vector<2x1x25xf32>
    %c0_454 = arith.constant 0 : index
    %c4_455 = arith.constant 4 : index
    %c8_456 = arith.constant 8 : index
    %c0_457 = arith.constant 0 : index
    %782 = vector.load %arg18[%c0_454, %c4_455, %c8_456, %c0_457] : memref<2x5x30x25xf32, #tpu.memory_space<vmem>>, vector<2x1x1x25xf32>
    %783 = vector.shape_cast %782 : vector<2x1x1x25xf32> to vector<2x1x25xf32>
    %784 = vector.shape_cast %781 : vector<2x1x25xf32> to vector<2x1x1x25xf32>
    tpu.vector_store %arg18[%c0_454, %c4_455, %c8_456, %c0_457], %784 {strides = array<i32>} : memref<2x5x30x25xf32, #tpu.memory_space<vmem>>, vector<2x1x1x25xf32>,
    %785 = vector.extract_strided_slice %772 {offsets = [0, 4, 0], sizes = [2, 1, 25], strides = [1, 1, 1]} : vector<2x30x25xf32> to vector<2x1x25xf32>
    %786 = vector.extract_strided_slice %772 {offsets = [0, 5, 0], sizes = [2, 1, 25], strides = [1, 1, 1]} : vector<2x30x25xf32> to vector<2x1x25xf32>
    %787 = arith.maximumf %785, %786 : vector<2x1x25xf32>
    %c0_458 = arith.constant 0 : index
    %c4_459 = arith.constant 4 : index
    %c9_460 = arith.constant 9 : index
    %c0_461 = arith.constant 0 : index
    %788 = vector.load %arg18[%c0_458, %c4_459, %c9_460, %c0_461] : memref<2x5x30x25xf32, #tpu.memory_space<vmem>>, vector<2x1x1x25xf32>
    %789 = vector.shape_cast %788 : vector<2x1x1x25xf32> to vector<2x1x25xf32>
    %790 = vector.shape_cast %787 : vector<2x1x25xf32> to vector<2x1x1x25xf32>
    tpu.vector_store %arg18[%c0_458, %c4_459, %c9_460, %c0_461], %790 {strides = array<i32>} : memref<2x5x30x25xf32, #tpu.memory_space<vmem>>, vector<2x1x1x25xf32>,
    %791 = vector.extract_strided_slice %772 {offsets = [0, 6, 0], sizes = [2, 1, 25], strides = [1, 1, 1]} : vector<2x30x25xf32> to vector<2x1x25xf32>
    %792 = vector.extract_strided_slice %772 {offsets = [0, 7, 0], sizes = [2, 1, 25], strides = [1, 1, 1]} : vector<2x30x25xf32> to vector<2x1x25xf32>
    %793 = arith.maximumf %791, %792 : vector<2x1x25xf32>
    %c0_462 = arith.constant 0 : index
    %c4_463 = arith.constant 4 : index
    %c10_464 = arith.constant 10 : index
    %c0_465 = arith.constant 0 : index
    %794 = vector.load %arg18[%c0_462, %c4_463, %c10_464, %c0_465] : memref<2x5x30x25xf32, #tpu.memory_space<vmem>>, vector<2x1x1x25xf32>
    %795 = vector.shape_cast %794 : vector<2x1x1x25xf32> to vector<2x1x25xf32>
    %796 = vector.shape_cast %793 : vector<2x1x25xf32> to vector<2x1x1x25xf32>
    tpu.vector_store %arg18[%c0_462, %c4_463, %c10_464, %c0_465], %796 {strides = array<i32>} : memref<2x5x30x25xf32, #tpu.memory_space<vmem>>, vector<2x1x1x25xf32>,
    %797 = vector.extract_strided_slice %772 {offsets = [0, 8, 0], sizes = [2, 1, 25], strides = [1, 1, 1]} : vector<2x30x25xf32> to vector<2x1x25xf32>
    %798 = vector.extract_strided_slice %772 {offsets = [0, 9, 0], sizes = [2, 1, 25], strides = [1, 1, 1]} : vector<2x30x25xf32> to vector<2x1x25xf32>
    %799 = arith.maximumf %797, %798 : vector<2x1x25xf32>
    %c0_466 = arith.constant 0 : index
    %c4_467 = arith.constant 4 : index
    %c11_468 = arith.constant 11 : index
    %c0_469 = arith.constant 0 : index
    %800 = vector.load %arg18[%c0_466, %c4_467, %c11_468, %c0_469] : memref<2x5x30x25xf32, #tpu.memory_space<vmem>>, vector<2x1x1x25xf32>
    %801 = vector.shape_cast %800 : vector<2x1x1x25xf32> to vector<2x1x25xf32>
    %802 = vector.shape_cast %799 : vector<2x1x25xf32> to vector<2x1x1x25xf32>
    tpu.vector_store %arg18[%c0_466, %c4_467, %c11_468, %c0_469], %802 {strides = array<i32>} : memref<2x5x30x25xf32, #tpu.memory_space<vmem>>, vector<2x1x1x25xf32>,
    %803 = vector.extract_strided_slice %772 {offsets = [0, 10, 0], sizes = [2, 1, 25], strides = [1, 1, 1]} : vector<2x30x25xf32> to vector<2x1x25xf32>
    %804 = vector.extract_strided_slice %772 {offsets = [0, 11, 0], sizes = [2, 1, 25], strides = [1, 1, 1]} : vector<2x30x25xf32> to vector<2x1x25xf32>
    %805 = arith.maximumf %803, %804 : vector<2x1x25xf32>
    %c0_470 = arith.constant 0 : index
    %c4_471 = arith.constant 4 : index
    %c12_472 = arith.constant 12 : index
    %c0_473 = arith.constant 0 : index
    %806 = vector.load %arg18[%c0_470, %c4_471, %c12_472, %c0_473] : memref<2x5x30x25xf32, #tpu.memory_space<vmem>>, vector<2x1x1x25xf32>
    %807 = vector.shape_cast %806 : vector<2x1x1x25xf32> to vector<2x1x25xf32>
    %808 = vector.shape_cast %805 : vector<2x1x25xf32> to vector<2x1x1x25xf32>
    tpu.vector_store %arg18[%c0_470, %c4_471, %c12_472, %c0_473], %808 {strides = array<i32>} : memref<2x5x30x25xf32, #tpu.memory_space<vmem>>, vector<2x1x1x25xf32>,
    %809 = vector.extract_strided_slice %772 {offsets = [0, 12, 0], sizes = [2, 1, 25], strides = [1, 1, 1]} : vector<2x30x25xf32> to vector<2x1x25xf32>
    %810 = vector.extract_strided_slice %772 {offsets = [0, 13, 0], sizes = [2, 1, 25], strides = [1, 1, 1]} : vector<2x30x25xf32> to vector<2x1x25xf32>
    %811 = arith.maximumf %809, %810 : vector<2x1x25xf32>
    %c0_474 = arith.constant 0 : index
    %c4_475 = arith.constant 4 : index
    %c13_476 = arith.constant 13 : index
    %c0_477 = arith.constant 0 : index
    %812 = vector.load %arg18[%c0_474, %c4_475, %c13_476, %c0_477] : memref<2x5x30x25xf32, #tpu.memory_space<vmem>>, vector<2x1x1x25xf32>
    %813 = vector.shape_cast %812 : vector<2x1x1x25xf32> to vector<2x1x25xf32>
    %814 = vector.shape_cast %811 : vector<2x1x25xf32> to vector<2x1x1x25xf32>
    tpu.vector_store %arg18[%c0_474, %c4_475, %c13_476, %c0_477], %814 {strides = array<i32>} : memref<2x5x30x25xf32, #tpu.memory_space<vmem>>, vector<2x1x1x25xf32>,
    %815 = vector.extract_strided_slice %772 {offsets = [0, 14, 0], sizes = [2, 1, 25], strides = [1, 1, 1]} : vector<2x30x25xf32> to vector<2x1x25xf32>
    %816 = vector.extract_strided_slice %772 {offsets = [0, 15, 0], sizes = [2, 1, 25], strides = [1, 1, 1]} : vector<2x30x25xf32> to vector<2x1x25xf32>
    %817 = arith.maximumf %815, %816 : vector<2x1x25xf32>
    %c0_478 = arith.constant 0 : index
    %c4_479 = arith.constant 4 : index
    %c14_480 = arith.constant 14 : index
    %c0_481 = arith.constant 0 : index
    %818 = vector.load %arg18[%c0_478, %c4_479, %c14_480, %c0_481] : memref<2x5x30x25xf32, #tpu.memory_space<vmem>>, vector<2x1x1x25xf32>
    %819 = vector.shape_cast %818 : vector<2x1x1x25xf32> to vector<2x1x25xf32>
    %820 = vector.shape_cast %817 : vector<2x1x25xf32> to vector<2x1x1x25xf32>
    tpu.vector_store %arg18[%c0_478, %c4_479, %c14_480, %c0_481], %820 {strides = array<i32>} : memref<2x5x30x25xf32, #tpu.memory_space<vmem>>, vector<2x1x1x25xf32>,
    %821 = vector.extract_strided_slice %772 {offsets = [0, 16, 0], sizes = [2, 1, 25], strides = [1, 1, 1]} : vector<2x30x25xf32> to vector<2x1x25xf32>
    %822 = vector.extract_strided_slice %772 {offsets = [0, 17, 0], sizes = [2, 1, 25], strides = [1, 1, 1]} : vector<2x30x25xf32> to vector<2x1x25xf32>
    %823 = arith.maximumf %821, %822 : vector<2x1x25xf32>
    %c0_482 = arith.constant 0 : index
    %c4_483 = arith.constant 4 : index
    %c15_484 = arith.constant 15 : index
    %c0_485 = arith.constant 0 : index
    %824 = vector.load %arg18[%c0_482, %c4_483, %c15_484, %c0_485] : memref<2x5x30x25xf32, #tpu.memory_space<vmem>>, vector<2x1x1x25xf32>
    %825 = vector.shape_cast %824 : vector<2x1x1x25xf32> to vector<2x1x25xf32>
    %826 = vector.shape_cast %823 : vector<2x1x25xf32> to vector<2x1x1x25xf32>
    tpu.vector_store %arg18[%c0_482, %c4_483, %c15_484, %c0_485], %826 {strides = array<i32>} : memref<2x5x30x25xf32, #tpu.memory_space<vmem>>, vector<2x1x1x25xf32>,
    %827 = vector.extract_strided_slice %772 {offsets = [0, 18, 0], sizes = [2, 1, 25], strides = [1, 1, 1]} : vector<2x30x25xf32> to vector<2x1x25xf32>
    %828 = vector.extract_strided_slice %772 {offsets = [0, 19, 0], sizes = [2, 1, 25], strides = [1, 1, 1]} : vector<2x30x25xf32> to vector<2x1x25xf32>
    %829 = arith.maximumf %827, %828 : vector<2x1x25xf32>
    %c0_486 = arith.constant 0 : index
    %c4_487 = arith.constant 4 : index
    %c16_488 = arith.constant 16 : index
    %c0_489 = arith.constant 0 : index
    %830 = vector.load %arg18[%c0_486, %c4_487, %c16_488, %c0_489] : memref<2x5x30x25xf32, #tpu.memory_space<vmem>>, vector<2x1x1x25xf32>
    %831 = vector.shape_cast %830 : vector<2x1x1x25xf32> to vector<2x1x25xf32>
    %832 = vector.shape_cast %829 : vector<2x1x25xf32> to vector<2x1x1x25xf32>
    tpu.vector_store %arg18[%c0_486, %c4_487, %c16_488, %c0_489], %832 {strides = array<i32>} : memref<2x5x30x25xf32, #tpu.memory_space<vmem>>, vector<2x1x1x25xf32>,
    %833 = vector.extract_strided_slice %772 {offsets = [0, 20, 0], sizes = [2, 1, 25], strides = [1, 1, 1]} : vector<2x30x25xf32> to vector<2x1x25xf32>
    %834 = vector.extract_strided_slice %772 {offsets = [0, 21, 0], sizes = [2, 1, 25], strides = [1, 1, 1]} : vector<2x30x25xf32> to vector<2x1x25xf32>
    %835 = arith.maximumf %833, %834 : vector<2x1x25xf32>
    %c0_490 = arith.constant 0 : index
    %c4_491 = arith.constant 4 : index
    %c17_492 = arith.constant 17 : index
    %c0_493 = arith.constant 0 : index
    %836 = vector.load %arg18[%c0_490, %c4_491, %c17_492, %c0_493] : memref<2x5x30x25xf32, #tpu.memory_space<vmem>>, vector<2x1x1x25xf32>
    %837 = vector.shape_cast %836 : vector<2x1x1x25xf32> to vector<2x1x25xf32>
    %838 = vector.shape_cast %835 : vector<2x1x25xf32> to vector<2x1x1x25xf32>
    tpu.vector_store %arg18[%c0_490, %c4_491, %c17_492, %c0_493], %838 {strides = array<i32>} : memref<2x5x30x25xf32, #tpu.memory_space<vmem>>, vector<2x1x1x25xf32>,
    %839 = vector.extract_strided_slice %772 {offsets = [0, 22, 0], sizes = [2, 1, 25], strides = [1, 1, 1]} : vector<2x30x25xf32> to vector<2x1x25xf32>
    %840 = vector.extract_strided_slice %772 {offsets = [0, 23, 0], sizes = [2, 1, 25], strides = [1, 1, 1]} : vector<2x30x25xf32> to vector<2x1x25xf32>
    %841 = arith.maximumf %839, %840 : vector<2x1x25xf32>
    %c0_494 = arith.constant 0 : index
    %c4_495 = arith.constant 4 : index
    %c18_496 = arith.constant 18 : index
    %c0_497 = arith.constant 0 : index
    %842 = vector.load %arg18[%c0_494, %c4_495, %c18_496, %c0_497] : memref<2x5x30x25xf32, #tpu.memory_space<vmem>>, vector<2x1x1x25xf32>
    %843 = vector.shape_cast %842 : vector<2x1x1x25xf32> to vector<2x1x25xf32>
    %844 = vector.shape_cast %841 : vector<2x1x25xf32> to vector<2x1x1x25xf32>
    tpu.vector_store %arg18[%c0_494, %c4_495, %c18_496, %c0_497], %844 {strides = array<i32>} : memref<2x5x30x25xf32, #tpu.memory_space<vmem>>, vector<2x1x1x25xf32>,
    %845 = vector.extract_strided_slice %772 {offsets = [0, 24, 0], sizes = [2, 1, 25], strides = [1, 1, 1]} : vector<2x30x25xf32> to vector<2x1x25xf32>
    %846 = vector.extract_strided_slice %772 {offsets = [0, 25, 0], sizes = [2, 1, 25], strides = [1, 1, 1]} : vector<2x30x25xf32> to vector<2x1x25xf32>
    %847 = arith.maximumf %845, %846 : vector<2x1x25xf32>
    %c0_498 = arith.constant 0 : index
    %c4_499 = arith.constant 4 : index
    %c19_500 = arith.constant 19 : index
    %c0_501 = arith.constant 0 : index
    %848 = vector.load %arg18[%c0_498, %c4_499, %c19_500, %c0_501] : memref<2x5x30x25xf32, #tpu.memory_space<vmem>>, vector<2x1x1x25xf32>
    %849 = vector.shape_cast %848 : vector<2x1x1x25xf32> to vector<2x1x25xf32>
    %850 = vector.shape_cast %847 : vector<2x1x25xf32> to vector<2x1x1x25xf32>
    tpu.vector_store %arg18[%c0_498, %c4_499, %c19_500, %c0_501], %850 {strides = array<i32>} : memref<2x5x30x25xf32, #tpu.memory_space<vmem>>, vector<2x1x1x25xf32>,
    %851 = vector.extract_strided_slice %772 {offsets = [0, 26, 0], sizes = [2, 1, 25], strides = [1, 1, 1]} : vector<2x30x25xf32> to vector<2x1x25xf32>
    %852 = vector.extract_strided_slice %772 {offsets = [0, 27, 0], sizes = [2, 1, 25], strides = [1, 1, 1]} : vector<2x30x25xf32> to vector<2x1x25xf32>
    %853 = arith.maximumf %851, %852 : vector<2x1x25xf32>
    %c0_502 = arith.constant 0 : index
    %c4_503 = arith.constant 4 : index
    %c20_504 = arith.constant 20 : index
    %c0_505 = arith.constant 0 : index
    %854 = vector.load %arg18[%c0_502, %c4_503, %c20_504, %c0_505] : memref<2x5x30x25xf32, #tpu.memory_space<vmem>>, vector<2x1x1x25xf32>
    %855 = vector.shape_cast %854 : vector<2x1x1x25xf32> to vector<2x1x25xf32>
    %856 = vector.shape_cast %853 : vector<2x1x25xf32> to vector<2x1x1x25xf32>
    tpu.vector_store %arg18[%c0_502, %c4_503, %c20_504, %c0_505], %856 {strides = array<i32>} : memref<2x5x30x25xf32, #tpu.memory_space<vmem>>, vector<2x1x1x25xf32>,
    %857 = vector.extract_strided_slice %772 {offsets = [0, 28, 0], sizes = [2, 1, 25], strides = [1, 1, 1]} : vector<2x30x25xf32> to vector<2x1x25xf32>
    %858 = vector.extract_strided_slice %772 {offsets = [0, 29, 0], sizes = [2, 1, 25], strides = [1, 1, 1]} : vector<2x30x25xf32> to vector<2x1x25xf32>
    %859 = arith.maximumf %857, %858 : vector<2x1x25xf32>
    %c0_506 = arith.constant 0 : index
    %c4_507 = arith.constant 4 : index
    %c21_508 = arith.constant 21 : index
    %c0_509 = arith.constant 0 : index
    %860 = vector.load %arg18[%c0_506, %c4_507, %c21_508, %c0_509] : memref<2x5x30x25xf32, #tpu.memory_space<vmem>>, vector<2x1x1x25xf32>
    %861 = vector.shape_cast %860 : vector<2x1x1x25xf32> to vector<2x1x25xf32>
    %862 = vector.shape_cast %859 : vector<2x1x25xf32> to vector<2x1x1x25xf32>
    tpu.vector_store %arg18[%c0_506, %c4_507, %c21_508, %c0_509], %862 {strides = array<i32>} : memref<2x5x30x25xf32, #tpu.memory_space<vmem>>, vector<2x1x1x25xf32>,
    %cst_510 = arith.constant 0.000000e+00 : f32
    %863 = vector.broadcast %cst_510 : f32 to vector<2x15x25xf32>
    %c0_511 = arith.constant 0 : index
    %c0_512 = arith.constant 0 : index
    %c0_513 = arith.constant 0 : index
    %c0_514 = arith.constant 0 : index
    %864 = vector.load %arg18[%c0_511, %c0_512, %c0_513, %c0_514] : memref<2x5x30x25xf32, #tpu.memory_space<vmem>>, vector<2x1x30x25xf32>
    %865 = vector.shape_cast %864 : vector<2x1x30x25xf32> to vector<2x30x25xf32>
    %c0_515 = arith.constant 0 : index
    %c0_516 = arith.constant 0 : index
    %c0_517 = arith.constant 0 : index
    %866 = vector.load %arg10[%c0_515, %c0_516, %c0_517] : memref<5x16x25xf32, #tpu.memory_space<vmem>>, vector<1x16x25xf32>
    %867 = vector.shape_cast %866 : vector<1x16x25xf32> to vector<16x25xf32>
    %868 = vector.extract_strided_slice %867 {offsets = [0, 0], sizes = [1, 25], strides = [1, 1]} : vector<16x25xf32> to vector<1x25xf32>
    %869 = vector.extract_strided_slice %865 {offsets = [0, 0, 0], sizes = [2, 15, 25], strides = [1, 1, 1]} : vector<2x30x25xf32> to vector<2x15x25xf32>
    %870 = vector.shape_cast %868 : vector<1x25xf32> to vector<1x1x25xf32>
    %871 = vector.broadcast %870 : vector<1x1x25xf32> to vector<2x15x25xf32>
    %872 = arith.mulf %871, %869 : vector<2x15x25xf32>
    %873 = arith.addf %863, %872 : vector<2x15x25xf32>
    %874 = vector.extract_strided_slice %867 {offsets = [1, 0], sizes = [1, 25], strides = [1, 1]} : vector<16x25xf32> to vector<1x25xf32>
    %875 = vector.extract_strided_slice %865 {offsets = [0, 1, 0], sizes = [2, 15, 25], strides = [1, 1, 1]} : vector<2x30x25xf32> to vector<2x15x25xf32>
    %876 = vector.shape_cast %874 : vector<1x25xf32> to vector<1x1x25xf32>
    %877 = vector.broadcast %876 : vector<1x1x25xf32> to vector<2x15x25xf32>
    %878 = arith.mulf %877, %875 : vector<2x15x25xf32>
    %879 = arith.addf %873, %878 : vector<2x15x25xf32>
    %880 = vector.extract_strided_slice %867 {offsets = [2, 0], sizes = [1, 25], strides = [1, 1]} : vector<16x25xf32> to vector<1x25xf32>
    %881 = vector.extract_strided_slice %865 {offsets = [0, 2, 0], sizes = [2, 15, 25], strides = [1, 1, 1]} : vector<2x30x25xf32> to vector<2x15x25xf32>
    %882 = vector.shape_cast %880 : vector<1x25xf32> to vector<1x1x25xf32>
    %883 = vector.broadcast %882 : vector<1x1x25xf32> to vector<2x15x25xf32>
    %884 = arith.mulf %883, %881 : vector<2x15x25xf32>
    %885 = arith.addf %879, %884 : vector<2x15x25xf32>
    %886 = vector.extract_strided_slice %867 {offsets = [3, 0], sizes = [1, 25], strides = [1, 1]} : vector<16x25xf32> to vector<1x25xf32>
    %887 = vector.extract_strided_slice %865 {offsets = [0, 3, 0], sizes = [2, 15, 25], strides = [1, 1, 1]} : vector<2x30x25xf32> to vector<2x15x25xf32>
    %888 = vector.shape_cast %886 : vector<1x25xf32> to vector<1x1x25xf32>
    %889 = vector.broadcast %888 : vector<1x1x25xf32> to vector<2x15x25xf32>
    %890 = arith.mulf %889, %887 : vector<2x15x25xf32>
    %891 = arith.addf %885, %890 : vector<2x15x25xf32>
    %892 = vector.extract_strided_slice %867 {offsets = [4, 0], sizes = [1, 25], strides = [1, 1]} : vector<16x25xf32> to vector<1x25xf32>
    %893 = vector.extract_strided_slice %865 {offsets = [0, 4, 0], sizes = [2, 15, 25], strides = [1, 1, 1]} : vector<2x30x25xf32> to vector<2x15x25xf32>
    %894 = vector.shape_cast %892 : vector<1x25xf32> to vector<1x1x25xf32>
    %895 = vector.broadcast %894 : vector<1x1x25xf32> to vector<2x15x25xf32>
    %896 = arith.mulf %895, %893 : vector<2x15x25xf32>
    %897 = arith.addf %891, %896 : vector<2x15x25xf32>
    %898 = vector.extract_strided_slice %867 {offsets = [5, 0], sizes = [1, 25], strides = [1, 1]} : vector<16x25xf32> to vector<1x25xf32>
    %899 = vector.extract_strided_slice %865 {offsets = [0, 5, 0], sizes = [2, 15, 25], strides = [1, 1, 1]} : vector<2x30x25xf32> to vector<2x15x25xf32>
    %900 = vector.shape_cast %898 : vector<1x25xf32> to vector<1x1x25xf32>
    %901 = vector.broadcast %900 : vector<1x1x25xf32> to vector<2x15x25xf32>
    %902 = arith.mulf %901, %899 : vector<2x15x25xf32>
    %903 = arith.addf %897, %902 : vector<2x15x25xf32>
    %904 = vector.extract_strided_slice %867 {offsets = [6, 0], sizes = [1, 25], strides = [1, 1]} : vector<16x25xf32> to vector<1x25xf32>
    %905 = vector.extract_strided_slice %865 {offsets = [0, 6, 0], sizes = [2, 15, 25], strides = [1, 1, 1]} : vector<2x30x25xf32> to vector<2x15x25xf32>
    %906 = vector.shape_cast %904 : vector<1x25xf32> to vector<1x1x25xf32>
    %907 = vector.broadcast %906 : vector<1x1x25xf32> to vector<2x15x25xf32>
    %908 = arith.mulf %907, %905 : vector<2x15x25xf32>
    %909 = arith.addf %903, %908 : vector<2x15x25xf32>
    %910 = vector.extract_strided_slice %867 {offsets = [7, 0], sizes = [1, 25], strides = [1, 1]} : vector<16x25xf32> to vector<1x25xf32>
    %911 = vector.extract_strided_slice %865 {offsets = [0, 7, 0], sizes = [2, 15, 25], strides = [1, 1, 1]} : vector<2x30x25xf32> to vector<2x15x25xf32>
    %912 = vector.shape_cast %910 : vector<1x25xf32> to vector<1x1x25xf32>
    %913 = vector.broadcast %912 : vector<1x1x25xf32> to vector<2x15x25xf32>
    %914 = arith.mulf %913, %911 : vector<2x15x25xf32>
    %915 = arith.addf %909, %914 : vector<2x15x25xf32>
    %916 = vector.extract_strided_slice %867 {offsets = [8, 0], sizes = [1, 25], strides = [1, 1]} : vector<16x25xf32> to vector<1x25xf32>
    %917 = vector.extract_strided_slice %865 {offsets = [0, 8, 0], sizes = [2, 15, 25], strides = [1, 1, 1]} : vector<2x30x25xf32> to vector<2x15x25xf32>
    %918 = vector.shape_cast %916 : vector<1x25xf32> to vector<1x1x25xf32>
    %919 = vector.broadcast %918 : vector<1x1x25xf32> to vector<2x15x25xf32>
    %920 = arith.mulf %919, %917 : vector<2x15x25xf32>
    %921 = arith.addf %915, %920 : vector<2x15x25xf32>
    %922 = vector.extract_strided_slice %867 {offsets = [9, 0], sizes = [1, 25], strides = [1, 1]} : vector<16x25xf32> to vector<1x25xf32>
    %923 = vector.extract_strided_slice %865 {offsets = [0, 9, 0], sizes = [2, 15, 25], strides = [1, 1, 1]} : vector<2x30x25xf32> to vector<2x15x25xf32>
    %924 = vector.shape_cast %922 : vector<1x25xf32> to vector<1x1x25xf32>
    %925 = vector.broadcast %924 : vector<1x1x25xf32> to vector<2x15x25xf32>
    %926 = arith.mulf %925, %923 : vector<2x15x25xf32>
    %927 = arith.addf %921, %926 : vector<2x15x25xf32>
    %928 = vector.extract_strided_slice %867 {offsets = [10, 0], sizes = [1, 25], strides = [1, 1]} : vector<16x25xf32> to vector<1x25xf32>
    %929 = vector.extract_strided_slice %865 {offsets = [0, 10, 0], sizes = [2, 15, 25], strides = [1, 1, 1]} : vector<2x30x25xf32> to vector<2x15x25xf32>
    %930 = vector.shape_cast %928 : vector<1x25xf32> to vector<1x1x25xf32>
    %931 = vector.broadcast %930 : vector<1x1x25xf32> to vector<2x15x25xf32>
    %932 = arith.mulf %931, %929 : vector<2x15x25xf32>
    %933 = arith.addf %927, %932 : vector<2x15x25xf32>
    %934 = vector.extract_strided_slice %867 {offsets = [11, 0], sizes = [1, 25], strides = [1, 1]} : vector<16x25xf32> to vector<1x25xf32>
    %935 = vector.extract_strided_slice %865 {offsets = [0, 11, 0], sizes = [2, 15, 25], strides = [1, 1, 1]} : vector<2x30x25xf32> to vector<2x15x25xf32>
    %936 = vector.shape_cast %934 : vector<1x25xf32> to vector<1x1x25xf32>
    %937 = vector.broadcast %936 : vector<1x1x25xf32> to vector<2x15x25xf32>
    %938 = arith.mulf %937, %935 : vector<2x15x25xf32>
    %939 = arith.addf %933, %938 : vector<2x15x25xf32>
    %940 = vector.extract_strided_slice %867 {offsets = [12, 0], sizes = [1, 25], strides = [1, 1]} : vector<16x25xf32> to vector<1x25xf32>
    %941 = vector.extract_strided_slice %865 {offsets = [0, 12, 0], sizes = [2, 15, 25], strides = [1, 1, 1]} : vector<2x30x25xf32> to vector<2x15x25xf32>
    %942 = vector.shape_cast %940 : vector<1x25xf32> to vector<1x1x25xf32>
    %943 = vector.broadcast %942 : vector<1x1x25xf32> to vector<2x15x25xf32>
    %944 = arith.mulf %943, %941 : vector<2x15x25xf32>
    %945 = arith.addf %939, %944 : vector<2x15x25xf32>
    %946 = vector.extract_strided_slice %867 {offsets = [13, 0], sizes = [1, 25], strides = [1, 1]} : vector<16x25xf32> to vector<1x25xf32>
    %947 = vector.extract_strided_slice %865 {offsets = [0, 13, 0], sizes = [2, 15, 25], strides = [1, 1, 1]} : vector<2x30x25xf32> to vector<2x15x25xf32>
    %948 = vector.shape_cast %946 : vector<1x25xf32> to vector<1x1x25xf32>
    %949 = vector.broadcast %948 : vector<1x1x25xf32> to vector<2x15x25xf32>
    %950 = arith.mulf %949, %947 : vector<2x15x25xf32>
    %951 = arith.addf %945, %950 : vector<2x15x25xf32>
    %952 = vector.extract_strided_slice %867 {offsets = [14, 0], sizes = [1, 25], strides = [1, 1]} : vector<16x25xf32> to vector<1x25xf32>
    %953 = vector.extract_strided_slice %865 {offsets = [0, 14, 0], sizes = [2, 15, 25], strides = [1, 1, 1]} : vector<2x30x25xf32> to vector<2x15x25xf32>
    %954 = vector.shape_cast %952 : vector<1x25xf32> to vector<1x1x25xf32>
    %955 = vector.broadcast %954 : vector<1x1x25xf32> to vector<2x15x25xf32>
    %956 = arith.mulf %955, %953 : vector<2x15x25xf32>
    %957 = arith.addf %951, %956 : vector<2x15x25xf32>
    %958 = vector.extract_strided_slice %867 {offsets = [15, 0], sizes = [1, 25], strides = [1, 1]} : vector<16x25xf32> to vector<1x25xf32>
    %959 = vector.extract_strided_slice %865 {offsets = [0, 15, 0], sizes = [2, 15, 25], strides = [1, 1, 1]} : vector<2x30x25xf32> to vector<2x15x25xf32>
    %960 = vector.shape_cast %958 : vector<1x25xf32> to vector<1x1x25xf32>
    %961 = vector.broadcast %960 : vector<1x1x25xf32> to vector<2x15x25xf32>
    %962 = arith.mulf %961, %959 : vector<2x15x25xf32>
    %963 = arith.addf %957, %962 : vector<2x15x25xf32>
    %c0_518 = arith.constant 0 : index
    %c1_519 = arith.constant 1 : index
    %c0_520 = arith.constant 0 : index
    %c0_521 = arith.constant 0 : index
    %964 = vector.load %arg18[%c0_518, %c1_519, %c0_520, %c0_521] : memref<2x5x30x25xf32, #tpu.memory_space<vmem>>, vector<2x1x30x25xf32>
    %965 = vector.shape_cast %964 : vector<2x1x30x25xf32> to vector<2x30x25xf32>
    %c1_522 = arith.constant 1 : index
    %c0_523 = arith.constant 0 : index
    %c0_524 = arith.constant 0 : index
    %966 = vector.load %arg10[%c1_522, %c0_523, %c0_524] : memref<5x16x25xf32, #tpu.memory_space<vmem>>, vector<1x16x25xf32>
    %967 = vector.shape_cast %966 : vector<1x16x25xf32> to vector<16x25xf32>
    %968 = vector.extract_strided_slice %967 {offsets = [0, 0], sizes = [1, 25], strides = [1, 1]} : vector<16x25xf32> to vector<1x25xf32>
    %969 = vector.extract_strided_slice %965 {offsets = [0, 0, 0], sizes = [2, 15, 25], strides = [1, 1, 1]} : vector<2x30x25xf32> to vector<2x15x25xf32>
    %970 = vector.shape_cast %968 : vector<1x25xf32> to vector<1x1x25xf32>
    %971 = vector.broadcast %970 : vector<1x1x25xf32> to vector<2x15x25xf32>
    %972 = arith.mulf %971, %969 : vector<2x15x25xf32>
    %973 = arith.addf %963, %972 : vector<2x15x25xf32>
    %974 = vector.extract_strided_slice %967 {offsets = [1, 0], sizes = [1, 25], strides = [1, 1]} : vector<16x25xf32> to vector<1x25xf32>
    %975 = vector.extract_strided_slice %965 {offsets = [0, 1, 0], sizes = [2, 15, 25], strides = [1, 1, 1]} : vector<2x30x25xf32> to vector<2x15x25xf32>
    %976 = vector.shape_cast %974 : vector<1x25xf32> to vector<1x1x25xf32>
    %977 = vector.broadcast %976 : vector<1x1x25xf32> to vector<2x15x25xf32>
    %978 = arith.mulf %977, %975 : vector<2x15x25xf32>
    %979 = arith.addf %973, %978 : vector<2x15x25xf32>
    %980 = vector.extract_strided_slice %967 {offsets = [2, 0], sizes = [1, 25], strides = [1, 1]} : vector<16x25xf32> to vector<1x25xf32>
    %981 = vector.extract_strided_slice %965 {offsets = [0, 2, 0], sizes = [2, 15, 25], strides = [1, 1, 1]} : vector<2x30x25xf32> to vector<2x15x25xf32>
    %982 = vector.shape_cast %980 : vector<1x25xf32> to vector<1x1x25xf32>
    %983 = vector.broadcast %982 : vector<1x1x25xf32> to vector<2x15x25xf32>
    %984 = arith.mulf %983, %981 : vector<2x15x25xf32>
    %985 = arith.addf %979, %984 : vector<2x15x25xf32>
    %986 = vector.extract_strided_slice %967 {offsets = [3, 0], sizes = [1, 25], strides = [1, 1]} : vector<16x25xf32> to vector<1x25xf32>
    %987 = vector.extract_strided_slice %965 {offsets = [0, 3, 0], sizes = [2, 15, 25], strides = [1, 1, 1]} : vector<2x30x25xf32> to vector<2x15x25xf32>
    %988 = vector.shape_cast %986 : vector<1x25xf32> to vector<1x1x25xf32>
    %989 = vector.broadcast %988 : vector<1x1x25xf32> to vector<2x15x25xf32>
    %990 = arith.mulf %989, %987 : vector<2x15x25xf32>
    %991 = arith.addf %985, %990 : vector<2x15x25xf32>
    %992 = vector.extract_strided_slice %967 {offsets = [4, 0], sizes = [1, 25], strides = [1, 1]} : vector<16x25xf32> to vector<1x25xf32>
    %993 = vector.extract_strided_slice %965 {offsets = [0, 4, 0], sizes = [2, 15, 25], strides = [1, 1, 1]} : vector<2x30x25xf32> to vector<2x15x25xf32>
    %994 = vector.shape_cast %992 : vector<1x25xf32> to vector<1x1x25xf32>
    %995 = vector.broadcast %994 : vector<1x1x25xf32> to vector<2x15x25xf32>
    %996 = arith.mulf %995, %993 : vector<2x15x25xf32>
    %997 = arith.addf %991, %996 : vector<2x15x25xf32>
    %998 = vector.extract_strided_slice %967 {offsets = [5, 0], sizes = [1, 25], strides = [1, 1]} : vector<16x25xf32> to vector<1x25xf32>
    %999 = vector.extract_strided_slice %965 {offsets = [0, 5, 0], sizes = [2, 15, 25], strides = [1, 1, 1]} : vector<2x30x25xf32> to vector<2x15x25xf32>
    %1000 = vector.shape_cast %998 : vector<1x25xf32> to vector<1x1x25xf32>
    %1001 = vector.broadcast %1000 : vector<1x1x25xf32> to vector<2x15x25xf32>
    %1002 = arith.mulf %1001, %999 : vector<2x15x25xf32>
    %1003 = arith.addf %997, %1002 : vector<2x15x25xf32>
    %1004 = vector.extract_strided_slice %967 {offsets = [6, 0], sizes = [1, 25], strides = [1, 1]} : vector<16x25xf32> to vector<1x25xf32>
    %1005 = vector.extract_strided_slice %965 {offsets = [0, 6, 0], sizes = [2, 15, 25], strides = [1, 1, 1]} : vector<2x30x25xf32> to vector<2x15x25xf32>
    %1006 = vector.shape_cast %1004 : vector<1x25xf32> to vector<1x1x25xf32>
    %1007 = vector.broadcast %1006 : vector<1x1x25xf32> to vector<2x15x25xf32>
    %1008 = arith.mulf %1007, %1005 : vector<2x15x25xf32>
    %1009 = arith.addf %1003, %1008 : vector<2x15x25xf32>
    %1010 = vector.extract_strided_slice %967 {offsets = [7, 0], sizes = [1, 25], strides = [1, 1]} : vector<16x25xf32> to vector<1x25xf32>
    %1011 = vector.extract_strided_slice %965 {offsets = [0, 7, 0], sizes = [2, 15, 25], strides = [1, 1, 1]} : vector<2x30x25xf32> to vector<2x15x25xf32>
    %1012 = vector.shape_cast %1010 : vector<1x25xf32> to vector<1x1x25xf32>
    %1013 = vector.broadcast %1012 : vector<1x1x25xf32> to vector<2x15x25xf32>
    %1014 = arith.mulf %1013, %1011 : vector<2x15x25xf32>
    %1015 = arith.addf %1009, %1014 : vector<2x15x25xf32>
    %1016 = vector.extract_strided_slice %967 {offsets = [8, 0], sizes = [1, 25], strides = [1, 1]} : vector<16x25xf32> to vector<1x25xf32>
    %1017 = vector.extract_strided_slice %965 {offsets = [0, 8, 0], sizes = [2, 15, 25], strides = [1, 1, 1]} : vector<2x30x25xf32> to vector<2x15x25xf32>
    %1018 = vector.shape_cast %1016 : vector<1x25xf32> to vector<1x1x25xf32>
    %1019 = vector.broadcast %1018 : vector<1x1x25xf32> to vector<2x15x25xf32>
    %1020 = arith.mulf %1019, %1017 : vector<2x15x25xf32>
    %1021 = arith.addf %1015, %1020 : vector<2x15x25xf32>
    %1022 = vector.extract_strided_slice %967 {offsets = [9, 0], sizes = [1, 25], strides = [1, 1]} : vector<16x25xf32> to vector<1x25xf32>
    %1023 = vector.extract_strided_slice %965 {offsets = [0, 9, 0], sizes = [2, 15, 25], strides = [1, 1, 1]} : vector<2x30x25xf32> to vector<2x15x25xf32>
    %1024 = vector.shape_cast %1022 : vector<1x25xf32> to vector<1x1x25xf32>
    %1025 = vector.broadcast %1024 : vector<1x1x25xf32> to vector<2x15x25xf32>
    %1026 = arith.mulf %1025, %1023 : vector<2x15x25xf32>
    %1027 = arith.addf %1021, %1026 : vector<2x15x25xf32>
    %1028 = vector.extract_strided_slice %967 {offsets = [10, 0], sizes = [1, 25], strides = [1, 1]} : vector<16x25xf32> to vector<1x25xf32>
    %1029 = vector.extract_strided_slice %965 {offsets = [0, 10, 0], sizes = [2, 15, 25], strides = [1, 1, 1]} : vector<2x30x25xf32> to vector<2x15x25xf32>
    %1030 = vector.shape_cast %1028 : vector<1x25xf32> to vector<1x1x25xf32>
    %1031 = vector.broadcast %1030 : vector<1x1x25xf32> to vector<2x15x25xf32>
    %1032 = arith.mulf %1031, %1029 : vector<2x15x25xf32>
    %1033 = arith.addf %1027, %1032 : vector<2x15x25xf32>
    %1034 = vector.extract_strided_slice %967 {offsets = [11, 0], sizes = [1, 25], strides = [1, 1]} : vector<16x25xf32> to vector<1x25xf32>
    %1035 = vector.extract_strided_slice %965 {offsets = [0, 11, 0], sizes = [2, 15, 25], strides = [1, 1, 1]} : vector<2x30x25xf32> to vector<2x15x25xf32>
    %1036 = vector.shape_cast %1034 : vector<1x25xf32> to vector<1x1x25xf32>
    %1037 = vector.broadcast %1036 : vector<1x1x25xf32> to vector<2x15x25xf32>
    %1038 = arith.mulf %1037, %1035 : vector<2x15x25xf32>
    %1039 = arith.addf %1033, %1038 : vector<2x15x25xf32>
    %1040 = vector.extract_strided_slice %967 {offsets = [12, 0], sizes = [1, 25], strides = [1, 1]} : vector<16x25xf32> to vector<1x25xf32>
    %1041 = vector.extract_strided_slice %965 {offsets = [0, 12, 0], sizes = [2, 15, 25], strides = [1, 1, 1]} : vector<2x30x25xf32> to vector<2x15x25xf32>
    %1042 = vector.shape_cast %1040 : vector<1x25xf32> to vector<1x1x25xf32>
    %1043 = vector.broadcast %1042 : vector<1x1x25xf32> to vector<2x15x25xf32>
    %1044 = arith.mulf %1043, %1041 : vector<2x15x25xf32>
    %1045 = arith.addf %1039, %1044 : vector<2x15x25xf32>
    %1046 = vector.extract_strided_slice %967 {offsets = [13, 0], sizes = [1, 25], strides = [1, 1]} : vector<16x25xf32> to vector<1x25xf32>
    %1047 = vector.extract_strided_slice %965 {offsets = [0, 13, 0], sizes = [2, 15, 25], strides = [1, 1, 1]} : vector<2x30x25xf32> to vector<2x15x25xf32>
    %1048 = vector.shape_cast %1046 : vector<1x25xf32> to vector<1x1x25xf32>
    %1049 = vector.broadcast %1048 : vector<1x1x25xf32> to vector<2x15x25xf32>
    %1050 = arith.mulf %1049, %1047 : vector<2x15x25xf32>
    %1051 = arith.addf %1045, %1050 : vector<2x15x25xf32>
    %1052 = vector.extract_strided_slice %967 {offsets = [14, 0], sizes = [1, 25], strides = [1, 1]} : vector<16x25xf32> to vector<1x25xf32>
    %1053 = vector.extract_strided_slice %965 {offsets = [0, 14, 0], sizes = [2, 15, 25], strides = [1, 1, 1]} : vector<2x30x25xf32> to vector<2x15x25xf32>
    %1054 = vector.shape_cast %1052 : vector<1x25xf32> to vector<1x1x25xf32>
    %1055 = vector.broadcast %1054 : vector<1x1x25xf32> to vector<2x15x25xf32>
    %1056 = arith.mulf %1055, %1053 : vector<2x15x25xf32>
    %1057 = arith.addf %1051, %1056 : vector<2x15x25xf32>
    %1058 = vector.extract_strided_slice %967 {offsets = [15, 0], sizes = [1, 25], strides = [1, 1]} : vector<16x25xf32> to vector<1x25xf32>
    %1059 = vector.extract_strided_slice %965 {offsets = [0, 15, 0], sizes = [2, 15, 25], strides = [1, 1, 1]} : vector<2x30x25xf32> to vector<2x15x25xf32>
    %1060 = vector.shape_cast %1058 : vector<1x25xf32> to vector<1x1x25xf32>
    %1061 = vector.broadcast %1060 : vector<1x1x25xf32> to vector<2x15x25xf32>
    %1062 = arith.mulf %1061, %1059 : vector<2x15x25xf32>
    %1063 = arith.addf %1057, %1062 : vector<2x15x25xf32>
    %c0_525 = arith.constant 0 : index
    %c2_526 = arith.constant 2 : index
    %c0_527 = arith.constant 0 : index
    %c0_528 = arith.constant 0 : index
    %1064 = vector.load %arg18[%c0_525, %c2_526, %c0_527, %c0_528] : memref<2x5x30x25xf32, #tpu.memory_space<vmem>>, vector<2x1x30x25xf32>
    %1065 = vector.shape_cast %1064 : vector<2x1x30x25xf32> to vector<2x30x25xf32>
    %c2_529 = arith.constant 2 : index
    %c0_530 = arith.constant 0 : index
    %c0_531 = arith.constant 0 : index
    %1066 = vector.load %arg10[%c2_529, %c0_530, %c0_531] : memref<5x16x25xf32, #tpu.memory_space<vmem>>, vector<1x16x25xf32>
    %1067 = vector.shape_cast %1066 : vector<1x16x25xf32> to vector<16x25xf32>
    %1068 = vector.extract_strided_slice %1067 {offsets = [0, 0], sizes = [1, 25], strides = [1, 1]} : vector<16x25xf32> to vector<1x25xf32>
    %1069 = vector.extract_strided_slice %1065 {offsets = [0, 0, 0], sizes = [2, 15, 25], strides = [1, 1, 1]} : vector<2x30x25xf32> to vector<2x15x25xf32>
    %1070 = vector.shape_cast %1068 : vector<1x25xf32> to vector<1x1x25xf32>
    %1071 = vector.broadcast %1070 : vector<1x1x25xf32> to vector<2x15x25xf32>
    %1072 = arith.mulf %1071, %1069 : vector<2x15x25xf32>
    %1073 = arith.addf %1063, %1072 : vector<2x15x25xf32>
    %1074 = vector.extract_strided_slice %1067 {offsets = [1, 0], sizes = [1, 25], strides = [1, 1]} : vector<16x25xf32> to vector<1x25xf32>
    %1075 = vector.extract_strided_slice %1065 {offsets = [0, 1, 0], sizes = [2, 15, 25], strides = [1, 1, 1]} : vector<2x30x25xf32> to vector<2x15x25xf32>
    %1076 = vector.shape_cast %1074 : vector<1x25xf32> to vector<1x1x25xf32>
    %1077 = vector.broadcast %1076 : vector<1x1x25xf32> to vector<2x15x25xf32>
    %1078 = arith.mulf %1077, %1075 : vector<2x15x25xf32>
    %1079 = arith.addf %1073, %1078 : vector<2x15x25xf32>
    %1080 = vector.extract_strided_slice %1067 {offsets = [2, 0], sizes = [1, 25], strides = [1, 1]} : vector<16x25xf32> to vector<1x25xf32>
    %1081 = vector.extract_strided_slice %1065 {offsets = [0, 2, 0], sizes = [2, 15, 25], strides = [1, 1, 1]} : vector<2x30x25xf32> to vector<2x15x25xf32>
    %1082 = vector.shape_cast %1080 : vector<1x25xf32> to vector<1x1x25xf32>
    %1083 = vector.broadcast %1082 : vector<1x1x25xf32> to vector<2x15x25xf32>
    %1084 = arith.mulf %1083, %1081 : vector<2x15x25xf32>
    %1085 = arith.addf %1079, %1084 : vector<2x15x25xf32>
    %1086 = vector.extract_strided_slice %1067 {offsets = [3, 0], sizes = [1, 25], strides = [1, 1]} : vector<16x25xf32> to vector<1x25xf32>
    %1087 = vector.extract_strided_slice %1065 {offsets = [0, 3, 0], sizes = [2, 15, 25], strides = [1, 1, 1]} : vector<2x30x25xf32> to vector<2x15x25xf32>
    %1088 = vector.shape_cast %1086 : vector<1x25xf32> to vector<1x1x25xf32>
    %1089 = vector.broadcast %1088 : vector<1x1x25xf32> to vector<2x15x25xf32>
    %1090 = arith.mulf %1089, %1087 : vector<2x15x25xf32>
    %1091 = arith.addf %1085, %1090 : vector<2x15x25xf32>
    %1092 = vector.extract_strided_slice %1067 {offsets = [4, 0], sizes = [1, 25], strides = [1, 1]} : vector<16x25xf32> to vector<1x25xf32>
    %1093 = vector.extract_strided_slice %1065 {offsets = [0, 4, 0], sizes = [2, 15, 25], strides = [1, 1, 1]} : vector<2x30x25xf32> to vector<2x15x25xf32>
    %1094 = vector.shape_cast %1092 : vector<1x25xf32> to vector<1x1x25xf32>
    %1095 = vector.broadcast %1094 : vector<1x1x25xf32> to vector<2x15x25xf32>
    %1096 = arith.mulf %1095, %1093 : vector<2x15x25xf32>
    %1097 = arith.addf %1091, %1096 : vector<2x15x25xf32>
    %1098 = vector.extract_strided_slice %1067 {offsets = [5, 0], sizes = [1, 25], strides = [1, 1]} : vector<16x25xf32> to vector<1x25xf32>
    %1099 = vector.extract_strided_slice %1065 {offsets = [0, 5, 0], sizes = [2, 15, 25], strides = [1, 1, 1]} : vector<2x30x25xf32> to vector<2x15x25xf32>
    %1100 = vector.shape_cast %1098 : vector<1x25xf32> to vector<1x1x25xf32>
    %1101 = vector.broadcast %1100 : vector<1x1x25xf32> to vector<2x15x25xf32>
    %1102 = arith.mulf %1101, %1099 : vector<2x15x25xf32>
    %1103 = arith.addf %1097, %1102 : vector<2x15x25xf32>
    %1104 = vector.extract_strided_slice %1067 {offsets = [6, 0], sizes = [1, 25], strides = [1, 1]} : vector<16x25xf32> to vector<1x25xf32>
    %1105 = vector.extract_strided_slice %1065 {offsets = [0, 6, 0], sizes = [2, 15, 25], strides = [1, 1, 1]} : vector<2x30x25xf32> to vector<2x15x25xf32>
    %1106 = vector.shape_cast %1104 : vector<1x25xf32> to vector<1x1x25xf32>
    %1107 = vector.broadcast %1106 : vector<1x1x25xf32> to vector<2x15x25xf32>
    %1108 = arith.mulf %1107, %1105 : vector<2x15x25xf32>
    %1109 = arith.addf %1103, %1108 : vector<2x15x25xf32>
    %1110 = vector.extract_strided_slice %1067 {offsets = [7, 0], sizes = [1, 25], strides = [1, 1]} : vector<16x25xf32> to vector<1x25xf32>
    %1111 = vector.extract_strided_slice %1065 {offsets = [0, 7, 0], sizes = [2, 15, 25], strides = [1, 1, 1]} : vector<2x30x25xf32> to vector<2x15x25xf32>
    %1112 = vector.shape_cast %1110 : vector<1x25xf32> to vector<1x1x25xf32>
    %1113 = vector.broadcast %1112 : vector<1x1x25xf32> to vector<2x15x25xf32>
    %1114 = arith.mulf %1113, %1111 : vector<2x15x25xf32>
    %1115 = arith.addf %1109, %1114 : vector<2x15x25xf32>
    %1116 = vector.extract_strided_slice %1067 {offsets = [8, 0], sizes = [1, 25], strides = [1, 1]} : vector<16x25xf32> to vector<1x25xf32>
    %1117 = vector.extract_strided_slice %1065 {offsets = [0, 8, 0], sizes = [2, 15, 25], strides = [1, 1, 1]} : vector<2x30x25xf32> to vector<2x15x25xf32>
    %1118 = vector.shape_cast %1116 : vector<1x25xf32> to vector<1x1x25xf32>
    %1119 = vector.broadcast %1118 : vector<1x1x25xf32> to vector<2x15x25xf32>
    %1120 = arith.mulf %1119, %1117 : vector<2x15x25xf32>
    %1121 = arith.addf %1115, %1120 : vector<2x15x25xf32>
    %1122 = vector.extract_strided_slice %1067 {offsets = [9, 0], sizes = [1, 25], strides = [1, 1]} : vector<16x25xf32> to vector<1x25xf32>
    %1123 = vector.extract_strided_slice %1065 {offsets = [0, 9, 0], sizes = [2, 15, 25], strides = [1, 1, 1]} : vector<2x30x25xf32> to vector<2x15x25xf32>
    %1124 = vector.shape_cast %1122 : vector<1x25xf32> to vector<1x1x25xf32>
    %1125 = vector.broadcast %1124 : vector<1x1x25xf32> to vector<2x15x25xf32>
    %1126 = arith.mulf %1125, %1123 : vector<2x15x25xf32>
    %1127 = arith.addf %1121, %1126 : vector<2x15x25xf32>
    %1128 = vector.extract_strided_slice %1067 {offsets = [10, 0], sizes = [1, 25], strides = [1, 1]} : vector<16x25xf32> to vector<1x25xf32>
    %1129 = vector.extract_strided_slice %1065 {offsets = [0, 10, 0], sizes = [2, 15, 25], strides = [1, 1, 1]} : vector<2x30x25xf32> to vector<2x15x25xf32>
    %1130 = vector.shape_cast %1128 : vector<1x25xf32> to vector<1x1x25xf32>
    %1131 = vector.broadcast %1130 : vector<1x1x25xf32> to vector<2x15x25xf32>
    %1132 = arith.mulf %1131, %1129 : vector<2x15x25xf32>
    %1133 = arith.addf %1127, %1132 : vector<2x15x25xf32>
    %1134 = vector.extract_strided_slice %1067 {offsets = [11, 0], sizes = [1, 25], strides = [1, 1]} : vector<16x25xf32> to vector<1x25xf32>
    %1135 = vector.extract_strided_slice %1065 {offsets = [0, 11, 0], sizes = [2, 15, 25], strides = [1, 1, 1]} : vector<2x30x25xf32> to vector<2x15x25xf32>
    %1136 = vector.shape_cast %1134 : vector<1x25xf32> to vector<1x1x25xf32>
    %1137 = vector.broadcast %1136 : vector<1x1x25xf32> to vector<2x15x25xf32>
    %1138 = arith.mulf %1137, %1135 : vector<2x15x25xf32>
    %1139 = arith.addf %1133, %1138 : vector<2x15x25xf32>
    %1140 = vector.extract_strided_slice %1067 {offsets = [12, 0], sizes = [1, 25], strides = [1, 1]} : vector<16x25xf32> to vector<1x25xf32>
    %1141 = vector.extract_strided_slice %1065 {offsets = [0, 12, 0], sizes = [2, 15, 25], strides = [1, 1, 1]} : vector<2x30x25xf32> to vector<2x15x25xf32>
    %1142 = vector.shape_cast %1140 : vector<1x25xf32> to vector<1x1x25xf32>
    %1143 = vector.broadcast %1142 : vector<1x1x25xf32> to vector<2x15x25xf32>
    %1144 = arith.mulf %1143, %1141 : vector<2x15x25xf32>
    %1145 = arith.addf %1139, %1144 : vector<2x15x25xf32>
    %1146 = vector.extract_strided_slice %1067 {offsets = [13, 0], sizes = [1, 25], strides = [1, 1]} : vector<16x25xf32> to vector<1x25xf32>
    %1147 = vector.extract_strided_slice %1065 {offsets = [0, 13, 0], sizes = [2, 15, 25], strides = [1, 1, 1]} : vector<2x30x25xf32> to vector<2x15x25xf32>
    %1148 = vector.shape_cast %1146 : vector<1x25xf32> to vector<1x1x25xf32>
    %1149 = vector.broadcast %1148 : vector<1x1x25xf32> to vector<2x15x25xf32>
    %1150 = arith.mulf %1149, %1147 : vector<2x15x25xf32>
    %1151 = arith.addf %1145, %1150 : vector<2x15x25xf32>
    %1152 = vector.extract_strided_slice %1067 {offsets = [14, 0], sizes = [1, 25], strides = [1, 1]} : vector<16x25xf32> to vector<1x25xf32>
    %1153 = vector.extract_strided_slice %1065 {offsets = [0, 14, 0], sizes = [2, 15, 25], strides = [1, 1, 1]} : vector<2x30x25xf32> to vector<2x15x25xf32>
    %1154 = vector.shape_cast %1152 : vector<1x25xf32> to vector<1x1x25xf32>
    %1155 = vector.broadcast %1154 : vector<1x1x25xf32> to vector<2x15x25xf32>
    %1156 = arith.mulf %1155, %1153 : vector<2x15x25xf32>
    %1157 = arith.addf %1151, %1156 : vector<2x15x25xf32>
    %1158 = vector.extract_strided_slice %1067 {offsets = [15, 0], sizes = [1, 25], strides = [1, 1]} : vector<16x25xf32> to vector<1x25xf32>
    %1159 = vector.extract_strided_slice %1065 {offsets = [0, 15, 0], sizes = [2, 15, 25], strides = [1, 1, 1]} : vector<2x30x25xf32> to vector<2x15x25xf32>
    %1160 = vector.shape_cast %1158 : vector<1x25xf32> to vector<1x1x25xf32>
    %1161 = vector.broadcast %1160 : vector<1x1x25xf32> to vector<2x15x25xf32>
    %1162 = arith.mulf %1161, %1159 : vector<2x15x25xf32>
    %1163 = arith.addf %1157, %1162 : vector<2x15x25xf32>
    %c0_532 = arith.constant 0 : index
    %c3_533 = arith.constant 3 : index
    %c0_534 = arith.constant 0 : index
    %c0_535 = arith.constant 0 : index
    %1164 = vector.load %arg18[%c0_532, %c3_533, %c0_534, %c0_535] : memref<2x5x30x25xf32, #tpu.memory_space<vmem>>, vector<2x1x30x25xf32>
    %1165 = vector.shape_cast %1164 : vector<2x1x30x25xf32> to vector<2x30x25xf32>
    %c3_536 = arith.constant 3 : index
    %c0_537 = arith.constant 0 : index
    %c0_538 = arith.constant 0 : index
    %1166 = vector.load %arg10[%c3_536, %c0_537, %c0_538] : memref<5x16x25xf32, #tpu.memory_space<vmem>>, vector<1x16x25xf32>
    %1167 = vector.shape_cast %1166 : vector<1x16x25xf32> to vector<16x25xf32>
    %1168 = vector.extract_strided_slice %1167 {offsets = [0, 0], sizes = [1, 25], strides = [1, 1]} : vector<16x25xf32> to vector<1x25xf32>
    %1169 = vector.extract_strided_slice %1165 {offsets = [0, 0, 0], sizes = [2, 15, 25], strides = [1, 1, 1]} : vector<2x30x25xf32> to vector<2x15x25xf32>
    %1170 = vector.shape_cast %1168 : vector<1x25xf32> to vector<1x1x25xf32>
    %1171 = vector.broadcast %1170 : vector<1x1x25xf32> to vector<2x15x25xf32>
    %1172 = arith.mulf %1171, %1169 : vector<2x15x25xf32>
    %1173 = arith.addf %1163, %1172 : vector<2x15x25xf32>
    %1174 = vector.extract_strided_slice %1167 {offsets = [1, 0], sizes = [1, 25], strides = [1, 1]} : vector<16x25xf32> to vector<1x25xf32>
    %1175 = vector.extract_strided_slice %1165 {offsets = [0, 1, 0], sizes = [2, 15, 25], strides = [1, 1, 1]} : vector<2x30x25xf32> to vector<2x15x25xf32>
    %1176 = vector.shape_cast %1174 : vector<1x25xf32> to vector<1x1x25xf32>
    %1177 = vector.broadcast %1176 : vector<1x1x25xf32> to vector<2x15x25xf32>
    %1178 = arith.mulf %1177, %1175 : vector<2x15x25xf32>
    %1179 = arith.addf %1173, %1178 : vector<2x15x25xf32>
    %1180 = vector.extract_strided_slice %1167 {offsets = [2, 0], sizes = [1, 25], strides = [1, 1]} : vector<16x25xf32> to vector<1x25xf32>
    %1181 = vector.extract_strided_slice %1165 {offsets = [0, 2, 0], sizes = [2, 15, 25], strides = [1, 1, 1]} : vector<2x30x25xf32> to vector<2x15x25xf32>
    %1182 = vector.shape_cast %1180 : vector<1x25xf32> to vector<1x1x25xf32>
    %1183 = vector.broadcast %1182 : vector<1x1x25xf32> to vector<2x15x25xf32>
    %1184 = arith.mulf %1183, %1181 : vector<2x15x25xf32>
    %1185 = arith.addf %1179, %1184 : vector<2x15x25xf32>
    %1186 = vector.extract_strided_slice %1167 {offsets = [3, 0], sizes = [1, 25], strides = [1, 1]} : vector<16x25xf32> to vector<1x25xf32>
    %1187 = vector.extract_strided_slice %1165 {offsets = [0, 3, 0], sizes = [2, 15, 25], strides = [1, 1, 1]} : vector<2x30x25xf32> to vector<2x15x25xf32>
    %1188 = vector.shape_cast %1186 : vector<1x25xf32> to vector<1x1x25xf32>
    %1189 = vector.broadcast %1188 : vector<1x1x25xf32> to vector<2x15x25xf32>
    %1190 = arith.mulf %1189, %1187 : vector<2x15x25xf32>
    %1191 = arith.addf %1185, %1190 : vector<2x15x25xf32>
    %1192 = vector.extract_strided_slice %1167 {offsets = [4, 0], sizes = [1, 25], strides = [1, 1]} : vector<16x25xf32> to vector<1x25xf32>
    %1193 = vector.extract_strided_slice %1165 {offsets = [0, 4, 0], sizes = [2, 15, 25], strides = [1, 1, 1]} : vector<2x30x25xf32> to vector<2x15x25xf32>
    %1194 = vector.shape_cast %1192 : vector<1x25xf32> to vector<1x1x25xf32>
    %1195 = vector.broadcast %1194 : vector<1x1x25xf32> to vector<2x15x25xf32>
    %1196 = arith.mulf %1195, %1193 : vector<2x15x25xf32>
    %1197 = arith.addf %1191, %1196 : vector<2x15x25xf32>
    %1198 = vector.extract_strided_slice %1167 {offsets = [5, 0], sizes = [1, 25], strides = [1, 1]} : vector<16x25xf32> to vector<1x25xf32>
    %1199 = vector.extract_strided_slice %1165 {offsets = [0, 5, 0], sizes = [2, 15, 25], strides = [1, 1, 1]} : vector<2x30x25xf32> to vector<2x15x25xf32>
    %1200 = vector.shape_cast %1198 : vector<1x25xf32> to vector<1x1x25xf32>
    %1201 = vector.broadcast %1200 : vector<1x1x25xf32> to vector<2x15x25xf32>
    %1202 = arith.mulf %1201, %1199 : vector<2x15x25xf32>
    %1203 = arith.addf %1197, %1202 : vector<2x15x25xf32>
    %1204 = vector.extract_strided_slice %1167 {offsets = [6, 0], sizes = [1, 25], strides = [1, 1]} : vector<16x25xf32> to vector<1x25xf32>
    %1205 = vector.extract_strided_slice %1165 {offsets = [0, 6, 0], sizes = [2, 15, 25], strides = [1, 1, 1]} : vector<2x30x25xf32> to vector<2x15x25xf32>
    %1206 = vector.shape_cast %1204 : vector<1x25xf32> to vector<1x1x25xf32>
    %1207 = vector.broadcast %1206 : vector<1x1x25xf32> to vector<2x15x25xf32>
    %1208 = arith.mulf %1207, %1205 : vector<2x15x25xf32>
    %1209 = arith.addf %1203, %1208 : vector<2x15x25xf32>
    %1210 = vector.extract_strided_slice %1167 {offsets = [7, 0], sizes = [1, 25], strides = [1, 1]} : vector<16x25xf32> to vector<1x25xf32>
    %1211 = vector.extract_strided_slice %1165 {offsets = [0, 7, 0], sizes = [2, 15, 25], strides = [1, 1, 1]} : vector<2x30x25xf32> to vector<2x15x25xf32>
    %1212 = vector.shape_cast %1210 : vector<1x25xf32> to vector<1x1x25xf32>
    %1213 = vector.broadcast %1212 : vector<1x1x25xf32> to vector<2x15x25xf32>
    %1214 = arith.mulf %1213, %1211 : vector<2x15x25xf32>
    %1215 = arith.addf %1209, %1214 : vector<2x15x25xf32>
    %1216 = vector.extract_strided_slice %1167 {offsets = [8, 0], sizes = [1, 25], strides = [1, 1]} : vector<16x25xf32> to vector<1x25xf32>
    %1217 = vector.extract_strided_slice %1165 {offsets = [0, 8, 0], sizes = [2, 15, 25], strides = [1, 1, 1]} : vector<2x30x25xf32> to vector<2x15x25xf32>
    %1218 = vector.shape_cast %1216 : vector<1x25xf32> to vector<1x1x25xf32>
    %1219 = vector.broadcast %1218 : vector<1x1x25xf32> to vector<2x15x25xf32>
    %1220 = arith.mulf %1219, %1217 : vector<2x15x25xf32>
    %1221 = arith.addf %1215, %1220 : vector<2x15x25xf32>
    %1222 = vector.extract_strided_slice %1167 {offsets = [9, 0], sizes = [1, 25], strides = [1, 1]} : vector<16x25xf32> to vector<1x25xf32>
    %1223 = vector.extract_strided_slice %1165 {offsets = [0, 9, 0], sizes = [2, 15, 25], strides = [1, 1, 1]} : vector<2x30x25xf32> to vector<2x15x25xf32>
    %1224 = vector.shape_cast %1222 : vector<1x25xf32> to vector<1x1x25xf32>
    %1225 = vector.broadcast %1224 : vector<1x1x25xf32> to vector<2x15x25xf32>
    %1226 = arith.mulf %1225, %1223 : vector<2x15x25xf32>
    %1227 = arith.addf %1221, %1226 : vector<2x15x25xf32>
    %1228 = vector.extract_strided_slice %1167 {offsets = [10, 0], sizes = [1, 25], strides = [1, 1]} : vector<16x25xf32> to vector<1x25xf32>
    %1229 = vector.extract_strided_slice %1165 {offsets = [0, 10, 0], sizes = [2, 15, 25], strides = [1, 1, 1]} : vector<2x30x25xf32> to vector<2x15x25xf32>
    %1230 = vector.shape_cast %1228 : vector<1x25xf32> to vector<1x1x25xf32>
    %1231 = vector.broadcast %1230 : vector<1x1x25xf32> to vector<2x15x25xf32>
    %1232 = arith.mulf %1231, %1229 : vector<2x15x25xf32>
    %1233 = arith.addf %1227, %1232 : vector<2x15x25xf32>
    %1234 = vector.extract_strided_slice %1167 {offsets = [11, 0], sizes = [1, 25], strides = [1, 1]} : vector<16x25xf32> to vector<1x25xf32>
    %1235 = vector.extract_strided_slice %1165 {offsets = [0, 11, 0], sizes = [2, 15, 25], strides = [1, 1, 1]} : vector<2x30x25xf32> to vector<2x15x25xf32>
    %1236 = vector.shape_cast %1234 : vector<1x25xf32> to vector<1x1x25xf32>
    %1237 = vector.broadcast %1236 : vector<1x1x25xf32> to vector<2x15x25xf32>
    %1238 = arith.mulf %1237, %1235 : vector<2x15x25xf32>
    %1239 = arith.addf %1233, %1238 : vector<2x15x25xf32>
    %1240 = vector.extract_strided_slice %1167 {offsets = [12, 0], sizes = [1, 25], strides = [1, 1]} : vector<16x25xf32> to vector<1x25xf32>
    %1241 = vector.extract_strided_slice %1165 {offsets = [0, 12, 0], sizes = [2, 15, 25], strides = [1, 1, 1]} : vector<2x30x25xf32> to vector<2x15x25xf32>
    %1242 = vector.shape_cast %1240 : vector<1x25xf32> to vector<1x1x25xf32>
    %1243 = vector.broadcast %1242 : vector<1x1x25xf32> to vector<2x15x25xf32>
    %1244 = arith.mulf %1243, %1241 : vector<2x15x25xf32>
    %1245 = arith.addf %1239, %1244 : vector<2x15x25xf32>
    %1246 = vector.extract_strided_slice %1167 {offsets = [13, 0], sizes = [1, 25], strides = [1, 1]} : vector<16x25xf32> to vector<1x25xf32>
    %1247 = vector.extract_strided_slice %1165 {offsets = [0, 13, 0], sizes = [2, 15, 25], strides = [1, 1, 1]} : vector<2x30x25xf32> to vector<2x15x25xf32>
    %1248 = vector.shape_cast %1246 : vector<1x25xf32> to vector<1x1x25xf32>
    %1249 = vector.broadcast %1248 : vector<1x1x25xf32> to vector<2x15x25xf32>
    %1250 = arith.mulf %1249, %1247 : vector<2x15x25xf32>
    %1251 = arith.addf %1245, %1250 : vector<2x15x25xf32>
    %1252 = vector.extract_strided_slice %1167 {offsets = [14, 0], sizes = [1, 25], strides = [1, 1]} : vector<16x25xf32> to vector<1x25xf32>
    %1253 = vector.extract_strided_slice %1165 {offsets = [0, 14, 0], sizes = [2, 15, 25], strides = [1, 1, 1]} : vector<2x30x25xf32> to vector<2x15x25xf32>
    %1254 = vector.shape_cast %1252 : vector<1x25xf32> to vector<1x1x25xf32>
    %1255 = vector.broadcast %1254 : vector<1x1x25xf32> to vector<2x15x25xf32>
    %1256 = arith.mulf %1255, %1253 : vector<2x15x25xf32>
    %1257 = arith.addf %1251, %1256 : vector<2x15x25xf32>
    %1258 = vector.extract_strided_slice %1167 {offsets = [15, 0], sizes = [1, 25], strides = [1, 1]} : vector<16x25xf32> to vector<1x25xf32>
    %1259 = vector.extract_strided_slice %1165 {offsets = [0, 15, 0], sizes = [2, 15, 25], strides = [1, 1, 1]} : vector<2x30x25xf32> to vector<2x15x25xf32>
    %1260 = vector.shape_cast %1258 : vector<1x25xf32> to vector<1x1x25xf32>
    %1261 = vector.broadcast %1260 : vector<1x1x25xf32> to vector<2x15x25xf32>
    %1262 = arith.mulf %1261, %1259 : vector<2x15x25xf32>
    %1263 = arith.addf %1257, %1262 : vector<2x15x25xf32>
    %c0_539 = arith.constant 0 : index
    %c4_540 = arith.constant 4 : index
    %c0_541 = arith.constant 0 : index
    %c0_542 = arith.constant 0 : index
    %1264 = vector.load %arg18[%c0_539, %c4_540, %c0_541, %c0_542] : memref<2x5x30x25xf32, #tpu.memory_space<vmem>>, vector<2x1x30x25xf32>
    %1265 = vector.shape_cast %1264 : vector<2x1x30x25xf32> to vector<2x30x25xf32>
    %c4_543 = arith.constant 4 : index
    %c0_544 = arith.constant 0 : index
    %c0_545 = arith.constant 0 : index
    %1266 = vector.load %arg10[%c4_543, %c0_544, %c0_545] : memref<5x16x25xf32, #tpu.memory_space<vmem>>, vector<1x16x25xf32>
    %1267 = vector.shape_cast %1266 : vector<1x16x25xf32> to vector<16x25xf32>
    %1268 = vector.extract_strided_slice %1267 {offsets = [0, 0], sizes = [1, 25], strides = [1, 1]} : vector<16x25xf32> to vector<1x25xf32>
    %1269 = vector.extract_strided_slice %1265 {offsets = [0, 0, 0], sizes = [2, 15, 25], strides = [1, 1, 1]} : vector<2x30x25xf32> to vector<2x15x25xf32>
    %1270 = vector.shape_cast %1268 : vector<1x25xf32> to vector<1x1x25xf32>
    %1271 = vector.broadcast %1270 : vector<1x1x25xf32> to vector<2x15x25xf32>
    %1272 = arith.mulf %1271, %1269 : vector<2x15x25xf32>
    %1273 = arith.addf %1263, %1272 : vector<2x15x25xf32>
    %1274 = vector.extract_strided_slice %1267 {offsets = [1, 0], sizes = [1, 25], strides = [1, 1]} : vector<16x25xf32> to vector<1x25xf32>
    %1275 = vector.extract_strided_slice %1265 {offsets = [0, 1, 0], sizes = [2, 15, 25], strides = [1, 1, 1]} : vector<2x30x25xf32> to vector<2x15x25xf32>
    %1276 = vector.shape_cast %1274 : vector<1x25xf32> to vector<1x1x25xf32>
    %1277 = vector.broadcast %1276 : vector<1x1x25xf32> to vector<2x15x25xf32>
    %1278 = arith.mulf %1277, %1275 : vector<2x15x25xf32>
    %1279 = arith.addf %1273, %1278 : vector<2x15x25xf32>
    %1280 = vector.extract_strided_slice %1267 {offsets = [2, 0], sizes = [1, 25], strides = [1, 1]} : vector<16x25xf32> to vector<1x25xf32>
    %1281 = vector.extract_strided_slice %1265 {offsets = [0, 2, 0], sizes = [2, 15, 25], strides = [1, 1, 1]} : vector<2x30x25xf32> to vector<2x15x25xf32>
    %1282 = vector.shape_cast %1280 : vector<1x25xf32> to vector<1x1x25xf32>
    %1283 = vector.broadcast %1282 : vector<1x1x25xf32> to vector<2x15x25xf32>
    %1284 = arith.mulf %1283, %1281 : vector<2x15x25xf32>
    %1285 = arith.addf %1279, %1284 : vector<2x15x25xf32>
    %1286 = vector.extract_strided_slice %1267 {offsets = [3, 0], sizes = [1, 25], strides = [1, 1]} : vector<16x25xf32> to vector<1x25xf32>
    %1287 = vector.extract_strided_slice %1265 {offsets = [0, 3, 0], sizes = [2, 15, 25], strides = [1, 1, 1]} : vector<2x30x25xf32> to vector<2x15x25xf32>
    %1288 = vector.shape_cast %1286 : vector<1x25xf32> to vector<1x1x25xf32>
    %1289 = vector.broadcast %1288 : vector<1x1x25xf32> to vector<2x15x25xf32>
    %1290 = arith.mulf %1289, %1287 : vector<2x15x25xf32>
    %1291 = arith.addf %1285, %1290 : vector<2x15x25xf32>
    %1292 = vector.extract_strided_slice %1267 {offsets = [4, 0], sizes = [1, 25], strides = [1, 1]} : vector<16x25xf32> to vector<1x25xf32>
    %1293 = vector.extract_strided_slice %1265 {offsets = [0, 4, 0], sizes = [2, 15, 25], strides = [1, 1, 1]} : vector<2x30x25xf32> to vector<2x15x25xf32>
    %1294 = vector.shape_cast %1292 : vector<1x25xf32> to vector<1x1x25xf32>
    %1295 = vector.broadcast %1294 : vector<1x1x25xf32> to vector<2x15x25xf32>
    %1296 = arith.mulf %1295, %1293 : vector<2x15x25xf32>
    %1297 = arith.addf %1291, %1296 : vector<2x15x25xf32>
    %1298 = vector.extract_strided_slice %1267 {offsets = [5, 0], sizes = [1, 25], strides = [1, 1]} : vector<16x25xf32> to vector<1x25xf32>
    %1299 = vector.extract_strided_slice %1265 {offsets = [0, 5, 0], sizes = [2, 15, 25], strides = [1, 1, 1]} : vector<2x30x25xf32> to vector<2x15x25xf32>
    %1300 = vector.shape_cast %1298 : vector<1x25xf32> to vector<1x1x25xf32>
    %1301 = vector.broadcast %1300 : vector<1x1x25xf32> to vector<2x15x25xf32>
    %1302 = arith.mulf %1301, %1299 : vector<2x15x25xf32>
    %1303 = arith.addf %1297, %1302 : vector<2x15x25xf32>
    %1304 = vector.extract_strided_slice %1267 {offsets = [6, 0], sizes = [1, 25], strides = [1, 1]} : vector<16x25xf32> to vector<1x25xf32>
    %1305 = vector.extract_strided_slice %1265 {offsets = [0, 6, 0], sizes = [2, 15, 25], strides = [1, 1, 1]} : vector<2x30x25xf32> to vector<2x15x25xf32>
    %1306 = vector.shape_cast %1304 : vector<1x25xf32> to vector<1x1x25xf32>
    %1307 = vector.broadcast %1306 : vector<1x1x25xf32> to vector<2x15x25xf32>
    %1308 = arith.mulf %1307, %1305 : vector<2x15x25xf32>
    %1309 = arith.addf %1303, %1308 : vector<2x15x25xf32>
    %1310 = vector.extract_strided_slice %1267 {offsets = [7, 0], sizes = [1, 25], strides = [1, 1]} : vector<16x25xf32> to vector<1x25xf32>
    %1311 = vector.extract_strided_slice %1265 {offsets = [0, 7, 0], sizes = [2, 15, 25], strides = [1, 1, 1]} : vector<2x30x25xf32> to vector<2x15x25xf32>
    %1312 = vector.shape_cast %1310 : vector<1x25xf32> to vector<1x1x25xf32>
    %1313 = vector.broadcast %1312 : vector<1x1x25xf32> to vector<2x15x25xf32>
    %1314 = arith.mulf %1313, %1311 : vector<2x15x25xf32>
    %1315 = arith.addf %1309, %1314 : vector<2x15x25xf32>
    %1316 = vector.extract_strided_slice %1267 {offsets = [8, 0], sizes = [1, 25], strides = [1, 1]} : vector<16x25xf32> to vector<1x25xf32>
    %1317 = vector.extract_strided_slice %1265 {offsets = [0, 8, 0], sizes = [2, 15, 25], strides = [1, 1, 1]} : vector<2x30x25xf32> to vector<2x15x25xf32>
    %1318 = vector.shape_cast %1316 : vector<1x25xf32> to vector<1x1x25xf32>
    %1319 = vector.broadcast %1318 : vector<1x1x25xf32> to vector<2x15x25xf32>
    %1320 = arith.mulf %1319, %1317 : vector<2x15x25xf32>
    %1321 = arith.addf %1315, %1320 : vector<2x15x25xf32>
    %1322 = vector.extract_strided_slice %1267 {offsets = [9, 0], sizes = [1, 25], strides = [1, 1]} : vector<16x25xf32> to vector<1x25xf32>
    %1323 = vector.extract_strided_slice %1265 {offsets = [0, 9, 0], sizes = [2, 15, 25], strides = [1, 1, 1]} : vector<2x30x25xf32> to vector<2x15x25xf32>
    %1324 = vector.shape_cast %1322 : vector<1x25xf32> to vector<1x1x25xf32>
    %1325 = vector.broadcast %1324 : vector<1x1x25xf32> to vector<2x15x25xf32>
    %1326 = arith.mulf %1325, %1323 : vector<2x15x25xf32>
    %1327 = arith.addf %1321, %1326 : vector<2x15x25xf32>
    %1328 = vector.extract_strided_slice %1267 {offsets = [10, 0], sizes = [1, 25], strides = [1, 1]} : vector<16x25xf32> to vector<1x25xf32>
    %1329 = vector.extract_strided_slice %1265 {offsets = [0, 10, 0], sizes = [2, 15, 25], strides = [1, 1, 1]} : vector<2x30x25xf32> to vector<2x15x25xf32>
    %1330 = vector.shape_cast %1328 : vector<1x25xf32> to vector<1x1x25xf32>
    %1331 = vector.broadcast %1330 : vector<1x1x25xf32> to vector<2x15x25xf32>
    %1332 = arith.mulf %1331, %1329 : vector<2x15x25xf32>
    %1333 = arith.addf %1327, %1332 : vector<2x15x25xf32>
    %1334 = vector.extract_strided_slice %1267 {offsets = [11, 0], sizes = [1, 25], strides = [1, 1]} : vector<16x25xf32> to vector<1x25xf32>
    %1335 = vector.extract_strided_slice %1265 {offsets = [0, 11, 0], sizes = [2, 15, 25], strides = [1, 1, 1]} : vector<2x30x25xf32> to vector<2x15x25xf32>
    %1336 = vector.shape_cast %1334 : vector<1x25xf32> to vector<1x1x25xf32>
    %1337 = vector.broadcast %1336 : vector<1x1x25xf32> to vector<2x15x25xf32>
    %1338 = arith.mulf %1337, %1335 : vector<2x15x25xf32>
    %1339 = arith.addf %1333, %1338 : vector<2x15x25xf32>
    %1340 = vector.extract_strided_slice %1267 {offsets = [12, 0], sizes = [1, 25], strides = [1, 1]} : vector<16x25xf32> to vector<1x25xf32>
    %1341 = vector.extract_strided_slice %1265 {offsets = [0, 12, 0], sizes = [2, 15, 25], strides = [1, 1, 1]} : vector<2x30x25xf32> to vector<2x15x25xf32>
    %1342 = vector.shape_cast %1340 : vector<1x25xf32> to vector<1x1x25xf32>
    %1343 = vector.broadcast %1342 : vector<1x1x25xf32> to vector<2x15x25xf32>
    %1344 = arith.mulf %1343, %1341 : vector<2x15x25xf32>
    %1345 = arith.addf %1339, %1344 : vector<2x15x25xf32>
    %1346 = vector.extract_strided_slice %1267 {offsets = [13, 0], sizes = [1, 25], strides = [1, 1]} : vector<16x25xf32> to vector<1x25xf32>
    %1347 = vector.extract_strided_slice %1265 {offsets = [0, 13, 0], sizes = [2, 15, 25], strides = [1, 1, 1]} : vector<2x30x25xf32> to vector<2x15x25xf32>
    %1348 = vector.shape_cast %1346 : vector<1x25xf32> to vector<1x1x25xf32>
    %1349 = vector.broadcast %1348 : vector<1x1x25xf32> to vector<2x15x25xf32>
    %1350 = arith.mulf %1349, %1347 : vector<2x15x25xf32>
    %1351 = arith.addf %1345, %1350 : vector<2x15x25xf32>
    %1352 = vector.extract_strided_slice %1267 {offsets = [14, 0], sizes = [1, 25], strides = [1, 1]} : vector<16x25xf32> to vector<1x25xf32>
    %1353 = vector.extract_strided_slice %1265 {offsets = [0, 14, 0], sizes = [2, 15, 25], strides = [1, 1, 1]} : vector<2x30x25xf32> to vector<2x15x25xf32>
    %1354 = vector.shape_cast %1352 : vector<1x25xf32> to vector<1x1x25xf32>
    %1355 = vector.broadcast %1354 : vector<1x1x25xf32> to vector<2x15x25xf32>
    %1356 = arith.mulf %1355, %1353 : vector<2x15x25xf32>
    %1357 = arith.addf %1351, %1356 : vector<2x15x25xf32>
    %1358 = vector.extract_strided_slice %1267 {offsets = [15, 0], sizes = [1, 25], strides = [1, 1]} : vector<16x25xf32> to vector<1x25xf32>
    %1359 = vector.extract_strided_slice %1265 {offsets = [0, 15, 0], sizes = [2, 15, 25], strides = [1, 1, 1]} : vector<2x30x25xf32> to vector<2x15x25xf32>
    %1360 = vector.shape_cast %1358 : vector<1x25xf32> to vector<1x1x25xf32>
    %1361 = vector.broadcast %1360 : vector<1x1x25xf32> to vector<2x15x25xf32>
    %1362 = arith.mulf %1361, %1359 : vector<2x15x25xf32>
    %1363 = arith.addf %1357, %1362 : vector<2x15x25xf32>
    %c20_546 = arith.constant 20 : index
    %1364 = memref.load %arg0[%c20_546] : memref<22xf32, #tpu.memory_space<smem>>
    %1365 = vector.broadcast %1364 : f32 to vector<2x15x25xf32>
    %1366 = arith.mulf %1363, %1365 : vector<2x15x25xf32>
    %c21_547 = arith.constant 21 : index
    %1367 = memref.load %arg0[%c21_547] : memref<22xf32, #tpu.memory_space<smem>>
    %1368 = vector.broadcast %1367 : f32 to vector<2x15x25xf32>
    %1369 = arith.addf %1366, %1368 : vector<2x15x25xf32>
    %cst_548 = arith.constant 0.000000e+00 : f32
    %1370 = vector.broadcast %cst_548 : f32 to vector<2x15x25xf32>
    %1371 = arith.cmpf ogt, %1369, %1370 : vector<2x15x25xf32>
    %cst_549 = arith.constant 0.000000e+00 : f32
    %1372 = vector.broadcast %cst_549 : f32 to vector<2x15x25xf32>
    %1373 = arith.minimumf %1369, %1372 : vector<2x15x25xf32>
    %1374 = math.exp %1373 : vector<2x15x25xf32>
    %cst_550 = arith.constant 1.000000e+00 : f32
    %1375 = vector.broadcast %cst_550 : f32 to vector<2x15x25xf32>
    %1376 = arith.subf %1374, %1375 : vector<2x15x25xf32>
    %1377 = arith.select %1371, %1369, %1376 : vector<2x15x25xi1>, vector<2x15x25xf32>
    %cst_551 = arith.constant 0.000000e+00 : f32
    %1378 = vector.broadcast %cst_551 : f32 to vector<2x100xf32>
    %1379 = vector.extract_strided_slice %1377 {offsets = [0, 0, 0], sizes = [2, 1, 25], strides = [1, 1, 1]} : vector<2x15x25xf32> to vector<2x1x25xf32>
    %cst_552 = arith.constant dense<0.000000e+00> : vector<2x25xf32>
    %1380 = vector.multi_reduction <add>, %1379, %cst_552 [1] : vector<2x1x25xf32> to vector<2x25xf32>
    %c0_553 = arith.constant 0 : index
    %c0_554 = arith.constant 0 : index
    %1381 = vector.load %arg11[%c0_553, %c0_554] : memref<375x100xf32, #tpu.memory_space<vmem>>, vector<25x100xf32>
    %cst_555 = arith.constant dense<0.000000e+00> : vector<2x100xf32>
    %1382 = tpu.matmul %1380, %1381, %cst_555 {dimension_numbers = #tpu.dot_dimension_numbers<[1], [0], [0], [1], [0, 0, 1, 1], [], []>} : vector<2x25xf32>, vector<25x100xf32>, vector<2x100xf32> -> vector<2x100xf32>
    %1383 = arith.addf %1378, %1382 : vector<2x100xf32>
    %1384 = vector.extract_strided_slice %1377 {offsets = [0, 1, 0], sizes = [2, 1, 25], strides = [1, 1, 1]} : vector<2x15x25xf32> to vector<2x1x25xf32>
    %cst_556 = arith.constant dense<0.000000e+00> : vector<2x25xf32>
    %1385 = vector.multi_reduction <add>, %1384, %cst_556 [1] : vector<2x1x25xf32> to vector<2x25xf32>
    %c25 = arith.constant 25 : index
    %c0_557 = arith.constant 0 : index
    %1386 = vector.load %arg11[%c25, %c0_557] : memref<375x100xf32, #tpu.memory_space<vmem>>, vector<25x100xf32>
    %cst_558 = arith.constant dense<0.000000e+00> : vector<2x100xf32>
    %1387 = tpu.matmul %1385, %1386, %cst_558 {dimension_numbers = #tpu.dot_dimension_numbers<[1], [0], [0], [1], [0, 0, 1, 1], [], []>} : vector<2x25xf32>, vector<25x100xf32>, vector<2x100xf32> -> vector<2x100xf32>
    %1388 = arith.addf %1383, %1387 : vector<2x100xf32>
    %1389 = vector.extract_strided_slice %1377 {offsets = [0, 2, 0], sizes = [2, 1, 25], strides = [1, 1, 1]} : vector<2x15x25xf32> to vector<2x1x25xf32>
    %cst_559 = arith.constant dense<0.000000e+00> : vector<2x25xf32>
    %1390 = vector.multi_reduction <add>, %1389, %cst_559 [1] : vector<2x1x25xf32> to vector<2x25xf32>
    %c50 = arith.constant 50 : index
    %c0_560 = arith.constant 0 : index
    %1391 = vector.load %arg11[%c50, %c0_560] : memref<375x100xf32, #tpu.memory_space<vmem>>, vector<25x100xf32>
    %cst_561 = arith.constant dense<0.000000e+00> : vector<2x100xf32>
    %1392 = tpu.matmul %1390, %1391, %cst_561 {dimension_numbers = #tpu.dot_dimension_numbers<[1], [0], [0], [1], [0, 0, 1, 1], [], []>} : vector<2x25xf32>, vector<25x100xf32>, vector<2x100xf32> -> vector<2x100xf32>
    %1393 = arith.addf %1388, %1392 : vector<2x100xf32>
    %1394 = vector.extract_strided_slice %1377 {offsets = [0, 3, 0], sizes = [2, 1, 25], strides = [1, 1, 1]} : vector<2x15x25xf32> to vector<2x1x25xf32>
    %cst_562 = arith.constant dense<0.000000e+00> : vector<2x25xf32>
    %1395 = vector.multi_reduction <add>, %1394, %cst_562 [1] : vector<2x1x25xf32> to vector<2x25xf32>
    %c75 = arith.constant 75 : index
    %c0_563 = arith.constant 0 : index
    %1396 = vector.load %arg11[%c75, %c0_563] : memref<375x100xf32, #tpu.memory_space<vmem>>, vector<25x100xf32>
    %cst_564 = arith.constant dense<0.000000e+00> : vector<2x100xf32>
    %1397 = tpu.matmul %1395, %1396, %cst_564 {dimension_numbers = #tpu.dot_dimension_numbers<[1], [0], [0], [1], [0, 0, 1, 1], [], []>} : vector<2x25xf32>, vector<25x100xf32>, vector<2x100xf32> -> vector<2x100xf32>
    %1398 = arith.addf %1393, %1397 : vector<2x100xf32>
    %1399 = vector.extract_strided_slice %1377 {offsets = [0, 4, 0], sizes = [2, 1, 25], strides = [1, 1, 1]} : vector<2x15x25xf32> to vector<2x1x25xf32>
    %cst_565 = arith.constant dense<0.000000e+00> : vector<2x25xf32>
    %1400 = vector.multi_reduction <add>, %1399, %cst_565 [1] : vector<2x1x25xf32> to vector<2x25xf32>
    %c100 = arith.constant 100 : index
    %c0_566 = arith.constant 0 : index
    %1401 = vector.load %arg11[%c100, %c0_566] : memref<375x100xf32, #tpu.memory_space<vmem>>, vector<25x100xf32>
    %cst_567 = arith.constant dense<0.000000e+00> : vector<2x100xf32>
    %1402 = tpu.matmul %1400, %1401, %cst_567 {dimension_numbers = #tpu.dot_dimension_numbers<[1], [0], [0], [1], [0, 0, 1, 1], [], []>} : vector<2x25xf32>, vector<25x100xf32>, vector<2x100xf32> -> vector<2x100xf32>
    %1403 = arith.addf %1398, %1402 : vector<2x100xf32>
    %1404 = vector.extract_strided_slice %1377 {offsets = [0, 5, 0], sizes = [2, 1, 25], strides = [1, 1, 1]} : vector<2x15x25xf32> to vector<2x1x25xf32>
    %cst_568 = arith.constant dense<0.000000e+00> : vector<2x25xf32>
    %1405 = vector.multi_reduction <add>, %1404, %cst_568 [1] : vector<2x1x25xf32> to vector<2x25xf32>
    %c125 = arith.constant 125 : index
    %c0_569 = arith.constant 0 : index
    %1406 = vector.load %arg11[%c125, %c0_569] : memref<375x100xf32, #tpu.memory_space<vmem>>, vector<25x100xf32>
    %cst_570 = arith.constant dense<0.000000e+00> : vector<2x100xf32>
    %1407 = tpu.matmul %1405, %1406, %cst_570 {dimension_numbers = #tpu.dot_dimension_numbers<[1], [0], [0], [1], [0, 0, 1, 1], [], []>} : vector<2x25xf32>, vector<25x100xf32>, vector<2x100xf32> -> vector<2x100xf32>
    %1408 = arith.addf %1403, %1407 : vector<2x100xf32>
    %1409 = vector.extract_strided_slice %1377 {offsets = [0, 6, 0], sizes = [2, 1, 25], strides = [1, 1, 1]} : vector<2x15x25xf32> to vector<2x1x25xf32>
    %cst_571 = arith.constant dense<0.000000e+00> : vector<2x25xf32>
    %1410 = vector.multi_reduction <add>, %1409, %cst_571 [1] : vector<2x1x25xf32> to vector<2x25xf32>
    %c150 = arith.constant 150 : index
    %c0_572 = arith.constant 0 : index
    %1411 = vector.load %arg11[%c150, %c0_572] : memref<375x100xf32, #tpu.memory_space<vmem>>, vector<25x100xf32>
    %cst_573 = arith.constant dense<0.000000e+00> : vector<2x100xf32>
    %1412 = tpu.matmul %1410, %1411, %cst_573 {dimension_numbers = #tpu.dot_dimension_numbers<[1], [0], [0], [1], [0, 0, 1, 1], [], []>} : vector<2x25xf32>, vector<25x100xf32>, vector<2x100xf32> -> vector<2x100xf32>
    %1413 = arith.addf %1408, %1412 : vector<2x100xf32>
    %1414 = vector.extract_strided_slice %1377 {offsets = [0, 7, 0], sizes = [2, 1, 25], strides = [1, 1, 1]} : vector<2x15x25xf32> to vector<2x1x25xf32>
    %cst_574 = arith.constant dense<0.000000e+00> : vector<2x25xf32>
    %1415 = vector.multi_reduction <add>, %1414, %cst_574 [1] : vector<2x1x25xf32> to vector<2x25xf32>
    %c175 = arith.constant 175 : index
    %c0_575 = arith.constant 0 : index
    %1416 = vector.load %arg11[%c175, %c0_575] : memref<375x100xf32, #tpu.memory_space<vmem>>, vector<25x100xf32>
    %cst_576 = arith.constant dense<0.000000e+00> : vector<2x100xf32>
    %1417 = tpu.matmul %1415, %1416, %cst_576 {dimension_numbers = #tpu.dot_dimension_numbers<[1], [0], [0], [1], [0, 0, 1, 1], [], []>} : vector<2x25xf32>, vector<25x100xf32>, vector<2x100xf32> -> vector<2x100xf32>
    %1418 = arith.addf %1413, %1417 : vector<2x100xf32>
    %1419 = vector.extract_strided_slice %1377 {offsets = [0, 8, 0], sizes = [2, 1, 25], strides = [1, 1, 1]} : vector<2x15x25xf32> to vector<2x1x25xf32>
    %cst_577 = arith.constant dense<0.000000e+00> : vector<2x25xf32>
    %1420 = vector.multi_reduction <add>, %1419, %cst_577 [1] : vector<2x1x25xf32> to vector<2x25xf32>
    %c200 = arith.constant 200 : index
    %c0_578 = arith.constant 0 : index
    %1421 = vector.load %arg11[%c200, %c0_578] : memref<375x100xf32, #tpu.memory_space<vmem>>, vector<25x100xf32>
    %cst_579 = arith.constant dense<0.000000e+00> : vector<2x100xf32>
    %1422 = tpu.matmul %1420, %1421, %cst_579 {dimension_numbers = #tpu.dot_dimension_numbers<[1], [0], [0], [1], [0, 0, 1, 1], [], []>} : vector<2x25xf32>, vector<25x100xf32>, vector<2x100xf32> -> vector<2x100xf32>
    %1423 = arith.addf %1418, %1422 : vector<2x100xf32>
    %1424 = vector.extract_strided_slice %1377 {offsets = [0, 9, 0], sizes = [2, 1, 25], strides = [1, 1, 1]} : vector<2x15x25xf32> to vector<2x1x25xf32>
    %cst_580 = arith.constant dense<0.000000e+00> : vector<2x25xf32>
    %1425 = vector.multi_reduction <add>, %1424, %cst_580 [1] : vector<2x1x25xf32> to vector<2x25xf32>
    %c225 = arith.constant 225 : index
    %c0_581 = arith.constant 0 : index
    %1426 = vector.load %arg11[%c225, %c0_581] : memref<375x100xf32, #tpu.memory_space<vmem>>, vector<25x100xf32>
    %cst_582 = arith.constant dense<0.000000e+00> : vector<2x100xf32>
    %1427 = tpu.matmul %1425, %1426, %cst_582 {dimension_numbers = #tpu.dot_dimension_numbers<[1], [0], [0], [1], [0, 0, 1, 1], [], []>} : vector<2x25xf32>, vector<25x100xf32>, vector<2x100xf32> -> vector<2x100xf32>
    %1428 = arith.addf %1423, %1427 : vector<2x100xf32>
    %1429 = vector.extract_strided_slice %1377 {offsets = [0, 10, 0], sizes = [2, 1, 25], strides = [1, 1, 1]} : vector<2x15x25xf32> to vector<2x1x25xf32>
    %cst_583 = arith.constant dense<0.000000e+00> : vector<2x25xf32>
    %1430 = vector.multi_reduction <add>, %1429, %cst_583 [1] : vector<2x1x25xf32> to vector<2x25xf32>
    %c250 = arith.constant 250 : index
    %c0_584 = arith.constant 0 : index
    %1431 = vector.load %arg11[%c250, %c0_584] : memref<375x100xf32, #tpu.memory_space<vmem>>, vector<25x100xf32>
    %cst_585 = arith.constant dense<0.000000e+00> : vector<2x100xf32>
    %1432 = tpu.matmul %1430, %1431, %cst_585 {dimension_numbers = #tpu.dot_dimension_numbers<[1], [0], [0], [1], [0, 0, 1, 1], [], []>} : vector<2x25xf32>, vector<25x100xf32>, vector<2x100xf32> -> vector<2x100xf32>
    %1433 = arith.addf %1428, %1432 : vector<2x100xf32>
    %1434 = vector.extract_strided_slice %1377 {offsets = [0, 11, 0], sizes = [2, 1, 25], strides = [1, 1, 1]} : vector<2x15x25xf32> to vector<2x1x25xf32>
    %cst_586 = arith.constant dense<0.000000e+00> : vector<2x25xf32>
    %1435 = vector.multi_reduction <add>, %1434, %cst_586 [1] : vector<2x1x25xf32> to vector<2x25xf32>
    %c275 = arith.constant 275 : index
    %c0_587 = arith.constant 0 : index
    %1436 = vector.load %arg11[%c275, %c0_587] : memref<375x100xf32, #tpu.memory_space<vmem>>, vector<25x100xf32>
    %cst_588 = arith.constant dense<0.000000e+00> : vector<2x100xf32>
    %1437 = tpu.matmul %1435, %1436, %cst_588 {dimension_numbers = #tpu.dot_dimension_numbers<[1], [0], [0], [1], [0, 0, 1, 1], [], []>} : vector<2x25xf32>, vector<25x100xf32>, vector<2x100xf32> -> vector<2x100xf32>
    %1438 = arith.addf %1433, %1437 : vector<2x100xf32>
    %1439 = vector.extract_strided_slice %1377 {offsets = [0, 12, 0], sizes = [2, 1, 25], strides = [1, 1, 1]} : vector<2x15x25xf32> to vector<2x1x25xf32>
    %cst_589 = arith.constant dense<0.000000e+00> : vector<2x25xf32>
    %1440 = vector.multi_reduction <add>, %1439, %cst_589 [1] : vector<2x1x25xf32> to vector<2x25xf32>
    %c300 = arith.constant 300 : index
    %c0_590 = arith.constant 0 : index
    %1441 = vector.load %arg11[%c300, %c0_590] : memref<375x100xf32, #tpu.memory_space<vmem>>, vector<25x100xf32>
    %cst_591 = arith.constant dense<0.000000e+00> : vector<2x100xf32>
    %1442 = tpu.matmul %1440, %1441, %cst_591 {dimension_numbers = #tpu.dot_dimension_numbers<[1], [0], [0], [1], [0, 0, 1, 1], [], []>} : vector<2x25xf32>, vector<25x100xf32>, vector<2x100xf32> -> vector<2x100xf32>
    %1443 = arith.addf %1438, %1442 : vector<2x100xf32>
    %1444 = vector.extract_strided_slice %1377 {offsets = [0, 13, 0], sizes = [2, 1, 25], strides = [1, 1, 1]} : vector<2x15x25xf32> to vector<2x1x25xf32>
    %cst_592 = arith.constant dense<0.000000e+00> : vector<2x25xf32>
    %1445 = vector.multi_reduction <add>, %1444, %cst_592 [1] : vector<2x1x25xf32> to vector<2x25xf32>
    %c325 = arith.constant 325 : index
    %c0_593 = arith.constant 0 : index
    %1446 = vector.load %arg11[%c325, %c0_593] : memref<375x100xf32, #tpu.memory_space<vmem>>, vector<25x100xf32>
    %cst_594 = arith.constant dense<0.000000e+00> : vector<2x100xf32>
    %1447 = tpu.matmul %1445, %1446, %cst_594 {dimension_numbers = #tpu.dot_dimension_numbers<[1], [0], [0], [1], [0, 0, 1, 1], [], []>} : vector<2x25xf32>, vector<25x100xf32>, vector<2x100xf32> -> vector<2x100xf32>
    %1448 = arith.addf %1443, %1447 : vector<2x100xf32>
    %1449 = vector.extract_strided_slice %1377 {offsets = [0, 14, 0], sizes = [2, 1, 25], strides = [1, 1, 1]} : vector<2x15x25xf32> to vector<2x1x25xf32>
    %cst_595 = arith.constant dense<0.000000e+00> : vector<2x25xf32>
    %1450 = vector.multi_reduction <add>, %1449, %cst_595 [1] : vector<2x1x25xf32> to vector<2x25xf32>
    %c350 = arith.constant 350 : index
    %c0_596 = arith.constant 0 : index
    %1451 = vector.load %arg11[%c350, %c0_596] : memref<375x100xf32, #tpu.memory_space<vmem>>, vector<25x100xf32>
    %cst_597 = arith.constant dense<0.000000e+00> : vector<2x100xf32>
    %1452 = tpu.matmul %1450, %1451, %cst_597 {dimension_numbers = #tpu.dot_dimension_numbers<[1], [0], [0], [1], [0, 0, 1, 1], [], []>} : vector<2x25xf32>, vector<25x100xf32>, vector<2x100xf32> -> vector<2x100xf32>
    %1453 = arith.addf %1448, %1452 : vector<2x100xf32>
    %c0_598 = arith.constant 0 : index
    %c0_599 = arith.constant 0 : index
    %1454 = vector.load %arg12[%c0_598, %c0_599] : memref<1x100xf32, #tpu.memory_space<vmem>>, vector<1x100xf32>
    %1455 = vector.broadcast %1454 : vector<1x100xf32> to vector<2x100xf32>
    %1456 = arith.addf %1453, %1455 : vector<2x100xf32>
    %cst_600 = arith.constant 0.000000e+00 : f32
    %1457 = vector.broadcast %cst_600 : f32 to vector<2x100xf32>
    %1458 = arith.cmpf ogt, %1456, %1457 : vector<2x100xf32>
    %cst_601 = arith.constant 0.000000e+00 : f32
    %1459 = vector.broadcast %cst_601 : f32 to vector<2x100xf32>
    %1460 = arith.minimumf %1456, %1459 : vector<2x100xf32>
    %1461 = math.exp %1460 : vector<2x100xf32>
    %cst_602 = arith.constant 1.000000e+00 : f32
    %1462 = vector.broadcast %cst_602 : f32 to vector<2x100xf32>
    %1463 = arith.subf %1461, %1462 : vector<2x100xf32>
    %1464 = arith.select %1458, %1456, %1463 : vector<2x100xi1>, vector<2x100xf32>
    %c0_603 = arith.constant 0 : index
    %c0_604 = arith.constant 0 : index
    %1465 = vector.load %arg13[%c0_603, %c0_604] : memref<100x10xf32, #tpu.memory_space<vmem>>, vector<100x10xf32>
    %cst_605 = arith.constant dense<0.000000e+00> : vector<2x10xf32>
    %1466 = tpu.matmul %1464, %1465, %cst_605 {dimension_numbers = #tpu.dot_dimension_numbers<[1], [0], [0], [1], [0, 0, 1, 1], [], []>} : vector<2x100xf32>, vector<100x10xf32>, vector<2x10xf32> -> vector<2x10xf32>
    %c0_606 = arith.constant 0 : index
    %c0_607 = arith.constant 0 : index
    %1467 = vector.load %arg14[%c0_606, %c0_607] : memref<1x10xf32, #tpu.memory_space<vmem>>, vector<1x10xf32>
    %1468 = vector.broadcast %1467 : vector<1x10xf32> to vector<2x10xf32>
    %1469 = arith.addf %1466, %1468 : vector<2x10xf32>
    %cst_608 = arith.constant 0.000000e+00 : f32
    %1470 = vector.broadcast %cst_608 : f32 to vector<2x10xf32>
    %1471 = arith.cmpf ogt, %1469, %1470 : vector<2x10xf32>
    %cst_609 = arith.constant 0.000000e+00 : f32
    %1472 = vector.broadcast %cst_609 : f32 to vector<2x10xf32>
    %1473 = arith.minimumf %1469, %1472 : vector<2x10xf32>
    %1474 = math.exp %1473 : vector<2x10xf32>
    %cst_610 = arith.constant 1.000000e+00 : f32
    %1475 = vector.broadcast %cst_610 : f32 to vector<2x10xf32>
    %1476 = arith.subf %1474, %1475 : vector<2x10xf32>
    %1477 = arith.select %1471, %1469, %1476 : vector<2x10xi1>, vector<2x10xf32>
    %c0_611 = arith.constant 0 : index
    %c0_612 = arith.constant 0 : index
    %1478 = vector.load %arg15[%c0_611, %c0_612] : memref<10x2xf32, #tpu.memory_space<vmem>>, vector<10x2xf32>
    %cst_613 = arith.constant dense<0.000000e+00> : vector<2x2xf32>
    %1479 = tpu.matmul %1477, %1478, %cst_613 {dimension_numbers = #tpu.dot_dimension_numbers<[1], [0], [0], [1], [0, 0, 1, 1], [], []>} : vector<2x10xf32>, vector<10x2xf32>, vector<2x2xf32> -> vector<2x2xf32>
    %c0_614 = arith.constant 0 : index
    %c0_615 = arith.constant 0 : index
    %1480 = vector.load %arg16[%c0_614, %c0_615] : memref<1x2xf32, #tpu.memory_space<vmem>>, vector<1x2xf32>
    %1481 = vector.broadcast %1480 : vector<1x2xf32> to vector<2x2xf32>
    %1482 = arith.addf %1479, %1481 : vector<2x2xf32>
    %cst_616 = arith.constant 0.000000e+00 : f32
    %1483 = vector.broadcast %cst_616 : f32 to vector<2x2xf32>
    %1484 = arith.cmpf ogt, %1482, %1483 : vector<2x2xf32>
    %cst_617 = arith.constant 0.000000e+00 : f32
    %1485 = vector.broadcast %cst_617 : f32 to vector<2x2xf32>
    %1486 = arith.minimumf %1482, %1485 : vector<2x2xf32>
    %1487 = math.exp %1486 : vector<2x2xf32>
    %cst_618 = arith.constant 1.000000e+00 : f32
    %1488 = vector.broadcast %cst_618 : f32 to vector<2x2xf32>
    %1489 = arith.subf %1487, %1488 : vector<2x2xf32>
    %1490 = arith.select %1484, %1482, %1489 : vector<2x2xi1>, vector<2x2xf32>
    %c0_619 = arith.constant 0 : index
    %c0_620 = arith.constant 0 : index
    %1491 = vector.load %arg17[%c0_619, %c0_620] : memref<2x2xf32, #tpu.memory_space<vmem>>, vector<2x2xf32>
    tpu.vector_store %arg17[%c0_619, %c0_620], %1490 {strides = array<i32>} : memref<2x2xf32, #tpu.memory_space<vmem>>, vector<2x2xf32>,
    return
  }
}

</mosaic_0001>

<llo_original>
// kernel: forward.1
$region0: #{forward.1}
  #allocation0 [shape = 'u32[]', space=smem, size = 0x4, offset = 0x4, fixed_abs, tag = 'smem constant byte address 0x4 - core index']
  #allocation1 [shape = 'u32[144,128]{1,0:T(1,128)}', space=vmem, size = 0x12000, scoped, tag = 'internal scratch']
  #allocation2 [shape = 'f32[2,5,30,25]{3,2,1,0:T(8,128)}', space=vmem, size = 0x28000, scoped, tag = 'scratch operand']
  #allocation3 [shape = 'f32[2,5]{1,0:T(2,128)}', space=vmem, size = 0x400, scoped, tag = 'scratch operand']
  %s0 = inlined_call_operand.vmem [shape: f32[22], index: 0, kind: input, shape index: {}]
  %s1 = inlined_call_operand.vmem [shape: f32[2,5,30,25], index: 1, kind: input, shape index: {}]
  %s2 = inlined_call_operand.vmem [shape: f32[5,30,15], index: 2, kind: input, shape index: {}]
  %s3 = inlined_call_operand.vmem [shape: f32[5,1,15], index: 3, kind: input, shape index: {}]
  %s4 = inlined_call_operand.vmem [shape: f32[5,15,30], index: 4, kind: input, shape index: {}]
  %s5 = inlined_call_operand.vmem [shape: f32[5,1,30], index: 5, kind: input, shape index: {}]
  %s6 = inlined_call_operand.vmem [shape: f32[5,3], index: 6, kind: input, shape index: {}]
  %s7 = inlined_call_operand.vmem [shape: f32[1,3], index: 7, kind: input, shape index: {}]
  %s8 = inlined_call_operand.vmem [shape: f32[3,5], index: 8, kind: input, shape index: {}]
  %s9 = inlined_call_operand.vmem [shape: f32[1,5], index: 9, kind: input, shape index: {}]
  %s10 = inlined_call_operand.vmem [shape: f32[5,16,25], index: 10, kind: input, shape index: {}]
  %s11 = inlined_call_operand.vmem [shape: f32[375,100], index: 11, kind: input, shape index: {}]
  %s12 = inlined_call_operand.vmem [shape: f32[1,100], index: 12, kind: input, shape index: {}]
  %s13 = inlined_call_operand.vmem [shape: f32[100,10], index: 13, kind: input, shape index: {}]
  %s14 = inlined_call_operand.vmem [shape: f32[1,10], index: 14, kind: input, shape index: {}]
  %s15 = inlined_call_operand.vmem [shape: f32[10,2], index: 15, kind: input, shape index: {}]
  %s16 = inlined_call_operand.vmem [shape: f32[1,2], index: 16, kind: input, shape index: {}]
  %s17 = inlined_call_operand.hbm [shape: f32[2,2], index: 17, kind: output, shape index: {}]
  %s18 = sld [smem:[#allocation0]]
  $region82: #{forward.1} parent=0
    _
  %s20 = ssub.s32 1, %s18
  %s21 = scalar_select 0, %s20, %s18
  $region1: #{forward.1} parent=0
    #allocation4 [shape = 'u8[512]{0}', space=smem, size = 0x200, scoped, tag = 'input window, operand 0, single buffered']
    #allocation5 [shape = 's32[1]{0}', space=sflag, size = 0x4, scoped, tag = 'scoped memory for forward.1']
    #allocation6 [shape = 's32[1]{0}', space=sflag, size = 0x4, scoped, tag = 'scoped memory for forward.1']
    #allocation7 [shape = 'u8[1024]{0}', space=vmem, size = 0x400, scoped, tag = 'output window, operand 0, single buffered']
    %22 = vsyncpa [#allocation6], 0
    %23 = vsyncpa [#allocation5], 0
    // Predicated region
    $region2: #{forward.1} parent=1 // pred_check
      _
    $region3: #{forward.1} parent=1 // pred_check_branch
      %25 = sbr.rel (0) target = $region5
    $region4: #{forward.1} parent=1 // pred_region
      %s27 = ssub.s32 16, 16
      %28 = vsyncadd [#allocation6], %s27
      %s30 = sshll.u32 %s0, 4
      %s31 = int_to_ptr.vmem [resolvable:$true] %s30
      %33 = dma.vmem_to_smem %s31, 16, [#allocation4], [#allocation6]
    $region5: #{forward.1} parent=1 // pred_fallthru
      _
    // Predicated region
    $region6: #{forward.1} parent=1 // pred_check
      _
    $region7: #{forward.1} parent=1 // pred_check_branch
      %35 = sbr.rel (0) target = $region9
    $region8: #{forward.1} parent=1 // pred_region
      _
    $region9: #{forward.1} parent=1 // pred_fallthru
      _
    // Predicated region
    $region10: #{forward.1} parent=1 // pred_check
      _
    $region11: #{forward.1} parent=1 // pred_check_branch
      %37 = sbr.rel (0) target = $region13
    $region12: #{forward.1} parent=1 // pred_region
      _
    $region13: #{forward.1} parent=1 // pred_fallthru
      _
    // Predicated region
    $region14: #{forward.1} parent=1 // pred_check
      _
    $region15: #{forward.1} parent=1 // pred_check_branch
      %39 = sbr.rel (0) target = $region17
    $region16: #{forward.1} parent=1 // pred_region
      _
    $region17: #{forward.1} parent=1 // pred_fallthru
      _
    // Predicated region
    $region18: #{forward.1} parent=1 // pred_check
      _
    $region19: #{forward.1} parent=1 // pred_check_branch
      %41 = sbr.rel (0) target = $region21
    $region20: #{forward.1} parent=1 // pred_region
      _
    $region21: #{forward.1} parent=1 // pred_fallthru
      _
    // Predicated region
    $region22: #{forward.1} parent=1 // pred_check
      _
    $region23: #{forward.1} parent=1 // pred_check_branch
      %43 = sbr.rel (0) target = $region25
    $region24: #{forward.1} parent=1 // pred_region
      _
    $region25: #{forward.1} parent=1 // pred_fallthru
      _
    // Predicated region
    $region26: #{forward.1} parent=1 // pred_check
      _
    $region27: #{forward.1} parent=1 // pred_check_branch
      %45 = sbr.rel (0) target = $region29
    $region28: #{forward.1} parent=1 // pred_region
      _
    $region29: #{forward.1} parent=1 // pred_fallthru
      _
    // Predicated region
    $region30: #{forward.1} parent=1 // pred_check
      _
    $region31: #{forward.1} parent=1 // pred_check_branch
      %47 = sbr.rel (0) target = $region33
    $region32: #{forward.1} parent=1 // pred_region
      _
    $region33: #{forward.1} parent=1 // pred_fallthru
      _
    // Predicated region
    $region34: #{forward.1} parent=1 // pred_check
      _
    $region35: #{forward.1} parent=1 // pred_check_branch
      %49 = sbr.rel (0) target = $region37
    $region36: #{forward.1} parent=1 // pred_region
      _
    $region37: #{forward.1} parent=1 // pred_fallthru
      _
    // Predicated region
    $region38: #{forward.1} parent=1 // pred_check
      _
    $region39: #{forward.1} parent=1 // pred_check_branch
      %51 = sbr.rel (0) target = $region41
    $region40: #{forward.1} parent=1 // pred_region
      _
    $region41: #{forward.1} parent=1 // pred_fallthru
      _
    // Predicated region
    $region42: #{forward.1} parent=1 // pred_check
      _
    $region43: #{forward.1} parent=1 // pred_check_branch
      %53 = sbr.rel (0) target = $region45
    $region44: #{forward.1} parent=1 // pred_region
      _
    $region45: #{forward.1} parent=1 // pred_fallthru
      _
    // Predicated region
    $region46: #{forward.1} parent=1 // pred_check
      _
    $region47: #{forward.1} parent=1 // pred_check_branch
      %55 = sbr.rel (0) target = $region49
    $region48: #{forward.1} parent=1 // pred_region
      _
    $region49: #{forward.1} parent=1 // pred_fallthru
      _
    // Predicated region
    $region50: #{forward.1} parent=1 // pred_check
      _
    $region51: #{forward.1} parent=1 // pred_check_branch
      %57 = sbr.rel (0) target = $region53
    $region52: #{forward.1} parent=1 // pred_region
      _
    $region53: #{forward.1} parent=1 // pred_fallthru
      _
    // Predicated region
    $region54: #{forward.1} parent=1 // pred_check
      _
    $region55: #{forward.1} parent=1 // pred_check_branch
      %59 = sbr.rel (0) target = $region57
    $region56: #{forward.1} parent=1 // pred_region
      _
    $region57: #{forward.1} parent=1 // pred_fallthru
      _
    // Predicated region
    $region58: #{forward.1} parent=1 // pred_check
      _
    $region59: #{forward.1} parent=1 // pred_check_branch
      %61 = sbr.rel (0) target = $region61
    $region60: #{forward.1} parent=1 // pred_region
      _
    $region61: #{forward.1} parent=1 // pred_fallthru
      _
    // Predicated region
    $region62: #{forward.1} parent=1 // pred_check
      _
    $region63: #{forward.1} parent=1 // pred_check_branch
      %63 = sbr.rel (0) target = $region65
    $region64: #{forward.1} parent=1 // pred_region
      _
    $region65: #{forward.1} parent=1 // pred_fallthru
      _
    // Predicated region
    $region66: #{forward.1} parent=1 // pred_check
      _
    $region67: #{forward.1} parent=1 // pred_check_branch
      %65 = sbr.rel (0) target = $region69
    $region68: #{forward.1} parent=1 // pred_region
      _
    $region69: #{forward.1} parent=1 // pred_fallthru
      _
    // Predicated region
    $region70: #{forward.1} parent=1 // pred_check
      _
    $region71: #{forward.1} parent=1 // pred_check_branch
      %67 = sbr.rel (0) target = $region73
    $region72: #{forward.1} parent=1 // pred_region
      %68 = dma.done [#allocation6], 16
    $region73: #{forward.1} parent=1 // pred_fallthru
      _
    %69 = sfence
    %vm70 = vcmask 203776
    %71 = vst.msk [vmem:[#allocation2] sm:$0xff] %vm70, 0.0
    %72 = vst.msk [vmem:[#allocation2 + $0x8] sm:$0xff] %vm70, 0.0
    %73 = vst.msk [vmem:[#allocation2 + $0x10] sm:$0xff] %vm70, 0.0
    %vm74 = vcmask 201728
    %75 = vst.msk [vmem:[#allocation2 + $0x18] sm:$0x3f] %vm74, 0.0
    %76 = vst.msk [vmem:[#allocation2 + $0x20] sm:$0xff] %vm70, 0.0
    %77 = vst.msk [vmem:[#allocation2 + $0x28] sm:$0xff] %vm70, 0.0
    %78 = vst.msk [vmem:[#allocation2 + $0x30] sm:$0xff] %vm70, 0.0
    %79 = vst.msk [vmem:[#allocation2 + $0x38] sm:$0x3f] %vm74, 0.0
    %80 = vst.msk [vmem:[#allocation2 + $0x40] sm:$0xff] %vm70, 0.0
    %81 = vst.msk [vmem:[#allocation2 + $0x48] sm:$0xff] %vm70, 0.0
    %82 = vst.msk [vmem:[#allocation2 + $0x50] sm:$0xff] %vm70, 0.0
    %83 = vst.msk [vmem:[#allocation2 + $0x58] sm:$0x3f] %vm74, 0.0
    %84 = vst.msk [vmem:[#allocation2 + $0x60] sm:$0xff] %vm70, 0.0
    %85 = vst.msk [vmem:[#allocation2 + $0x68] sm:$0xff] %vm70, 0.0
    %86 = vst.msk [vmem:[#allocation2 + $0x70] sm:$0xff] %vm70, 0.0
    %87 = vst.msk [vmem:[#allocation2 + $0x78] sm:$0x3f] %vm74, 0.0
    %88 = vst.msk [vmem:[#allocation2 + $0x80] sm:$0xff] %vm70, 0.0
    %89 = vst.msk [vmem:[#allocation2 + $0x88] sm:$0xff] %vm70, 0.0
    %90 = vst.msk [vmem:[#allocation2 + $0x90] sm:$0xff] %vm70, 0.0
    %91 = vst.msk [vmem:[#allocation2 + $0x98] sm:$0x3f] %vm74, 0.0
    %92 = vst.msk [vmem:[#allocation2 + $0xa0] sm:$0xff] %vm70, 0.0
    %93 = vst.msk [vmem:[#allocation2 + $0xa8] sm:$0xff] %vm70, 0.0
    %94 = vst.msk [vmem:[#allocation2 + $0xb0] sm:$0xff] %vm70, 0.0
    %95 = vst.msk [vmem:[#allocation2 + $0xb8] sm:$0x3f] %vm74, 0.0
    %96 = vst.msk [vmem:[#allocation2 + $0xc0] sm:$0xff] %vm70, 0.0
    %97 = vst.msk [vmem:[#allocation2 + $0xc8] sm:$0xff] %vm70, 0.0
    %98 = vst.msk [vmem:[#allocation2 + $0xd0] sm:$0xff] %vm70, 0.0
    %99 = vst.msk [vmem:[#allocation2 + $0xd8] sm:$0x3f] %vm74, 0.0
    %100 = vst.msk [vmem:[#allocation2 + $0xe0] sm:$0xff] %vm70, 0.0
    %101 = vst.msk [vmem:[#allocation2 + $0xe8] sm:$0xff] %vm70, 0.0
    %102 = vst.msk [vmem:[#allocation2 + $0xf0] sm:$0xff] %vm70, 0.0
    %103 = vst.msk [vmem:[#allocation2 + $0xf8] sm:$0x3f] %vm74, 0.0
    %104 = vst.msk [vmem:[#allocation2 + $0x100] sm:$0xff] %vm70, 0.0
    %105 = vst.msk [vmem:[#allocation2 + $0x108] sm:$0xff] %vm70, 0.0
    %106 = vst.msk [vmem:[#allocation2 + $0x110] sm:$0xff] %vm70, 0.0
    %107 = vst.msk [vmem:[#allocation2 + $0x118] sm:$0x3f] %vm74, 0.0
    %108 = vst.msk [vmem:[#allocation2 + $0x120] sm:$0xff] %vm70, 0.0
    %109 = vst.msk [vmem:[#allocation2 + $0x128] sm:$0xff] %vm70, 0.0
    %110 = vst.msk [vmem:[#allocation2 + $0x130] sm:$0xff] %vm70, 0.0
    %111 = vst.msk [vmem:[#allocation2 + $0x138] sm:$0x3f] %vm74, 0.0
    %v112 = vld [vmem:[%s1] sm:$0xff]
    %v113 = vld [vmem:[%s1 + $0x8] sm:$0xff]
    %v114 = vld [vmem:[%s1 + $0x10] sm:$0xff]
    %v115 = vld [vmem:[%s1 + $0x18] sm:$0x3f]
    %v116 = vld [vmem:[%s1 + $0xa0] sm:$0xff]
    %v117 = vld [vmem:[%s1 + $0xa8] sm:$0xff]
    %v118 = vld [vmem:[%s1 + $0xb0] sm:$0xff]
    %v119 = vld [vmem:[%s1 + $0xb8] sm:$0x3f]
    %v120 = vsel %vm70, %v112, 0.0
    %121 = vadd.xlane.f32.xlu0 %v120
    %v122 = vpop.xlane.xlu0 %121
    %v123 = vsel %vm70, %v113, 0.0
    %124 = vadd.xlane.f32.xlu0 %v123
    %v125 = vpop.xlane.xlu0 %124
    %v126 = vsel %vm70, %v114, 0.0
    %127 = vadd.xlane.f32.xlu0 %v126
    %v128 = vpop.xlane.xlu0 %127
    %v129 = vsel %vm74, %v115, 0.0
    %130 = vadd.xlane.f32.xlu0 %v129
    %v131 = vpop.xlane.xlu0 %130
    %v132 = vsel %vm70, %v116, 0.0
    %133 = vadd.xlane.f32.xlu0 %v132
    %v134 = vpop.xlane.xlu0 %133
    %v135 = vsel %vm70, %v117, 0.0
    %136 = vadd.xlane.f32.xlu0 %v135
    %v137 = vpop.xlane.xlu0 %136
    %v138 = vsel %vm70, %v118, 0.0
    %139 = vadd.xlane.f32.xlu0 %v138
    %v140 = vpop.xlane.xlu0 %139
    %v141 = vsel %vm74, %v119, 0.0
    %142 = vadd.xlane.f32.xlu0 %v141
    %v143 = vpop.xlane.xlu0 %142
    %v144 = vrcp.pop 25.0
    %v145 = vmul.f32 %v122, %v144
    %v146 = vmul.f32 %v125, %v144
    %v147 = vmul.f32 %v128, %v144
    %v148 = vmul.f32 %v131, %v144
    %v149 = vmul.f32 %v134, %v144
    %v150 = vmul.f32 %v137, %v144
    %v151 = vmul.f32 %v140, %v144
    %v152 = vmul.f32 %v143, %v144
    %v153 = vld [vmem:[%s2] sm:$0xff]
    %v154 = vld [vmem:[%s2 + $0x8] sm:$0xff]
    %v155 = vld [vmem:[%s2 + $0x10] sm:$0xff]
    %v156 = vld [vmem:[%s2 + $0x18] sm:$0x3f]
    %v157 = vld [vmem:[%s3] sm:$0x1]
    %v159 = vlaneseq
    %v160 = vshrl.u32 %v159, 7
    %v161 = vsub.s32 0, %v160
    %v162 = vrot.slane %v157, %v161
    %v172 = vlaneseq
    %v173 = vand.u32 %v172, 127
    %v174 = vlaneseq
    %v175 = vshrl.u32 %v174, 7
    %v176 = vsub.s32 %v173, %v175
    %v177 = vrot.slane %v145, %v176
    %v178 = vadd.s32 %v173, 4294967288
    %v179 = vlaneseq
    %v180 = vshrl.u32 %v179, 7
    %v181 = vsub.s32 %v178, %v180
    %v182 = vrot.slane %v146, %v181
    %vm183 = vcmask 130112
    %v184 = vsel %vm183, %v182, %v177
    %v185 = vadd.s32 %v173, 4294967280
    %v186 = vlaneseq
    %v187 = vshrl.u32 %v186, 7
    %v188 = vsub.s32 %v185, %v187
    %v189 = vrot.slane %v147, %v188
    %vm190 = vcmask 195712
    %v191 = vsel %vm190, %v189, %v184
    %v192 = vadd.s32 %v173, 4294967272
    %v193 = vlaneseq
    %v194 = vshrl.u32 %v193, 7
    %v195 = vsub.s32 %v192, %v194
    %v196 = vrot.slane %v148, %v195
    %vm197 = vcmask 261312
    %v198 = vsel %vm197, %v196, %v191
    %v199 = vlaneseq
    %v200 = vshrl.u32 %v199, 7
    %v201 = vsub.s32 %v173, %v200
    %v202 = vrot.slane %v149, %v201
    %v203 = vlaneseq
    %v204 = vshrl.u32 %v203, 7
    %v205 = vsub.s32 %v178, %v204
    %v206 = vrot.slane %v150, %v205
    %v207 = vsel %vm183, %v206, %v202
    %v208 = vlaneseq
    %v209 = vshrl.u32 %v208, 7
    %v210 = vsub.s32 %v185, %v209
    %v211 = vrot.slane %v151, %v210
    %v212 = vsel %vm190, %v211, %v207
    %v213 = vlaneseq
    %v214 = vshrl.u32 %v213, 7
    %v215 = vsub.s32 %v192, %v214
    %v216 = vrot.slane %v152, %v215
    %v217 = vsel %vm197, %v216, %v212
    %vm218 = vcmask 1041409
    %v219 = vsel %vm218, %v217, %v198
    %vm220 = vcmask 244736
    %v221 = vsel %vm220, %v219, 0
    %vm223 = vcmask 1045504
    %v225 = vsel %vm223, %v156, 0
    %227 = vmatprep.subr.mxu0 0.0
    %228 = vmatpush1.msra.mxu0 %v153
    %229 = vmatprep.subr.mxu0 0.0
    %230 = vmatpush1.msra.mxu0 %v154
    %231 = vmatprep.subr.mxu0 0.0
    %232 = vmatpush1.msra.mxu0 %v155
    %233 = vmatprep.subr.mxu0 0.0
    %234 = vmatpush1.msra.mxu0 %v225
    %235 = vmatprep.subr.mxu0 0.0
    %236 = vmatpush1.msra.mxu0 0.0
    %237 = vmatprep.subr.mxu0 0.0
    %238 = vmatpush1.msra.mxu0 0.0
    %239 = vmatprep.subr.mxu0 0.0
    %240 = vmatpush1.msra.mxu0 0.0
    %241 = vmatprep.subr.mxu0 0.0
    %242 = vmatpush1.msra.mxu0 0.0
    %243 = vmatprep.subr.mxu0 0.0
    %244 = vmatpush1.msra.mxu0 0.0
    %245 = vmatprep.subr.mxu0 0.0
    %246 = vmatpush1.msra.mxu0 0.0
    %247 = vmatprep.subr.mxu0 0.0
    %248 = vmatpush1.msra.mxu0 0.0
    %249 = vmatprep.subr.mxu0 0.0
    %250 = vmatpush1.msra.mxu0 0.0
    %251 = vmatprep.subr.mxu0 0.0
    %252 = vmatpush1.msra.mxu0 0.0
    %253 = vmatprep.subr.mxu0 0.0
    %254 = vmatpush1.msra.mxu0 0.0
    %255 = vmatprep.subr.mxu0 0.0
    %256 = vmatpush1.msra.mxu0 0.0
    %257 = vmatprep.subr.mxu0 0.0
    %258 = vmatpush1.msra.mxu0 0.0
    %259 = vmatprep.subr.mxu0 0.0
    %260 = vmatpush1.msra.mxu0 0.0
    %261 = vmatprep.subr.mxu0 0.0
    %262 = vmatpush1.msra.mxu0 0.0
    %263 = vmatprep.subr.mxu0 0.0
    %264 = vmatpush1.msra.mxu0 0.0
    %265 = vmatprep.subr.mxu0 0.0
    %266 = vmatpush1.msra.mxu0 0.0
    %267 = vmatprep.subr.mxu0 0.0
    %268 = vmatpush1.msra.mxu0 0.0
    %269 = vmatprep.subr.mxu0 0.0
    %270 = vmatpush1.msra.mxu0 0.0
    %271 = vmatprep.subr.mxu0 0.0
    %272 = vmatpush1.msra.mxu0 0.0
    %273 = vmatprep.subr.mxu0 0.0
    %274 = vmatpush1.msra.mxu0 0.0
    %275 = vmatprep.subr.mxu0 0.0
    %276 = vmatpush1.msra.mxu0 0.0
    %277 = vmatprep.subr.mxu0 0.0
    %278 = vmatpush1.msra.mxu0 0.0
    %279 = vmatprep.subr.mxu0 0.0
    %280 = vmatpush1.msra.mxu0 0.0
    %281 = vmatprep.subr.mxu0 0.0
    %282 = vmatpush1.msra.mxu0 0.0
    %283 = vmatprep.subr.mxu0 0.0
    %284 = vmatpush1.msra.mxu0 0.0
    %285 = vmatprep.subr.mxu0 0.0
    %286 = vmatpush1.msra.mxu0 0.0
    %287 = vmatprep.subr.mxu0 0.0
    %288 = vmatpush1.msra.mxu0 0.0
    %289 = vmatprep.subr.mxu0 0.0
    %290 = vmatpush1.msra.mxu0 0.0
    %291 = vmatprep.mubr.f32.mxu0 0.0
    %292 = vmatmul.mubr.f32.gmra.mrb[0].mxu0 %v221
    %v293 = vpop.f32.mrb[0].mxu0
    %v294 = vadd.f32 %v162, %v293
    %v295 = vpop.f32.mrb[0].mxu0
    %296 = vdwg.mxu0
    %vm297 = vcmp.gt.f32.partialorder %v294, 0.0
    %v298 = vmin.f32 %v294, 0.0
    %v299 = vmul.f32 %v298, 1.442695
    %v300 = vpow.pop %v299
    %v301 = vsub.f32 %v300, 1.0
    %v302 = vsel %vm297, %v294, %v301
    %v303 = vld [vmem:[%s4] sm:$0xff]
    %v304 = vld [vmem:[%s4 + $0x8] sm:$0x7f]
    %v305 = vld [vmem:[%s5] sm:$0x1]
    %v307 = vlaneseq
    %v308 = vshrl.u32 %v307, 7
    %v309 = vsub.s32 0, %v308
    %v310 = vrot.slane %v305, %v309
    %vm312 = vcmask 121856
    %v314 = vsel %vm312, %v302, 0
    %vm316 = vcmask 1046528
    %v318 = vsel %vm316, %v304, 0
    %320 = vmatprep.subr.mxu0 0.0
    %321 = vmatpush1.msra.mxu0 %v303
    %322 = vmatprep.subr.mxu0 0.0
    %323 = vmatpush1.msra.mxu0 %v318
    %324 = vmatprep.subr.mxu0 0.0
    %325 = vmatpush1.msra.mxu0 0.0
    %326 = vmatprep.subr.mxu0 0.0
    %327 = vmatpush1.msra.mxu0 0.0
    %328 = vmatprep.subr.mxu0 0.0
    %329 = vmatpush1.msra.mxu0 0.0
    %330 = vmatprep.subr.mxu0 0.0
    %331 = vmatpush1.msra.mxu0 0.0
    %332 = vmatprep.subr.mxu0 0.0
    %333 = vmatpush1.msra.mxu0 0.0
    %334 = vmatprep.subr.mxu0 0.0
    %335 = vmatpush1.msra.mxu0 0.0
    %336 = vmatprep.subr.mxu0 0.0
    %337 = vmatpush1.msra.mxu0 0.0
    %338 = vmatprep.subr.mxu0 0.0
    %339 = vmatpush1.msra.mxu0 0.0
    %340 = vmatprep.subr.mxu0 0.0
    %341 = vmatpush1.msra.mxu0 0.0
    %342 = vmatprep.subr.mxu0 0.0
    %343 = vmatpush1.msra.mxu0 0.0
    %344 = vmatprep.subr.mxu0 0.0
    %345 = vmatpush1.msra.mxu0 0.0
    %346 = vmatprep.subr.mxu0 0.0
    %347 = vmatpush1.msra.mxu0 0.0
    %348 = vmatprep.subr.mxu0 0.0
    %349 = vmatpush1.msra.mxu0 0.0
    %350 = vmatprep.subr.mxu0 0.0
    %351 = vmatpush1.msra.mxu0 0.0
    %352 = vmatprep.subr.mxu0 0.0
    %353 = vmatpush1.msra.mxu0 0.0
    %354 = vmatprep.subr.mxu0 0.0
    %355 = vmatpush1.msra.mxu0 0.0
    %356 = vmatprep.subr.mxu0 0.0
    %357 = vmatpush1.msra.mxu0 0.0
    %358 = vmatprep.subr.mxu0 0.0
    %359 = vmatpush1.msra.mxu0 0.0
    %360 = vmatprep.subr.mxu0 0.0
    %361 = vmatpush1.msra.mxu0 0.0
    %362 = vmatprep.subr.mxu0 0.0
    %363 = vmatpush1.msra.mxu0 0.0
    %364 = vmatprep.subr.mxu0 0.0
    %365 = vmatpush1.msra.mxu0 0.0
    %366 = vmatprep.subr.mxu0 0.0
    %367 = vmatpush1.msra.mxu0 0.0
    %368 = vmatprep.subr.mxu0 0.0
    %369 = vmatpush1.msra.mxu0 0.0
    %370 = vmatprep.subr.mxu0 0.0
    %371 = vmatpush1.msra.mxu0 0.0
    %372 = vmatprep.subr.mxu0 0.0
    %373 = vmatpush1.msra.mxu0 0.0
    %374 = vmatprep.subr.mxu0 0.0
    %375 = vmatpush1.msra.mxu0 0.0
    %376 = vmatprep.subr.mxu0 0.0
    %377 = vmatpush1.msra.mxu0 0.0
    %378 = vmatprep.subr.mxu0 0.0
    %379 = vmatpush1.msra.mxu0 0.0
    %380 = vmatprep.subr.mxu0 0.0
    %381 = vmatpush1.msra.mxu0 0.0
    %382 = vmatprep.subr.mxu0 0.0
    %383 = vmatpush1.msra.mxu0 0.0
    %384 = vmatprep.mubr.f32.mxu0 0.0
    %385 = vmatmul.mubr.f32.gmra.mrb[0].mxu0 %v314
    %v386 = vpop.f32.mrb[0].mxu0
    %v387 = vadd.f32 %v310, %v386
    %v388 = vpop.f32.mrb[0].mxu0
    %389 = vdwg.mxu0
    %v390 = vsub.f32 0.0, %v387
    %v391 = vmul.f32 %v390, 1.442695
    %v392 = vpow.pop %v391
    %v393 = vadd.f32 %v392, 1.0
    %v394 = vrcp.pop %v393
    %v395 = vmul.f32 1.0, %v394
    %v396 = vlaneseq
    %v397 = vshrl.u32 %v396, 7
    %v398 = vsub.s32 0, %v397
    %v399 = vrot.slane %v395, %v398
    %401 = vbcast.lane.b32.xlu0 %v399, 256
    %v402 = vpop.permute.xlu0 %401
    %s404 = sor.u32 256, 8
    %405 = vbcast.lane.b32.xlu0 %v399, %s404
    %v406 = vpop.permute.xlu0 %405
    %s408 = sor.u32 256, 16
    %409 = vbcast.lane.b32.xlu0 %v399, %s408
    %v410 = vpop.permute.xlu0 %409
    %s412 = sor.u32 256, 24
    %413 = vbcast.lane.b32.xlu0 %v399, %s412
    %v414 = vpop.permute.xlu0 %413
    %v415 = vlaneseq
    %v416 = vshrl.u32 %v415, 7
    %v417 = vsub.s32 1, %v416
    %v418 = vrot.slane %v395, %v417
    %420 = vbcast.lane.b32.xlu0 %v418, 256
    %v421 = vpop.permute.xlu0 %420
    %s423 = sor.u32 256, 8
    %424 = vbcast.lane.b32.xlu0 %v418, %s423
    %v425 = vpop.permute.xlu0 %424
    %s427 = sor.u32 256, 16
    %428 = vbcast.lane.b32.xlu0 %v418, %s427
    %v429 = vpop.permute.xlu0 %428
    %s431 = sor.u32 256, 24
    %432 = vbcast.lane.b32.xlu0 %v418, %s431
    %v433 = vpop.permute.xlu0 %432
    %v434 = vmul.f32 %v112, %v402
    %v435 = vmul.f32 %v113, %v406
    %v436 = vmul.f32 %v114, %v410
    %v437 = vmul.f32 %v115, %v414
    %v438 = vmul.f32 %v116, %v421
    %v439 = vmul.f32 %v117, %v425
    %v440 = vmul.f32 %v118, %v429
    %v441 = vmul.f32 %v119, %v433
    %s442 = sld [smem:[#allocation4]]
    %v443 = vstv %s442
    %v444 = vmul.f32 %v434, %v443
    %v445 = vmul.f32 %v435, %v443
    %v446 = vmul.f32 %v436, %v443
    %v447 = vmul.f32 %v437, %v443
    %v448 = vmul.f32 %v438, %v443
    %v449 = vmul.f32 %v439, %v443
    %v450 = vmul.f32 %v440, %v443
    %v451 = vmul.f32 %v441, %v443
    %s452 = sld [smem:[#allocation4 + $0x5]]
    %v453 = vstv %s452
    %v454 = vadd.f32 %v444, %v453
    %v455 = vadd.f32 %v445, %v453
    %v456 = vadd.f32 %v446, %v453
    %v457 = vadd.f32 %v447, %v453
    %v458 = vadd.f32 %v448, %v453
    %v459 = vadd.f32 %v449, %v453
    %v460 = vadd.f32 %v450, %v453
    %v461 = vadd.f32 %v451, %v453
    %vm462 = vcmp.gt.f32.partialorder %v454, 0.0
    %vm463 = vcmp.gt.f32.partialorder %v455, 0.0
    %vm464 = vcmp.gt.f32.partialorder %v456, 0.0
    %vm465 = vcmp.gt.f32.partialorder %v457, 0.0
    %vm466 = vcmp.gt.f32.partialorder %v458, 0.0
    %vm467 = vcmp.gt.f32.partialorder %v459, 0.0
    %vm468 = vcmp.gt.f32.partialorder %v460, 0.0
    %vm469 = vcmp.gt.f32.partialorder %v461, 0.0
    %v470 = vmin.f32 %v454, 0.0
    %v471 = vmin.f32 %v455, 0.0
    %v472 = vmin.f32 %v456, 0.0
    %v473 = vmin.f32 %v457, 0.0
    %v474 = vmin.f32 %v458, 0.0
    %v475 = vmin.f32 %v459, 0.0
    %v476 = vmin.f32 %v460, 0.0
    %v477 = vmin.f32 %v461, 0.0
    %v478 = vmul.f32 %v470, 1.442695
    %v479 = vpow.pop %v478
    %v480 = vmul.f32 %v471, 1.442695
    %v481 = vpow.pop %v480
    %v482 = vmul.f32 %v472, 1.442695
    %v483 = vpow.pop %v482
    %v484 = vmul.f32 %v473, 1.442695
    %v485 = vpow.pop %v484
    %v486 = vmul.f32 %v474, 1.442695
    %v487 = vpow.pop %v486
    %v488 = vmul.f32 %v475, 1.442695
    %v489 = vpow.pop %v488
    %v490 = vmul.f32 %v476, 1.442695
    %v491 = vpow.pop %v490
    %v492 = vmul.f32 %v477, 1.442695
    %v493 = vpow.pop %v492
    %v494 = vsub.f32 %v479, 1.0
    %v495 = vsub.f32 %v481, 1.0
    %v496 = vsub.f32 %v483, 1.0
    %v497 = vsub.f32 %v485, 1.0
    %v498 = vsub.f32 %v487, 1.0
    %v499 = vsub.f32 %v489, 1.0
    %v500 = vsub.f32 %v491, 1.0
    %v501 = vsub.f32 %v493, 1.0
    %v502 = vsel %vm462, %v454, %v494
    %v503 = vsel %vm463, %v455, %v495
    %v504 = vsel %vm464, %v456, %v496
    %v505 = vsel %vm465, %v457, %v497
    %v506 = vsel %vm466, %v458, %v498
    %v507 = vsel %vm467, %v459, %v499
    %v508 = vsel %vm468, %v460, %v500
    %v509 = vsel %vm469, %v461, %v501
    %v510 = vsel %vm70, %v502, 0.0
    %511 = vadd.xlane.f32.xlu0 %v510
    %v512 = vpop.xlane.xlu0 %511
    %v513 = vsel %vm70, %v503, 0.0
    %514 = vadd.xlane.f32.xlu0 %v513
    %v515 = vpop.xlane.xlu0 %514
    %v516 = vsel %vm70, %v504, 0.0
    %517 = vadd.xlane.f32.xlu0 %v516
    %v518 = vpop.xlane.xlu0 %517
    %v519 = vsel %vm74, %v505, 0.0
    %520 = vadd.xlane.f32.xlu0 %v519
    %v521 = vpop.xlane.xlu0 %520
    %v522 = vsel %vm70, %v506, 0.0
    %523 = vadd.xlane.f32.xlu0 %v522
    %v524 = vpop.xlane.xlu0 %523
    %v525 = vsel %vm70, %v507, 0.0
    %526 = vadd.xlane.f32.xlu0 %v525
    %v527 = vpop.xlane.xlu0 %526
    %v528 = vsel %vm70, %v508, 0.0
    %529 = vadd.xlane.f32.xlu0 %v528
    %v530 = vpop.xlane.xlu0 %529
    %v531 = vsel %vm74, %v509, 0.0
    %532 = vadd.xlane.f32.xlu0 %v531
    %v533 = vpop.xlane.xlu0 %532
    %v534 = vmul.f32 %v512, %v144
    %v535 = vmul.f32 %v515, %v144
    %v536 = vmul.f32 %v518, %v144
    %v537 = vmul.f32 %v521, %v144
    %v538 = vmul.f32 %v524, %v144
    %v539 = vmul.f32 %v527, %v144
    %v540 = vmul.f32 %v530, %v144
    %v541 = vmul.f32 %v533, %v144
    %v550 = vlaneseq
    %v551 = vshrl.u32 %v550, 7
    %v552 = vsub.s32 %v173, %v551
    %v553 = vrot.slane %v534, %v552
    %v554 = vlaneseq
    %v555 = vshrl.u32 %v554, 7
    %v556 = vsub.s32 %v178, %v555
    %v557 = vrot.slane %v535, %v556
    %v558 = vsel %vm183, %v557, %v553
    %v559 = vlaneseq
    %v560 = vshrl.u32 %v559, 7
    %v561 = vsub.s32 %v185, %v560
    %v562 = vrot.slane %v536, %v561
    %v563 = vsel %vm190, %v562, %v558
    %v564 = vlaneseq
    %v565 = vshrl.u32 %v564, 7
    %v566 = vsub.s32 %v192, %v565
    %v567 = vrot.slane %v537, %v566
    %v568 = vsel %vm197, %v567, %v563
    %v569 = vlaneseq
    %v570 = vshrl.u32 %v569, 7
    %v571 = vsub.s32 %v173, %v570
    %v572 = vrot.slane %v538, %v571
    %v573 = vlaneseq
    %v574 = vshrl.u32 %v573, 7
    %v575 = vsub.s32 %v178, %v574
    %v576 = vrot.slane %v539, %v575
    %v577 = vsel %vm183, %v576, %v572
    %v578 = vlaneseq
    %v579 = vshrl.u32 %v578, 7
    %v580 = vsub.s32 %v185, %v579
    %v581 = vrot.slane %v540, %v580
    %v582 = vsel %vm190, %v581, %v577
    %v583 = vlaneseq
    %v584 = vshrl.u32 %v583, 7
    %v585 = vsub.s32 %v192, %v584
    %v586 = vrot.slane %v541, %v585
    %v587 = vsel %vm197, %v586, %v582
    %v588 = vsel %vm218, %v587, %v568
    %vm590 = vcmask 238592
    %v591 = vsel %vm590, %v588, 0.0
    %592 = vadd.xlane.f32.xlu0 %v591
    %v593 = vpop.xlane.xlu0 %592
    %v594 = vrcp.pop 30.0
    %v595 = vmul.f32 %v593, %v594
    %vm596 = vcmask 1024
    %597 = vst.msk [vmem:[#allocation3] sm:$0x3] %vm596, %v595
    %s598 = scalar_lea.vmem %s1, 32
    %v599 = vld [vmem:[%s598] sm:$0xff]
    %v600 = vld [vmem:[%s598 + $0x8] sm:$0xff]
    %v601 = vld [vmem:[%s598 + $0x10] sm:$0xff]
    %v602 = vld [vmem:[%s598 + $0x18] sm:$0x3f]
    %v603 = vld [vmem:[%s598 + $0xa0] sm:$0xff]
    %v604 = vld [vmem:[%s598 + $0xa8] sm:$0xff]
    %v605 = vld [vmem:[%s598 + $0xb0] sm:$0xff]
    %v606 = vld [vmem:[%s598 + $0xb8] sm:$0x3f]
    %v607 = vsel %vm70, %v599, 0.0
    %608 = vadd.xlane.f32.xlu0 %v607
    %v609 = vpop.xlane.xlu0 %608
    %v610 = vsel %vm70, %v600, 0.0
    %611 = vadd.xlane.f32.xlu0 %v610
    %v612 = vpop.xlane.xlu0 %611
    %v613 = vsel %vm70, %v601, 0.0
    %614 = vadd.xlane.f32.xlu0 %v613
    %v615 = vpop.xlane.xlu0 %614
    %v616 = vsel %vm74, %v602, 0.0
    %617 = vadd.xlane.f32.xlu0 %v616
    %v618 = vpop.xlane.xlu0 %617
    %v619 = vsel %vm70, %v603, 0.0
    %620 = vadd.xlane.f32.xlu0 %v619
    %v621 = vpop.xlane.xlu0 %620
    %v622 = vsel %vm70, %v604, 0.0
    %623 = vadd.xlane.f32.xlu0 %v622
    %v624 = vpop.xlane.xlu0 %623
    %v625 = vsel %vm70, %v605, 0.0
    %626 = vadd.xlane.f32.xlu0 %v625
    %v627 = vpop.xlane.xlu0 %626
    %v628 = vsel %vm74, %v606, 0.0
    %629 = vadd.xlane.f32.xlu0 %v628
    %v630 = vpop.xlane.xlu0 %629
    %v631 = vmul.f32 %v609, %v144
    %v632 = vmul.f32 %v612, %v144
    %v633 = vmul.f32 %v615, %v144
    %v634 = vmul.f32 %v618, %v144
    %v635 = vmul.f32 %v621, %v144
    %v636 = vmul.f32 %v624, %v144
    %v637 = vmul.f32 %v627, %v144
    %v638 = vmul.f32 %v630, %v144
    %s639 = scalar_lea.vmem %s2, 32
    %v640 = vld [vmem:[%s639] sm:$0xff]
    %v641 = vld [vmem:[%s639 + $0x8] sm:$0xff]
    %v642 = vld [vmem:[%s639 + $0x10] sm:$0xff]
    %v643 = vld [vmem:[%s639 + $0x18] sm:$0x3f]
    %s644 = scalar_lea.vmem %s3, 1
    %v645 = vld [vmem:[%s644] sm:$0x1]
    %v647 = vlaneseq
    %v648 = vshrl.u32 %v647, 7
    %v649 = vsub.s32 0, %v648
    %v650 = vrot.slane %v645, %v649
    %v660 = vlaneseq
    %v661 = vshrl.u32 %v660, 7
    %v662 = vsub.s32 %v173, %v661
    %v663 = vrot.slane %v631, %v662
    %v664 = vlaneseq
    %v665 = vshrl.u32 %v664, 7
    %v666 = vsub.s32 %v178, %v665
    %v667 = vrot.slane %v632, %v666
    %v668 = vsel %vm183, %v667, %v663
    %v669 = vlaneseq
    %v670 = vshrl.u32 %v669, 7
    %v671 = vsub.s32 %v185, %v670
    %v672 = vrot.slane %v633, %v671
    %v673 = vsel %vm190, %v672, %v668
    %v674 = vlaneseq
    %v675 = vshrl.u32 %v674, 7
    %v676 = vsub.s32 %v192, %v675
    %v677 = vrot.slane %v634, %v676
    %v678 = vsel %vm197, %v677, %v673
    %v679 = vlaneseq
    %v680 = vshrl.u32 %v679, 7
    %v681 = vsub.s32 %v173, %v680
    %v682 = vrot.slane %v635, %v681
    %v683 = vlaneseq
    %v684 = vshrl.u32 %v683, 7
    %v685 = vsub.s32 %v178, %v684
    %v686 = vrot.slane %v636, %v685
    %v687 = vsel %vm183, %v686, %v682
    %v688 = vlaneseq
    %v689 = vshrl.u32 %v688, 7
    %v690 = vsub.s32 %v185, %v689
    %v691 = vrot.slane %v637, %v690
    %v692 = vsel %vm190, %v691, %v687
    %v693 = vlaneseq
    %v694 = vshrl.u32 %v693, 7
    %v695 = vsub.s32 %v192, %v694
    %v696 = vrot.slane %v638, %v695
    %v697 = vsel %vm197, %v696, %v692
    %v698 = vsel %vm218, %v697, %v678
    %v699 = vsel %vm220, %v698, 0
    %v702 = vsel %vm223, %v643, 0
    %704 = vmatprep.subr.mxu0 0.0
    %705 = vmatpush1.msra.mxu0 %v640
    %706 = vmatprep.subr.mxu0 0.0
    %707 = vmatpush1.msra.mxu0 %v641
    %708 = vmatprep.subr.mxu0 0.0
    %709 = vmatpush1.msra.mxu0 %v642
    %710 = vmatprep.subr.mxu0 0.0
    %711 = vmatpush1.msra.mxu0 %v702
    %712 = vmatprep.subr.mxu0 0.0
    %713 = vmatpush1.msra.mxu0 0.0
    %714 = vmatprep.subr.mxu0 0.0
    %715 = vmatpush1.msra.mxu0 0.0
    %716 = vmatprep.subr.mxu0 0.0
    %717 = vmatpush1.msra.mxu0 0.0
    %718 = vmatprep.subr.mxu0 0.0
    %719 = vmatpush1.msra.mxu0 0.0
    %720 = vmatprep.subr.mxu0 0.0
    %721 = vmatpush1.msra.mxu0 0.0
    %722 = vmatprep.subr.mxu0 0.0
    %723 = vmatpush1.msra.mxu0 0.0
    %724 = vmatprep.subr.mxu0 0.0
    %725 = vmatpush1.msra.mxu0 0.0
    %726 = vmatprep.subr.mxu0 0.0
    %727 = vmatpush1.msra.mxu0 0.0
    %728 = vmatprep.subr.mxu0 0.0
    %729 = vmatpush1.msra.mxu0 0.0
    %730 = vmatprep.subr.mxu0 0.0
    %731 = vmatpush1.msra.mxu0 0.0
    %732 = vmatprep.subr.mxu0 0.0
    %733 = vmatpush1.msra.mxu0 0.0
    %734 = vmatprep.subr.mxu0 0.0
    %735 = vmatpush1.msra.mxu0 0.0
    %736 = vmatprep.subr.mxu0 0.0
    %737 = vmatpush1.msra.mxu0 0.0
    %738 = vmatprep.subr.mxu0 0.0
    %739 = vmatpush1.msra.mxu0 0.0
    %740 = vmatprep.subr.mxu0 0.0
    %741 = vmatpush1.msra.mxu0 0.0
    %742 = vmatprep.subr.mxu0 0.0
    %743 = vmatpush1.msra.mxu0 0.0
    %744 = vmatprep.subr.mxu0 0.0
    %745 = vmatpush1.msra.mxu0 0.0
    %746 = vmatprep.subr.mxu0 0.0
    %747 = vmatpush1.msra.mxu0 0.0
    %748 = vmatprep.subr.mxu0 0.0
    %749 = vmatpush1.msra.mxu0 0.0
    %750 = vmatprep.subr.mxu0 0.0
    %751 = vmatpush1.msra.mxu0 0.0
    %752 = vmatprep.subr.mxu0 0.0
    %753 = vmatpush1.msra.mxu0 0.0
    %754 = vmatprep.subr.mxu0 0.0
    %755 = vmatpush1.msra.mxu0 0.0
    %756 = vmatprep.subr.mxu0 0.0
    %757 = vmatpush1.msra.mxu0 0.0
    %758 = vmatprep.subr.mxu0 0.0
    %759 = vmatpush1.msra.mxu0 0.0
    %760 = vmatprep.subr.mxu0 0.0
    %761 = vmatpush1.msra.mxu0 0.0
    %762 = vmatprep.subr.mxu0 0.0
    %763 = vmatpush1.msra.mxu0 0.0
    %764 = vmatprep.subr.mxu0 0.0
    %765 = vmatpush1.msra.mxu0 0.0
    %766 = vmatprep.subr.mxu0 0.0
    %767 = vmatpush1.msra.mxu0 0.0
    %768 = vmatprep.mubr.f32.mxu0 0.0
    %769 = vmatmul.mubr.f32.gmra.mrb[0].mxu0 %v699
    %v770 = vpop.f32.mrb[0].mxu0
    %v771 = vadd.f32 %v650, %v770
    %v772 = vpop.f32.mrb[0].mxu0
    %773 = vdwg.mxu0
    %vm774 = vcmp.gt.f32.partialorder %v771, 0.0
    %v775 = vmin.f32 %v771, 0.0
    %v776 = vmul.f32 %v775, 1.442695
    %v777 = vpow.pop %v776
    %v778 = vsub.f32 %v777, 1.0
    %v779 = vsel %vm774, %v771, %v778
    %s780 = scalar_lea.vmem %s4, 16
    %v781 = vld [vmem:[%s780] sm:$0xff]
    %v782 = vld [vmem:[%s780 + $0x8] sm:$0x7f]
    %s783 = scalar_lea.vmem %s5, 1
    %v784 = vld [vmem:[%s783] sm:$0x1]
    %v786 = vlaneseq
    %v787 = vshrl.u32 %v786, 7
    %v788 = vsub.s32 0, %v787
    %v789 = vrot.slane %v784, %v788
    %v792 = vsel %vm312, %v779, 0
    %v795 = vsel %vm316, %v782, 0
    %797 = vmatprep.subr.mxu0 0.0
    %798 = vmatpush1.msra.mxu0 %v781
    %799 = vmatprep.subr.mxu0 0.0
    %800 = vmatpush1.msra.mxu0 %v795
    %801 = vmatprep.subr.mxu0 0.0
    %802 = vmatpush1.msra.mxu0 0.0
    %803 = vmatprep.subr.mxu0 0.0
    %804 = vmatpush1.msra.mxu0 0.0
    %805 = vmatprep.subr.mxu0 0.0
    %806 = vmatpush1.msra.mxu0 0.0
    %807 = vmatprep.subr.mxu0 0.0
    %808 = vmatpush1.msra.mxu0 0.0
    %809 = vmatprep.subr.mxu0 0.0
    %810 = vmatpush1.msra.mxu0 0.0
    %811 = vmatprep.subr.mxu0 0.0
    %812 = vmatpush1.msra.mxu0 0.0
    %813 = vmatprep.subr.mxu0 0.0
    %814 = vmatpush1.msra.mxu0 0.0
    %815 = vmatprep.subr.mxu0 0.0
    %816 = vmatpush1.msra.mxu0 0.0
    %817 = vmatprep.subr.mxu0 0.0
    %818 = vmatpush1.msra.mxu0 0.0
    %819 = vmatprep.subr.mxu0 0.0
    %820 = vmatpush1.msra.mxu0 0.0
    %821 = vmatprep.subr.mxu0 0.0
    %822 = vmatpush1.msra.mxu0 0.0
    %823 = vmatprep.subr.mxu0 0.0
    %824 = vmatpush1.msra.mxu0 0.0
    %825 = vmatprep.subr.mxu0 0.0
    %826 = vmatpush1.msra.mxu0 0.0
    %827 = vmatprep.subr.mxu0 0.0
    %828 = vmatpush1.msra.mxu0 0.0
    %829 = vmatprep.subr.mxu0 0.0
    %830 = vmatpush1.msra.mxu0 0.0
    %831 = vmatprep.subr.mxu0 0.0
    %832 = vmatpush1.msra.mxu0 0.0
    %833 = vmatprep.subr.mxu0 0.0
    %834 = vmatpush1.msra.mxu0 0.0
    %835 = vmatprep.subr.mxu0 0.0
    %836 = vmatpush1.msra.mxu0 0.0
    %837 = vmatprep.subr.mxu0 0.0
    %838 = vmatpush1.msra.mxu0 0.0
    %839 = vmatprep.subr.mxu0 0.0
    %840 = vmatpush1.msra.mxu0 0.0
    %841 = vmatprep.subr.mxu0 0.0
    %842 = vmatpush1.msra.mxu0 0.0
    %843 = vmatprep.subr.mxu0 0.0
    %844 = vmatpush1.msra.mxu0 0.0
    %845 = vmatprep.subr.mxu0 0.0
    %846 = vmatpush1.msra.mxu0 0.0
    %847 = vmatprep.subr.mxu0 0.0
    %848 = vmatpush1.msra.mxu0 0.0
    %849 = vmatprep.subr.mxu0 0.0
    %850 = vmatpush1.msra.mxu0 0.0
    %851 = vmatprep.subr.mxu0 0.0
    %852 = vmatpush1.msra.mxu0 0.0
    %853 = vmatprep.subr.mxu0 0.0
    %854 = vmatpush1.msra.mxu0 0.0
    %855 = vmatprep.subr.mxu0 0.0
    %856 = vmatpush1.msra.mxu0 0.0
    %857 = vmatprep.subr.mxu0 0.0
    %858 = vmatpush1.msra.mxu0 0.0
    %859 = vmatprep.subr.mxu0 0.0
    %860 = vmatpush1.msra.mxu0 0.0
    %861 = vmatprep.mubr.f32.mxu0 0.0
    %862 = vmatmul.mubr.f32.gmra.mrb[0].mxu0 %v792
    %v863 = vpop.f32.mrb[0].mxu0
    %v864 = vadd.f32 %v789, %v863
    %v865 = vpop.f32.mrb[0].mxu0
    %866 = vdwg.mxu0
    %v867 = vsub.f32 0.0, %v864
    %v868 = vmul.f32 %v867, 1.442695
    %v869 = vpow.pop %v868
    %v870 = vadd.f32 %v869, 1.0
    %v871 = vrcp.pop %v870
    %v872 = vmul.f32 1.0, %v871
    %v873 = vlaneseq
    %v874 = vshrl.u32 %v873, 7
    %v875 = vsub.s32 0, %v874
    %v876 = vrot.slane %v872, %v875
    %878 = vbcast.lane.b32.xlu0 %v876, 256
    %v879 = vpop.permute.xlu0 %878
    %s881 = sor.u32 256, 8
    %882 = vbcast.lane.b32.xlu0 %v876, %s881
    %v883 = vpop.permute.xlu0 %882
    %s885 = sor.u32 256, 16
    %886 = vbcast.lane.b32.xlu0 %v876, %s885
    %v887 = vpop.permute.xlu0 %886
    %s889 = sor.u32 256, 24
    %890 = vbcast.lane.b32.xlu0 %v876, %s889
    %v891 = vpop.permute.xlu0 %890
    %v892 = vlaneseq
    %v893 = vshrl.u32 %v892, 7
    %v894 = vsub.s32 1, %v893
    %v895 = vrot.slane %v872, %v894
    %897 = vbcast.lane.b32.xlu0 %v895, 256
    %v898 = vpop.permute.xlu0 %897
    %s900 = sor.u32 256, 8
    %901 = vbcast.lane.b32.xlu0 %v895, %s900
    %v902 = vpop.permute.xlu0 %901
    %s904 = sor.u32 256, 16
    %905 = vbcast.lane.b32.xlu0 %v895, %s904
    %v906 = vpop.permute.xlu0 %905
    %s908 = sor.u32 256, 24
    %909 = vbcast.lane.b32.xlu0 %v895, %s908
    %v910 = vpop.permute.xlu0 %909
    %v911 = vmul.f32 %v599, %v879
    %v912 = vmul.f32 %v600, %v883
    %v913 = vmul.f32 %v601, %v887
    %v914 = vmul.f32 %v602, %v891
    %v915 = vmul.f32 %v603, %v898
    %v916 = vmul.f32 %v604, %v902
    %v917 = vmul.f32 %v605, %v906
    %v918 = vmul.f32 %v606, %v910
    %s919 = sld [smem:[#allocation4 + $0x1]]
    %v920 = vstv %s919
    %v921 = vmul.f32 %v911, %v920
    %v922 = vmul.f32 %v912, %v920
    %v923 = vmul.f32 %v913, %v920
    %v924 = vmul.f32 %v914, %v920
    %v925 = vmul.f32 %v915, %v920
    %v926 = vmul.f32 %v916, %v920
    %v927 = vmul.f32 %v917, %v920
    %v928 = vmul.f32 %v918, %v920
    %s929 = sld [smem:[#allocation4 + $0x6]]
    %v930 = vstv %s929
    %v931 = vadd.f32 %v921, %v930
    %v932 = vadd.f32 %v922, %v930
    %v933 = vadd.f32 %v923, %v930
    %v934 = vadd.f32 %v924, %v930
    %v935 = vadd.f32 %v925, %v930
    %v936 = vadd.f32 %v926, %v930
    %v937 = vadd.f32 %v927, %v930
    %v938 = vadd.f32 %v928, %v930
    %vm939 = vcmp.gt.f32.partialorder %v931, 0.0
    %vm940 = vcmp.gt.f32.partialorder %v932, 0.0
    %vm941 = vcmp.gt.f32.partialorder %v933, 0.0
    %vm942 = vcmp.gt.f32.partialorder %v934, 0.0
    %vm943 = vcmp.gt.f32.partialorder %v935, 0.0
    %vm944 = vcmp.gt.f32.partialorder %v936, 0.0
    %vm945 = vcmp.gt.f32.partialorder %v937, 0.0
    %vm946 = vcmp.gt.f32.partialorder %v938, 0.0
    %v947 = vmin.f32 %v931, 0.0
    %v948 = vmin.f32 %v932, 0.0
    %v949 = vmin.f32 %v933, 0.0
    %v950 = vmin.f32 %v934, 0.0
    %v951 = vmin.f32 %v935, 0.0
    %v952 = vmin.f32 %v936, 0.0
    %v953 = vmin.f32 %v937, 0.0
    %v954 = vmin.f32 %v938, 0.0
    %v955 = vmul.f32 %v947, 1.442695
    %v956 = vpow.pop %v955
    %v957 = vmul.f32 %v948, 1.442695
    %v958 = vpow.pop %v957
    %v959 = vmul.f32 %v949, 1.442695
    %v960 = vpow.pop %v959
    %v961 = vmul.f32 %v950, 1.442695
    %v962 = vpow.pop %v961
    %v963 = vmul.f32 %v951, 1.442695
    %v964 = vpow.pop %v963
    %v965 = vmul.f32 %v952, 1.442695
    %v966 = vpow.pop %v965
    %v967 = vmul.f32 %v953, 1.442695
    %v968 = vpow.pop %v967
    %v969 = vmul.f32 %v954, 1.442695
    %v970 = vpow.pop %v969
    %v971 = vsub.f32 %v956, 1.0
    %v972 = vsub.f32 %v958, 1.0
    %v973 = vsub.f32 %v960, 1.0
    %v974 = vsub.f32 %v962, 1.0
    %v975 = vsub.f32 %v964, 1.0
    %v976 = vsub.f32 %v966, 1.0
    %v977 = vsub.f32 %v968, 1.0
    %v978 = vsub.f32 %v970, 1.0
    %v979 = vsel %vm939, %v931, %v971
    %v980 = vsel %vm940, %v932, %v972
    %v981 = vsel %vm941, %v933, %v973
    %v982 = vsel %vm942, %v934, %v974
    %v983 = vsel %vm943, %v935, %v975
    %v984 = vsel %vm944, %v936, %v976
    %v985 = vsel %vm945, %v937, %v977
    %v986 = vsel %vm946, %v938, %v978
    %v987 = vsel %vm70, %v979, 0.0
    %988 = vadd.xlane.f32.xlu0 %v987
    %v989 = vpop.xlane.xlu0 %988
    %v990 = vsel %vm70, %v980, 0.0
    %991 = vadd.xlane.f32.xlu0 %v990
    %v992 = vpop.xlane.xlu0 %991
    %v993 = vsel %vm70, %v981, 0.0
    %994 = vadd.xlane.f32.xlu0 %v993
    %v995 = vpop.xlane.xlu0 %994
    %v996 = vsel %vm74, %v982, 0.0
    %997 = vadd.xlane.f32.xlu0 %v996
    %v998 = vpop.xlane.xlu0 %997
    %v999 = vsel %vm70, %v983, 0.0
    %1000 = vadd.xlane.f32.xlu0 %v999
    %v1001 = vpop.xlane.xlu0 %1000
    %v1002 = vsel %vm70, %v984, 0.0
    %1003 = vadd.xlane.f32.xlu0 %v1002
    %v1004 = vpop.xlane.xlu0 %1003
    %v1005 = vsel %vm70, %v985, 0.0
    %1006 = vadd.xlane.f32.xlu0 %v1005
    %v1007 = vpop.xlane.xlu0 %1006
    %v1008 = vsel %vm74, %v986, 0.0
    %1009 = vadd.xlane.f32.xlu0 %v1008
    %v1010 = vpop.xlane.xlu0 %1009
    %v1011 = vmul.f32 %v989, %v144
    %v1012 = vmul.f32 %v992, %v144
    %v1013 = vmul.f32 %v995, %v144
    %v1014 = vmul.f32 %v998, %v144
    %v1015 = vmul.f32 %v1001, %v144
    %v1016 = vmul.f32 %v1004, %v144
    %v1017 = vmul.f32 %v1007, %v144
    %v1018 = vmul.f32 %v1010, %v144
    %v1027 = vlaneseq
    %v1028 = vshrl.u32 %v1027, 7
    %v1029 = vsub.s32 %v173, %v1028
    %v1030 = vrot.slane %v1011, %v1029
    %v1031 = vlaneseq
    %v1032 = vshrl.u32 %v1031, 7
    %v1033 = vsub.s32 %v178, %v1032
    %v1034 = vrot.slane %v1012, %v1033
    %v1035 = vsel %vm183, %v1034, %v1030
    %v1036 = vlaneseq
    %v1037 = vshrl.u32 %v1036, 7
    %v1038 = vsub.s32 %v185, %v1037
    %v1039 = vrot.slane %v1013, %v1038
    %v1040 = vsel %vm190, %v1039, %v1035
    %v1041 = vlaneseq
    %v1042 = vshrl.u32 %v1041, 7
    %v1043 = vsub.s32 %v192, %v1042
    %v1044 = vrot.slane %v1014, %v1043
    %v1045 = vsel %vm197, %v1044, %v1040
    %v1046 = vlaneseq
    %v1047 = vshrl.u32 %v1046, 7
    %v1048 = vsub.s32 %v173, %v1047
    %v1049 = vrot.slane %v1015, %v1048
    %v1050 = vlaneseq
    %v1051 = vshrl.u32 %v1050, 7
    %v1052 = vsub.s32 %v178, %v1051
    %v1053 = vrot.slane %v1016, %v1052
    %v1054 = vsel %vm183, %v1053, %v1049
    %v1055 = vlaneseq
    %v1056 = vshrl.u32 %v1055, 7
    %v1057 = vsub.s32 %v185, %v1056
    %v1058 = vrot.slane %v1017, %v1057
    %v1059 = vsel %vm190, %v1058, %v1054
    %v1060 = vlaneseq
    %v1061 = vshrl.u32 %v1060, 7
    %v1062 = vsub.s32 %v192, %v1061
    %v1063 = vrot.slane %v1018, %v1062
    %v1064 = vsel %vm197, %v1063, %v1059
    %v1065 = vsel %vm218, %v1064, %v1045
    %v1067 = vsel %vm590, %v1065, 0.0
    %1068 = vadd.xlane.f32.xlu0 %v1067
    %v1069 = vpop.xlane.xlu0 %1068
    %v1070 = vmul.f32 %v1069, %v594
    %vm1071 = vcmask 9224
    %1072 = vst.msk [vmem:[#allocation3] sm:$0x3] %vm1071, %v1070
    %s1073 = scalar_lea.vmem %s1, 64
    %v1074 = vld [vmem:[%s1073] sm:$0xff]
    %v1075 = vld [vmem:[%s1073 + $0x8] sm:$0xff]
    %v1076 = vld [vmem:[%s1073 + $0x10] sm:$0xff]
    %v1077 = vld [vmem:[%s1073 + $0x18] sm:$0x3f]
    %v1078 = vld [vmem:[%s1073 + $0xa0] sm:$0xff]
    %v1079 = vld [vmem:[%s1073 + $0xa8] sm:$0xff]
    %v1080 = vld [vmem:[%s1073 + $0xb0] sm:$0xff]
    %v1081 = vld [vmem:[%s1073 + $0xb8] sm:$0x3f]
    %v1082 = vsel %vm70, %v1074, 0.0
    %1083 = vadd.xlane.f32.xlu0 %v1082
    %v1084 = vpop.xlane.xlu0 %1083
    %v1085 = vsel %vm70, %v1075, 0.0
    %1086 = vadd.xlane.f32.xlu0 %v1085
    %v1087 = vpop.xlane.xlu0 %1086
    %v1088 = vsel %vm70, %v1076, 0.0
    %1089 = vadd.xlane.f32.xlu0 %v1088
    %v1090 = vpop.xlane.xlu0 %1089
    %v1091 = vsel %vm74, %v1077, 0.0
    %1092 = vadd.xlane.f32.xlu0 %v1091
    %v1093 = vpop.xlane.xlu0 %1092
    %v1094 = vsel %vm70, %v1078, 0.0
    %1095 = vadd.xlane.f32.xlu0 %v1094
    %v1096 = vpop.xlane.xlu0 %1095
    %v1097 = vsel %vm70, %v1079, 0.0
    %1098 = vadd.xlane.f32.xlu0 %v1097
    %v1099 = vpop.xlane.xlu0 %1098
    %v1100 = vsel %vm70, %v1080, 0.0
    %1101 = vadd.xlane.f32.xlu0 %v1100
    %v1102 = vpop.xlane.xlu0 %1101
    %v1103 = vsel %vm74, %v1081, 0.0
    %1104 = vadd.xlane.f32.xlu0 %v1103
    %v1105 = vpop.xlane.xlu0 %1104
    %v1106 = vmul.f32 %v1084, %v144
    %v1107 = vmul.f32 %v1087, %v144
    %v1108 = vmul.f32 %v1090, %v144
    %v1109 = vmul.f32 %v1093, %v144
    %v1110 = vmul.f32 %v1096, %v144
    %v1111 = vmul.f32 %v1099, %v144
    %v1112 = vmul.f32 %v1102, %v144
    %v1113 = vmul.f32 %v1105, %v144
    %s1114 = scalar_lea.vmem %s2, 64
    %v1115 = vld [vmem:[%s1114] sm:$0xff]
    %v1116 = vld [vmem:[%s1114 + $0x8] sm:$0xff]
    %v1117 = vld [vmem:[%s1114 + $0x10] sm:$0xff]
    %v1118 = vld [vmem:[%s1114 + $0x18] sm:$0x3f]
    %s1119 = scalar_lea.vmem %s3, 2
    %v1120 = vld [vmem:[%s1119] sm:$0x1]
    %v1122 = vlaneseq
    %v1123 = vshrl.u32 %v1122, 7
    %v1124 = vsub.s32 0, %v1123
    %v1125 = vrot.slane %v1120, %v1124
    %v1135 = vlaneseq
    %v1136 = vshrl.u32 %v1135, 7
    %v1137 = vsub.s32 %v173, %v1136
    %v1138 = vrot.slane %v1106, %v1137
    %v1139 = vlaneseq
    %v1140 = vshrl.u32 %v1139, 7
    %v1141 = vsub.s32 %v178, %v1140
    %v1142 = vrot.slane %v1107, %v1141
    %v1143 = vsel %vm183, %v1142, %v1138
    %v1144 = vlaneseq
    %v1145 = vshrl.u32 %v1144, 7
    %v1146 = vsub.s32 %v185, %v1145
    %v1147 = vrot.slane %v1108, %v1146
    %v1148 = vsel %vm190, %v1147, %v1143
    %v1149 = vlaneseq
    %v1150 = vshrl.u32 %v1149, 7
    %v1151 = vsub.s32 %v192, %v1150
    %v1152 = vrot.slane %v1109, %v1151
    %v1153 = vsel %vm197, %v1152, %v1148
    %v1154 = vlaneseq
    %v1155 = vshrl.u32 %v1154, 7
    %v1156 = vsub.s32 %v173, %v1155
    %v1157 = vrot.slane %v1110, %v1156
    %v1158 = vlaneseq
    %v1159 = vshrl.u32 %v1158, 7
    %v1160 = vsub.s32 %v178, %v1159
    %v1161 = vrot.slane %v1111, %v1160
    %v1162 = vsel %vm183, %v1161, %v1157
    %v1163 = vlaneseq
    %v1164 = vshrl.u32 %v1163, 7
    %v1165 = vsub.s32 %v185, %v1164
    %v1166 = vrot.slane %v1112, %v1165
    %v1167 = vsel %vm190, %v1166, %v1162
    %v1168 = vlaneseq
    %v1169 = vshrl.u32 %v1168, 7
    %v1170 = vsub.s32 %v192, %v1169
    %v1171 = vrot.slane %v1113, %v1170
    %v1172 = vsel %vm197, %v1171, %v1167
    %v1173 = vsel %vm218, %v1172, %v1153
    %v1174 = vsel %vm220, %v1173, 0
    %v1177 = vsel %vm223, %v1118, 0
    %1179 = vmatprep.subr.mxu0 0.0
    %1180 = vmatpush1.msra.mxu0 %v1115
    %1181 = vmatprep.subr.mxu0 0.0
    %1182 = vmatpush1.msra.mxu0 %v1116
    %1183 = vmatprep.subr.mxu0 0.0
    %1184 = vmatpush1.msra.mxu0 %v1117
    %1185 = vmatprep.subr.mxu0 0.0
    %1186 = vmatpush1.msra.mxu0 %v1177
    %1187 = vmatprep.subr.mxu0 0.0
    %1188 = vmatpush1.msra.mxu0 0.0
    %1189 = vmatprep.subr.mxu0 0.0
    %1190 = vmatpush1.msra.mxu0 0.0
    %1191 = vmatprep.subr.mxu0 0.0
    %1192 = vmatpush1.msra.mxu0 0.0
    %1193 = vmatprep.subr.mxu0 0.0
    %1194 = vmatpush1.msra.mxu0 0.0
    %1195 = vmatprep.subr.mxu0 0.0
    %1196 = vmatpush1.msra.mxu0 0.0
    %1197 = vmatprep.subr.mxu0 0.0
    %1198 = vmatpush1.msra.mxu0 0.0
    %1199 = vmatprep.subr.mxu0 0.0
    %1200 = vmatpush1.msra.mxu0 0.0
    %1201 = vmatprep.subr.mxu0 0.0
    %1202 = vmatpush1.msra.mxu0 0.0
    %1203 = vmatprep.subr.mxu0 0.0
    %1204 = vmatpush1.msra.mxu0 0.0
    %1205 = vmatprep.subr.mxu0 0.0
    %1206 = vmatpush1.msra.mxu0 0.0
    %1207 = vmatprep.subr.mxu0 0.0
    %1208 = vmatpush1.msra.mxu0 0.0
    %1209 = vmatprep.subr.mxu0 0.0
    %1210 = vmatpush1.msra.mxu0 0.0
    %1211 = vmatprep.subr.mxu0 0.0
    %1212 = vmatpush1.msra.mxu0 0.0
    %1213 = vmatprep.subr.mxu0 0.0
    %1214 = vmatpush1.msra.mxu0 0.0
    %1215 = vmatprep.subr.mxu0 0.0
    %1216 = vmatpush1.msra.mxu0 0.0
    %1217 = vmatprep.subr.mxu0 0.0
    %1218 = vmatpush1.msra.mxu0 0.0
    %1219 = vmatprep.subr.mxu0 0.0
    %1220 = vmatpush1.msra.mxu0 0.0
    %1221 = vmatprep.subr.mxu0 0.0
    %1222 = vmatpush1.msra.mxu0 0.0
    %1223 = vmatprep.subr.mxu0 0.0
    %1224 = vmatpush1.msra.mxu0 0.0
    %1225 = vmatprep.subr.mxu0 0.0
    %1226 = vmatpush1.msra.mxu0 0.0
    %1227 = vmatprep.subr.mxu0 0.0
    %1228 = vmatpush1.msra.mxu0 0.0
    %1229 = vmatprep.subr.mxu0 0.0
    %1230 = vmatpush1.msra.mxu0 0.0
    %1231 = vmatprep.subr.mxu0 0.0
    %1232 = vmatpush1.msra.mxu0 0.0
    %1233 = vmatprep.subr.mxu0 0.0
    %1234 = vmatpush1.msra.mxu0 0.0
    %1235 = vmatprep.subr.mxu0 0.0
    %1236 = vmatpush1.msra.mxu0 0.0
    %1237 = vmatprep.subr.mxu0 0.0
    %1238 = vmatpush1.msra.mxu0 0.0
    %1239 = vmatprep.subr.mxu0 0.0
    %1240 = vmatpush1.msra.mxu0 0.0
    %1241 = vmatprep.subr.mxu0 0.0
    %1242 = vmatpush1.msra.mxu0 0.0
    %1243 = vmatprep.mubr.f32.mxu0 0.0
    %1244 = vmatmul.mubr.f32.gmra.mrb[0].mxu0 %v1174
    %v1245 = vpop.f32.mrb[0].mxu0
    %v1246 = vadd.f32 %v1125, %v1245
    %v1247 = vpop.f32.mrb[0].mxu0
    %1248 = vdwg.mxu0
    %vm1249 = vcmp.gt.f32.partialorder %v1246, 0.0
    %v1250 = vmin.f32 %v1246, 0.0
    %v1251 = vmul.f32 %v1250, 1.442695
    %v1252 = vpow.pop %v1251
    %v1253 = vsub.f32 %v1252, 1.0
    %v1254 = vsel %vm1249, %v1246, %v1253
    %s1255 = scalar_lea.vmem %s4, 32
    %v1256 = vld [vmem:[%s1255] sm:$0xff]
    %v1257 = vld [vmem:[%s1255 + $0x8] sm:$0x7f]
    %s1258 = scalar_lea.vmem %s5, 2
    %v1259 = vld [vmem:[%s1258] sm:$0x1]
    %v1261 = vlaneseq
    %v1262 = vshrl.u32 %v1261, 7
    %v1263 = vsub.s32 0, %v1262
    %v1264 = vrot.slane %v1259, %v1263
    %v1267 = vsel %vm312, %v1254, 0
    %v1270 = vsel %vm316, %v1257, 0
    %1272 = vmatprep.subr.mxu0 0.0
    %1273 = vmatpush1.msra.mxu0 %v1256
    %1274 = vmatprep.subr.mxu0 0.0
    %1275 = vmatpush1.msra.mxu0 %v1270
    %1276 = vmatprep.subr.mxu0 0.0
    %1277 = vmatpush1.msra.mxu0 0.0
    %1278 = vmatprep.subr.mxu0 0.0
    %1279 = vmatpush1.msra.mxu0 0.0
    %1280 = vmatprep.subr.mxu0 0.0
    %1281 = vmatpush1.msra.mxu0 0.0
    %1282 = vmatprep.subr.mxu0 0.0
    %1283 = vmatpush1.msra.mxu0 0.0
    %1284 = vmatprep.subr.mxu0 0.0
    %1285 = vmatpush1.msra.mxu0 0.0
    %1286 = vmatprep.subr.mxu0 0.0
    %1287 = vmatpush1.msra.mxu0 0.0
    %1288 = vmatprep.subr.mxu0 0.0
    %1289 = vmatpush1.msra.mxu0 0.0
    %1290 = vmatprep.subr.mxu0 0.0
    %1291 = vmatpush1.msra.mxu0 0.0
    %1292 = vmatprep.subr.mxu0 0.0
    %1293 = vmatpush1.msra.mxu0 0.0
    %1294 = vmatprep.subr.mxu0 0.0
    %1295 = vmatpush1.msra.mxu0 0.0
    %1296 = vmatprep.subr.mxu0 0.0
    %1297 = vmatpush1.msra.mxu0 0.0
    %1298 = vmatprep.subr.mxu0 0.0
    %1299 = vmatpush1.msra.mxu0 0.0
    %1300 = vmatprep.subr.mxu0 0.0
    %1301 = vmatpush1.msra.mxu0 0.0
    %1302 = vmatprep.subr.mxu0 0.0
    %1303 = vmatpush1.msra.mxu0 0.0
    %1304 = vmatprep.subr.mxu0 0.0
    %1305 = vmatpush1.msra.mxu0 0.0
    %1306 = vmatprep.subr.mxu0 0.0
    %1307 = vmatpush1.msra.mxu0 0.0
    %1308 = vmatprep.subr.mxu0 0.0
    %1309 = vmatpush1.msra.mxu0 0.0
    %1310 = vmatprep.subr.mxu0 0.0
    %1311 = vmatpush1.msra.mxu0 0.0
    %1312 = vmatprep.subr.mxu0 0.0
    %1313 = vmatpush1.msra.mxu0 0.0
    %1314 = vmatprep.subr.mxu0 0.0
    %1315 = vmatpush1.msra.mxu0 0.0
    %1316 = vmatprep.subr.mxu0 0.0
    %1317 = vmatpush1.msra.mxu0 0.0
    %1318 = vmatprep.subr.mxu0 0.0
    %1319 = vmatpush1.msra.mxu0 0.0
    %1320 = vmatprep.subr.mxu0 0.0
    %1321 = vmatpush1.msra.mxu0 0.0
    %1322 = vmatprep.subr.mxu0 0.0
    %1323 = vmatpush1.msra.mxu0 0.0
    %1324 = vmatprep.subr.mxu0 0.0
    %1325 = vmatpush1.msra.mxu0 0.0
    %1326 = vmatprep.subr.mxu0 0.0
    %1327 = vmatpush1.msra.mxu0 0.0
    %1328 = vmatprep.subr.mxu0 0.0
    %1329 = vmatpush1.msra.mxu0 0.0
    %1330 = vmatprep.subr.mxu0 0.0
    %1331 = vmatpush1.msra.mxu0 0.0
    %1332 = vmatprep.subr.mxu0 0.0
    %1333 = vmatpush1.msra.mxu0 0.0
    %1334 = vmatprep.subr.mxu0 0.0
    %1335 = vmatpush1.msra.mxu0 0.0
    %1336 = vmatprep.mubr.f32.mxu0 0.0
    %1337 = vmatmul.mubr.f32.gmra.mrb[0].mxu0 %v1267
    %v1338 = vpop.f32.mrb[0].mxu0
    %v1339 = vadd.f32 %v1264, %v1338
    %v1340 = vpop.f32.mrb[0].mxu0
    %1341 = vdwg.mxu0
    %v1342 = vsub.f32 0.0, %v1339
    %v1343 = vmul.f32 %v1342, 1.442695
    %v1344 = vpow.pop %v1343
    %v1345 = vadd.f32 %v1344, 1.0
    %v1346 = vrcp.pop %v1345
    %v1347 = vmul.f32 1.0, %v1346
    %v1348 = vlaneseq
    %v1349 = vshrl.u32 %v1348, 7
    %v1350 = vsub.s32 0, %v1349
    %v1351 = vrot.slane %v1347, %v1350
    %1353 = vbcast.lane.b32.xlu0 %v1351, 256
    %v1354 = vpop.permute.xlu0 %1353
    %s1356 = sor.u32 256, 8
    %1357 = vbcast.lane.b32.xlu0 %v1351, %s1356
    %v1358 = vpop.permute.xlu0 %1357
    %s1360 = sor.u32 256, 16
    %1361 = vbcast.lane.b32.xlu0 %v1351, %s1360
    %v1362 = vpop.permute.xlu0 %1361
    %s1364 = sor.u32 256, 24
    %1365 = vbcast.lane.b32.xlu0 %v1351, %s1364
    %v1366 = vpop.permute.xlu0 %1365
    %v1367 = vlaneseq
    %v1368 = vshrl.u32 %v1367, 7
    %v1369 = vsub.s32 1, %v1368
    %v1370 = vrot.slane %v1347, %v1369
    %1372 = vbcast.lane.b32.xlu0 %v1370, 256
    %v1373 = vpop.permute.xlu0 %1372
    %s1375 = sor.u32 256, 8
    %1376 = vbcast.lane.b32.xlu0 %v1370, %s1375
    %v1377 = vpop.permute.xlu0 %1376
    %s1379 = sor.u32 256, 16
    %1380 = vbcast.lane.b32.xlu0 %v1370, %s1379
    %v1381 = vpop.permute.xlu0 %1380
    %s1383 = sor.u32 256, 24
    %1384 = vbcast.lane.b32.xlu0 %v1370, %s1383
    %v1385 = vpop.permute.xlu0 %1384
    %v1386 = vmul.f32 %v1074, %v1354
    %v1387 = vmul.f32 %v1075, %v1358
    %v1388 = vmul.f32 %v1076, %v1362
    %v1389 = vmul.f32 %v1077, %v1366
    %v1390 = vmul.f32 %v1078, %v1373
    %v1391 = vmul.f32 %v1079, %v1377
    %v1392 = vmul.f32 %v1080, %v1381
    %v1393 = vmul.f32 %v1081, %v1385
    %s1394 = sld [smem:[#allocation4 + $0x2]]
    %v1395 = vstv %s1394
    %v1396 = vmul.f32 %v1386, %v1395
    %v1397 = vmul.f32 %v1387, %v1395
    %v1398 = vmul.f32 %v1388, %v1395
    %v1399 = vmul.f32 %v1389, %v1395
    %v1400 = vmul.f32 %v1390, %v1395
    %v1401 = vmul.f32 %v1391, %v1395
    %v1402 = vmul.f32 %v1392, %v1395
    %v1403 = vmul.f32 %v1393, %v1395
    %s1404 = sld [smem:[#allocation4 + $0x7]]
    %v1405 = vstv %s1404
    %v1406 = vadd.f32 %v1396, %v1405
    %v1407 = vadd.f32 %v1397, %v1405
    %v1408 = vadd.f32 %v1398, %v1405
    %v1409 = vadd.f32 %v1399, %v1405
    %v1410 = vadd.f32 %v1400, %v1405
    %v1411 = vadd.f32 %v1401, %v1405
    %v1412 = vadd.f32 %v1402, %v1405
    %v1413 = vadd.f32 %v1403, %v1405
    %vm1414 = vcmp.gt.f32.partialorder %v1406, 0.0
    %vm1415 = vcmp.gt.f32.partialorder %v1407, 0.0
    %vm1416 = vcmp.gt.f32.partialorder %v1408, 0.0
    %vm1417 = vcmp.gt.f32.partialorder %v1409, 0.0
    %vm1418 = vcmp.gt.f32.partialorder %v1410, 0.0
    %vm1419 = vcmp.gt.f32.partialorder %v1411, 0.0
    %vm1420 = vcmp.gt.f32.partialorder %v1412, 0.0
    %vm1421 = vcmp.gt.f32.partialorder %v1413, 0.0
    %v1422 = vmin.f32 %v1406, 0.0
    %v1423 = vmin.f32 %v1407, 0.0
    %v1424 = vmin.f32 %v1408, 0.0
    %v1425 = vmin.f32 %v1409, 0.0
    %v1426 = vmin.f32 %v1410, 0.0
    %v1427 = vmin.f32 %v1411, 0.0
    %v1428 = vmin.f32 %v1412, 0.0
    %v1429 = vmin.f32 %v1413, 0.0
    %v1430 = vmul.f32 %v1422, 1.442695
    %v1431 = vpow.pop %v1430
    %v1432 = vmul.f32 %v1423, 1.442695
    %v1433 = vpow.pop %v1432
    %v1434 = vmul.f32 %v1424, 1.442695
    %v1435 = vpow.pop %v1434
    %v1436 = vmul.f32 %v1425, 1.442695
    %v1437 = vpow.pop %v1436
    %v1438 = vmul.f32 %v1426, 1.442695
    %v1439 = vpow.pop %v1438
    %v1440 = vmul.f32 %v1427, 1.442695
    %v1441 = vpow.pop %v1440
    %v1442 = vmul.f32 %v1428, 1.442695
    %v1443 = vpow.pop %v1442
    %v1444 = vmul.f32 %v1429, 1.442695
    %v1445 = vpow.pop %v1444
    %v1446 = vsub.f32 %v1431, 1.0
    %v1447 = vsub.f32 %v1433, 1.0
    %v1448 = vsub.f32 %v1435, 1.0
    %v1449 = vsub.f32 %v1437, 1.0
    %v1450 = vsub.f32 %v1439, 1.0
    %v1451 = vsub.f32 %v1441, 1.0
    %v1452 = vsub.f32 %v1443, 1.0
    %v1453 = vsub.f32 %v1445, 1.0
    %v1454 = vsel %vm1414, %v1406, %v1446
    %v1455 = vsel %vm1415, %v1407, %v1447
    %v1456 = vsel %vm1416, %v1408, %v1448
    %v1457 = vsel %vm1417, %v1409, %v1449
    %v1458 = vsel %vm1418, %v1410, %v1450
    %v1459 = vsel %vm1419, %v1411, %v1451
    %v1460 = vsel %vm1420, %v1412, %v1452
    %v1461 = vsel %vm1421, %v1413, %v1453
    %v1462 = vsel %vm70, %v1454, 0.0
    %1463 = vadd.xlane.f32.xlu0 %v1462
    %v1464 = vpop.xlane.xlu0 %1463
    %v1465 = vsel %vm70, %v1455, 0.0
    %1466 = vadd.xlane.f32.xlu0 %v1465
    %v1467 = vpop.xlane.xlu0 %1466
    %v1468 = vsel %vm70, %v1456, 0.0
    %1469 = vadd.xlane.f32.xlu0 %v1468
    %v1470 = vpop.xlane.xlu0 %1469
    %v1471 = vsel %vm74, %v1457, 0.0
    %1472 = vadd.xlane.f32.xlu0 %v1471
    %v1473 = vpop.xlane.xlu0 %1472
    %v1474 = vsel %vm70, %v1458, 0.0
    %1475 = vadd.xlane.f32.xlu0 %v1474
    %v1476 = vpop.xlane.xlu0 %1475
    %v1477 = vsel %vm70, %v1459, 0.0
    %1478 = vadd.xlane.f32.xlu0 %v1477
    %v1479 = vpop.xlane.xlu0 %1478
    %v1480 = vsel %vm70, %v1460, 0.0
    %1481 = vadd.xlane.f32.xlu0 %v1480
    %v1482 = vpop.xlane.xlu0 %1481
    %v1483 = vsel %vm74, %v1461, 0.0
    %1484 = vadd.xlane.f32.xlu0 %v1483
    %v1485 = vpop.xlane.xlu0 %1484
    %v1486 = vmul.f32 %v1464, %v144
    %v1487 = vmul.f32 %v1467, %v144
    %v1488 = vmul.f32 %v1470, %v144
    %v1489 = vmul.f32 %v1473, %v144
    %v1490 = vmul.f32 %v1476, %v144
    %v1491 = vmul.f32 %v1479, %v144
    %v1492 = vmul.f32 %v1482, %v144
    %v1493 = vmul.f32 %v1485, %v144
    %v1502 = vlaneseq
    %v1503 = vshrl.u32 %v1502, 7
    %v1504 = vsub.s32 %v173, %v1503
    %v1505 = vrot.slane %v1486, %v1504
    %v1506 = vlaneseq
    %v1507 = vshrl.u32 %v1506, 7
    %v1508 = vsub.s32 %v178, %v1507
    %v1509 = vrot.slane %v1487, %v1508
    %v1510 = vsel %vm183, %v1509, %v1505
    %v1511 = vlaneseq
    %v1512 = vshrl.u32 %v1511, 7
    %v1513 = vsub.s32 %v185, %v1512
    %v1514 = vrot.slane %v1488, %v1513
    %v1515 = vsel %vm190, %v1514, %v1510
    %v1516 = vlaneseq
    %v1517 = vshrl.u32 %v1516, 7
    %v1518 = vsub.s32 %v192, %v1517
    %v1519 = vrot.slane %v1489, %v1518
    %v1520 = vsel %vm197, %v1519, %v1515
    %v1521 = vlaneseq
    %v1522 = vshrl.u32 %v1521, 7
    %v1523 = vsub.s32 %v173, %v1522
    %v1524 = vrot.slane %v1490, %v1523
    %v1525 = vlaneseq
    %v1526 = vshrl.u32 %v1525, 7
    %v1527 = vsub.s32 %v178, %v1526
    %v1528 = vrot.slane %v1491, %v1527
    %v1529 = vsel %vm183, %v1528, %v1524
    %v1530 = vlaneseq
    %v1531 = vshrl.u32 %v1530, 7
    %v1532 = vsub.s32 %v185, %v1531
    %v1533 = vrot.slane %v1492, %v1532
    %v1534 = vsel %vm190, %v1533, %v1529
    %v1535 = vlaneseq
    %v1536 = vshrl.u32 %v1535, 7
    %v1537 = vsub.s32 %v192, %v1536
    %v1538 = vrot.slane %v1493, %v1537
    %v1539 = vsel %vm197, %v1538, %v1534
    %v1540 = vsel %vm218, %v1539, %v1520
    %v1542 = vsel %vm590, %v1540, 0.0
    %1543 = vadd.xlane.f32.xlu0 %v1542
    %v1544 = vpop.xlane.xlu0 %1543
    %v1545 = vmul.f32 %v1544, %v594
    %vm1546 = vcmask 17424
    %1547 = vst.msk [vmem:[#allocation3] sm:$0x3] %vm1546, %v1545
    %s1548 = scalar_lea.vmem %s1, 96
    %v1549 = vld [vmem:[%s1548] sm:$0xff]
    %v1550 = vld [vmem:[%s1548 + $0x8] sm:$0xff]
    %v1551 = vld [vmem:[%s1548 + $0x10] sm:$0xff]
    %v1552 = vld [vmem:[%s1548 + $0x18] sm:$0x3f]
    %v1553 = vld [vmem:[%s1548 + $0xa0] sm:$0xff]
    %v1554 = vld [vmem:[%s1548 + $0xa8] sm:$0xff]
    %v1555 = vld [vmem:[%s1548 + $0xb0] sm:$0xff]
    %v1556 = vld [vmem:[%s1548 + $0xb8] sm:$0x3f]
    %v1557 = vsel %vm70, %v1549, 0.0
    %1558 = vadd.xlane.f32.xlu0 %v1557
    %v1559 = vpop.xlane.xlu0 %1558
    %v1560 = vsel %vm70, %v1550, 0.0
    %1561 = vadd.xlane.f32.xlu0 %v1560
    %v1562 = vpop.xlane.xlu0 %1561
    %v1563 = vsel %vm70, %v1551, 0.0
    %1564 = vadd.xlane.f32.xlu0 %v1563
    %v1565 = vpop.xlane.xlu0 %1564
    %v1566 = vsel %vm74, %v1552, 0.0
    %1567 = vadd.xlane.f32.xlu0 %v1566
    %v1568 = vpop.xlane.xlu0 %1567
    %v1569 = vsel %vm70, %v1553, 0.0
    %1570 = vadd.xlane.f32.xlu0 %v1569
    %v1571 = vpop.xlane.xlu0 %1570
    %v1572 = vsel %vm70, %v1554, 0.0
    %1573 = vadd.xlane.f32.xlu0 %v1572
    %v1574 = vpop.xlane.xlu0 %1573
    %v1575 = vsel %vm70, %v1555, 0.0
    %1576 = vadd.xlane.f32.xlu0 %v1575
    %v1577 = vpop.xlane.xlu0 %1576
    %v1578 = vsel %vm74, %v1556, 0.0
    %1579 = vadd.xlane.f32.xlu0 %v1578
    %v1580 = vpop.xlane.xlu0 %1579
    %v1581 = vmul.f32 %v1559, %v144
    %v1582 = vmul.f32 %v1562, %v144
    %v1583 = vmul.f32 %v1565, %v144
    %v1584 = vmul.f32 %v1568, %v144
    %v1585 = vmul.f32 %v1571, %v144
    %v1586 = vmul.f32 %v1574, %v144
    %v1587 = vmul.f32 %v1577, %v144
    %v1588 = vmul.f32 %v1580, %v144
    %s1589 = scalar_lea.vmem %s2, 96
    %v1590 = vld [vmem:[%s1589] sm:$0xff]
    %v1591 = vld [vmem:[%s1589 + $0x8] sm:$0xff]
    %v1592 = vld [vmem:[%s1589 + $0x10] sm:$0xff]
    %v1593 = vld [vmem:[%s1589 + $0x18] sm:$0x3f]
    %s1594 = scalar_lea.vmem %s3, 3
    %v1595 = vld [vmem:[%s1594] sm:$0x1]
    %v1597 = vlaneseq
    %v1598 = vshrl.u32 %v1597, 7
    %v1599 = vsub.s32 0, %v1598
    %v1600 = vrot.slane %v1595, %v1599
    %v1610 = vlaneseq
    %v1611 = vshrl.u32 %v1610, 7
    %v1612 = vsub.s32 %v173, %v1611
    %v1613 = vrot.slane %v1581, %v1612
    %v1614 = vlaneseq
    %v1615 = vshrl.u32 %v1614, 7
    %v1616 = vsub.s32 %v178, %v1615
    %v1617 = vrot.slane %v1582, %v1616
    %v1618 = vsel %vm183, %v1617, %v1613
    %v1619 = vlaneseq
    %v1620 = vshrl.u32 %v1619, 7
    %v1621 = vsub.s32 %v185, %v1620
    %v1622 = vrot.slane %v1583, %v1621
    %v1623 = vsel %vm190, %v1622, %v1618
    %v1624 = vlaneseq
    %v1625 = vshrl.u32 %v1624, 7
    %v1626 = vsub.s32 %v192, %v1625
    %v1627 = vrot.slane %v1584, %v1626
    %v1628 = vsel %vm197, %v1627, %v1623
    %v1629 = vlaneseq
    %v1630 = vshrl.u32 %v1629, 7
    %v1631 = vsub.s32 %v173, %v1630
    %v1632 = vrot.slane %v1585, %v1631
    %v1633 = vlaneseq
    %v1634 = vshrl.u32 %v1633, 7
    %v1635 = vsub.s32 %v178, %v1634
    %v1636 = vrot.slane %v1586, %v1635
    %v1637 = vsel %vm183, %v1636, %v1632
    %v1638 = vlaneseq
    %v1639 = vshrl.u32 %v1638, 7
    %v1640 = vsub.s32 %v185, %v1639
    %v1641 = vrot.slane %v1587, %v1640
    %v1642 = vsel %vm190, %v1641, %v1637
    %v1643 = vlaneseq
    %v1644 = vshrl.u32 %v1643, 7
    %v1645 = vsub.s32 %v192, %v1644
    %v1646 = vrot.slane %v1588, %v1645
    %v1647 = vsel %vm197, %v1646, %v1642
    %v1648 = vsel %vm218, %v1647, %v1628
    %v1649 = vsel %vm220, %v1648, 0
    %v1652 = vsel %vm223, %v1593, 0
    %1654 = vmatprep.subr.mxu0 0.0
    %1655 = vmatpush1.msra.mxu0 %v1590
    %1656 = vmatprep.subr.mxu0 0.0
    %1657 = vmatpush1.msra.mxu0 %v1591
    %1658 = vmatprep.subr.mxu0 0.0
    %1659 = vmatpush1.msra.mxu0 %v1592
    %1660 = vmatprep.subr.mxu0 0.0
    %1661 = vmatpush1.msra.mxu0 %v1652
    %1662 = vmatprep.subr.mxu0 0.0
    %1663 = vmatpush1.msra.mxu0 0.0
    %1664 = vmatprep.subr.mxu0 0.0
    %1665 = vmatpush1.msra.mxu0 0.0
    %1666 = vmatprep.subr.mxu0 0.0
    %1667 = vmatpush1.msra.mxu0 0.0
    %1668 = vmatprep.subr.mxu0 0.0
    %1669 = vmatpush1.msra.mxu0 0.0
    %1670 = vmatprep.subr.mxu0 0.0
    %1671 = vmatpush1.msra.mxu0 0.0
    %1672 = vmatprep.subr.mxu0 0.0
    %1673 = vmatpush1.msra.mxu0 0.0
    %1674 = vmatprep.subr.mxu0 0.0
    %1675 = vmatpush1.msra.mxu0 0.0
    %1676 = vmatprep.subr.mxu0 0.0
    %1677 = vmatpush1.msra.mxu0 0.0
    %1678 = vmatprep.subr.mxu0 0.0
    %1679 = vmatpush1.msra.mxu0 0.0
    %1680 = vmatprep.subr.mxu0 0.0
    %1681 = vmatpush1.msra.mxu0 0.0
    %1682 = vmatprep.subr.mxu0 0.0
    %1683 = vmatpush1.msra.mxu0 0.0
    %1684 = vmatprep.subr.mxu0 0.0
    %1685 = vmatpush1.msra.mxu0 0.0
    %1686 = vmatprep.subr.mxu0 0.0
    %1687 = vmatpush1.msra.mxu0 0.0
    %1688 = vmatprep.subr.mxu0 0.0
    %1689 = vmatpush1.msra.mxu0 0.0
    %1690 = vmatprep.subr.mxu0 0.0
    %1691 = vmatpush1.msra.mxu0 0.0
    %1692 = vmatprep.subr.mxu0 0.0
    %1693 = vmatpush1.msra.mxu0 0.0
    %1694 = vmatprep.subr.mxu0 0.0
    %1695 = vmatpush1.msra.mxu0 0.0
    %1696 = vmatprep.subr.mxu0 0.0
    %1697 = vmatpush1.msra.mxu0 0.0
    %1698 = vmatprep.subr.mxu0 0.0
    %1699 = vmatpush1.msra.mxu0 0.0
    %1700 = vmatprep.subr.mxu0 0.0
    %1701 = vmatpush1.msra.mxu0 0.0
    %1702 = vmatprep.subr.mxu0 0.0
    %1703 = vmatpush1.msra.mxu0 0.0
    %1704 = vmatprep.subr.mxu0 0.0
    %1705 = vmatpush1.msra.mxu0 0.0
    %1706 = vmatprep.subr.mxu0 0.0
    %1707 = vmatpush1.msra.mxu0 0.0
    %1708 = vmatprep.subr.mxu0 0.0
    %1709 = vmatpush1.msra.mxu0 0.0
    %1710 = vmatprep.subr.mxu0 0.0
    %1711 = vmatpush1.msra.mxu0 0.0
    %1712 = vmatprep.subr.mxu0 0.0
    %1713 = vmatpush1.msra.mxu0 0.0
    %1714 = vmatprep.subr.mxu0 0.0
    %1715 = vmatpush1.msra.mxu0 0.0
    %1716 = vmatprep.subr.mxu0 0.0
    %1717 = vmatpush1.msra.mxu0 0.0
    %1718 = vmatprep.mubr.f32.mxu0 0.0
    %1719 = vmatmul.mubr.f32.gmra.mrb[0].mxu0 %v1649
    %v1720 = vpop.f32.mrb[0].mxu0
    %v1721 = vadd.f32 %v1600, %v1720
    %v1722 = vpop.f32.mrb[0].mxu0
    %1723 = vdwg.mxu0
    %vm1724 = vcmp.gt.f32.partialorder %v1721, 0.0
    %v1725 = vmin.f32 %v1721, 0.0
    %v1726 = vmul.f32 %v1725, 1.442695
    %v1727 = vpow.pop %v1726
    %v1728 = vsub.f32 %v1727, 1.0
    %v1729 = vsel %vm1724, %v1721, %v1728
    %s1730 = scalar_lea.vmem %s4, 48
    %v1731 = vld [vmem:[%s1730] sm:$0xff]
    %v1732 = vld [vmem:[%s1730 + $0x8] sm:$0x7f]
    %s1733 = scalar_lea.vmem %s5, 3
    %v1734 = vld [vmem:[%s1733] sm:$0x1]
    %v1736 = vlaneseq
    %v1737 = vshrl.u32 %v1736, 7
    %v1738 = vsub.s32 0, %v1737
    %v1739 = vrot.slane %v1734, %v1738
    %v1742 = vsel %vm312, %v1729, 0
    %v1745 = vsel %vm316, %v1732, 0
    %1747 = vmatprep.subr.mxu0 0.0
    %1748 = vmatpush1.msra.mxu0 %v1731
    %1749 = vmatprep.subr.mxu0 0.0
    %1750 = vmatpush1.msra.mxu0 %v1745
    %1751 = vmatprep.subr.mxu0 0.0
    %1752 = vmatpush1.msra.mxu0 0.0
    %1753 = vmatprep.subr.mxu0 0.0
    %1754 = vmatpush1.msra.mxu0 0.0
    %1755 = vmatprep.subr.mxu0 0.0
    %1756 = vmatpush1.msra.mxu0 0.0
    %1757 = vmatprep.subr.mxu0 0.0
    %1758 = vmatpush1.msra.mxu0 0.0
    %1759 = vmatprep.subr.mxu0 0.0
    %1760 = vmatpush1.msra.mxu0 0.0
    %1761 = vmatprep.subr.mxu0 0.0
    %1762 = vmatpush1.msra.mxu0 0.0
    %1763 = vmatprep.subr.mxu0 0.0
    %1764 = vmatpush1.msra.mxu0 0.0
    %1765 = vmatprep.subr.mxu0 0.0
    %1766 = vmatpush1.msra.mxu0 0.0
    %1767 = vmatprep.subr.mxu0 0.0
    %1768 = vmatpush1.msra.mxu0 0.0
    %1769 = vmatprep.subr.mxu0 0.0
    %1770 = vmatpush1.msra.mxu0 0.0
    %1771 = vmatprep.subr.mxu0 0.0
    %1772 = vmatpush1.msra.mxu0 0.0
    %1773 = vmatprep.subr.mxu0 0.0
    %1774 = vmatpush1.msra.mxu0 0.0
    %1775 = vmatprep.subr.mxu0 0.0
    %1776 = vmatpush1.msra.mxu0 0.0
    %1777 = vmatprep.subr.mxu0 0.0
    %1778 = vmatpush1.msra.mxu0 0.0
    %1779 = vmatprep.subr.mxu0 0.0
    %1780 = vmatpush1.msra.mxu0 0.0
    %1781 = vmatprep.subr.mxu0 0.0
    %1782 = vmatpush1.msra.mxu0 0.0
    %1783 = vmatprep.subr.mxu0 0.0
    %1784 = vmatpush1.msra.mxu0 0.0
    %1785 = vmatprep.subr.mxu0 0.0
    %1786 = vmatpush1.msra.mxu0 0.0
    %1787 = vmatprep.subr.mxu0 0.0
    %1788 = vmatpush1.msra.mxu0 0.0
    %1789 = vmatprep.subr.mxu0 0.0
    %1790 = vmatpush1.msra.mxu0 0.0
    %1791 = vmatprep.subr.mxu0 0.0
    %1792 = vmatpush1.msra.mxu0 0.0
    %1793 = vmatprep.subr.mxu0 0.0
    %1794 = vmatpush1.msra.mxu0 0.0
    %1795 = vmatprep.subr.mxu0 0.0
    %1796 = vmatpush1.msra.mxu0 0.0
    %1797 = vmatprep.subr.mxu0 0.0
    %1798 = vmatpush1.msra.mxu0 0.0
    %1799 = vmatprep.subr.mxu0 0.0
    %1800 = vmatpush1.msra.mxu0 0.0
    %1801 = vmatprep.subr.mxu0 0.0
    %1802 = vmatpush1.msra.mxu0 0.0
    %1803 = vmatprep.subr.mxu0 0.0
    %1804 = vmatpush1.msra.mxu0 0.0
    %1805 = vmatprep.subr.mxu0 0.0
    %1806 = vmatpush1.msra.mxu0 0.0
    %1807 = vmatprep.subr.mxu0 0.0
    %1808 = vmatpush1.msra.mxu0 0.0
    %1809 = vmatprep.subr.mxu0 0.0
    %1810 = vmatpush1.msra.mxu0 0.0
    %1811 = vmatprep.mubr.f32.mxu0 0.0
    %1812 = vmatmul.mubr.f32.gmra.mrb[0].mxu0 %v1742
    %v1813 = vpop.f32.mrb[0].mxu0
    %v1814 = vadd.f32 %v1739, %v1813
    %v1815 = vpop.f32.mrb[0].mxu0
    %1816 = vdwg.mxu0
    %v1817 = vsub.f32 0.0, %v1814
    %v1818 = vmul.f32 %v1817, 1.442695
    %v1819 = vpow.pop %v1818
    %v1820 = vadd.f32 %v1819, 1.0
    %v1821 = vrcp.pop %v1820
    %v1822 = vmul.f32 1.0, %v1821
    %v1823 = vlaneseq
    %v1824 = vshrl.u32 %v1823, 7
    %v1825 = vsub.s32 0, %v1824
    %v1826 = vrot.slane %v1822, %v1825
    %1828 = vbcast.lane.b32.xlu0 %v1826, 256
    %v1829 = vpop.permute.xlu0 %1828
    %s1831 = sor.u32 256, 8
    %1832 = vbcast.lane.b32.xlu0 %v1826, %s1831
    %v1833 = vpop.permute.xlu0 %1832
    %s1835 = sor.u32 256, 16
    %1836 = vbcast.lane.b32.xlu0 %v1826, %s1835
    %v1837 = vpop.permute.xlu0 %1836
    %s1839 = sor.u32 256, 24
    %1840 = vbcast.lane.b32.xlu0 %v1826, %s1839
    %v1841 = vpop.permute.xlu0 %1840
    %v1842 = vlaneseq
    %v1843 = vshrl.u32 %v1842, 7
    %v1844 = vsub.s32 1, %v1843
    %v1845 = vrot.slane %v1822, %v1844
    %1847 = vbcast.lane.b32.xlu0 %v1845, 256
    %v1848 = vpop.permute.xlu0 %1847
    %s1850 = sor.u32 256, 8
    %1851 = vbcast.lane.b32.xlu0 %v1845, %s1850
    %v1852 = vpop.permute.xlu0 %1851
    %s1854 = sor.u32 256, 16
    %1855 = vbcast.lane.b32.xlu0 %v1845, %s1854
    %v1856 = vpop.permute.xlu0 %1855
    %s1858 = sor.u32 256, 24
    %1859 = vbcast.lane.b32.xlu0 %v1845, %s1858
    %v1860 = vpop.permute.xlu0 %1859
    %v1861 = vmul.f32 %v1549, %v1829
    %v1862 = vmul.f32 %v1550, %v1833
    %v1863 = vmul.f32 %v1551, %v1837
    %v1864 = vmul.f32 %v1552, %v1841
    %v1865 = vmul.f32 %v1553, %v1848
    %v1866 = vmul.f32 %v1554, %v1852
    %v1867 = vmul.f32 %v1555, %v1856
    %v1868 = vmul.f32 %v1556, %v1860
    %s1869 = sld [smem:[#allocation4 + $0x3]]
    %v1870 = vstv %s1869
    %v1871 = vmul.f32 %v1861, %v1870
    %v1872 = vmul.f32 %v1862, %v1870
    %v1873 = vmul.f32 %v1863, %v1870
    %v1874 = vmul.f32 %v1864, %v1870
    %v1875 = vmul.f32 %v1865, %v1870
    %v1876 = vmul.f32 %v1866, %v1870
    %v1877 = vmul.f32 %v1867, %v1870
    %v1878 = vmul.f32 %v1868, %v1870
    %s1879 = sld [smem:[#allocation4 + $0x8]]
    %v1880 = vstv %s1879
    %v1881 = vadd.f32 %v1871, %v1880
    %v1882 = vadd.f32 %v1872, %v1880
    %v1883 = vadd.f32 %v1873, %v1880
    %v1884 = vadd.f32 %v1874, %v1880
    %v1885 = vadd.f32 %v1875, %v1880
    %v1886 = vadd.f32 %v1876, %v1880
    %v1887 = vadd.f32 %v1877, %v1880
    %v1888 = vadd.f32 %v1878, %v1880
    %vm1889 = vcmp.gt.f32.partialorder %v1881, 0.0
    %vm1890 = vcmp.gt.f32.partialorder %v1882, 0.0
    %vm1891 = vcmp.gt.f32.partialorder %v1883, 0.0
    %vm1892 = vcmp.gt.f32.partialorder %v1884, 0.0
    %vm1893 = vcmp.gt.f32.partialorder %v1885, 0.0
    %vm1894 = vcmp.gt.f32.partialorder %v1886, 0.0
    %vm1895 = vcmp.gt.f32.partialorder %v1887, 0.0
    %vm1896 = vcmp.gt.f32.partialorder %v1888, 0.0
    %v1897 = vmin.f32 %v1881, 0.0
    %v1898 = vmin.f32 %v1882, 0.0
    %v1899 = vmin.f32 %v1883, 0.0
    %v1900 = vmin.f32 %v1884, 0.0
    %v1901 = vmin.f32 %v1885, 0.0
    %v1902 = vmin.f32 %v1886, 0.0
    %v1903 = vmin.f32 %v1887, 0.0
    %v1904 = vmin.f32 %v1888, 0.0
    %v1905 = vmul.f32 %v1897, 1.442695
    %v1906 = vpow.pop %v1905
    %v1907 = vmul.f32 %v1898, 1.442695
    %v1908 = vpow.pop %v1907
    %v1909 = vmul.f32 %v1899, 1.442695
    %v1910 = vpow.pop %v1909
    %v1911 = vmul.f32 %v1900, 1.442695
    %v1912 = vpow.pop %v1911
    %v1913 = vmul.f32 %v1901, 1.442695
    %v1914 = vpow.pop %v1913
    %v1915 = vmul.f32 %v1902, 1.442695
    %v1916 = vpow.pop %v1915
    %v1917 = vmul.f32 %v1903, 1.442695
    %v1918 = vpow.pop %v1917
    %v1919 = vmul.f32 %v1904, 1.442695
    %v1920 = vpow.pop %v1919
    %v1921 = vsub.f32 %v1906, 1.0
    %v1922 = vsub.f32 %v1908, 1.0
    %v1923 = vsub.f32 %v1910, 1.0
    %v1924 = vsub.f32 %v1912, 1.0
    %v1925 = vsub.f32 %v1914, 1.0
    %v1926 = vsub.f32 %v1916, 1.0
    %v1927 = vsub.f32 %v1918, 1.0
    %v1928 = vsub.f32 %v1920, 1.0
    %v1929 = vsel %vm1889, %v1881, %v1921
    %v1930 = vsel %vm1890, %v1882, %v1922
    %v1931 = vsel %vm1891, %v1883, %v1923
    %v1932 = vsel %vm1892, %v1884, %v1924
    %v1933 = vsel %vm1893, %v1885, %v1925
    %v1934 = vsel %vm1894, %v1886, %v1926
    %v1935 = vsel %vm1895, %v1887, %v1927
    %v1936 = vsel %vm1896, %v1888, %v1928
    %v1937 = vsel %vm70, %v1929, 0.0
    %1938 = vadd.xlane.f32.xlu0 %v1937
    %v1939 = vpop.xlane.xlu0 %1938
    %v1940 = vsel %vm70, %v1930, 0.0
    %1941 = vadd.xlane.f32.xlu0 %v1940
    %v1942 = vpop.xlane.xlu0 %1941
    %v1943 = vsel %vm70, %v1931, 0.0
    %1944 = vadd.xlane.f32.xlu0 %v1943
    %v1945 = vpop.xlane.xlu0 %1944
    %v1946 = vsel %vm74, %v1932, 0.0
    %1947 = vadd.xlane.f32.xlu0 %v1946
    %v1948 = vpop.xlane.xlu0 %1947
    %v1949 = vsel %vm70, %v1933, 0.0
    %1950 = vadd.xlane.f32.xlu0 %v1949
    %v1951 = vpop.xlane.xlu0 %1950
    %v1952 = vsel %vm70, %v1934, 0.0
    %1953 = vadd.xlane.f32.xlu0 %v1952
    %v1954 = vpop.xlane.xlu0 %1953
    %v1955 = vsel %vm70, %v1935, 0.0
    %1956 = vadd.xlane.f32.xlu0 %v1955
    %v1957 = vpop.xlane.xlu0 %1956
    %v1958 = vsel %vm74, %v1936, 0.0
    %1959 = vadd.xlane.f32.xlu0 %v1958
    %v1960 = vpop.xlane.xlu0 %1959
    %v1961 = vmul.f32 %v1939, %v144
    %v1962 = vmul.f32 %v1942, %v144
    %v1963 = vmul.f32 %v1945, %v144
    %v1964 = vmul.f32 %v1948, %v144
    %v1965 = vmul.f32 %v1951, %v144
    %v1966 = vmul.f32 %v1954, %v144
    %v1967 = vmul.f32 %v1957, %v144
    %v1968 = vmul.f32 %v1960, %v144
    %v1977 = vlaneseq
    %v1978 = vshrl.u32 %v1977, 7
    %v1979 = vsub.s32 %v173, %v1978
    %v1980 = vrot.slane %v1961, %v1979
    %v1981 = vlaneseq
    %v1982 = vshrl.u32 %v1981, 7
    %v1983 = vsub.s32 %v178, %v1982
    %v1984 = vrot.slane %v1962, %v1983
    %v1985 = vsel %vm183, %v1984, %v1980
    %v1986 = vlaneseq
    %v1987 = vshrl.u32 %v1986, 7
    %v1988 = vsub.s32 %v185, %v1987
    %v1989 = vrot.slane %v1963, %v1988
    %v1990 = vsel %vm190, %v1989, %v1985
    %v1991 = vlaneseq
    %v1992 = vshrl.u32 %v1991, 7
    %v1993 = vsub.s32 %v192, %v1992
    %v1994 = vrot.slane %v1964, %v1993
    %v1995 = vsel %vm197, %v1994, %v1990
    %v1996 = vlaneseq
    %v1997 = vshrl.u32 %v1996, 7
    %v1998 = vsub.s32 %v173, %v1997
    %v1999 = vrot.slane %v1965, %v1998
    %v2000 = vlaneseq
    %v2001 = vshrl.u32 %v2000, 7
    %v2002 = vsub.s32 %v178, %v2001
    %v2003 = vrot.slane %v1966, %v2002
    %v2004 = vsel %vm183, %v2003, %v1999
    %v2005 = vlaneseq
    %v2006 = vshrl.u32 %v2005, 7
    %v2007 = vsub.s32 %v185, %v2006
    %v2008 = vrot.slane %v1967, %v2007
    %v2009 = vsel %vm190, %v2008, %v2004
    %v2010 = vlaneseq
    %v2011 = vshrl.u32 %v2010, 7
    %v2012 = vsub.s32 %v192, %v2011
    %v2013 = vrot.slane %v1968, %v2012
    %v2014 = vsel %vm197, %v2013, %v2009
    %v2015 = vsel %vm218, %v2014, %v1995
    %v2017 = vsel %vm590, %v2015, 0.0
    %2018 = vadd.xlane.f32.xlu0 %v2017
    %v2019 = vpop.xlane.xlu0 %2018
    %v2020 = vmul.f32 %v2019, %v594
    %vm2021 = vcmask 25624
    %2022 = vst.msk [vmem:[#allocation3] sm:$0x3] %vm2021, %v2020
    %s2023 = scalar_lea.vmem %s1, 128
    %v2024 = vld [vmem:[%s2023] sm:$0xff]
    %v2025 = vld [vmem:[%s2023 + $0x8] sm:$0xff]
    %v2026 = vld [vmem:[%s2023 + $0x10] sm:$0xff]
    %v2027 = vld [vmem:[%s2023 + $0x18] sm:$0x3f]
    %v2028 = vld [vmem:[%s2023 + $0xa0] sm:$0xff]
    %v2029 = vld [vmem:[%s2023 + $0xa8] sm:$0xff]
    %v2030 = vld [vmem:[%s2023 + $0xb0] sm:$0xff]
    %v2031 = vld [vmem:[%s2023 + $0xb8] sm:$0x3f]
    %v2032 = vsel %vm70, %v2024, 0.0
    %2033 = vadd.xlane.f32.xlu0 %v2032
    %v2034 = vpop.xlane.xlu0 %2033
    %v2035 = vsel %vm70, %v2025, 0.0
    %2036 = vadd.xlane.f32.xlu0 %v2035
    %v2037 = vpop.xlane.xlu0 %2036
    %v2038 = vsel %vm70, %v2026, 0.0
    %2039 = vadd.xlane.f32.xlu0 %v2038
    %v2040 = vpop.xlane.xlu0 %2039
    %v2041 = vsel %vm74, %v2027, 0.0
    %2042 = vadd.xlane.f32.xlu0 %v2041
    %v2043 = vpop.xlane.xlu0 %2042
    %v2044 = vsel %vm70, %v2028, 0.0
    %2045 = vadd.xlane.f32.xlu0 %v2044
    %v2046 = vpop.xlane.xlu0 %2045
    %v2047 = vsel %vm70, %v2029, 0.0
    %2048 = vadd.xlane.f32.xlu0 %v2047
    %v2049 = vpop.xlane.xlu0 %2048
    %v2050 = vsel %vm70, %v2030, 0.0
    %2051 = vadd.xlane.f32.xlu0 %v2050
    %v2052 = vpop.xlane.xlu0 %2051
    %v2053 = vsel %vm74, %v2031, 0.0
    %2054 = vadd.xlane.f32.xlu0 %v2053
    %v2055 = vpop.xlane.xlu0 %2054
    %v2056 = vmul.f32 %v2034, %v144
    %v2057 = vmul.f32 %v2037, %v144
    %v2058 = vmul.f32 %v2040, %v144
    %v2059 = vmul.f32 %v2043, %v144
    %v2060 = vmul.f32 %v2046, %v144
    %v2061 = vmul.f32 %v2049, %v144
    %v2062 = vmul.f32 %v2052, %v144
    %v2063 = vmul.f32 %v2055, %v144
    %s2064 = scalar_lea.vmem %s2, 128
    %v2065 = vld [vmem:[%s2064] sm:$0xff]
    %v2066 = vld [vmem:[%s2064 + $0x8] sm:$0xff]
    %v2067 = vld [vmem:[%s2064 + $0x10] sm:$0xff]
    %v2068 = vld [vmem:[%s2064 + $0x18] sm:$0x3f]
    %s2069 = scalar_lea.vmem %s3, 4
    %v2070 = vld [vmem:[%s2069] sm:$0x1]
    %v2072 = vlaneseq
    %v2073 = vshrl.u32 %v2072, 7
    %v2074 = vsub.s32 0, %v2073
    %v2075 = vrot.slane %v2070, %v2074
    %v2085 = vlaneseq
    %v2086 = vshrl.u32 %v2085, 7
    %v2087 = vsub.s32 %v173, %v2086
    %v2088 = vrot.slane %v2056, %v2087
    %v2089 = vlaneseq
    %v2090 = vshrl.u32 %v2089, 7
    %v2091 = vsub.s32 %v178, %v2090
    %v2092 = vrot.slane %v2057, %v2091
    %v2093 = vsel %vm183, %v2092, %v2088
    %v2094 = vlaneseq
    %v2095 = vshrl.u32 %v2094, 7
    %v2096 = vsub.s32 %v185, %v2095
    %v2097 = vrot.slane %v2058, %v2096
    %v2098 = vsel %vm190, %v2097, %v2093
    %v2099 = vlaneseq
    %v2100 = vshrl.u32 %v2099, 7
    %v2101 = vsub.s32 %v192, %v2100
    %v2102 = vrot.slane %v2059, %v2101
    %v2103 = vsel %vm197, %v2102, %v2098
    %v2104 = vlaneseq
    %v2105 = vshrl.u32 %v2104, 7
    %v2106 = vsub.s32 %v173, %v2105
    %v2107 = vrot.slane %v2060, %v2106
    %v2108 = vlaneseq
    %v2109 = vshrl.u32 %v2108, 7
    %v2110 = vsub.s32 %v178, %v2109
    %v2111 = vrot.slane %v2061, %v2110
    %v2112 = vsel %vm183, %v2111, %v2107
    %v2113 = vlaneseq
    %v2114 = vshrl.u32 %v2113, 7
    %v2115 = vsub.s32 %v185, %v2114
    %v2116 = vrot.slane %v2062, %v2115
    %v2117 = vsel %vm190, %v2116, %v2112
    %v2118 = vlaneseq
    %v2119 = vshrl.u32 %v2118, 7
    %v2120 = vsub.s32 %v192, %v2119
    %v2121 = vrot.slane %v2063, %v2120
    %v2122 = vsel %vm197, %v2121, %v2117
    %v2123 = vsel %vm218, %v2122, %v2103
    %v2124 = vsel %vm220, %v2123, 0
    %v2127 = vsel %vm223, %v2068, 0
    %2129 = vmatprep.subr.mxu0 0.0
    %2130 = vmatpush1.msra.mxu0 %v2065
    %2131 = vmatprep.subr.mxu0 0.0
    %2132 = vmatpush1.msra.mxu0 %v2066
    %2133 = vmatprep.subr.mxu0 0.0
    %2134 = vmatpush1.msra.mxu0 %v2067
    %2135 = vmatprep.subr.mxu0 0.0
    %2136 = vmatpush1.msra.mxu0 %v2127
    %2137 = vmatprep.subr.mxu0 0.0
    %2138 = vmatpush1.msra.mxu0 0.0
    %2139 = vmatprep.subr.mxu0 0.0
    %2140 = vmatpush1.msra.mxu0 0.0
    %2141 = vmatprep.subr.mxu0 0.0
    %2142 = vmatpush1.msra.mxu0 0.0
    %2143 = vmatprep.subr.mxu0 0.0
    %2144 = vmatpush1.msra.mxu0 0.0
    %2145 = vmatprep.subr.mxu0 0.0
    %2146 = vmatpush1.msra.mxu0 0.0
    %2147 = vmatprep.subr.mxu0 0.0
    %2148 = vmatpush1.msra.mxu0 0.0
    %2149 = vmatprep.subr.mxu0 0.0
    %2150 = vmatpush1.msra.mxu0 0.0
    %2151 = vmatprep.subr.mxu0 0.0
    %2152 = vmatpush1.msra.mxu0 0.0
    %2153 = vmatprep.subr.mxu0 0.0
    %2154 = vmatpush1.msra.mxu0 0.0
    %2155 = vmatprep.subr.mxu0 0.0
    %2156 = vmatpush1.msra.mxu0 0.0
    %2157 = vmatprep.subr.mxu0 0.0
    %2158 = vmatpush1.msra.mxu0 0.0
    %2159 = vmatprep.subr.mxu0 0.0
    %2160 = vmatpush1.msra.mxu0 0.0
    %2161 = vmatprep.subr.mxu0 0.0
    %2162 = vmatpush1.msra.mxu0 0.0
    %2163 = vmatprep.subr.mxu0 0.0
    %2164 = vmatpush1.msra.mxu0 0.0
    %2165 = vmatprep.subr.mxu0 0.0
    %2166 = vmatpush1.msra.mxu0 0.0
    %2167 = vmatprep.subr.mxu0 0.0
    %2168 = vmatpush1.msra.mxu0 0.0
    %2169 = vmatprep.subr.mxu0 0.0
    %2170 = vmatpush1.msra.mxu0 0.0
    %2171 = vmatprep.subr.mxu0 0.0
    %2172 = vmatpush1.msra.mxu0 0.0
    %2173 = vmatprep.subr.mxu0 0.0
    %2174 = vmatpush1.msra.mxu0 0.0
    %2175 = vmatprep.subr.mxu0 0.0
    %2176 = vmatpush1.msra.mxu0 0.0
    %2177 = vmatprep.subr.mxu0 0.0
    %2178 = vmatpush1.msra.mxu0 0.0
    %2179 = vmatprep.subr.mxu0 0.0
    %2180 = vmatpush1.msra.mxu0 0.0
    %2181 = vmatprep.subr.mxu0 0.0
    %2182 = vmatpush1.msra.mxu0 0.0
    %2183 = vmatprep.subr.mxu0 0.0
    %2184 = vmatpush1.msra.mxu0 0.0
    %2185 = vmatprep.subr.mxu0 0.0
    %2186 = vmatpush1.msra.mxu0 0.0
    %2187 = vmatprep.subr.mxu0 0.0
    %2188 = vmatpush1.msra.mxu0 0.0
    %2189 = vmatprep.subr.mxu0 0.0
    %2190 = vmatpush1.msra.mxu0 0.0
    %2191 = vmatprep.subr.mxu0 0.0
    %2192 = vmatpush1.msra.mxu0 0.0
    %2193 = vmatprep.mubr.f32.mxu0 0.0
    %2194 = vmatmul.mubr.f32.gmra.mrb[0].mxu0 %v2124
    %v2195 = vpop.f32.mrb[0].mxu0
    %v2196 = vadd.f32 %v2075, %v2195
    %v2197 = vpop.f32.mrb[0].mxu0
    %2198 = vdwg.mxu0
    %vm2199 = vcmp.gt.f32.partialorder %v2196, 0.0
    %v2200 = vmin.f32 %v2196, 0.0
    %v2201 = vmul.f32 %v2200, 1.442695
    %v2202 = vpow.pop %v2201
    %v2203 = vsub.f32 %v2202, 1.0
    %v2204 = vsel %vm2199, %v2196, %v2203
    %s2205 = scalar_lea.vmem %s4, 64
    %v2206 = vld [vmem:[%s2205] sm:$0xff]
    %v2207 = vld [vmem:[%s2205 + $0x8] sm:$0x7f]
    %s2208 = scalar_lea.vmem %s5, 4
    %v2209 = vld [vmem:[%s2208] sm:$0x1]
    %v2211 = vlaneseq
    %v2212 = vshrl.u32 %v2211, 7
    %v2213 = vsub.s32 0, %v2212
    %v2214 = vrot.slane %v2209, %v2213
    %v2217 = vsel %vm312, %v2204, 0
    %v2220 = vsel %vm316, %v2207, 0
    %2222 = vmatprep.subr.mxu0 0.0
    %2223 = vmatpush1.msra.mxu0 %v2206
    %2224 = vmatprep.subr.mxu0 0.0
    %2225 = vmatpush1.msra.mxu0 %v2220
    %2226 = vmatprep.subr.mxu0 0.0
    %2227 = vmatpush1.msra.mxu0 0.0
    %2228 = vmatprep.subr.mxu0 0.0
    %2229 = vmatpush1.msra.mxu0 0.0
    %2230 = vmatprep.subr.mxu0 0.0
    %2231 = vmatpush1.msra.mxu0 0.0
    %2232 = vmatprep.subr.mxu0 0.0
    %2233 = vmatpush1.msra.mxu0 0.0
    %2234 = vmatprep.subr.mxu0 0.0
    %2235 = vmatpush1.msra.mxu0 0.0
    %2236 = vmatprep.subr.mxu0 0.0
    %2237 = vmatpush1.msra.mxu0 0.0
    %2238 = vmatprep.subr.mxu0 0.0
    %2239 = vmatpush1.msra.mxu0 0.0
    %2240 = vmatprep.subr.mxu0 0.0
    %2241 = vmatpush1.msra.mxu0 0.0
    %2242 = vmatprep.subr.mxu0 0.0
    %2243 = vmatpush1.msra.mxu0 0.0
    %2244 = vmatprep.subr.mxu0 0.0
    %2245 = vmatpush1.msra.mxu0 0.0
    %2246 = vmatprep.subr.mxu0 0.0
    %2247 = vmatpush1.msra.mxu0 0.0
    %2248 = vmatprep.subr.mxu0 0.0
    %2249 = vmatpush1.msra.mxu0 0.0
    %2250 = vmatprep.subr.mxu0 0.0
    %2251 = vmatpush1.msra.mxu0 0.0
    %2252 = vmatprep.subr.mxu0 0.0
    %2253 = vmatpush1.msra.mxu0 0.0
    %2254 = vmatprep.subr.mxu0 0.0
    %2255 = vmatpush1.msra.mxu0 0.0
    %2256 = vmatprep.subr.mxu0 0.0
    %2257 = vmatpush1.msra.mxu0 0.0
    %2258 = vmatprep.subr.mxu0 0.0
    %2259 = vmatpush1.msra.mxu0 0.0
    %2260 = vmatprep.subr.mxu0 0.0
    %2261 = vmatpush1.msra.mxu0 0.0
    %2262 = vmatprep.subr.mxu0 0.0
    %2263 = vmatpush1.msra.mxu0 0.0
    %2264 = vmatprep.subr.mxu0 0.0
    %2265 = vmatpush1.msra.mxu0 0.0
    %2266 = vmatprep.subr.mxu0 0.0
    %2267 = vmatpush1.msra.mxu0 0.0
    %2268 = vmatprep.subr.mxu0 0.0
    %2269 = vmatpush1.msra.mxu0 0.0
    %2270 = vmatprep.subr.mxu0 0.0
    %2271 = vmatpush1.msra.mxu0 0.0
    %2272 = vmatprep.subr.mxu0 0.0
    %2273 = vmatpush1.msra.mxu0 0.0
    %2274 = vmatprep.subr.mxu0 0.0
    %2275 = vmatpush1.msra.mxu0 0.0
    %2276 = vmatprep.subr.mxu0 0.0
    %2277 = vmatpush1.msra.mxu0 0.0
    %2278 = vmatprep.subr.mxu0 0.0
    %2279 = vmatpush1.msra.mxu0 0.0
    %2280 = vmatprep.subr.mxu0 0.0
    %2281 = vmatpush1.msra.mxu0 0.0
    %2282 = vmatprep.subr.mxu0 0.0
    %2283 = vmatpush1.msra.mxu0 0.0
    %2284 = vmatprep.subr.mxu0 0.0
    %2285 = vmatpush1.msra.mxu0 0.0
    %2286 = vmatprep.mubr.f32.mxu0 0.0
    %2287 = vmatmul.mubr.f32.gmra.mrb[0].mxu0 %v2217
    %v2288 = vpop.f32.mrb[0].mxu0
    %v2289 = vadd.f32 %v2214, %v2288
    %v2290 = vpop.f32.mrb[0].mxu0
    %2291 = vdwg.mxu0
    %v2292 = vsub.f32 0.0, %v2289
    %v2293 = vmul.f32 %v2292, 1.442695
    %v2294 = vpow.pop %v2293
    %v2295 = vadd.f32 %v2294, 1.0
    %v2296 = vrcp.pop %v2295
    %v2297 = vmul.f32 1.0, %v2296
    %v2298 = vlaneseq
    %v2299 = vshrl.u32 %v2298, 7
    %v2300 = vsub.s32 0, %v2299
    %v2301 = vrot.slane %v2297, %v2300
    %2303 = vbcast.lane.b32.xlu0 %v2301, 256
    %v2304 = vpop.permute.xlu0 %2303
    %s2306 = sor.u32 256, 8
    %2307 = vbcast.lane.b32.xlu0 %v2301, %s2306
    %v2308 = vpop.permute.xlu0 %2307
    %s2310 = sor.u32 256, 16
    %2311 = vbcast.lane.b32.xlu0 %v2301, %s2310
    %v2312 = vpop.permute.xlu0 %2311
    %s2314 = sor.u32 256, 24
    %2315 = vbcast.lane.b32.xlu0 %v2301, %s2314
    %v2316 = vpop.permute.xlu0 %2315
    %v2317 = vlaneseq
    %v2318 = vshrl.u32 %v2317, 7
    %v2319 = vsub.s32 1, %v2318
    %v2320 = vrot.slane %v2297, %v2319
    %2322 = vbcast.lane.b32.xlu0 %v2320, 256
    %v2323 = vpop.permute.xlu0 %2322
    %s2325 = sor.u32 256, 8
    %2326 = vbcast.lane.b32.xlu0 %v2320, %s2325
    %v2327 = vpop.permute.xlu0 %2326
    %s2329 = sor.u32 256, 16
    %2330 = vbcast.lane.b32.xlu0 %v2320, %s2329
    %v2331 = vpop.permute.xlu0 %2330
    %s2333 = sor.u32 256, 24
    %2334 = vbcast.lane.b32.xlu0 %v2320, %s2333
    %v2335 = vpop.permute.xlu0 %2334
    %v2336 = vmul.f32 %v2024, %v2304
    %v2337 = vmul.f32 %v2025, %v2308
    %v2338 = vmul.f32 %v2026, %v2312
    %v2339 = vmul.f32 %v2027, %v2316
    %v2340 = vmul.f32 %v2028, %v2323
    %v2341 = vmul.f32 %v2029, %v2327
    %v2342 = vmul.f32 %v2030, %v2331
    %v2343 = vmul.f32 %v2031, %v2335
    %s2344 = sld [smem:[#allocation4 + $0x4]]
    %v2345 = vstv %s2344
    %v2346 = vmul.f32 %v2336, %v2345
    %v2347 = vmul.f32 %v2337, %v2345
    %v2348 = vmul.f32 %v2338, %v2345
    %v2349 = vmul.f32 %v2339, %v2345
    %v2350 = vmul.f32 %v2340, %v2345
    %v2351 = vmul.f32 %v2341, %v2345
    %v2352 = vmul.f32 %v2342, %v2345
    %v2353 = vmul.f32 %v2343, %v2345
    %s2354 = sld [smem:[#allocation4 + $0x9]]
    %v2355 = vstv %s2354
    %v2356 = vadd.f32 %v2346, %v2355
    %v2357 = vadd.f32 %v2347, %v2355
    %v2358 = vadd.f32 %v2348, %v2355
    %v2359 = vadd.f32 %v2349, %v2355
    %v2360 = vadd.f32 %v2350, %v2355
    %v2361 = vadd.f32 %v2351, %v2355
    %v2362 = vadd.f32 %v2352, %v2355
    %v2363 = vadd.f32 %v2353, %v2355
    %vm2364 = vcmp.gt.f32.partialorder %v2356, 0.0
    %vm2365 = vcmp.gt.f32.partialorder %v2357, 0.0
    %vm2366 = vcmp.gt.f32.partialorder %v2358, 0.0
    %vm2367 = vcmp.gt.f32.partialorder %v2359, 0.0
    %vm2368 = vcmp.gt.f32.partialorder %v2360, 0.0
    %vm2369 = vcmp.gt.f32.partialorder %v2361, 0.0
    %vm2370 = vcmp.gt.f32.partialorder %v2362, 0.0
    %vm2371 = vcmp.gt.f32.partialorder %v2363, 0.0
    %v2372 = vmin.f32 %v2356, 0.0
    %v2373 = vmin.f32 %v2357, 0.0
    %v2374 = vmin.f32 %v2358, 0.0
    %v2375 = vmin.f32 %v2359, 0.0
    %v2376 = vmin.f32 %v2360, 0.0
    %v2377 = vmin.f32 %v2361, 0.0
    %v2378 = vmin.f32 %v2362, 0.0
    %v2379 = vmin.f32 %v2363, 0.0
    %v2380 = vmul.f32 %v2372, 1.442695
    %v2381 = vpow.pop %v2380
    %v2382 = vmul.f32 %v2373, 1.442695
    %v2383 = vpow.pop %v2382
    %v2384 = vmul.f32 %v2374, 1.442695
    %v2385 = vpow.pop %v2384
    %v2386 = vmul.f32 %v2375, 1.442695
    %v2387 = vpow.pop %v2386
    %v2388 = vmul.f32 %v2376, 1.442695
    %v2389 = vpow.pop %v2388
    %v2390 = vmul.f32 %v2377, 1.442695
    %v2391 = vpow.pop %v2390
    %v2392 = vmul.f32 %v2378, 1.442695
    %v2393 = vpow.pop %v2392
    %v2394 = vmul.f32 %v2379, 1.442695
    %v2395 = vpow.pop %v2394
    %v2396 = vsub.f32 %v2381, 1.0
    %v2397 = vsub.f32 %v2383, 1.0
    %v2398 = vsub.f32 %v2385, 1.0
    %v2399 = vsub.f32 %v2387, 1.0
    %v2400 = vsub.f32 %v2389, 1.0
    %v2401 = vsub.f32 %v2391, 1.0
    %v2402 = vsub.f32 %v2393, 1.0
    %v2403 = vsub.f32 %v2395, 1.0
    %v2404 = vsel %vm2364, %v2356, %v2396
    %v2405 = vsel %vm2365, %v2357, %v2397
    %v2406 = vsel %vm2366, %v2358, %v2398
    %v2407 = vsel %vm2367, %v2359, %v2399
    %v2408 = vsel %vm2368, %v2360, %v2400
    %v2409 = vsel %vm2369, %v2361, %v2401
    %v2410 = vsel %vm2370, %v2362, %v2402
    %v2411 = vsel %vm2371, %v2363, %v2403
    %v2412 = vsel %vm70, %v2404, 0.0
    %2413 = vadd.xlane.f32.xlu0 %v2412
    %v2414 = vpop.xlane.xlu0 %2413
    %v2415 = vsel %vm70, %v2405, 0.0
    %2416 = vadd.xlane.f32.xlu0 %v2415
    %v2417 = vpop.xlane.xlu0 %2416
    %v2418 = vsel %vm70, %v2406, 0.0
    %2419 = vadd.xlane.f32.xlu0 %v2418
    %v2420 = vpop.xlane.xlu0 %2419
    %v2421 = vsel %vm74, %v2407, 0.0
    %2422 = vadd.xlane.f32.xlu0 %v2421
    %v2423 = vpop.xlane.xlu0 %2422
    %v2424 = vsel %vm70, %v2408, 0.0
    %2425 = vadd.xlane.f32.xlu0 %v2424
    %v2426 = vpop.xlane.xlu0 %2425
    %v2427 = vsel %vm70, %v2409, 0.0
    %2428 = vadd.xlane.f32.xlu0 %v2427
    %v2429 = vpop.xlane.xlu0 %2428
    %v2430 = vsel %vm70, %v2410, 0.0
    %2431 = vadd.xlane.f32.xlu0 %v2430
    %v2432 = vpop.xlane.xlu0 %2431
    %v2433 = vsel %vm74, %v2411, 0.0
    %2434 = vadd.xlane.f32.xlu0 %v2433
    %v2435 = vpop.xlane.xlu0 %2434
    %v2436 = vmul.f32 %v2414, %v144
    %v2437 = vmul.f32 %v2417, %v144
    %v2438 = vmul.f32 %v2420, %v144
    %v2439 = vmul.f32 %v2423, %v144
    %v2440 = vmul.f32 %v2426, %v144
    %v2441 = vmul.f32 %v2429, %v144
    %v2442 = vmul.f32 %v2432, %v144
    %v2443 = vmul.f32 %v2435, %v144
    %v2452 = vlaneseq
    %v2453 = vshrl.u32 %v2452, 7
    %v2454 = vsub.s32 %v173, %v2453
    %v2455 = vrot.slane %v2436, %v2454
    %v2456 = vlaneseq
    %v2457 = vshrl.u32 %v2456, 7
    %v2458 = vsub.s32 %v178, %v2457
    %v2459 = vrot.slane %v2437, %v2458
    %v2460 = vsel %vm183, %v2459, %v2455
    %v2461 = vlaneseq
    %v2462 = vshrl.u32 %v2461, 7
    %v2463 = vsub.s32 %v185, %v2462
    %v2464 = vrot.slane %v2438, %v2463
    %v2465 = vsel %vm190, %v2464, %v2460
    %v2466 = vlaneseq
    %v2467 = vshrl.u32 %v2466, 7
    %v2468 = vsub.s32 %v192, %v2467
    %v2469 = vrot.slane %v2439, %v2468
    %v2470 = vsel %vm197, %v2469, %v2465
    %v2471 = vlaneseq
    %v2472 = vshrl.u32 %v2471, 7
    %v2473 = vsub.s32 %v173, %v2472
    %v2474 = vrot.slane %v2440, %v2473
    %v2475 = vlaneseq
    %v2476 = vshrl.u32 %v2475, 7
    %v2477 = vsub.s32 %v178, %v2476
    %v2478 = vrot.slane %v2441, %v2477
    %v2479 = vsel %vm183, %v2478, %v2474
    %v2480 = vlaneseq
    %v2481 = vshrl.u32 %v2480, 7
    %v2482 = vsub.s32 %v185, %v2481
    %v2483 = vrot.slane %v2442, %v2482
    %v2484 = vsel %vm190, %v2483, %v2479
    %v2485 = vlaneseq
    %v2486 = vshrl.u32 %v2485, 7
    %v2487 = vsub.s32 %v192, %v2486
    %v2488 = vrot.slane %v2443, %v2487
    %v2489 = vsel %vm197, %v2488, %v2484
    %v2490 = vsel %vm218, %v2489, %v2470
    %v2492 = vsel %vm590, %v2490, 0.0
    %2493 = vadd.xlane.f32.xlu0 %v2492
    %v2494 = vpop.xlane.xlu0 %2493
    %v2495 = vmul.f32 %v2494, %v594
    %vm2496 = vcmask 33824
    %2497 = vst.msk [vmem:[#allocation3] sm:$0x3] %vm2496, %v2495
    %v2498 = vld [vmem:[#allocation3] sm:$0x3]
    %v2499 = vld [vmem:[%s6] sm:$0x1f]
    %v2500 = vld [vmem:[%s7] sm:$0x1]
    %v2502 = vlaneseq
    %v2503 = vshrl.u32 %v2502, 7
    %v2504 = vsub.s32 0, %v2503
    %v2505 = vrot.slane %v2500, %v2504
    %vm2507 = vcmask 39936
    %v2509 = vsel %vm2507, %v2498, 0
    %vm2511 = vcmask 1044480
    %v2513 = vsel %vm2511, %v2499, 0
    %2515 = vmatprep.subr.mxu0 0.0
    %2516 = vmatpush1.msra.mxu0 %v2513
    %2517 = vmatprep.subr.mxu0 0.0
    %2518 = vmatpush1.msra.mxu0 0.0
    %2519 = vmatprep.subr.mxu0 0.0
    %2520 = vmatpush1.msra.mxu0 0.0
    %2521 = vmatprep.subr.mxu0 0.0
    %2522 = vmatpush1.msra.mxu0 0.0
    %2523 = vmatprep.subr.mxu0 0.0
    %2524 = vmatpush1.msra.mxu0 0.0
    %2525 = vmatprep.subr.mxu0 0.0
    %2526 = vmatpush1.msra.mxu0 0.0
    %2527 = vmatprep.subr.mxu0 0.0
    %2528 = vmatpush1.msra.mxu0 0.0
    %2529 = vmatprep.subr.mxu0 0.0
    %2530 = vmatpush1.msra.mxu0 0.0
    %2531 = vmatprep.subr.mxu0 0.0
    %2532 = vmatpush1.msra.mxu0 0.0
    %2533 = vmatprep.subr.mxu0 0.0
    %2534 = vmatpush1.msra.mxu0 0.0
    %2535 = vmatprep.subr.mxu0 0.0
    %2536 = vmatpush1.msra.mxu0 0.0
    %2537 = vmatprep.subr.mxu0 0.0
    %2538 = vmatpush1.msra.mxu0 0.0
    %2539 = vmatprep.subr.mxu0 0.0
    %2540 = vmatpush1.msra.mxu0 0.0
    %2541 = vmatprep.subr.mxu0 0.0
    %2542 = vmatpush1.msra.mxu0 0.0
    %2543 = vmatprep.subr.mxu0 0.0
    %2544 = vmatpush1.msra.mxu0 0.0
    %2545 = vmatprep.subr.mxu0 0.0
    %2546 = vmatpush1.msra.mxu0 0.0
    %2547 = vmatprep.subr.mxu0 0.0
    %2548 = vmatpush1.msra.mxu0 0.0
    %2549 = vmatprep.subr.mxu0 0.0
    %2550 = vmatpush1.msra.mxu0 0.0
    %2551 = vmatprep.subr.mxu0 0.0
    %2552 = vmatpush1.msra.mxu0 0.0
    %2553 = vmatprep.subr.mxu0 0.0
    %2554 = vmatpush1.msra.mxu0 0.0
    %2555 = vmatprep.subr.mxu0 0.0
    %2556 = vmatpush1.msra.mxu0 0.0
    %2557 = vmatprep.subr.mxu0 0.0
    %2558 = vmatpush1.msra.mxu0 0.0
    %2559 = vmatprep.subr.mxu0 0.0
    %2560 = vmatpush1.msra.mxu0 0.0
    %2561 = vmatprep.subr.mxu0 0.0
    %2562 = vmatpush1.msra.mxu0 0.0
    %2563 = vmatprep.subr.mxu0 0.0
    %2564 = vmatpush1.msra.mxu0 0.0
    %2565 = vmatprep.subr.mxu0 0.0
    %2566 = vmatpush1.msra.mxu0 0.0
    %2567 = vmatprep.subr.mxu0 0.0
    %2568 = vmatpush1.msra.mxu0 0.0
    %2569 = vmatprep.subr.mxu0 0.0
    %2570 = vmatpush1.msra.mxu0 0.0
    %2571 = vmatprep.subr.mxu0 0.0
    %2572 = vmatpush1.msra.mxu0 0.0
    %2573 = vmatprep.subr.mxu0 0.0
    %2574 = vmatpush1.msra.mxu0 0.0
    %2575 = vmatprep.subr.mxu0 0.0
    %2576 = vmatpush1.msra.mxu0 0.0
    %2577 = vmatprep.subr.mxu0 0.0
    %2578 = vmatpush1.msra.mxu0 0.0
    %2579 = vmatprep.mubr.f32.mxu0 0.0
    %2580 = vmatmul.mubr.f32.gmra.mrb[0].mxu0 %v2509
    %v2581 = vpop.f32.mrb[0].mxu0
    %v2582 = vadd.f32 %v2505, %v2581
    %v2583 = vpop.f32.mrb[0].mxu0
    %2584 = vdwg.mxu0
    %vm2585 = vcmp.gt.f32.partialorder %v2582, 0.0
    %v2586 = vmin.f32 %v2582, 0.0
    %v2587 = vmul.f32 %v2586, 1.442695
    %v2588 = vpow.pop %v2587
    %v2589 = vsub.f32 %v2588, 1.0
    %v2590 = vsel %vm2585, %v2582, %v2589
    %v2591 = vld [vmem:[%s8] sm:$0x7]
    %v2592 = vld [vmem:[%s9] sm:$0x1]
    %v2594 = vlaneseq
    %v2595 = vshrl.u32 %v2594, 7
    %v2596 = vsub.s32 0, %v2595
    %v2597 = vrot.slane %v2592, %v2596
    %vm2599 = vcmask 23552
    %v2601 = vsel %vm2599, %v2590, 0
    %vm2603 = vcmask 1042432
    %v2605 = vsel %vm2603, %v2591, 0
    %2607 = vmatprep.subr.mxu0 0.0
    %2608 = vmatpush1.msra.mxu0 %v2605
    %2609 = vmatprep.subr.mxu0 0.0
    %2610 = vmatpush1.msra.mxu0 0.0
    %2611 = vmatprep.subr.mxu0 0.0
    %2612 = vmatpush1.msra.mxu0 0.0
    %2613 = vmatprep.subr.mxu0 0.0
    %2614 = vmatpush1.msra.mxu0 0.0
    %2615 = vmatprep.subr.mxu0 0.0
    %2616 = vmatpush1.msra.mxu0 0.0
    %2617 = vmatprep.subr.mxu0 0.0
    %2618 = vmatpush1.msra.mxu0 0.0
    %2619 = vmatprep.subr.mxu0 0.0
    %2620 = vmatpush1.msra.mxu0 0.0
    %2621 = vmatprep.subr.mxu0 0.0
    %2622 = vmatpush1.msra.mxu0 0.0
    %2623 = vmatprep.subr.mxu0 0.0
    %2624 = vmatpush1.msra.mxu0 0.0
    %2625 = vmatprep.subr.mxu0 0.0
    %2626 = vmatpush1.msra.mxu0 0.0
    %2627 = vmatprep.subr.mxu0 0.0
    %2628 = vmatpush1.msra.mxu0 0.0
    %2629 = vmatprep.subr.mxu0 0.0
    %2630 = vmatpush1.msra.mxu0 0.0
    %2631 = vmatprep.subr.mxu0 0.0
    %2632 = vmatpush1.msra.mxu0 0.0
    %2633 = vmatprep.subr.mxu0 0.0
    %2634 = vmatpush1.msra.mxu0 0.0
    %2635 = vmatprep.subr.mxu0 0.0
    %2636 = vmatpush1.msra.mxu0 0.0
    %2637 = vmatprep.subr.mxu0 0.0
    %2638 = vmatpush1.msra.mxu0 0.0
    %2639 = vmatprep.subr.mxu0 0.0
    %2640 = vmatpush1.msra.mxu0 0.0
    %2641 = vmatprep.subr.mxu0 0.0
    %2642 = vmatpush1.msra.mxu0 0.0
    %2643 = vmatprep.subr.mxu0 0.0
    %2644 = vmatpush1.msra.mxu0 0.0
    %2645 = vmatprep.subr.mxu0 0.0
    %2646 = vmatpush1.msra.mxu0 0.0
    %2647 = vmatprep.subr.mxu0 0.0
    %2648 = vmatpush1.msra.mxu0 0.0
    %2649 = vmatprep.subr.mxu0 0.0
    %2650 = vmatpush1.msra.mxu0 0.0
    %2651 = vmatprep.subr.mxu0 0.0
    %2652 = vmatpush1.msra.mxu0 0.0
    %2653 = vmatprep.subr.mxu0 0.0
    %2654 = vmatpush1.msra.mxu0 0.0
    %2655 = vmatprep.subr.mxu0 0.0
    %2656 = vmatpush1.msra.mxu0 0.0
    %2657 = vmatprep.subr.mxu0 0.0
    %2658 = vmatpush1.msra.mxu0 0.0
    %2659 = vmatprep.subr.mxu0 0.0
    %2660 = vmatpush1.msra.mxu0 0.0
    %2661 = vmatprep.subr.mxu0 0.0
    %2662 = vmatpush1.msra.mxu0 0.0
    %2663 = vmatprep.subr.mxu0 0.0
    %2664 = vmatpush1.msra.mxu0 0.0
    %2665 = vmatprep.subr.mxu0 0.0
    %2666 = vmatpush1.msra.mxu0 0.0
    %2667 = vmatprep.subr.mxu0 0.0
    %2668 = vmatpush1.msra.mxu0 0.0
    %2669 = vmatprep.subr.mxu0 0.0
    %2670 = vmatpush1.msra.mxu0 0.0
    %2671 = vmatprep.mubr.f32.mxu0 0.0
    %2672 = vmatmul.mubr.f32.gmra.mrb[0].mxu0 %v2601
    %v2673 = vpop.f32.mrb[0].mxu0
    %v2674 = vadd.f32 %v2597, %v2673
    %v2675 = vpop.f32.mrb[0].mxu0
    %2676 = vdwg.mxu0
    %v2677 = vsub.f32 0.0, %v2674
    %v2678 = vmul.f32 %v2677, 1.442695
    %v2679 = vpow.pop %v2678
    %v2680 = vadd.f32 %v2679, 1.0
    %v2681 = vrcp.pop %v2680
    %v2682 = vmul.f32 1.0, %v2681
    %v2685 = vunpack.c.l.s4 1966171168
    %v2686 = vunpack.c.0.s8 %v2685
    %v2687 = vlaneseq
    %v2688 = vshrl.u32 %v2687, 7
    %v2689 = vsub.s32 %v2686, %v2688
    %v2690 = vrot.slane %v2682, %v2689
    %v2691 = vcombine.high %v2690, %v2690
    %v2693 = vunpack.c.l.s4 1966171168
    %v2694 = vunpack.c.0.s8 %v2693
    %v2695 = vlaneseq
    %v2696 = vshrl.u32 %v2695, 7
    %v2697 = vsub.s32 %v2694, %v2696
    %v2698 = vrot.slane %v2690, %v2697
    %v2700 = vunpack.c.l.s4 1966171168
    %v2701 = vunpack.c.0.s8 %v2700
    %v2702 = vlaneseq
    %v2703 = vshrl.u32 %v2702, 7
    %v2704 = vsub.s32 %v2701, %v2703
    %v2705 = vrot.slane %v2691, %v2704
    %s2708 = sld [smem:[#allocation4 + $0xa]]
    %v2709 = vstv %s2708
    %v2710 = vmul.f32 %v2698, %v2709
    %v2711 = vmul.f32 %v2705, %v2709
    %v2714 = vlaneseq
    %v2715 = vshrl.u32 %v2714, 7
    %v2716 = vsub.s32 0, %v2715
    %v2717 = vrot.slane %v2710, %v2716
    %v2718 = vlaneseq
    %v2719 = vshrl.u32 %v2718, 7
    %v2720 = vsub.s32 0, %v2719
    %v2721 = vrot.slane %v2711, %v2720
    %2722 = vset.pattern.permute.xlu0 0
    %2723 = vperm.xlu0 %2722, %v2717
    %v2724 = vpop.permute.xlu0 %2723
    %2726 = vset.pattern.permute.xlu0 0
    %2727 = vperm.xlu0 %2726, %v2721
    %v2728 = vpop.permute.xlu0 %2727
    %v2730 = vmul.f32 %v502, %v2724
    %v2731 = vmul.f32 %v503, %v2724
    %v2732 = vmul.f32 %v504, %v2724
    %v2733 = vmul.f32 %v505, %v2724
    %v2734 = vmul.f32 %v506, %v2728
    %v2735 = vmul.f32 %v507, %v2728
    %v2736 = vmul.f32 %v508, %v2728
    %v2737 = vmul.f32 %v509, %v2728
    %s2738 = sld [smem:[#allocation4 + $0xf]]
    %v2739 = vstv %s2738
    %v2740 = vadd.f32 %v2730, %v2739
    %v2741 = vadd.f32 %v2731, %v2739
    %v2742 = vadd.f32 %v2732, %v2739
    %v2743 = vadd.f32 %v2733, %v2739
    %v2744 = vadd.f32 %v2734, %v2739
    %v2745 = vadd.f32 %v2735, %v2739
    %v2746 = vadd.f32 %v2736, %v2739
    %v2747 = vadd.f32 %v2737, %v2739
    %vm2748 = vcmp.gt.f32.partialorder %v2740, 0.0
    %vm2749 = vcmp.gt.f32.partialorder %v2741, 0.0
    %vm2750 = vcmp.gt.f32.partialorder %v2742, 0.0
    %vm2751 = vcmp.gt.f32.partialorder %v2743, 0.0
    %vm2752 = vcmp.gt.f32.partialorder %v2744, 0.0
    %vm2753 = vcmp.gt.f32.partialorder %v2745, 0.0
    %vm2754 = vcmp.gt.f32.partialorder %v2746, 0.0
    %vm2755 = vcmp.gt.f32.partialorder %v2747, 0.0
    %v2756 = vmin.f32 %v2740, 0.0
    %v2757 = vmin.f32 %v2741, 0.0
    %v2758 = vmin.f32 %v2742, 0.0
    %v2759 = vmin.f32 %v2743, 0.0
    %v2760 = vmin.f32 %v2744, 0.0
    %v2761 = vmin.f32 %v2745, 0.0
    %v2762 = vmin.f32 %v2746, 0.0
    %v2763 = vmin.f32 %v2747, 0.0
    %v2764 = vmul.f32 %v2756, 1.442695
    %v2765 = vpow.pop %v2764
    %v2766 = vmul.f32 %v2757, 1.442695
    %v2767 = vpow.pop %v2766
    %v2768 = vmul.f32 %v2758, 1.442695
    %v2769 = vpow.pop %v2768
    %v2770 = vmul.f32 %v2759, 1.442695
    %v2771 = vpow.pop %v2770
    %v2772 = vmul.f32 %v2760, 1.442695
    %v2773 = vpow.pop %v2772
    %v2774 = vmul.f32 %v2761, 1.442695
    %v2775 = vpow.pop %v2774
    %v2776 = vmul.f32 %v2762, 1.442695
    %v2777 = vpow.pop %v2776
    %v2778 = vmul.f32 %v2763, 1.442695
    %v2779 = vpow.pop %v2778
    %v2780 = vsub.f32 %v2765, 1.0
    %v2781 = vsub.f32 %v2767, 1.0
    %v2782 = vsub.f32 %v2769, 1.0
    %v2783 = vsub.f32 %v2771, 1.0
    %v2784 = vsub.f32 %v2773, 1.0
    %v2785 = vsub.f32 %v2775, 1.0
    %v2786 = vsub.f32 %v2777, 1.0
    %v2787 = vsub.f32 %v2779, 1.0
    %v2788 = vsel %vm2748, %v2740, %v2780
    %v2789 = vsel %vm2749, %v2741, %v2781
    %v2790 = vsel %vm2750, %v2742, %v2782
    %v2791 = vsel %vm2751, %v2743, %v2783
    %v2792 = vsel %vm2752, %v2744, %v2784
    %v2793 = vsel %vm2753, %v2745, %v2785
    %v2794 = vsel %vm2754, %v2746, %v2786
    %v2795 = vsel %vm2755, %v2747, %v2787
    %v2798 = vrot.slane %v2788, 1
    %v2799 = vrot.slane %v2792, 1
    %v2802 = vmax.f32 %v2788, %v2798
    %v2803 = vmax.f32 %v2792, %v2799
    %vm2804 = vcmask 196608
    %2805 = vst.msk [vmem:[#allocation2 + $0x7] sm:$0x1] %vm2804, %v2802
    %2806 = vst.msk [vmem:[#allocation2 + $0xa7] sm:$0x1] %vm2804, %v2803
    %vm2807 = vcmask 198658
    %2808 = vst.msk [vmem:[#allocation2 + $0x6] sm:$0x4] %vm2807, %v2802
    %2809 = vst.msk [vmem:[#allocation2 + $0xa6] sm:$0x4] %vm2807, %v2803
    %vm2810 = vcmask 200708
    %2811 = vst.msk [vmem:[#allocation2 + $0x5] sm:$0x10] %vm2810, %v2802
    %2812 = vst.msk [vmem:[#allocation2 + $0xa5] sm:$0x10] %vm2810, %v2803
    %vm2813 = vcmask 202758
    %2814 = vst.msk [vmem:[#allocation2 + $0x4] sm:$0x40] %vm2813, %v2802
    %2815 = vst.msk [vmem:[#allocation2 + $0xa4] sm:$0x40] %vm2813, %v2803
    %v2818 = vrot.slane %v2789, 1
    %v2819 = vrot.slane %v2793, 1
    %v2822 = vmax.f32 %v2789, %v2818
    %v2823 = vmax.f32 %v2793, %v2819
    %2824 = vst.msk [vmem:[#allocation2 + $0xb] sm:$0x1] %vm2804, %v2822
    %2825 = vst.msk [vmem:[#allocation2 + $0xab] sm:$0x1] %vm2804, %v2823
    %2826 = vst.msk [vmem:[#allocation2 + $0xa] sm:$0x4] %vm2807, %v2822
    %2827 = vst.msk [vmem:[#allocation2 + $0xaa] sm:$0x4] %vm2807, %v2823
    %2828 = vst.msk [vmem:[#allocation2 + $0x9] sm:$0x10] %vm2810, %v2822
    %2829 = vst.msk [vmem:[#allocation2 + $0xa9] sm:$0x10] %vm2810, %v2823
    %2830 = vst.msk [vmem:[#allocation2 + $0x8] sm:$0x40] %vm2813, %v2822
    %2831 = vst.msk [vmem:[#allocation2 + $0xa8] sm:$0x40] %vm2813, %v2823
    %v2834 = vrot.slane %v2790, 1
    %v2835 = vrot.slane %v2794, 1
    %v2838 = vmax.f32 %v2790, %v2834
    %v2839 = vmax.f32 %v2794, %v2835
    %2840 = vst.msk [vmem:[#allocation2 + $0xf] sm:$0x1] %vm2804, %v2838
    %2841 = vst.msk [vmem:[#allocation2 + $0xaf] sm:$0x1] %vm2804, %v2839
    %2842 = vst.msk [vmem:[#allocation2 + $0xe] sm:$0x4] %vm2807, %v2838
    %2843 = vst.msk [vmem:[#allocation2 + $0xae] sm:$0x4] %vm2807, %v2839
    %2844 = vst.msk [vmem:[#allocation2 + $0xd] sm:$0x10] %vm2810, %v2838
    %2845 = vst.msk [vmem:[#allocation2 + $0xad] sm:$0x10] %vm2810, %v2839
    %2846 = vst.msk [vmem:[#allocation2 + $0xc] sm:$0x40] %vm2813, %v2838
    %2847 = vst.msk [vmem:[#allocation2 + $0xac] sm:$0x40] %vm2813, %v2839
    %v2850 = vrot.slane %v2791, 1
    %v2851 = vrot.slane %v2795, 1
    %v2854 = vmax.f32 %v2791, %v2850
    %v2855 = vmax.f32 %v2795, %v2851
    %2856 = vst.msk [vmem:[#allocation2 + $0x13] sm:$0x1] %vm2804, %v2854
    %2857 = vst.msk [vmem:[#allocation2 + $0xb3] sm:$0x1] %vm2804, %v2855
    %2858 = vst.msk [vmem:[#allocation2 + $0x12] sm:$0x4] %vm2807, %v2854
    %2859 = vst.msk [vmem:[#allocation2 + $0xb2] sm:$0x4] %vm2807, %v2855
    %2860 = vst.msk [vmem:[#allocation2 + $0x11] sm:$0x10] %vm2810, %v2854
    %2861 = vst.msk [vmem:[#allocation2 + $0xb1] sm:$0x10] %vm2810, %v2855
    %s2862 = sld [smem:[#allocation4 + $0xb]]
    %v2863 = vstv %s2862
    %v2864 = vmul.f32 %v2698, %v2863
    %v2865 = vmul.f32 %v2705, %v2863
    %v2868 = vlaneseq
    %v2869 = vshrl.u32 %v2868, 7
    %v2870 = vsub.s32 0, %v2869
    %v2871 = vrot.slane %v2864, %v2870
    %v2872 = vlaneseq
    %v2873 = vshrl.u32 %v2872, 7
    %v2874 = vsub.s32 0, %v2873
    %v2875 = vrot.slane %v2865, %v2874
    %2876 = vset.pattern.permute.xlu0 1
    %2877 = vperm.xlu0 %2876, %v2871
    %v2878 = vpop.permute.xlu0 %2877
    %2880 = vset.pattern.permute.xlu0 1
    %2881 = vperm.xlu0 %2880, %v2875
    %v2882 = vpop.permute.xlu0 %2881
    %v2884 = vmul.f32 %v979, %v2878
    %v2885 = vmul.f32 %v980, %v2878
    %v2886 = vmul.f32 %v981, %v2878
    %v2887 = vmul.f32 %v982, %v2878
    %v2888 = vmul.f32 %v983, %v2882
    %v2889 = vmul.f32 %v984, %v2882
    %v2890 = vmul.f32 %v985, %v2882
    %v2891 = vmul.f32 %v986, %v2882
    %s2892 = sld [smem:[#allocation4 + $0x10]]
    %v2893 = vstv %s2892
    %v2894 = vadd.f32 %v2884, %v2893
    %v2895 = vadd.f32 %v2885, %v2893
    %v2896 = vadd.f32 %v2886, %v2893
    %v2897 = vadd.f32 %v2887, %v2893
    %v2898 = vadd.f32 %v2888, %v2893
    %v2899 = vadd.f32 %v2889, %v2893
    %v2900 = vadd.f32 %v2890, %v2893
    %v2901 = vadd.f32 %v2891, %v2893
    %vm2902 = vcmp.gt.f32.partialorder %v2894, 0.0
    %vm2903 = vcmp.gt.f32.partialorder %v2895, 0.0
    %vm2904 = vcmp.gt.f32.partialorder %v2896, 0.0
    %vm2905 = vcmp.gt.f32.partialorder %v2897, 0.0
    %vm2906 = vcmp.gt.f32.partialorder %v2898, 0.0
    %vm2907 = vcmp.gt.f32.partialorder %v2899, 0.0
    %vm2908 = vcmp.gt.f32.partialorder %v2900, 0.0
    %vm2909 = vcmp.gt.f32.partialorder %v2901, 0.0
    %v2910 = vmin.f32 %v2894, 0.0
    %v2911 = vmin.f32 %v2895, 0.0
    %v2912 = vmin.f32 %v2896, 0.0
    %v2913 = vmin.f32 %v2897, 0.0
    %v2914 = vmin.f32 %v2898, 0.0
    %v2915 = vmin.f32 %v2899, 0.0
    %v2916 = vmin.f32 %v2900, 0.0
    %v2917 = vmin.f32 %v2901, 0.0
    %v2918 = vmul.f32 %v2910, 1.442695
    %v2919 = vpow.pop %v2918
    %v2920 = vmul.f32 %v2911, 1.442695
    %v2921 = vpow.pop %v2920
    %v2922 = vmul.f32 %v2912, 1.442695
    %v2923 = vpow.pop %v2922
    %v2924 = vmul.f32 %v2913, 1.442695
    %v2925 = vpow.pop %v2924
    %v2926 = vmul.f32 %v2914, 1.442695
    %v2927 = vpow.pop %v2926
    %v2928 = vmul.f32 %v2915, 1.442695
    %v2929 = vpow.pop %v2928
    %v2930 = vmul.f32 %v2916, 1.442695
    %v2931 = vpow.pop %v2930
    %v2932 = vmul.f32 %v2917, 1.442695
    %v2933 = vpow.pop %v2932
    %v2934 = vsub.f32 %v2919, 1.0
    %v2935 = vsub.f32 %v2921, 1.0
    %v2936 = vsub.f32 %v2923, 1.0
    %v2937 = vsub.f32 %v2925, 1.0
    %v2938 = vsub.f32 %v2927, 1.0
    %v2939 = vsub.f32 %v2929, 1.0
    %v2940 = vsub.f32 %v2931, 1.0
    %v2941 = vsub.f32 %v2933, 1.0
    %v2942 = vsel %vm2902, %v2894, %v2934
    %v2943 = vsel %vm2903, %v2895, %v2935
    %v2944 = vsel %vm2904, %v2896, %v2936
    %v2945 = vsel %vm2905, %v2897, %v2937
    %v2946 = vsel %vm2906, %v2898, %v2938
    %v2947 = vsel %vm2907, %v2899, %v2939
    %v2948 = vsel %vm2908, %v2900, %v2940
    %v2949 = vsel %vm2909, %v2901, %v2941
    %v2952 = vrot.slane %v2942, 1
    %v2953 = vrot.slane %v2946, 1
    %v2956 = vmax.f32 %v2942, %v2952
    %v2957 = vmax.f32 %v2946, %v2953
    %s2958 = scalar_lea.vmem [#allocation2], 32
    %2959 = vst.msk [vmem:[%s2958 + $0x7] sm:$0x1] %vm2804, %v2956
    %2960 = vst.msk [vmem:[%s2958 + $0xa7] sm:$0x1] %vm2804, %v2957
    %2961 = vst.msk [vmem:[%s2958 + $0x6] sm:$0x4] %vm2807, %v2956
    %2962 = vst.msk [vmem:[%s2958 + $0xa6] sm:$0x4] %vm2807, %v2957
    %2963 = vst.msk [vmem:[%s2958 + $0x5] sm:$0x10] %vm2810, %v2956
    %2964 = vst.msk [vmem:[%s2958 + $0xa5] sm:$0x10] %vm2810, %v2957
    %2965 = vst.msk [vmem:[%s2958 + $0x4] sm:$0x40] %vm2813, %v2956
    %2966 = vst.msk [vmem:[%s2958 + $0xa4] sm:$0x40] %vm2813, %v2957
    %v2969 = vrot.slane %v2943, 1
    %v2970 = vrot.slane %v2947, 1
    %v2973 = vmax.f32 %v2943, %v2969
    %v2974 = vmax.f32 %v2947, %v2970
    %2975 = vst.msk [vmem:[%s2958 + $0xb] sm:$0x1] %vm2804, %v2973
    %2976 = vst.msk [vmem:[%s2958 + $0xab] sm:$0x1] %vm2804, %v2974
    %2977 = vst.msk [vmem:[%s2958 + $0xa] sm:$0x4] %vm2807, %v2973
    %2978 = vst.msk [vmem:[%s2958 + $0xaa] sm:$0x4] %vm2807, %v2974
    %2979 = vst.msk [vmem:[%s2958 + $0x9] sm:$0x10] %vm2810, %v2973
    %2980 = vst.msk [vmem:[%s2958 + $0xa9] sm:$0x10] %vm2810, %v2974
    %2981 = vst.msk [vmem:[%s2958 + $0x8] sm:$0x40] %vm2813, %v2973
    %2982 = vst.msk [vmem:[%s2958 + $0xa8] sm:$0x40] %vm2813, %v2974
    %v2985 = vrot.slane %v2944, 1
    %v2986 = vrot.slane %v2948, 1
    %v2989 = vmax.f32 %v2944, %v2985
    %v2990 = vmax.f32 %v2948, %v2986
    %2991 = vst.msk [vmem:[%s2958 + $0xf] sm:$0x1] %vm2804, %v2989
    %2992 = vst.msk [vmem:[%s2958 + $0xaf] sm:$0x1] %vm2804, %v2990
    %2993 = vst.msk [vmem:[%s2958 + $0xe] sm:$0x4] %vm2807, %v2989
    %2994 = vst.msk [vmem:[%s2958 + $0xae] sm:$0x4] %vm2807, %v2990
    %2995 = vst.msk [vmem:[%s2958 + $0xd] sm:$0x10] %vm2810, %v2989
    %2996 = vst.msk [vmem:[%s2958 + $0xad] sm:$0x10] %vm2810, %v2990
    %2997 = vst.msk [vmem:[%s2958 + $0xc] sm:$0x40] %vm2813, %v2989
    %2998 = vst.msk [vmem:[%s2958 + $0xac] sm:$0x40] %vm2813, %v2990
    %v3001 = vrot.slane %v2945, 1
    %v3002 = vrot.slane %v2949, 1
    %v3005 = vmax.f32 %v2945, %v3001
    %v3006 = vmax.f32 %v2949, %v3002
    %3007 = vst.msk [vmem:[%s2958 + $0x13] sm:$0x1] %vm2804, %v3005
    %3008 = vst.msk [vmem:[%s2958 + $0xb3] sm:$0x1] %vm2804, %v3006
    %3009 = vst.msk [vmem:[%s2958 + $0x12] sm:$0x4] %vm2807, %v3005
    %3010 = vst.msk [vmem:[%s2958 + $0xb2] sm:$0x4] %vm2807, %v3006
    %3011 = vst.msk [vmem:[%s2958 + $0x11] sm:$0x10] %vm2810, %v3005
    %3012 = vst.msk [vmem:[%s2958 + $0xb1] sm:$0x10] %vm2810, %v3006
    %s3013 = sld [smem:[#allocation4 + $0xc]]
    %v3014 = vstv %s3013
    %v3015 = vmul.f32 %v2698, %v3014
    %v3016 = vmul.f32 %v2705, %v3014
    %v3019 = vlaneseq
    %v3020 = vshrl.u32 %v3019, 7
    %v3021 = vsub.s32 0, %v3020
    %v3022 = vrot.slane %v3015, %v3021
    %v3023 = vlaneseq
    %v3024 = vshrl.u32 %v3023, 7
    %v3025 = vsub.s32 0, %v3024
    %v3026 = vrot.slane %v3016, %v3025
    %3027 = vset.pattern.permute.xlu0 2
    %3028 = vperm.xlu0 %3027, %v3022
    %v3029 = vpop.permute.xlu0 %3028
    %3031 = vset.pattern.permute.xlu0 2
    %3032 = vperm.xlu0 %3031, %v3026
    %v3033 = vpop.permute.xlu0 %3032
    %v3035 = vmul.f32 %v1454, %v3029
    %v3036 = vmul.f32 %v1455, %v3029
    %v3037 = vmul.f32 %v1456, %v3029
    %v3038 = vmul.f32 %v1457, %v3029
    %v3039 = vmul.f32 %v1458, %v3033
    %v3040 = vmul.f32 %v1459, %v3033
    %v3041 = vmul.f32 %v1460, %v3033
    %v3042 = vmul.f32 %v1461, %v3033
    %s3043 = sld [smem:[#allocation4 + $0x11]]
    %v3044 = vstv %s3043
    %v3045 = vadd.f32 %v3035, %v3044
    %v3046 = vadd.f32 %v3036, %v3044
    %v3047 = vadd.f32 %v3037, %v3044
    %v3048 = vadd.f32 %v3038, %v3044
    %v3049 = vadd.f32 %v3039, %v3044
    %v3050 = vadd.f32 %v3040, %v3044
    %v3051 = vadd.f32 %v3041, %v3044
    %v3052 = vadd.f32 %v3042, %v3044
    %vm3053 = vcmp.gt.f32.partialorder %v3045, 0.0
    %vm3054 = vcmp.gt.f32.partialorder %v3046, 0.0
    %vm3055 = vcmp.gt.f32.partialorder %v3047, 0.0
    %vm3056 = vcmp.gt.f32.partialorder %v3048, 0.0
    %vm3057 = vcmp.gt.f32.partialorder %v3049, 0.0
    %vm3058 = vcmp.gt.f32.partialorder %v3050, 0.0
    %vm3059 = vcmp.gt.f32.partialorder %v3051, 0.0
    %vm3060 = vcmp.gt.f32.partialorder %v3052, 0.0
    %v3061 = vmin.f32 %v3045, 0.0
    %v3062 = vmin.f32 %v3046, 0.0
    %v3063 = vmin.f32 %v3047, 0.0
    %v3064 = vmin.f32 %v3048, 0.0
    %v3065 = vmin.f32 %v3049, 0.0
    %v3066 = vmin.f32 %v3050, 0.0
    %v3067 = vmin.f32 %v3051, 0.0
    %v3068 = vmin.f32 %v3052, 0.0
    %v3069 = vmul.f32 %v3061, 1.442695
    %v3070 = vpow.pop %v3069
    %v3071 = vmul.f32 %v3062, 1.442695
    %v3072 = vpow.pop %v3071
    %v3073 = vmul.f32 %v3063, 1.442695
    %v3074 = vpow.pop %v3073
    %v3075 = vmul.f32 %v3064, 1.442695
    %v3076 = vpow.pop %v3075
    %v3077 = vmul.f32 %v3065, 1.442695
    %v3078 = vpow.pop %v3077
    %v3079 = vmul.f32 %v3066, 1.442695
    %v3080 = vpow.pop %v3079
    %v3081 = vmul.f32 %v3067, 1.442695
    %v3082 = vpow.pop %v3081
    %v3083 = vmul.f32 %v3068, 1.442695
    %v3084 = vpow.pop %v3083
    %v3085 = vsub.f32 %v3070, 1.0
    %v3086 = vsub.f32 %v3072, 1.0
    %v3087 = vsub.f32 %v3074, 1.0
    %v3088 = vsub.f32 %v3076, 1.0
    %v3089 = vsub.f32 %v3078, 1.0
    %v3090 = vsub.f32 %v3080, 1.0
    %v3091 = vsub.f32 %v3082, 1.0
    %v3092 = vsub.f32 %v3084, 1.0
    %v3093 = vsel %vm3053, %v3045, %v3085
    %v3094 = vsel %vm3054, %v3046, %v3086
    %v3095 = vsel %vm3055, %v3047, %v3087
    %v3096 = vsel %vm3056, %v3048, %v3088
    %v3097 = vsel %vm3057, %v3049, %v3089
    %v3098 = vsel %vm3058, %v3050, %v3090
    %v3099 = vsel %vm3059, %v3051, %v3091
    %v3100 = vsel %vm3060, %v3052, %v3092
    %v3103 = vrot.slane %v3093, 1
    %v3104 = vrot.slane %v3097, 1
    %v3107 = vmax.f32 %v3093, %v3103
    %v3108 = vmax.f32 %v3097, %v3104
    %s3109 = scalar_lea.vmem [#allocation2], 64
    %3110 = vst.msk [vmem:[%s3109 + $0x7] sm:$0x1] %vm2804, %v3107
    %3111 = vst.msk [vmem:[%s3109 + $0xa7] sm:$0x1] %vm2804, %v3108
    %3112 = vst.msk [vmem:[%s3109 + $0x6] sm:$0x4] %vm2807, %v3107
    %3113 = vst.msk [vmem:[%s3109 + $0xa6] sm:$0x4] %vm2807, %v3108
    %3114 = vst.msk [vmem:[%s3109 + $0x5] sm:$0x10] %vm2810, %v3107
    %3115 = vst.msk [vmem:[%s3109 + $0xa5] sm:$0x10] %vm2810, %v3108
    %3116 = vst.msk [vmem:[%s3109 + $0x4] sm:$0x40] %vm2813, %v3107
    %3117 = vst.msk [vmem:[%s3109 + $0xa4] sm:$0x40] %vm2813, %v3108
    %v3120 = vrot.slane %v3094, 1
    %v3121 = vrot.slane %v3098, 1
    %v3124 = vmax.f32 %v3094, %v3120
    %v3125 = vmax.f32 %v3098, %v3121
    %3126 = vst.msk [vmem:[%s3109 + $0xb] sm:$0x1] %vm2804, %v3124
    %3127 = vst.msk [vmem:[%s3109 + $0xab] sm:$0x1] %vm2804, %v3125
    %3128 = vst.msk [vmem:[%s3109 + $0xa] sm:$0x4] %vm2807, %v3124
    %3129 = vst.msk [vmem:[%s3109 + $0xaa] sm:$0x4] %vm2807, %v3125
    %3130 = vst.msk [vmem:[%s3109 + $0x9] sm:$0x10] %vm2810, %v3124
    %3131 = vst.msk [vmem:[%s3109 + $0xa9] sm:$0x10] %vm2810, %v3125
    %3132 = vst.msk [vmem:[%s3109 + $0x8] sm:$0x40] %vm2813, %v3124
    %3133 = vst.msk [vmem:[%s3109 + $0xa8] sm:$0x40] %vm2813, %v3125
    %v3136 = vrot.slane %v3095, 1
    %v3137 = vrot.slane %v3099, 1
    %v3140 = vmax.f32 %v3095, %v3136
    %v3141 = vmax.f32 %v3099, %v3137
    %3142 = vst.msk [vmem:[%s3109 + $0xf] sm:$0x1] %vm2804, %v3140
    %3143 = vst.msk [vmem:[%s3109 + $0xaf] sm:$0x1] %vm2804, %v3141
    %3144 = vst.msk [vmem:[%s3109 + $0xe] sm:$0x4] %vm2807, %v3140
    %3145 = vst.msk [vmem:[%s3109 + $0xae] sm:$0x4] %vm2807, %v3141
    %3146 = vst.msk [vmem:[%s3109 + $0xd] sm:$0x10] %vm2810, %v3140
    %3147 = vst.msk [vmem:[%s3109 + $0xad] sm:$0x10] %vm2810, %v3141
    %3148 = vst.msk [vmem:[%s3109 + $0xc] sm:$0x40] %vm2813, %v3140
    %3149 = vst.msk [vmem:[%s3109 + $0xac] sm:$0x40] %vm2813, %v3141
    %v3152 = vrot.slane %v3096, 1
    %v3153 = vrot.slane %v3100, 1
    %v3156 = vmax.f32 %v3096, %v3152
    %v3157 = vmax.f32 %v3100, %v3153
    %3158 = vst.msk [vmem:[%s3109 + $0x13] sm:$0x1] %vm2804, %v3156
    %3159 = vst.msk [vmem:[%s3109 + $0xb3] sm:$0x1] %vm2804, %v3157
    %3160 = vst.msk [vmem:[%s3109 + $0x12] sm:$0x4] %vm2807, %v3156
    %3161 = vst.msk [vmem:[%s3109 + $0xb2] sm:$0x4] %vm2807, %v3157
    %3162 = vst.msk [vmem:[%s3109 + $0x11] sm:$0x10] %vm2810, %v3156
    %3163 = vst.msk [vmem:[%s3109 + $0xb1] sm:$0x10] %vm2810, %v3157
    %s3164 = sld [smem:[#allocation4 + $0xd]]
    %v3165 = vstv %s3164
    %v3166 = vmul.f32 %v2698, %v3165
    %v3167 = vmul.f32 %v2705, %v3165
    %v3170 = vlaneseq
    %v3171 = vshrl.u32 %v3170, 7
    %v3172 = vsub.s32 0, %v3171
    %v3173 = vrot.slane %v3166, %v3172
    %v3174 = vlaneseq
    %v3175 = vshrl.u32 %v3174, 7
    %v3176 = vsub.s32 0, %v3175
    %v3177 = vrot.slane %v3167, %v3176
    %3178 = vset.pattern.permute.xlu0 3
    %3179 = vperm.xlu0 %3178, %v3173
    %v3180 = vpop.permute.xlu0 %3179
    %3182 = vset.pattern.permute.xlu0 3
    %3183 = vperm.xlu0 %3182, %v3177
    %v3184 = vpop.permute.xlu0 %3183
    %v3186 = vmul.f32 %v1929, %v3180
    %v3187 = vmul.f32 %v1930, %v3180
    %v3188 = vmul.f32 %v1931, %v3180
    %v3189 = vmul.f32 %v1932, %v3180
    %v3190 = vmul.f32 %v1933, %v3184
    %v3191 = vmul.f32 %v1934, %v3184
    %v3192 = vmul.f32 %v1935, %v3184
    %v3193 = vmul.f32 %v1936, %v3184
    %s3194 = sld [smem:[#allocation4 + $0x12]]
    %v3195 = vstv %s3194
    %v3196 = vadd.f32 %v3186, %v3195
    %v3197 = vadd.f32 %v3187, %v3195
    %v3198 = vadd.f32 %v3188, %v3195
    %v3199 = vadd.f32 %v3189, %v3195
    %v3200 = vadd.f32 %v3190, %v3195
    %v3201 = vadd.f32 %v3191, %v3195
    %v3202 = vadd.f32 %v3192, %v3195
    %v3203 = vadd.f32 %v3193, %v3195
    %vm3204 = vcmp.gt.f32.partialorder %v3196, 0.0
    %vm3205 = vcmp.gt.f32.partialorder %v3197, 0.0
    %vm3206 = vcmp.gt.f32.partialorder %v3198, 0.0
    %vm3207 = vcmp.gt.f32.partialorder %v3199, 0.0
    %vm3208 = vcmp.gt.f32.partialorder %v3200, 0.0
    %vm3209 = vcmp.gt.f32.partialorder %v3201, 0.0
    %vm3210 = vcmp.gt.f32.partialorder %v3202, 0.0
    %vm3211 = vcmp.gt.f32.partialorder %v3203, 0.0
    %v3212 = vmin.f32 %v3196, 0.0
    %v3213 = vmin.f32 %v3197, 0.0
    %v3214 = vmin.f32 %v3198, 0.0
    %v3215 = vmin.f32 %v3199, 0.0
    %v3216 = vmin.f32 %v3200, 0.0
    %v3217 = vmin.f32 %v3201, 0.0
    %v3218 = vmin.f32 %v3202, 0.0
    %v3219 = vmin.f32 %v3203, 0.0
    %v3220 = vmul.f32 %v3212, 1.442695
    %v3221 = vpow.pop %v3220
    %v3222 = vmul.f32 %v3213, 1.442695
    %v3223 = vpow.pop %v3222
    %v3224 = vmul.f32 %v3214, 1.442695
    %v3225 = vpow.pop %v3224
    %v3226 = vmul.f32 %v3215, 1.442695
    %v3227 = vpow.pop %v3226
    %v3228 = vmul.f32 %v3216, 1.442695
    %v3229 = vpow.pop %v3228
    %v3230 = vmul.f32 %v3217, 1.442695
    %v3231 = vpow.pop %v3230
    %v3232 = vmul.f32 %v3218, 1.442695
    %v3233 = vpow.pop %v3232
    %v3234 = vmul.f32 %v3219, 1.442695
    %v3235 = vpow.pop %v3234
    %v3236 = vsub.f32 %v3221, 1.0
    %v3237 = vsub.f32 %v3223, 1.0
    %v3238 = vsub.f32 %v3225, 1.0
    %v3239 = vsub.f32 %v3227, 1.0
    %v3240 = vsub.f32 %v3229, 1.0
    %v3241 = vsub.f32 %v3231, 1.0
    %v3242 = vsub.f32 %v3233, 1.0
    %v3243 = vsub.f32 %v3235, 1.0
    %v3244 = vsel %vm3204, %v3196, %v3236
    %v3245 = vsel %vm3205, %v3197, %v3237
    %v3246 = vsel %vm3206, %v3198, %v3238
    %v3247 = vsel %vm3207, %v3199, %v3239
    %v3248 = vsel %vm3208, %v3200, %v3240
    %v3249 = vsel %vm3209, %v3201, %v3241
    %v3250 = vsel %vm3210, %v3202, %v3242
    %v3251 = vsel %vm3211, %v3203, %v3243
    %v3254 = vrot.slane %v3244, 1
    %v3255 = vrot.slane %v3248, 1
    %v3258 = vmax.f32 %v3244, %v3254
    %v3259 = vmax.f32 %v3248, %v3255
    %s3260 = scalar_lea.vmem [#allocation2], 96
    %3261 = vst.msk [vmem:[%s3260 + $0x7] sm:$0x1] %vm2804, %v3258
    %3262 = vst.msk [vmem:[%s3260 + $0xa7] sm:$0x1] %vm2804, %v3259
    %3263 = vst.msk [vmem:[%s3260 + $0x6] sm:$0x4] %vm2807, %v3258
    %3264 = vst.msk [vmem:[%s3260 + $0xa6] sm:$0x4] %vm2807, %v3259
    %3265 = vst.msk [vmem:[%s3260 + $0x5] sm:$0x10] %vm2810, %v3258
    %3266 = vst.msk [vmem:[%s3260 + $0xa5] sm:$0x10] %vm2810, %v3259
    %3267 = vst.msk [vmem:[%s3260 + $0x4] sm:$0x40] %vm2813, %v3258
    %3268 = vst.msk [vmem:[%s3260 + $0xa4] sm:$0x40] %vm2813, %v3259
    %v3271 = vrot.slane %v3245, 1
    %v3272 = vrot.slane %v3249, 1
    %v3275 = vmax.f32 %v3245, %v3271
    %v3276 = vmax.f32 %v3249, %v3272
    %3277 = vst.msk [vmem:[%s3260 + $0xb] sm:$0x1] %vm2804, %v3275
    %3278 = vst.msk [vmem:[%s3260 + $0xab] sm:$0x1] %vm2804, %v3276
    %3279 = vst.msk [vmem:[%s3260 + $0xa] sm:$0x4] %vm2807, %v3275
    %3280 = vst.msk [vmem:[%s3260 + $0xaa] sm:$0x4] %vm2807, %v3276
    %3281 = vst.msk [vmem:[%s3260 + $0x9] sm:$0x10] %vm2810, %v3275
    %3282 = vst.msk [vmem:[%s3260 + $0xa9] sm:$0x10] %vm2810, %v3276
    %3283 = vst.msk [vmem:[%s3260 + $0x8] sm:$0x40] %vm2813, %v3275
    %3284 = vst.msk [vmem:[%s3260 + $0xa8] sm:$0x40] %vm2813, %v3276
    %v3287 = vrot.slane %v3246, 1
    %v3288 = vrot.slane %v3250, 1
    %v3291 = vmax.f32 %v3246, %v3287
    %v3292 = vmax.f32 %v3250, %v3288
    %3293 = vst.msk [vmem:[%s3260 + $0xf] sm:$0x1] %vm2804, %v3291
    %3294 = vst.msk [vmem:[%s3260 + $0xaf] sm:$0x1] %vm2804, %v3292
    %3295 = vst.msk [vmem:[%s3260 + $0xe] sm:$0x4] %vm2807, %v3291
    %3296 = vst.msk [vmem:[%s3260 + $0xae] sm:$0x4] %vm2807, %v3292
    %3297 = vst.msk [vmem:[%s3260 + $0xd] sm:$0x10] %vm2810, %v3291
    %3298 = vst.msk [vmem:[%s3260 + $0xad] sm:$0x10] %vm2810, %v3292
    %3299 = vst.msk [vmem:[%s3260 + $0xc] sm:$0x40] %vm2813, %v3291
    %3300 = vst.msk [vmem:[%s3260 + $0xac] sm:$0x40] %vm2813, %v3292
    %v3303 = vrot.slane %v3247, 1
    %v3304 = vrot.slane %v3251, 1
    %v3307 = vmax.f32 %v3247, %v3303
    %v3308 = vmax.f32 %v3251, %v3304
    %3309 = vst.msk [vmem:[%s3260 + $0x13] sm:$0x1] %vm2804, %v3307
    %3310 = vst.msk [vmem:[%s3260 + $0xb3] sm:$0x1] %vm2804, %v3308
    %3311 = vst.msk [vmem:[%s3260 + $0x12] sm:$0x4] %vm2807, %v3307
    %3312 = vst.msk [vmem:[%s3260 + $0xb2] sm:$0x4] %vm2807, %v3308
    %3313 = vst.msk [vmem:[%s3260 + $0x11] sm:$0x10] %vm2810, %v3307
    %3314 = vst.msk [vmem:[%s3260 + $0xb1] sm:$0x10] %vm2810, %v3308
    %s3315 = sld [smem:[#allocation4 + $0xe]]
    %v3316 = vstv %s3315
    %v3317 = vmul.f32 %v2698, %v3316
    %v3318 = vmul.f32 %v2705, %v3316
    %v3321 = vlaneseq
    %v3322 = vshrl.u32 %v3321, 7
    %v3323 = vsub.s32 0, %v3322
    %v3324 = vrot.slane %v3317, %v3323
    %v3325 = vlaneseq
    %v3326 = vshrl.u32 %v3325, 7
    %v3327 = vsub.s32 0, %v3326
    %v3328 = vrot.slane %v3318, %v3327
    %3329 = vset.pattern.permute.xlu0 4
    %3330 = vperm.xlu0 %3329, %v3324
    %v3331 = vpop.permute.xlu0 %3330
    %3333 = vset.pattern.permute.xlu0 4
    %3334 = vperm.xlu0 %3333, %v3328
    %v3335 = vpop.permute.xlu0 %3334
    %v3337 = vmul.f32 %v2404, %v3331
    %v3338 = vmul.f32 %v2405, %v3331
    %v3339 = vmul.f32 %v2406, %v3331
    %v3340 = vmul.f32 %v2407, %v3331
    %v3341 = vmul.f32 %v2408, %v3335
    %v3342 = vmul.f32 %v2409, %v3335
    %v3343 = vmul.f32 %v2410, %v3335
    %v3344 = vmul.f32 %v2411, %v3335
    %s3345 = sld [smem:[#allocation4 + $0x13]]
    %v3346 = vstv %s3345
    %v3347 = vadd.f32 %v3337, %v3346
    %v3348 = vadd.f32 %v3338, %v3346
    %v3349 = vadd.f32 %v3339, %v3346
    %v3350 = vadd.f32 %v3340, %v3346
    %v3351 = vadd.f32 %v3341, %v3346
    %v3352 = vadd.f32 %v3342, %v3346
    %v3353 = vadd.f32 %v3343, %v3346
    %v3354 = vadd.f32 %v3344, %v3346
    %vm3355 = vcmp.gt.f32.partialorder %v3347, 0.0
    %vm3356 = vcmp.gt.f32.partialorder %v3348, 0.0
    %vm3357 = vcmp.gt.f32.partialorder %v3349, 0.0
    %vm3358 = vcmp.gt.f32.partialorder %v3350, 0.0
    %vm3359 = vcmp.gt.f32.partialorder %v3351, 0.0
    %vm3360 = vcmp.gt.f32.partialorder %v3352, 0.0
    %vm3361 = vcmp.gt.f32.partialorder %v3353, 0.0
    %vm3362 = vcmp.gt.f32.partialorder %v3354, 0.0
    %v3363 = vmin.f32 %v3347, 0.0
    %v3364 = vmin.f32 %v3348, 0.0
    %v3365 = vmin.f32 %v3349, 0.0
    %v3366 = vmin.f32 %v3350, 0.0
    %v3367 = vmin.f32 %v3351, 0.0
    %v3368 = vmin.f32 %v3352, 0.0
    %v3369 = vmin.f32 %v3353, 0.0
    %v3370 = vmin.f32 %v3354, 0.0
    %v3371 = vmul.f32 %v3363, 1.442695
    %v3372 = vpow.pop %v3371
    %v3373 = vmul.f32 %v3364, 1.442695
    %v3374 = vpow.pop %v3373
    %v3375 = vmul.f32 %v3365, 1.442695
    %v3376 = vpow.pop %v3375
    %v3377 = vmul.f32 %v3366, 1.442695
    %v3378 = vpow.pop %v3377
    %v3379 = vmul.f32 %v3367, 1.442695
    %v3380 = vpow.pop %v3379
    %v3381 = vmul.f32 %v3368, 1.442695
    %v3382 = vpow.pop %v3381
    %v3383 = vmul.f32 %v3369, 1.442695
    %v3384 = vpow.pop %v3383
    %v3385 = vmul.f32 %v3370, 1.442695
    %v3386 = vpow.pop %v3385
    %v3387 = vsub.f32 %v3372, 1.0
    %v3388 = vsub.f32 %v3374, 1.0
    %v3389 = vsub.f32 %v3376, 1.0
    %v3390 = vsub.f32 %v3378, 1.0
    %v3391 = vsub.f32 %v3380, 1.0
    %v3392 = vsub.f32 %v3382, 1.0
    %v3393 = vsub.f32 %v3384, 1.0
    %v3394 = vsub.f32 %v3386, 1.0
    %v3395 = vsel %vm3355, %v3347, %v3387
    %v3396 = vsel %vm3356, %v3348, %v3388
    %v3397 = vsel %vm3357, %v3349, %v3389
    %v3398 = vsel %vm3358, %v3350, %v3390
    %v3399 = vsel %vm3359, %v3351, %v3391
    %v3400 = vsel %vm3360, %v3352, %v3392
    %v3401 = vsel %vm3361, %v3353, %v3393
    %v3402 = vsel %vm3362, %v3354, %v3394
    %v3405 = vrot.slane %v3395, 1
    %v3406 = vrot.slane %v3399, 1
    %v3409 = vmax.f32 %v3395, %v3405
    %v3410 = vmax.f32 %v3399, %v3406
    %s3411 = scalar_lea.vmem [#allocation2], 128
    %3412 = vst.msk [vmem:[%s3411 + $0x7] sm:$0x1] %vm2804, %v3409
    %3413 = vst.msk [vmem:[%s3411 + $0xa7] sm:$0x1] %vm2804, %v3410
    %3414 = vst.msk [vmem:[%s3411 + $0x6] sm:$0x4] %vm2807, %v3409
    %3415 = vst.msk [vmem:[%s3411 + $0xa6] sm:$0x4] %vm2807, %v3410
    %3416 = vst.msk [vmem:[%s3411 + $0x5] sm:$0x10] %vm2810, %v3409
    %3417 = vst.msk [vmem:[%s3411 + $0xa5] sm:$0x10] %vm2810, %v3410
    %3418 = vst.msk [vmem:[%s3411 + $0x4] sm:$0x40] %vm2813, %v3409
    %3419 = vst.msk [vmem:[%s3411 + $0xa4] sm:$0x40] %vm2813, %v3410
    %v3422 = vrot.slane %v3396, 1
    %v3423 = vrot.slane %v3400, 1
    %v3426 = vmax.f32 %v3396, %v3422
    %v3427 = vmax.f32 %v3400, %v3423
    %3428 = vst.msk [vmem:[%s3411 + $0xb] sm:$0x1] %vm2804, %v3426
    %3429 = vst.msk [vmem:[%s3411 + $0xab] sm:$0x1] %vm2804, %v3427
    %3430 = vst.msk [vmem:[%s3411 + $0xa] sm:$0x4] %vm2807, %v3426
    %3431 = vst.msk [vmem:[%s3411 + $0xaa] sm:$0x4] %vm2807, %v3427
    %3432 = vst.msk [vmem:[%s3411 + $0x9] sm:$0x10] %vm2810, %v3426
    %3433 = vst.msk [vmem:[%s3411 + $0xa9] sm:$0x10] %vm2810, %v3427
    %3434 = vst.msk [vmem:[%s3411 + $0x8] sm:$0x40] %vm2813, %v3426
    %3435 = vst.msk [vmem:[%s3411 + $0xa8] sm:$0x40] %vm2813, %v3427
    %v3438 = vrot.slane %v3397, 1
    %v3439 = vrot.slane %v3401, 1
    %v3442 = vmax.f32 %v3397, %v3438
    %v3443 = vmax.f32 %v3401, %v3439
    %3444 = vst.msk [vmem:[%s3411 + $0xf] sm:$0x1] %vm2804, %v3442
    %3445 = vst.msk [vmem:[%s3411 + $0xaf] sm:$0x1] %vm2804, %v3443
    %3446 = vst.msk [vmem:[%s3411 + $0xe] sm:$0x4] %vm2807, %v3442
    %3447 = vst.msk [vmem:[%s3411 + $0xae] sm:$0x4] %vm2807, %v3443
    %3448 = vst.msk [vmem:[%s3411 + $0xd] sm:$0x10] %vm2810, %v3442
    %3449 = vst.msk [vmem:[%s3411 + $0xad] sm:$0x10] %vm2810, %v3443
    %3450 = vst.msk [vmem:[%s3411 + $0xc] sm:$0x40] %vm2813, %v3442
    %3451 = vst.msk [vmem:[%s3411 + $0xac] sm:$0x40] %vm2813, %v3443
    %v3454 = vrot.slane %v3398, 1
    %v3455 = vrot.slane %v3402, 1
    %v3458 = vmax.f32 %v3398, %v3454
    %v3459 = vmax.f32 %v3402, %v3455
    %3460 = vst.msk [vmem:[%s3411 + $0x13] sm:$0x1] %vm2804, %v3458
    %3461 = vst.msk [vmem:[%s3411 + $0xb3] sm:$0x1] %vm2804, %v3459
    %3462 = vst.msk [vmem:[%s3411 + $0x12] sm:$0x4] %vm2807, %v3458
    %3463 = vst.msk [vmem:[%s3411 + $0xb2] sm:$0x4] %vm2807, %v3459
    %3464 = vst.msk [vmem:[%s3411 + $0x11] sm:$0x10] %vm2810, %v3458
    %3465 = vst.msk [vmem:[%s3411 + $0xb1] sm:$0x10] %vm2810, %v3459
    %v3466 = vld [vmem:[#allocation2] sm:$0xff]
    %v3467 = vld [vmem:[#allocation2 + $0x8] sm:$0xff]
    %v3468 = vld [vmem:[#allocation2 + $0x10] sm:$0xff]
    %v3469 = vld [vmem:[#allocation2 + $0x18] sm:$0x3f]
    %v3470 = vld [vmem:[#allocation2 + $0xa0] sm:$0xff]
    %v3471 = vld [vmem:[#allocation2 + $0xa8] sm:$0xff]
    %v3472 = vld [vmem:[#allocation2 + $0xb0] sm:$0xff]
    %v3473 = vld [vmem:[#allocation2 + $0xb8] sm:$0x3f]
    %v3474 = vld [vmem:[%s10] sm:$0xff]
    %v3475 = vld [vmem:[%s10 + $0x8] sm:$0xff]
    %v3476 = vlaneseq
    %v3477 = vshrl.u32 %v3476, 7
    %v3478 = vsub.s32 0, %v3477
    %v3479 = vrot.slane %v3474, %v3478
    %v3480 = vmul.f32 %v3479, %v3466
    %v3481 = vmul.f32 %v3479, %v3467
    %v3482 = vmul.f32 %v3479, %v3470
    %v3483 = vmul.f32 %v3479, %v3471
    %v3484 = vadd.f32 %v3480, 0.0
    %v3485 = vadd.f32 %v3481, 0.0
    %v3486 = vadd.f32 %v3482, 0.0
    %v3487 = vadd.f32 %v3483, 0.0
    %v3488 = vlaneseq
    %v3489 = vshrl.u32 %v3488, 7
    %v3490 = vsub.s32 1, %v3489
    %v3491 = vrot.slane %v3474, %v3490
    %v3492 = vmul.f32 %v3491, %v3466
    %v3493 = vmul.f32 %v3491, %v3467
    %v3494 = vmul.f32 %v3491, %v3470
    %v3495 = vmul.f32 %v3491, %v3471
    %v3500 = vrot.slane %v3492, 1
    %v3501 = vrot.slane %v3493, 1
    %v3502 = vsel %vm316, %v3500, %v3501
    %v3503 = vrot.slane %v3494, 1
    %v3504 = vrot.slane %v3495, 1
    %v3505 = vsel %vm316, %v3503, %v3504
    %v3510 = vadd.f32 %v3484, %v3502
    %v3511 = vadd.f32 %v3485, %v3501
    %v3512 = vadd.f32 %v3486, %v3505
    %v3513 = vadd.f32 %v3487, %v3504
    %v3514 = vlaneseq
    %v3515 = vshrl.u32 %v3514, 7
    %v3516 = vsub.s32 2, %v3515
    %v3517 = vrot.slane %v3474, %v3516
    %v3518 = vmul.f32 %v3517, %v3466
    %v3519 = vmul.f32 %v3517, %v3467
    %v3520 = vmul.f32 %v3517, %v3468
    %v3521 = vmul.f32 %v3517, %v3470
    %v3522 = vmul.f32 %v3517, %v3471
    %v3523 = vmul.f32 %v3517, %v3472
    %v3530 = vrot.slane %v3518, 2
    %v3531 = vrot.slane %v3519, 2
    %v3532 = vsel %vm223, %v3530, %v3531
    %v3533 = vrot.slane %v3520, 2
    %v3534 = vsel %vm223, %v3531, %v3533
    %v3535 = vrot.slane %v3521, 2
    %v3536 = vrot.slane %v3522, 2
    %v3537 = vsel %vm223, %v3535, %v3536
    %v3538 = vrot.slane %v3523, 2
    %v3539 = vsel %vm223, %v3536, %v3538
    %v3544 = vadd.f32 %v3510, %v3532
    %v3545 = vadd.f32 %v3511, %v3534
    %v3546 = vadd.f32 %v3512, %v3537
    %v3547 = vadd.f32 %v3513, %v3539
    %v3548 = vlaneseq
    %v3549 = vshrl.u32 %v3548, 7
    %v3550 = vsub.s32 3, %v3549
    %v3551 = vrot.slane %v3474, %v3550
    %v3552 = vmul.f32 %v3551, %v3466
    %v3553 = vmul.f32 %v3551, %v3467
    %v3554 = vmul.f32 %v3551, %v3468
    %v3555 = vmul.f32 %v3551, %v3470
    %v3556 = vmul.f32 %v3551, %v3471
    %v3557 = vmul.f32 %v3551, %v3472
    %v3564 = vrot.slane %v3552, 3
    %v3565 = vrot.slane %v3553, 3
    %v3566 = vsel %vm2511, %v3564, %v3565
    %v3567 = vrot.slane %v3554, 3
    %v3568 = vsel %vm2511, %v3565, %v3567
    %v3569 = vrot.slane %v3555, 3
    %v3570 = vrot.slane %v3556, 3
    %v3571 = vsel %vm2511, %v3569, %v3570
    %v3572 = vrot.slane %v3557, 3
    %v3573 = vsel %vm2511, %v3570, %v3572
    %v3578 = vadd.f32 %v3544, %v3566
    %v3579 = vadd.f32 %v3545, %v3568
    %v3580 = vadd.f32 %v3546, %v3571
    %v3581 = vadd.f32 %v3547, %v3573
    %v3582 = vlaneseq
    %v3583 = vshrl.u32 %v3582, 7
    %v3584 = vsub.s32 4, %v3583
    %v3585 = vrot.slane %v3474, %v3584
    %v3586 = vmul.f32 %v3585, %v3466
    %v3587 = vmul.f32 %v3585, %v3467
    %v3588 = vmul.f32 %v3585, %v3468
    %v3589 = vmul.f32 %v3585, %v3470
    %v3590 = vmul.f32 %v3585, %v3471
    %v3591 = vmul.f32 %v3585, %v3472
    %vm3598 = vcmask 1043456
    %v3599 = vrot.slane %v3586, 4
    %v3600 = vrot.slane %v3587, 4
    %v3601 = vsel %vm3598, %v3599, %v3600
    %v3602 = vrot.slane %v3588, 4
    %v3603 = vsel %vm3598, %v3600, %v3602
    %v3604 = vrot.slane %v3589, 4
    %v3605 = vrot.slane %v3590, 4
    %v3606 = vsel %vm3598, %v3604, %v3605
    %v3607 = vrot.slane %v3591, 4
    %v3608 = vsel %vm3598, %v3605, %v3607
    %v3613 = vadd.f32 %v3578, %v3601
    %v3614 = vadd.f32 %v3579, %v3603
    %v3615 = vadd.f32 %v3580, %v3606
    %v3616 = vadd.f32 %v3581, %v3608
    %v3617 = vlaneseq
    %v3618 = vshrl.u32 %v3617, 7
    %v3619 = vsub.s32 5, %v3618
    %v3620 = vrot.slane %v3474, %v3619
    %v3621 = vmul.f32 %v3620, %v3466
    %v3622 = vmul.f32 %v3620, %v3467
    %v3623 = vmul.f32 %v3620, %v3468
    %v3624 = vmul.f32 %v3620, %v3470
    %v3625 = vmul.f32 %v3620, %v3471
    %v3626 = vmul.f32 %v3620, %v3472
    %v3633 = vrot.slane %v3621, 5
    %v3634 = vrot.slane %v3622, 5
    %v3635 = vsel %vm2603, %v3633, %v3634
    %v3636 = vrot.slane %v3623, 5
    %v3637 = vsel %vm2603, %v3634, %v3636
    %v3638 = vrot.slane %v3624, 5
    %v3639 = vrot.slane %v3625, 5
    %v3640 = vsel %vm2603, %v3638, %v3639
    %v3641 = vrot.slane %v3626, 5
    %v3642 = vsel %vm2603, %v3639, %v3641
    %v3647 = vadd.f32 %v3613, %v3635
    %v3648 = vadd.f32 %v3614, %v3637
    %v3649 = vadd.f32 %v3615, %v3640
    %v3650 = vadd.f32 %v3616, %v3642
    %v3651 = vlaneseq
    %v3652 = vshrl.u32 %v3651, 7
    %v3653 = vsub.s32 6, %v3652
    %v3654 = vrot.slane %v3474, %v3653
    %v3655 = vmul.f32 %v3654, %v3466
    %v3656 = vmul.f32 %v3654, %v3467
    %v3657 = vmul.f32 %v3654, %v3468
    %v3658 = vmul.f32 %v3654, %v3470
    %v3659 = vmul.f32 %v3654, %v3471
    %v3660 = vmul.f32 %v3654, %v3472
    %vm3667 = vcmask 1041408
    %v3668 = vrot.slane %v3655, 6
    %v3669 = vrot.slane %v3656, 6
    %v3670 = vsel %vm3667, %v3668, %v3669
    %v3671 = vrot.slane %v3657, 6
    %v3672 = vsel %vm3667, %v3669, %v3671
    %v3673 = vrot.slane %v3658, 6
    %v3674 = vrot.slane %v3659, 6
    %v3675 = vsel %vm3667, %v3673, %v3674
    %v3676 = vrot.slane %v3660, 6
    %v3677 = vsel %vm3667, %v3674, %v3676
    %v3682 = vadd.f32 %v3647, %v3670
    %v3683 = vadd.f32 %v3648, %v3672
    %v3684 = vadd.f32 %v3649, %v3675
    %v3685 = vadd.f32 %v3650, %v3677
    %v3686 = vlaneseq
    %v3687 = vshrl.u32 %v3686, 7
    %v3688 = vsub.s32 7, %v3687
    %v3689 = vrot.slane %v3474, %v3688
    %v3690 = vmul.f32 %v3689, %v3466
    %v3691 = vmul.f32 %v3689, %v3467
    %v3692 = vmul.f32 %v3689, %v3468
    %v3693 = vmul.f32 %v3689, %v3470
    %v3694 = vmul.f32 %v3689, %v3471
    %v3695 = vmul.f32 %v3689, %v3472
    %vm3702 = vcmask 1040384
    %v3703 = vrot.slane %v3690, 7
    %v3704 = vrot.slane %v3691, 7
    %v3705 = vsel %vm3702, %v3703, %v3704
    %v3706 = vrot.slane %v3692, 7
    %v3707 = vsel %vm3702, %v3704, %v3706
    %v3708 = vrot.slane %v3693, 7
    %v3709 = vrot.slane %v3694, 7
    %v3710 = vsel %vm3702, %v3708, %v3709
    %v3711 = vrot.slane %v3695, 7
    %v3712 = vsel %vm3702, %v3709, %v3711
    %v3717 = vadd.f32 %v3682, %v3705
    %v3718 = vadd.f32 %v3683, %v3707
    %v3719 = vadd.f32 %v3684, %v3710
    %v3720 = vadd.f32 %v3685, %v3712
    %v3721 = vlaneseq
    %v3722 = vshrl.u32 %v3721, 7
    %v3723 = vsub.s32 0, %v3722
    %v3724 = vrot.slane %v3475, %v3723
    %v3725 = vmul.f32 %v3724, %v3467
    %v3726 = vmul.f32 %v3724, %v3468
    %v3727 = vmul.f32 %v3724, %v3471
    %v3728 = vmul.f32 %v3724, %v3472
    %v3729 = vadd.f32 %v3717, %v3725
    %v3730 = vadd.f32 %v3718, %v3726
    %v3731 = vadd.f32 %v3719, %v3727
    %v3732 = vadd.f32 %v3720, %v3728
    %v3733 = vlaneseq
    %v3734 = vshrl.u32 %v3733, 7
    %v3735 = vsub.s32 1, %v3734
    %v3736 = vrot.slane %v3475, %v3735
    %v3737 = vmul.f32 %v3736, %v3467
    %v3738 = vmul.f32 %v3736, %v3468
    %v3739 = vmul.f32 %v3736, %v3471
    %v3740 = vmul.f32 %v3736, %v3472
    %v3745 = vrot.slane %v3737, 1
    %v3746 = vrot.slane %v3738, 1
    %v3747 = vsel %vm316, %v3745, %v3746
    %v3748 = vrot.slane %v3739, 1
    %v3749 = vrot.slane %v3740, 1
    %v3750 = vsel %vm316, %v3748, %v3749
    %v3755 = vadd.f32 %v3729, %v3747
    %v3756 = vadd.f32 %v3730, %v3746
    %v3757 = vadd.f32 %v3731, %v3750
    %v3758 = vadd.f32 %v3732, %v3749
    %v3759 = vlaneseq
    %v3760 = vshrl.u32 %v3759, 7
    %v3761 = vsub.s32 2, %v3760
    %v3762 = vrot.slane %v3475, %v3761
    %v3763 = vmul.f32 %v3762, %v3467
    %v3764 = vmul.f32 %v3762, %v3468
    %v3765 = vmul.f32 %v3762, %v3469
    %v3766 = vmul.f32 %v3762, %v3471
    %v3767 = vmul.f32 %v3762, %v3472
    %v3768 = vmul.f32 %v3762, %v3473
    %v3775 = vrot.slane %v3763, 2
    %v3776 = vrot.slane %v3764, 2
    %v3777 = vsel %vm223, %v3775, %v3776
    %v3778 = vrot.slane %v3765, 2
    %v3779 = vsel %vm223, %v3776, %v3778
    %v3780 = vrot.slane %v3766, 2
    %v3781 = vrot.slane %v3767, 2
    %v3782 = vsel %vm223, %v3780, %v3781
    %v3783 = vrot.slane %v3768, 2
    %v3784 = vsel %vm223, %v3781, %v3783
    %v3789 = vadd.f32 %v3755, %v3777
    %v3790 = vadd.f32 %v3756, %v3779
    %v3791 = vadd.f32 %v3757, %v3782
    %v3792 = vadd.f32 %v3758, %v3784
    %v3793 = vlaneseq
    %v3794 = vshrl.u32 %v3793, 7
    %v3795 = vsub.s32 3, %v3794
    %v3796 = vrot.slane %v3475, %v3795
    %v3797 = vmul.f32 %v3796, %v3467
    %v3798 = vmul.f32 %v3796, %v3468
    %v3799 = vmul.f32 %v3796, %v3469
    %v3800 = vmul.f32 %v3796, %v3471
    %v3801 = vmul.f32 %v3796, %v3472
    %v3802 = vmul.f32 %v3796, %v3473
    %v3809 = vrot.slane %v3797, 3
    %v3810 = vrot.slane %v3798, 3
    %v3811 = vsel %vm2511, %v3809, %v3810
    %v3812 = vrot.slane %v3799, 3
    %v3813 = vsel %vm2511, %v3810, %v3812
    %v3814 = vrot.slane %v3800, 3
    %v3815 = vrot.slane %v3801, 3
    %v3816 = vsel %vm2511, %v3814, %v3815
    %v3817 = vrot.slane %v3802, 3
    %v3818 = vsel %vm2511, %v3815, %v3817
    %v3823 = vadd.f32 %v3789, %v3811
    %v3824 = vadd.f32 %v3790, %v3813
    %v3825 = vadd.f32 %v3791, %v3816
    %v3826 = vadd.f32 %v3792, %v3818
    %v3827 = vlaneseq
    %v3828 = vshrl.u32 %v3827, 7
    %v3829 = vsub.s32 4, %v3828
    %v3830 = vrot.slane %v3475, %v3829
    %v3831 = vmul.f32 %v3830, %v3467
    %v3832 = vmul.f32 %v3830, %v3468
    %v3833 = vmul.f32 %v3830, %v3469
    %v3834 = vmul.f32 %v3830, %v3471
    %v3835 = vmul.f32 %v3830, %v3472
    %v3836 = vmul.f32 %v3830, %v3473
    %v3843 = vrot.slane %v3831, 4
    %v3844 = vrot.slane %v3832, 4
    %v3845 = vsel %vm3598, %v3843, %v3844
    %v3846 = vrot.slane %v3833, 4
    %v3847 = vsel %vm3598, %v3844, %v3846
    %v3848 = vrot.slane %v3834, 4
    %v3849 = vrot.slane %v3835, 4
    %v3850 = vsel %vm3598, %v3848, %v3849
    %v3851 = vrot.slane %v3836, 4
    %v3852 = vsel %vm3598, %v3849, %v3851
    %v3857 = vadd.f32 %v3823, %v3845
    %v3858 = vadd.f32 %v3824, %v3847
    %v3859 = vadd.f32 %v3825, %v3850
    %v3860 = vadd.f32 %v3826, %v3852
    %v3861 = vlaneseq
    %v3862 = vshrl.u32 %v3861, 7
    %v3863 = vsub.s32 5, %v3862
    %v3864 = vrot.slane %v3475, %v3863
    %v3865 = vmul.f32 %v3864, %v3467
    %v3866 = vmul.f32 %v3864, %v3468
    %v3867 = vmul.f32 %v3864, %v3469
    %v3868 = vmul.f32 %v3864, %v3471
    %v3869 = vmul.f32 %v3864, %v3472
    %v3870 = vmul.f32 %v3864, %v3473
    %v3877 = vrot.slane %v3865, 5
    %v3878 = vrot.slane %v3866, 5
    %v3879 = vsel %vm2603, %v3877, %v3878
    %v3880 = vrot.slane %v3867, 5
    %v3881 = vsel %vm2603, %v3878, %v3880
    %v3882 = vrot.slane %v3868, 5
    %v3883 = vrot.slane %v3869, 5
    %v3884 = vsel %vm2603, %v3882, %v3883
    %v3885 = vrot.slane %v3870, 5
    %v3886 = vsel %vm2603, %v3883, %v3885
    %v3891 = vadd.f32 %v3857, %v3879
    %v3892 = vadd.f32 %v3858, %v3881
    %v3893 = vadd.f32 %v3859, %v3884
    %v3894 = vadd.f32 %v3860, %v3886
    %v3895 = vlaneseq
    %v3896 = vshrl.u32 %v3895, 7
    %v3897 = vsub.s32 6, %v3896
    %v3898 = vrot.slane %v3475, %v3897
    %v3899 = vmul.f32 %v3898, %v3467
    %v3900 = vmul.f32 %v3898, %v3468
    %v3901 = vmul.f32 %v3898, %v3469
    %v3902 = vmul.f32 %v3898, %v3471
    %v3903 = vmul.f32 %v3898, %v3472
    %v3904 = vmul.f32 %v3898, %v3473
    %v3911 = vrot.slane %v3899, 6
    %v3912 = vrot.slane %v3900, 6
    %v3913 = vsel %vm3667, %v3911, %v3912
    %v3914 = vrot.slane %v3901, 6
    %v3915 = vsel %vm3667, %v3912, %v3914
    %v3916 = vrot.slane %v3902, 6
    %v3917 = vrot.slane %v3903, 6
    %v3918 = vsel %vm3667, %v3916, %v3917
    %v3919 = vrot.slane %v3904, 6
    %v3920 = vsel %vm3667, %v3917, %v3919
    %v3925 = vadd.f32 %v3891, %v3913
    %v3926 = vadd.f32 %v3892, %v3915
    %v3927 = vadd.f32 %v3893, %v3918
    %v3928 = vadd.f32 %v3894, %v3920
    %v3929 = vlaneseq
    %v3930 = vshrl.u32 %v3929, 7
    %v3931 = vsub.s32 7, %v3930
    %v3932 = vrot.slane %v3475, %v3931
    %v3933 = vmul.f32 %v3932, %v3467
    %v3934 = vmul.f32 %v3932, %v3468
    %v3935 = vmul.f32 %v3932, %v3469
    %v3936 = vmul.f32 %v3932, %v3471
    %v3937 = vmul.f32 %v3932, %v3472
    %v3938 = vmul.f32 %v3932, %v3473
    %v3945 = vrot.slane %v3933, 7
    %v3946 = vrot.slane %v3934, 7
    %v3947 = vsel %vm3702, %v3945, %v3946
    %v3948 = vrot.slane %v3935, 7
    %v3949 = vsel %vm3702, %v3946, %v3948
    %v3950 = vrot.slane %v3936, 7
    %v3951 = vrot.slane %v3937, 7
    %v3952 = vsel %vm3702, %v3950, %v3951
    %v3953 = vrot.slane %v3938, 7
    %v3954 = vsel %vm3702, %v3951, %v3953
    %v3959 = vadd.f32 %v3925, %v3947
    %v3960 = vadd.f32 %v3926, %v3949
    %v3961 = vadd.f32 %v3927, %v3952
    %v3962 = vadd.f32 %v3928, %v3954
    %v3963 = vld [vmem:[%s2958] sm:$0xff]
    %v3964 = vld [vmem:[%s2958 + $0x8] sm:$0xff]
    %v3965 = vld [vmem:[%s2958 + $0x10] sm:$0xff]
    %v3966 = vld [vmem:[%s2958 + $0x18] sm:$0x3f]
    %v3967 = vld [vmem:[%s2958 + $0xa0] sm:$0xff]
    %v3968 = vld [vmem:[%s2958 + $0xa8] sm:$0xff]
    %v3969 = vld [vmem:[%s2958 + $0xb0] sm:$0xff]
    %v3970 = vld [vmem:[%s2958 + $0xb8] sm:$0x3f]
    %s3971 = scalar_lea.vmem %s10, 16
    %v3972 = vld [vmem:[%s3971] sm:$0xff]
    %v3973 = vld [vmem:[%s3971 + $0x8] sm:$0xff]
    %v3974 = vlaneseq
    %v3975 = vshrl.u32 %v3974, 7
    %v3976 = vsub.s32 0, %v3975
    %v3977 = vrot.slane %v3972, %v3976
    %v3978 = vmul.f32 %v3977, %v3963
    %v3979 = vmul.f32 %v3977, %v3964
    %v3980 = vmul.f32 %v3977, %v3967
    %v3981 = vmul.f32 %v3977, %v3968
    %v3982 = vadd.f32 %v3959, %v3978
    %v3983 = vadd.f32 %v3960, %v3979
    %v3984 = vadd.f32 %v3961, %v3980
    %v3985 = vadd.f32 %v3962, %v3981
    %v3986 = vlaneseq
    %v3987 = vshrl.u32 %v3986, 7
    %v3988 = vsub.s32 1, %v3987
    %v3989 = vrot.slane %v3972, %v3988
    %v3990 = vmul.f32 %v3989, %v3963
    %v3991 = vmul.f32 %v3989, %v3964
    %v3992 = vmul.f32 %v3989, %v3967
    %v3993 = vmul.f32 %v3989, %v3968
    %v3998 = vrot.slane %v3990, 1
    %v3999 = vrot.slane %v3991, 1
    %v4000 = vsel %vm316, %v3998, %v3999
    %v4001 = vrot.slane %v3992, 1
    %v4002 = vrot.slane %v3993, 1
    %v4003 = vsel %vm316, %v4001, %v4002
    %v4008 = vadd.f32 %v3982, %v4000
    %v4009 = vadd.f32 %v3983, %v3999
    %v4010 = vadd.f32 %v3984, %v4003
    %v4011 = vadd.f32 %v3985, %v4002
    %v4012 = vlaneseq
    %v4013 = vshrl.u32 %v4012, 7
    %v4014 = vsub.s32 2, %v4013
    %v4015 = vrot.slane %v3972, %v4014
    %v4016 = vmul.f32 %v4015, %v3963
    %v4017 = vmul.f32 %v4015, %v3964
    %v4018 = vmul.f32 %v4015, %v3965
    %v4019 = vmul.f32 %v4015, %v3967
    %v4020 = vmul.f32 %v4015, %v3968
    %v4021 = vmul.f32 %v4015, %v3969
    %v4028 = vrot.slane %v4016, 2
    %v4029 = vrot.slane %v4017, 2
    %v4030 = vsel %vm223, %v4028, %v4029
    %v4031 = vrot.slane %v4018, 2
    %v4032 = vsel %vm223, %v4029, %v4031
    %v4033 = vrot.slane %v4019, 2
    %v4034 = vrot.slane %v4020, 2
    %v4035 = vsel %vm223, %v4033, %v4034
    %v4036 = vrot.slane %v4021, 2
    %v4037 = vsel %vm223, %v4034, %v4036
    %v4042 = vadd.f32 %v4008, %v4030
    %v4043 = vadd.f32 %v4009, %v4032
    %v4044 = vadd.f32 %v4010, %v4035
    %v4045 = vadd.f32 %v4011, %v4037
    %v4046 = vlaneseq
    %v4047 = vshrl.u32 %v4046, 7
    %v4048 = vsub.s32 3, %v4047
    %v4049 = vrot.slane %v3972, %v4048
    %v4050 = vmul.f32 %v4049, %v3963
    %v4051 = vmul.f32 %v4049, %v3964
    %v4052 = vmul.f32 %v4049, %v3965
    %v4053 = vmul.f32 %v4049, %v3967
    %v4054 = vmul.f32 %v4049, %v3968
    %v4055 = vmul.f32 %v4049, %v3969
    %v4062 = vrot.slane %v4050, 3
    %v4063 = vrot.slane %v4051, 3
    %v4064 = vsel %vm2511, %v4062, %v4063
    %v4065 = vrot.slane %v4052, 3
    %v4066 = vsel %vm2511, %v4063, %v4065
    %v4067 = vrot.slane %v4053, 3
    %v4068 = vrot.slane %v4054, 3
    %v4069 = vsel %vm2511, %v4067, %v4068
    %v4070 = vrot.slane %v4055, 3
    %v4071 = vsel %vm2511, %v4068, %v4070
    %v4076 = vadd.f32 %v4042, %v4064
    %v4077 = vadd.f32 %v4043, %v4066
    %v4078 = vadd.f32 %v4044, %v4069
    %v4079 = vadd.f32 %v4045, %v4071
    %v4080 = vlaneseq
    %v4081 = vshrl.u32 %v4080, 7
    %v4082 = vsub.s32 4, %v4081
    %v4083 = vrot.slane %v3972, %v4082
    %v4084 = vmul.f32 %v4083, %v3963
    %v4085 = vmul.f32 %v4083, %v3964
    %v4086 = vmul.f32 %v4083, %v3965
    %v4087 = vmul.f32 %v4083, %v3967
    %v4088 = vmul.f32 %v4083, %v3968
    %v4089 = vmul.f32 %v4083, %v3969
    %v4096 = vrot.slane %v4084, 4
    %v4097 = vrot.slane %v4085, 4
    %v4098 = vsel %vm3598, %v4096, %v4097
    %v4099 = vrot.slane %v4086, 4
    %v4100 = vsel %vm3598, %v4097, %v4099
    %v4101 = vrot.slane %v4087, 4
    %v4102 = vrot.slane %v4088, 4
    %v4103 = vsel %vm3598, %v4101, %v4102
    %v4104 = vrot.slane %v4089, 4
    %v4105 = vsel %vm3598, %v4102, %v4104
    %v4110 = vadd.f32 %v4076, %v4098
    %v4111 = vadd.f32 %v4077, %v4100
    %v4112 = vadd.f32 %v4078, %v4103
    %v4113 = vadd.f32 %v4079, %v4105
    %v4114 = vlaneseq
    %v4115 = vshrl.u32 %v4114, 7
    %v4116 = vsub.s32 5, %v4115
    %v4117 = vrot.slane %v3972, %v4116
    %v4118 = vmul.f32 %v4117, %v3963
    %v4119 = vmul.f32 %v4117, %v3964
    %v4120 = vmul.f32 %v4117, %v3965
    %v4121 = vmul.f32 %v4117, %v3967
    %v4122 = vmul.f32 %v4117, %v3968
    %v4123 = vmul.f32 %v4117, %v3969
    %v4130 = vrot.slane %v4118, 5
    %v4131 = vrot.slane %v4119, 5
    %v4132 = vsel %vm2603, %v4130, %v4131
    %v4133 = vrot.slane %v4120, 5
    %v4134 = vsel %vm2603, %v4131, %v4133
    %v4135 = vrot.slane %v4121, 5
    %v4136 = vrot.slane %v4122, 5
    %v4137 = vsel %vm2603, %v4135, %v4136
    %v4138 = vrot.slane %v4123, 5
    %v4139 = vsel %vm2603, %v4136, %v4138
    %v4144 = vadd.f32 %v4110, %v4132
    %v4145 = vadd.f32 %v4111, %v4134
    %v4146 = vadd.f32 %v4112, %v4137
    %v4147 = vadd.f32 %v4113, %v4139
    %v4148 = vlaneseq
    %v4149 = vshrl.u32 %v4148, 7
    %v4150 = vsub.s32 6, %v4149
    %v4151 = vrot.slane %v3972, %v4150
    %v4152 = vmul.f32 %v4151, %v3963
    %v4153 = vmul.f32 %v4151, %v3964
    %v4154 = vmul.f32 %v4151, %v3965
    %v4155 = vmul.f32 %v4151, %v3967
    %v4156 = vmul.f32 %v4151, %v3968
    %v4157 = vmul.f32 %v4151, %v3969
    %v4164 = vrot.slane %v4152, 6
    %v4165 = vrot.slane %v4153, 6
    %v4166 = vsel %vm3667, %v4164, %v4165
    %v4167 = vrot.slane %v4154, 6
    %v4168 = vsel %vm3667, %v4165, %v4167
    %v4169 = vrot.slane %v4155, 6
    %v4170 = vrot.slane %v4156, 6
    %v4171 = vsel %vm3667, %v4169, %v4170
    %v4172 = vrot.slane %v4157, 6
    %v4173 = vsel %vm3667, %v4170, %v4172
    %v4178 = vadd.f32 %v4144, %v4166
    %v4179 = vadd.f32 %v4145, %v4168
    %v4180 = vadd.f32 %v4146, %v4171
    %v4181 = vadd.f32 %v4147, %v4173
    %v4182 = vlaneseq
    %v4183 = vshrl.u32 %v4182, 7
    %v4184 = vsub.s32 7, %v4183
    %v4185 = vrot.slane %v3972, %v4184
    %v4186 = vmul.f32 %v4185, %v3963
    %v4187 = vmul.f32 %v4185, %v3964
    %v4188 = vmul.f32 %v4185, %v3965
    %v4189 = vmul.f32 %v4185, %v3967
    %v4190 = vmul.f32 %v4185, %v3968
    %v4191 = vmul.f32 %v4185, %v3969
    %v4198 = vrot.slane %v4186, 7
    %v4199 = vrot.slane %v4187, 7
    %v4200 = vsel %vm3702, %v4198, %v4199
    %v4201 = vrot.slane %v4188, 7
    %v4202 = vsel %vm3702, %v4199, %v4201
    %v4203 = vrot.slane %v4189, 7
    %v4204 = vrot.slane %v4190, 7
    %v4205 = vsel %vm3702, %v4203, %v4204
    %v4206 = vrot.slane %v4191, 7
    %v4207 = vsel %vm3702, %v4204, %v4206
    %v4212 = vadd.f32 %v4178, %v4200
    %v4213 = vadd.f32 %v4179, %v4202
    %v4214 = vadd.f32 %v4180, %v4205
    %v4215 = vadd.f32 %v4181, %v4207
    %v4216 = vlaneseq
    %v4217 = vshrl.u32 %v4216, 7
    %v4218 = vsub.s32 0, %v4217
    %v4219 = vrot.slane %v3973, %v4218
    %v4220 = vmul.f32 %v4219, %v3964
    %v4221 = vmul.f32 %v4219, %v3965
    %v4222 = vmul.f32 %v4219, %v3968
    %v4223 = vmul.f32 %v4219, %v3969
    %v4224 = vadd.f32 %v4212, %v4220
    %v4225 = vadd.f32 %v4213, %v4221
    %v4226 = vadd.f32 %v4214, %v4222
    %v4227 = vadd.f32 %v4215, %v4223
    %v4228 = vlaneseq
    %v4229 = vshrl.u32 %v4228, 7
    %v4230 = vsub.s32 1, %v4229
    %v4231 = vrot.slane %v3973, %v4230
    %v4232 = vmul.f32 %v4231, %v3964
    %v4233 = vmul.f32 %v4231, %v3965
    %v4234 = vmul.f32 %v4231, %v3968
    %v4235 = vmul.f32 %v4231, %v3969
    %v4240 = vrot.slane %v4232, 1
    %v4241 = vrot.slane %v4233, 1
    %v4242 = vsel %vm316, %v4240, %v4241
    %v4243 = vrot.slane %v4234, 1
    %v4244 = vrot.slane %v4235, 1
    %v4245 = vsel %vm316, %v4243, %v4244
    %v4250 = vadd.f32 %v4224, %v4242
    %v4251 = vadd.f32 %v4225, %v4241
    %v4252 = vadd.f32 %v4226, %v4245
    %v4253 = vadd.f32 %v4227, %v4244
    %v4254 = vlaneseq
    %v4255 = vshrl.u32 %v4254, 7
    %v4256 = vsub.s32 2, %v4255
    %v4257 = vrot.slane %v3973, %v4256
    %v4258 = vmul.f32 %v4257, %v3964
    %v4259 = vmul.f32 %v4257, %v3965
    %v4260 = vmul.f32 %v4257, %v3966
    %v4261 = vmul.f32 %v4257, %v3968
    %v4262 = vmul.f32 %v4257, %v3969
    %v4263 = vmul.f32 %v4257, %v3970
    %v4270 = vrot.slane %v4258, 2
    %v4271 = vrot.slane %v4259, 2
    %v4272 = vsel %vm223, %v4270, %v4271
    %v4273 = vrot.slane %v4260, 2
    %v4274 = vsel %vm223, %v4271, %v4273
    %v4275 = vrot.slane %v4261, 2
    %v4276 = vrot.slane %v4262, 2
    %v4277 = vsel %vm223, %v4275, %v4276
    %v4278 = vrot.slane %v4263, 2
    %v4279 = vsel %vm223, %v4276, %v4278
    %v4284 = vadd.f32 %v4250, %v4272
    %v4285 = vadd.f32 %v4251, %v4274
    %v4286 = vadd.f32 %v4252, %v4277
    %v4287 = vadd.f32 %v4253, %v4279
    %v4288 = vlaneseq
    %v4289 = vshrl.u32 %v4288, 7
    %v4290 = vsub.s32 3, %v4289
    %v4291 = vrot.slane %v3973, %v4290
    %v4292 = vmul.f32 %v4291, %v3964
    %v4293 = vmul.f32 %v4291, %v3965
    %v4294 = vmul.f32 %v4291, %v3966
    %v4295 = vmul.f32 %v4291, %v3968
    %v4296 = vmul.f32 %v4291, %v3969
    %v4297 = vmul.f32 %v4291, %v3970
    %v4304 = vrot.slane %v4292, 3
    %v4305 = vrot.slane %v4293, 3
    %v4306 = vsel %vm2511, %v4304, %v4305
    %v4307 = vrot.slane %v4294, 3
    %v4308 = vsel %vm2511, %v4305, %v4307
    %v4309 = vrot.slane %v4295, 3
    %v4310 = vrot.slane %v4296, 3
    %v4311 = vsel %vm2511, %v4309, %v4310
    %v4312 = vrot.slane %v4297, 3
    %v4313 = vsel %vm2511, %v4310, %v4312
    %v4318 = vadd.f32 %v4284, %v4306
    %v4319 = vadd.f32 %v4285, %v4308
    %v4320 = vadd.f32 %v4286, %v4311
    %v4321 = vadd.f32 %v4287, %v4313
    %v4322 = vlaneseq
    %v4323 = vshrl.u32 %v4322, 7
    %v4324 = vsub.s32 4, %v4323
    %v4325 = vrot.slane %v3973, %v4324
    %v4326 = vmul.f32 %v4325, %v3964
    %v4327 = vmul.f32 %v4325, %v3965
    %v4328 = vmul.f32 %v4325, %v3966
    %v4329 = vmul.f32 %v4325, %v3968
    %v4330 = vmul.f32 %v4325, %v3969
    %v4331 = vmul.f32 %v4325, %v3970
    %v4338 = vrot.slane %v4326, 4
    %v4339 = vrot.slane %v4327, 4
    %v4340 = vsel %vm3598, %v4338, %v4339
    %v4341 = vrot.slane %v4328, 4
    %v4342 = vsel %vm3598, %v4339, %v4341
    %v4343 = vrot.slane %v4329, 4
    %v4344 = vrot.slane %v4330, 4
    %v4345 = vsel %vm3598, %v4343, %v4344
    %v4346 = vrot.slane %v4331, 4
    %v4347 = vsel %vm3598, %v4344, %v4346
    %v4352 = vadd.f32 %v4318, %v4340
    %v4353 = vadd.f32 %v4319, %v4342
    %v4354 = vadd.f32 %v4320, %v4345
    %v4355 = vadd.f32 %v4321, %v4347
    %v4356 = vlaneseq
    %v4357 = vshrl.u32 %v4356, 7
    %v4358 = vsub.s32 5, %v4357
    %v4359 = vrot.slane %v3973, %v4358
    %v4360 = vmul.f32 %v4359, %v3964
    %v4361 = vmul.f32 %v4359, %v3965
    %v4362 = vmul.f32 %v4359, %v3966
    %v4363 = vmul.f32 %v4359, %v3968
    %v4364 = vmul.f32 %v4359, %v3969
    %v4365 = vmul.f32 %v4359, %v3970
    %v4372 = vrot.slane %v4360, 5
    %v4373 = vrot.slane %v4361, 5
    %v4374 = vsel %vm2603, %v4372, %v4373
    %v4375 = vrot.slane %v4362, 5
    %v4376 = vsel %vm2603, %v4373, %v4375
    %v4377 = vrot.slane %v4363, 5
    %v4378 = vrot.slane %v4364, 5
    %v4379 = vsel %vm2603, %v4377, %v4378
    %v4380 = vrot.slane %v4365, 5
    %v4381 = vsel %vm2603, %v4378, %v4380
    %v4386 = vadd.f32 %v4352, %v4374
    %v4387 = vadd.f32 %v4353, %v4376
    %v4388 = vadd.f32 %v4354, %v4379
    %v4389 = vadd.f32 %v4355, %v4381
    %v4390 = vlaneseq
    %v4391 = vshrl.u32 %v4390, 7
    %v4392 = vsub.s32 6, %v4391
    %v4393 = vrot.slane %v3973, %v4392
    %v4394 = vmul.f32 %v4393, %v3964
    %v4395 = vmul.f32 %v4393, %v3965
    %v4396 = vmul.f32 %v4393, %v3966
    %v4397 = vmul.f32 %v4393, %v3968
    %v4398 = vmul.f32 %v4393, %v3969
    %v4399 = vmul.f32 %v4393, %v3970
    %v4406 = vrot.slane %v4394, 6
    %v4407 = vrot.slane %v4395, 6
    %v4408 = vsel %vm3667, %v4406, %v4407
    %v4409 = vrot.slane %v4396, 6
    %v4410 = vsel %vm3667, %v4407, %v4409
    %v4411 = vrot.slane %v4397, 6
    %v4412 = vrot.slane %v4398, 6
    %v4413 = vsel %vm3667, %v4411, %v4412
    %v4414 = vrot.slane %v4399, 6
    %v4415 = vsel %vm3667, %v4412, %v4414
    %v4420 = vadd.f32 %v4386, %v4408
    %v4421 = vadd.f32 %v4387, %v4410
    %v4422 = vadd.f32 %v4388, %v4413
    %v4423 = vadd.f32 %v4389, %v4415
    %v4424 = vlaneseq
    %v4425 = vshrl.u32 %v4424, 7
    %v4426 = vsub.s32 7, %v4425
    %v4427 = vrot.slane %v3973, %v4426
    %v4428 = vmul.f32 %v4427, %v3964
    %v4429 = vmul.f32 %v4427, %v3965
    %v4430 = vmul.f32 %v4427, %v3966
    %v4431 = vmul.f32 %v4427, %v3968
    %v4432 = vmul.f32 %v4427, %v3969
    %v4433 = vmul.f32 %v4427, %v3970
    %v4440 = vrot.slane %v4428, 7
    %v4441 = vrot.slane %v4429, 7
    %v4442 = vsel %vm3702, %v4440, %v4441
    %v4443 = vrot.slane %v4430, 7
    %v4444 = vsel %vm3702, %v4441, %v4443
    %v4445 = vrot.slane %v4431, 7
    %v4446 = vrot.slane %v4432, 7
    %v4447 = vsel %vm3702, %v4445, %v4446
    %v4448 = vrot.slane %v4433, 7
    %v4449 = vsel %vm3702, %v4446, %v4448
    %v4454 = vadd.f32 %v4420, %v4442
    %v4455 = vadd.f32 %v4421, %v4444
    %v4456 = vadd.f32 %v4422, %v4447
    %v4457 = vadd.f32 %v4423, %v4449
    %v4458 = vld [vmem:[%s3109] sm:$0xff]
    %v4459 = vld [vmem:[%s3109 + $0x8] sm:$0xff]
    %v4460 = vld [vmem:[%s3109 + $0x10] sm:$0xff]
    %v4461 = vld [vmem:[%s3109 + $0x18] sm:$0x3f]
    %v4462 = vld [vmem:[%s3109 + $0xa0] sm:$0xff]
    %v4463 = vld [vmem:[%s3109 + $0xa8] sm:$0xff]
    %v4464 = vld [vmem:[%s3109 + $0xb0] sm:$0xff]
    %v4465 = vld [vmem:[%s3109 + $0xb8] sm:$0x3f]
    %s4466 = scalar_lea.vmem %s10, 32
    %v4467 = vld [vmem:[%s4466] sm:$0xff]
    %v4468 = vld [vmem:[%s4466 + $0x8] sm:$0xff]
    %v4469 = vlaneseq
    %v4470 = vshrl.u32 %v4469, 7
    %v4471 = vsub.s32 0, %v4470
    %v4472 = vrot.slane %v4467, %v4471
    %v4473 = vmul.f32 %v4472, %v4458
    %v4474 = vmul.f32 %v4472, %v4459
    %v4475 = vmul.f32 %v4472, %v4462
    %v4476 = vmul.f32 %v4472, %v4463
    %v4477 = vadd.f32 %v4454, %v4473
    %v4478 = vadd.f32 %v4455, %v4474
    %v4479 = vadd.f32 %v4456, %v4475
    %v4480 = vadd.f32 %v4457, %v4476
    %v4481 = vlaneseq
    %v4482 = vshrl.u32 %v4481, 7
    %v4483 = vsub.s32 1, %v4482
    %v4484 = vrot.slane %v4467, %v4483
    %v4485 = vmul.f32 %v4484, %v4458
    %v4486 = vmul.f32 %v4484, %v4459
    %v4487 = vmul.f32 %v4484, %v4462
    %v4488 = vmul.f32 %v4484, %v4463
    %v4493 = vrot.slane %v4485, 1
    %v4494 = vrot.slane %v4486, 1
    %v4495 = vsel %vm316, %v4493, %v4494
    %v4496 = vrot.slane %v4487, 1
    %v4497 = vrot.slane %v4488, 1
    %v4498 = vsel %vm316, %v4496, %v4497
    %v4503 = vadd.f32 %v4477, %v4495
    %v4504 = vadd.f32 %v4478, %v4494
    %v4505 = vadd.f32 %v4479, %v4498
    %v4506 = vadd.f32 %v4480, %v4497
    %v4507 = vlaneseq
    %v4508 = vshrl.u32 %v4507, 7
    %v4509 = vsub.s32 2, %v4508
    %v4510 = vrot.slane %v4467, %v4509
    %v4511 = vmul.f32 %v4510, %v4458
    %v4512 = vmul.f32 %v4510, %v4459
    %v4513 = vmul.f32 %v4510, %v4460
    %v4514 = vmul.f32 %v4510, %v4462
    %v4515 = vmul.f32 %v4510, %v4463
    %v4516 = vmul.f32 %v4510, %v4464
    %v4523 = vrot.slane %v4511, 2
    %v4524 = vrot.slane %v4512, 2
    %v4525 = vsel %vm223, %v4523, %v4524
    %v4526 = vrot.slane %v4513, 2
    %v4527 = vsel %vm223, %v4524, %v4526
    %v4528 = vrot.slane %v4514, 2
    %v4529 = vrot.slane %v4515, 2
    %v4530 = vsel %vm223, %v4528, %v4529
    %v4531 = vrot.slane %v4516, 2
    %v4532 = vsel %vm223, %v4529, %v4531
    %v4537 = vadd.f32 %v4503, %v4525
    %v4538 = vadd.f32 %v4504, %v4527
    %v4539 = vadd.f32 %v4505, %v4530
    %v4540 = vadd.f32 %v4506, %v4532
    %v4541 = vlaneseq
    %v4542 = vshrl.u32 %v4541, 7
    %v4543 = vsub.s32 3, %v4542
    %v4544 = vrot.slane %v4467, %v4543
    %v4545 = vmul.f32 %v4544, %v4458
    %v4546 = vmul.f32 %v4544, %v4459
    %v4547 = vmul.f32 %v4544, %v4460
    %v4548 = vmul.f32 %v4544, %v4462
    %v4549 = vmul.f32 %v4544, %v4463
    %v4550 = vmul.f32 %v4544, %v4464
    %v4557 = vrot.slane %v4545, 3
    %v4558 = vrot.slane %v4546, 3
    %v4559 = vsel %vm2511, %v4557, %v4558
    %v4560 = vrot.slane %v4547, 3
    %v4561 = vsel %vm2511, %v4558, %v4560
    %v4562 = vrot.slane %v4548, 3
    %v4563 = vrot.slane %v4549, 3
    %v4564 = vsel %vm2511, %v4562, %v4563
    %v4565 = vrot.slane %v4550, 3
    %v4566 = vsel %vm2511, %v4563, %v4565
    %v4571 = vadd.f32 %v4537, %v4559
    %v4572 = vadd.f32 %v4538, %v4561
    %v4573 = vadd.f32 %v4539, %v4564
    %v4574 = vadd.f32 %v4540, %v4566
    %v4575 = vlaneseq
    %v4576 = vshrl.u32 %v4575, 7
    %v4577 = vsub.s32 4, %v4576
    %v4578 = vrot.slane %v4467, %v4577
    %v4579 = vmul.f32 %v4578, %v4458
    %v4580 = vmul.f32 %v4578, %v4459
    %v4581 = vmul.f32 %v4578, %v4460
    %v4582 = vmul.f32 %v4578, %v4462
    %v4583 = vmul.f32 %v4578, %v4463
    %v4584 = vmul.f32 %v4578, %v4464
    %v4591 = vrot.slane %v4579, 4
    %v4592 = vrot.slane %v4580, 4
    %v4593 = vsel %vm3598, %v4591, %v4592
    %v4594 = vrot.slane %v4581, 4
    %v4595 = vsel %vm3598, %v4592, %v4594
    %v4596 = vrot.slane %v4582, 4
    %v4597 = vrot.slane %v4583, 4
    %v4598 = vsel %vm3598, %v4596, %v4597
    %v4599 = vrot.slane %v4584, 4
    %v4600 = vsel %vm3598, %v4597, %v4599
    %v4605 = vadd.f32 %v4571, %v4593
    %v4606 = vadd.f32 %v4572, %v4595
    %v4607 = vadd.f32 %v4573, %v4598
    %v4608 = vadd.f32 %v4574, %v4600
    %v4609 = vlaneseq
    %v4610 = vshrl.u32 %v4609, 7
    %v4611 = vsub.s32 5, %v4610
    %v4612 = vrot.slane %v4467, %v4611
    %v4613 = vmul.f32 %v4612, %v4458
    %v4614 = vmul.f32 %v4612, %v4459
    %v4615 = vmul.f32 %v4612, %v4460
    %v4616 = vmul.f32 %v4612, %v4462
    %v4617 = vmul.f32 %v4612, %v4463
    %v4618 = vmul.f32 %v4612, %v4464
    %v4625 = vrot.slane %v4613, 5
    %v4626 = vrot.slane %v4614, 5
    %v4627 = vsel %vm2603, %v4625, %v4626
    %v4628 = vrot.slane %v4615, 5
    %v4629 = vsel %vm2603, %v4626, %v4628
    %v4630 = vrot.slane %v4616, 5
    %v4631 = vrot.slane %v4617, 5
    %v4632 = vsel %vm2603, %v4630, %v4631
    %v4633 = vrot.slane %v4618, 5
    %v4634 = vsel %vm2603, %v4631, %v4633
    %v4639 = vadd.f32 %v4605, %v4627
    %v4640 = vadd.f32 %v4606, %v4629
    %v4641 = vadd.f32 %v4607, %v4632
    %v4642 = vadd.f32 %v4608, %v4634
    %v4643 = vlaneseq
    %v4644 = vshrl.u32 %v4643, 7
    %v4645 = vsub.s32 6, %v4644
    %v4646 = vrot.slane %v4467, %v4645
    %v4647 = vmul.f32 %v4646, %v4458
    %v4648 = vmul.f32 %v4646, %v4459
    %v4649 = vmul.f32 %v4646, %v4460
    %v4650 = vmul.f32 %v4646, %v4462
    %v4651 = vmul.f32 %v4646, %v4463
    %v4652 = vmul.f32 %v4646, %v4464
    %v4659 = vrot.slane %v4647, 6
    %v4660 = vrot.slane %v4648, 6
    %v4661 = vsel %vm3667, %v4659, %v4660
    %v4662 = vrot.slane %v4649, 6
    %v4663 = vsel %vm3667, %v4660, %v4662
    %v4664 = vrot.slane %v4650, 6
    %v4665 = vrot.slane %v4651, 6
    %v4666 = vsel %vm3667, %v4664, %v4665
    %v4667 = vrot.slane %v4652, 6
    %v4668 = vsel %vm3667, %v4665, %v4667
    %v4673 = vadd.f32 %v4639, %v4661
    %v4674 = vadd.f32 %v4640, %v4663
    %v4675 = vadd.f32 %v4641, %v4666
    %v4676 = vadd.f32 %v4642, %v4668
    %v4677 = vlaneseq
    %v4678 = vshrl.u32 %v4677, 7
    %v4679 = vsub.s32 7, %v4678
    %v4680 = vrot.slane %v4467, %v4679
    %v4681 = vmul.f32 %v4680, %v4458
    %v4682 = vmul.f32 %v4680, %v4459
    %v4683 = vmul.f32 %v4680, %v4460
    %v4684 = vmul.f32 %v4680, %v4462
    %v4685 = vmul.f32 %v4680, %v4463
    %v4686 = vmul.f32 %v4680, %v4464
    %v4693 = vrot.slane %v4681, 7
    %v4694 = vrot.slane %v4682, 7
    %v4695 = vsel %vm3702, %v4693, %v4694
    %v4696 = vrot.slane %v4683, 7
    %v4697 = vsel %vm3702, %v4694, %v4696
    %v4698 = vrot.slane %v4684, 7
    %v4699 = vrot.slane %v4685, 7
    %v4700 = vsel %vm3702, %v4698, %v4699
    %v4701 = vrot.slane %v4686, 7
    %v4702 = vsel %vm3702, %v4699, %v4701
    %v4707 = vadd.f32 %v4673, %v4695
    %v4708 = vadd.f32 %v4674, %v4697
    %v4709 = vadd.f32 %v4675, %v4700
    %v4710 = vadd.f32 %v4676, %v4702
    %v4711 = vlaneseq
    %v4712 = vshrl.u32 %v4711, 7
    %v4713 = vsub.s32 0, %v4712
    %v4714 = vrot.slane %v4468, %v4713
    %v4715 = vmul.f32 %v4714, %v4459
    %v4716 = vmul.f32 %v4714, %v4460
    %v4717 = vmul.f32 %v4714, %v4463
    %v4718 = vmul.f32 %v4714, %v4464
    %v4719 = vadd.f32 %v4707, %v4715
    %v4720 = vadd.f32 %v4708, %v4716
    %v4721 = vadd.f32 %v4709, %v4717
    %v4722 = vadd.f32 %v4710, %v4718
    %v4723 = vlaneseq
    %v4724 = vshrl.u32 %v4723, 7
    %v4725 = vsub.s32 1, %v4724
    %v4726 = vrot.slane %v4468, %v4725
    %v4727 = vmul.f32 %v4726, %v4459
    %v4728 = vmul.f32 %v4726, %v4460
    %v4729 = vmul.f32 %v4726, %v4463
    %v4730 = vmul.f32 %v4726, %v4464
    %v4735 = vrot.slane %v4727, 1
    %v4736 = vrot.slane %v4728, 1
    %v4737 = vsel %vm316, %v4735, %v4736
    %v4738 = vrot.slane %v4729, 1
    %v4739 = vrot.slane %v4730, 1
    %v4740 = vsel %vm316, %v4738, %v4739
    %v4745 = vadd.f32 %v4719, %v4737
    %v4746 = vadd.f32 %v4720, %v4736
    %v4747 = vadd.f32 %v4721, %v4740
    %v4748 = vadd.f32 %v4722, %v4739
    %v4749 = vlaneseq
    %v4750 = vshrl.u32 %v4749, 7
    %v4751 = vsub.s32 2, %v4750
    %v4752 = vrot.slane %v4468, %v4751
    %v4753 = vmul.f32 %v4752, %v4459
    %v4754 = vmul.f32 %v4752, %v4460
    %v4755 = vmul.f32 %v4752, %v4461
    %v4756 = vmul.f32 %v4752, %v4463
    %v4757 = vmul.f32 %v4752, %v4464
    %v4758 = vmul.f32 %v4752, %v4465
    %v4765 = vrot.slane %v4753, 2
    %v4766 = vrot.slane %v4754, 2
    %v4767 = vsel %vm223, %v4765, %v4766
    %v4768 = vrot.slane %v4755, 2
    %v4769 = vsel %vm223, %v4766, %v4768
    %v4770 = vrot.slane %v4756, 2
    %v4771 = vrot.slane %v4757, 2
    %v4772 = vsel %vm223, %v4770, %v4771
    %v4773 = vrot.slane %v4758, 2
    %v4774 = vsel %vm223, %v4771, %v4773
    %v4779 = vadd.f32 %v4745, %v4767
    %v4780 = vadd.f32 %v4746, %v4769
    %v4781 = vadd.f32 %v4747, %v4772
    %v4782 = vadd.f32 %v4748, %v4774
    %v4783 = vlaneseq
    %v4784 = vshrl.u32 %v4783, 7
    %v4785 = vsub.s32 3, %v4784
    %v4786 = vrot.slane %v4468, %v4785
    %v4787 = vmul.f32 %v4786, %v4459
    %v4788 = vmul.f32 %v4786, %v4460
    %v4789 = vmul.f32 %v4786, %v4461
    %v4790 = vmul.f32 %v4786, %v4463
    %v4791 = vmul.f32 %v4786, %v4464
    %v4792 = vmul.f32 %v4786, %v4465
    %v4799 = vrot.slane %v4787, 3
    %v4800 = vrot.slane %v4788, 3
    %v4801 = vsel %vm2511, %v4799, %v4800
    %v4802 = vrot.slane %v4789, 3
    %v4803 = vsel %vm2511, %v4800, %v4802
    %v4804 = vrot.slane %v4790, 3
    %v4805 = vrot.slane %v4791, 3
    %v4806 = vsel %vm2511, %v4804, %v4805
    %v4807 = vrot.slane %v4792, 3
    %v4808 = vsel %vm2511, %v4805, %v4807
    %v4813 = vadd.f32 %v4779, %v4801
    %v4814 = vadd.f32 %v4780, %v4803
    %v4815 = vadd.f32 %v4781, %v4806
    %v4816 = vadd.f32 %v4782, %v4808
    %v4817 = vlaneseq
    %v4818 = vshrl.u32 %v4817, 7
    %v4819 = vsub.s32 4, %v4818
    %v4820 = vrot.slane %v4468, %v4819
    %v4821 = vmul.f32 %v4820, %v4459
    %v4822 = vmul.f32 %v4820, %v4460
    %v4823 = vmul.f32 %v4820, %v4461
    %v4824 = vmul.f32 %v4820, %v4463
    %v4825 = vmul.f32 %v4820, %v4464
    %v4826 = vmul.f32 %v4820, %v4465
    %v4833 = vrot.slane %v4821, 4
    %v4834 = vrot.slane %v4822, 4
    %v4835 = vsel %vm3598, %v4833, %v4834
    %v4836 = vrot.slane %v4823, 4
    %v4837 = vsel %vm3598, %v4834, %v4836
    %v4838 = vrot.slane %v4824, 4
    %v4839 = vrot.slane %v4825, 4
    %v4840 = vsel %vm3598, %v4838, %v4839
    %v4841 = vrot.slane %v4826, 4
    %v4842 = vsel %vm3598, %v4839, %v4841
    %v4847 = vadd.f32 %v4813, %v4835
    %v4848 = vadd.f32 %v4814, %v4837
    %v4849 = vadd.f32 %v4815, %v4840
    %v4850 = vadd.f32 %v4816, %v4842
    %v4851 = vlaneseq
    %v4852 = vshrl.u32 %v4851, 7
    %v4853 = vsub.s32 5, %v4852
    %v4854 = vrot.slane %v4468, %v4853
    %v4855 = vmul.f32 %v4854, %v4459
    %v4856 = vmul.f32 %v4854, %v4460
    %v4857 = vmul.f32 %v4854, %v4461
    %v4858 = vmul.f32 %v4854, %v4463
    %v4859 = vmul.f32 %v4854, %v4464
    %v4860 = vmul.f32 %v4854, %v4465
    %v4867 = vrot.slane %v4855, 5
    %v4868 = vrot.slane %v4856, 5
    %v4869 = vsel %vm2603, %v4867, %v4868
    %v4870 = vrot.slane %v4857, 5
    %v4871 = vsel %vm2603, %v4868, %v4870
    %v4872 = vrot.slane %v4858, 5
    %v4873 = vrot.slane %v4859, 5
    %v4874 = vsel %vm2603, %v4872, %v4873
    %v4875 = vrot.slane %v4860, 5
    %v4876 = vsel %vm2603, %v4873, %v4875
    %v4881 = vadd.f32 %v4847, %v4869
    %v4882 = vadd.f32 %v4848, %v4871
    %v4883 = vadd.f32 %v4849, %v4874
    %v4884 = vadd.f32 %v4850, %v4876
    %v4885 = vlaneseq
    %v4886 = vshrl.u32 %v4885, 7
    %v4887 = vsub.s32 6, %v4886
    %v4888 = vrot.slane %v4468, %v4887
    %v4889 = vmul.f32 %v4888, %v4459
    %v4890 = vmul.f32 %v4888, %v4460
    %v4891 = vmul.f32 %v4888, %v4461
    %v4892 = vmul.f32 %v4888, %v4463
    %v4893 = vmul.f32 %v4888, %v4464
    %v4894 = vmul.f32 %v4888, %v4465
    %v4901 = vrot.slane %v4889, 6
    %v4902 = vrot.slane %v4890, 6
    %v4903 = vsel %vm3667, %v4901, %v4902
    %v4904 = vrot.slane %v4891, 6
    %v4905 = vsel %vm3667, %v4902, %v4904
    %v4906 = vrot.slane %v4892, 6
    %v4907 = vrot.slane %v4893, 6
    %v4908 = vsel %vm3667, %v4906, %v4907
    %v4909 = vrot.slane %v4894, 6
    %v4910 = vsel %vm3667, %v4907, %v4909
    %v4915 = vadd.f32 %v4881, %v4903
    %v4916 = vadd.f32 %v4882, %v4905
    %v4917 = vadd.f32 %v4883, %v4908
    %v4918 = vadd.f32 %v4884, %v4910
    %v4919 = vlaneseq
    %v4920 = vshrl.u32 %v4919, 7
    %v4921 = vsub.s32 7, %v4920
    %v4922 = vrot.slane %v4468, %v4921
    %v4923 = vmul.f32 %v4922, %v4459
    %v4924 = vmul.f32 %v4922, %v4460
    %v4925 = vmul.f32 %v4922, %v4461
    %v4926 = vmul.f32 %v4922, %v4463
    %v4927 = vmul.f32 %v4922, %v4464
    %v4928 = vmul.f32 %v4922, %v4465
    %v4935 = vrot.slane %v4923, 7
    %v4936 = vrot.slane %v4924, 7
    %v4937 = vsel %vm3702, %v4935, %v4936
    %v4938 = vrot.slane %v4925, 7
    %v4939 = vsel %vm3702, %v4936, %v4938
    %v4940 = vrot.slane %v4926, 7
    %v4941 = vrot.slane %v4927, 7
    %v4942 = vsel %vm3702, %v4940, %v4941
    %v4943 = vrot.slane %v4928, 7
    %v4944 = vsel %vm3702, %v4941, %v4943
    %v4949 = vadd.f32 %v4915, %v4937
    %v4950 = vadd.f32 %v4916, %v4939
    %v4951 = vadd.f32 %v4917, %v4942
    %v4952 = vadd.f32 %v4918, %v4944
    %v4953 = vld [vmem:[%s3260] sm:$0xff]
    %v4954 = vld [vmem:[%s3260 + $0x8] sm:$0xff]
    %v4955 = vld [vmem:[%s3260 + $0x10] sm:$0xff]
    %v4956 = vld [vmem:[%s3260 + $0x18] sm:$0x3f]
    %v4957 = vld [vmem:[%s3260 + $0xa0] sm:$0xff]
    %v4958 = vld [vmem:[%s3260 + $0xa8] sm:$0xff]
    %v4959 = vld [vmem:[%s3260 + $0xb0] sm:$0xff]
    %v4960 = vld [vmem:[%s3260 + $0xb8] sm:$0x3f]
    %s4961 = scalar_lea.vmem %s10, 48
    %v4962 = vld [vmem:[%s4961] sm:$0xff]
    %v4963 = vld [vmem:[%s4961 + $0x8] sm:$0xff]
    %v4964 = vlaneseq
    %v4965 = vshrl.u32 %v4964, 7
    %v4966 = vsub.s32 0, %v4965
    %v4967 = vrot.slane %v4962, %v4966
    %v4968 = vmul.f32 %v4967, %v4953
    %v4969 = vmul.f32 %v4967, %v4954
    %v4970 = vmul.f32 %v4967, %v4957
    %v4971 = vmul.f32 %v4967, %v4958
    %v4972 = vadd.f32 %v4949, %v4968
    %v4973 = vadd.f32 %v4950, %v4969
    %v4974 = vadd.f32 %v4951, %v4970
    %v4975 = vadd.f32 %v4952, %v4971
    %v4976 = vlaneseq
    %v4977 = vshrl.u32 %v4976, 7
    %v4978 = vsub.s32 1, %v4977
    %v4979 = vrot.slane %v4962, %v4978
    %v4980 = vmul.f32 %v4979, %v4953
    %v4981 = vmul.f32 %v4979, %v4954
    %v4982 = vmul.f32 %v4979, %v4957
    %v4983 = vmul.f32 %v4979, %v4958
    %v4988 = vrot.slane %v4980, 1
    %v4989 = vrot.slane %v4981, 1
    %v4990 = vsel %vm316, %v4988, %v4989
    %v4991 = vrot.slane %v4982, 1
    %v4992 = vrot.slane %v4983, 1
    %v4993 = vsel %vm316, %v4991, %v4992
    %v4998 = vadd.f32 %v4972, %v4990
    %v4999 = vadd.f32 %v4973, %v4989
    %v5000 = vadd.f32 %v4974, %v4993
    %v5001 = vadd.f32 %v4975, %v4992
    %v5002 = vlaneseq
    %v5003 = vshrl.u32 %v5002, 7
    %v5004 = vsub.s32 2, %v5003
    %v5005 = vrot.slane %v4962, %v5004
    %v5006 = vmul.f32 %v5005, %v4953
    %v5007 = vmul.f32 %v5005, %v4954
    %v5008 = vmul.f32 %v5005, %v4955
    %v5009 = vmul.f32 %v5005, %v4957
    %v5010 = vmul.f32 %v5005, %v4958
    %v5011 = vmul.f32 %v5005, %v4959
    %v5018 = vrot.slane %v5006, 2
    %v5019 = vrot.slane %v5007, 2
    %v5020 = vsel %vm223, %v5018, %v5019
    %v5021 = vrot.slane %v5008, 2
    %v5022 = vsel %vm223, %v5019, %v5021
    %v5023 = vrot.slane %v5009, 2
    %v5024 = vrot.slane %v5010, 2
    %v5025 = vsel %vm223, %v5023, %v5024
    %v5026 = vrot.slane %v5011, 2
    %v5027 = vsel %vm223, %v5024, %v5026
    %v5032 = vadd.f32 %v4998, %v5020
    %v5033 = vadd.f32 %v4999, %v5022
    %v5034 = vadd.f32 %v5000, %v5025
    %v5035 = vadd.f32 %v5001, %v5027
    %v5036 = vlaneseq
    %v5037 = vshrl.u32 %v5036, 7
    %v5038 = vsub.s32 3, %v5037
    %v5039 = vrot.slane %v4962, %v5038
    %v5040 = vmul.f32 %v5039, %v4953
    %v5041 = vmul.f32 %v5039, %v4954
    %v5042 = vmul.f32 %v5039, %v4955
    %v5043 = vmul.f32 %v5039, %v4957
    %v5044 = vmul.f32 %v5039, %v4958
    %v5045 = vmul.f32 %v5039, %v4959
    %v5052 = vrot.slane %v5040, 3
    %v5053 = vrot.slane %v5041, 3
    %v5054 = vsel %vm2511, %v5052, %v5053
    %v5055 = vrot.slane %v5042, 3
    %v5056 = vsel %vm2511, %v5053, %v5055
    %v5057 = vrot.slane %v5043, 3
    %v5058 = vrot.slane %v5044, 3
    %v5059 = vsel %vm2511, %v5057, %v5058
    %v5060 = vrot.slane %v5045, 3
    %v5061 = vsel %vm2511, %v5058, %v5060
    %v5066 = vadd.f32 %v5032, %v5054
    %v5067 = vadd.f32 %v5033, %v5056
    %v5068 = vadd.f32 %v5034, %v5059
    %v5069 = vadd.f32 %v5035, %v5061
    %v5070 = vlaneseq
    %v5071 = vshrl.u32 %v5070, 7
    %v5072 = vsub.s32 4, %v5071
    %v5073 = vrot.slane %v4962, %v5072
    %v5074 = vmul.f32 %v5073, %v4953
    %v5075 = vmul.f32 %v5073, %v4954
    %v5076 = vmul.f32 %v5073, %v4955
    %v5077 = vmul.f32 %v5073, %v4957
    %v5078 = vmul.f32 %v5073, %v4958
    %v5079 = vmul.f32 %v5073, %v4959
    %v5086 = vrot.slane %v5074, 4
    %v5087 = vrot.slane %v5075, 4
    %v5088 = vsel %vm3598, %v5086, %v5087
    %v5089 = vrot.slane %v5076, 4
    %v5090 = vsel %vm3598, %v5087, %v5089
    %v5091 = vrot.slane %v5077, 4
    %v5092 = vrot.slane %v5078, 4
    %v5093 = vsel %vm3598, %v5091, %v5092
    %v5094 = vrot.slane %v5079, 4
    %v5095 = vsel %vm3598, %v5092, %v5094
    %v5100 = vadd.f32 %v5066, %v5088
    %v5101 = vadd.f32 %v5067, %v5090
    %v5102 = vadd.f32 %v5068, %v5093
    %v5103 = vadd.f32 %v5069, %v5095
    %v5104 = vlaneseq
    %v5105 = vshrl.u32 %v5104, 7
    %v5106 = vsub.s32 5, %v5105
    %v5107 = vrot.slane %v4962, %v5106
    %v5108 = vmul.f32 %v5107, %v4953
    %v5109 = vmul.f32 %v5107, %v4954
    %v5110 = vmul.f32 %v5107, %v4955
    %v5111 = vmul.f32 %v5107, %v4957
    %v5112 = vmul.f32 %v5107, %v4958
    %v5113 = vmul.f32 %v5107, %v4959
    %v5120 = vrot.slane %v5108, 5
    %v5121 = vrot.slane %v5109, 5
    %v5122 = vsel %vm2603, %v5120, %v5121
    %v5123 = vrot.slane %v5110, 5
    %v5124 = vsel %vm2603, %v5121, %v5123
    %v5125 = vrot.slane %v5111, 5
    %v5126 = vrot.slane %v5112, 5
    %v5127 = vsel %vm2603, %v5125, %v5126
    %v5128 = vrot.slane %v5113, 5
    %v5129 = vsel %vm2603, %v5126, %v5128
    %v5134 = vadd.f32 %v5100, %v5122
    %v5135 = vadd.f32 %v5101, %v5124
    %v5136 = vadd.f32 %v5102, %v5127
    %v5137 = vadd.f32 %v5103, %v5129
    %v5138 = vlaneseq
    %v5139 = vshrl.u32 %v5138, 7
    %v5140 = vsub.s32 6, %v5139
    %v5141 = vrot.slane %v4962, %v5140
    %v5142 = vmul.f32 %v5141, %v4953
    %v5143 = vmul.f32 %v5141, %v4954
    %v5144 = vmul.f32 %v5141, %v4955
    %v5145 = vmul.f32 %v5141, %v4957
    %v5146 = vmul.f32 %v5141, %v4958
    %v5147 = vmul.f32 %v5141, %v4959
    %v5154 = vrot.slane %v5142, 6
    %v5155 = vrot.slane %v5143, 6
    %v5156 = vsel %vm3667, %v5154, %v5155
    %v5157 = vrot.slane %v5144, 6
    %v5158 = vsel %vm3667, %v5155, %v5157
    %v5159 = vrot.slane %v5145, 6
    %v5160 = vrot.slane %v5146, 6
    %v5161 = vsel %vm3667, %v5159, %v5160
    %v5162 = vrot.slane %v5147, 6
    %v5163 = vsel %vm3667, %v5160, %v5162
    %v5168 = vadd.f32 %v5134, %v5156
    %v5169 = vadd.f32 %v5135, %v5158
    %v5170 = vadd.f32 %v5136, %v5161
    %v5171 = vadd.f32 %v5137, %v5163
    %v5172 = vlaneseq
    %v5173 = vshrl.u32 %v5172, 7
    %v5174 = vsub.s32 7, %v5173
    %v5175 = vrot.slane %v4962, %v5174
    %v5176 = vmul.f32 %v5175, %v4953
    %v5177 = vmul.f32 %v5175, %v4954
    %v5178 = vmul.f32 %v5175, %v4955
    %v5179 = vmul.f32 %v5175, %v4957
    %v5180 = vmul.f32 %v5175, %v4958
    %v5181 = vmul.f32 %v5175, %v4959
    %v5188 = vrot.slane %v5176, 7
    %v5189 = vrot.slane %v5177, 7
    %v5190 = vsel %vm3702, %v5188, %v5189
    %v5191 = vrot.slane %v5178, 7
    %v5192 = vsel %vm3702, %v5189, %v5191
    %v5193 = vrot.slane %v5179, 7
    %v5194 = vrot.slane %v5180, 7
    %v5195 = vsel %vm3702, %v5193, %v5194
    %v5196 = vrot.slane %v5181, 7
    %v5197 = vsel %vm3702, %v5194, %v5196
    %v5202 = vadd.f32 %v5168, %v5190
    %v5203 = vadd.f32 %v5169, %v5192
    %v5204 = vadd.f32 %v5170, %v5195
    %v5205 = vadd.f32 %v5171, %v5197
    %v5206 = vlaneseq
    %v5207 = vshrl.u32 %v5206, 7
    %v5208 = vsub.s32 0, %v5207
    %v5209 = vrot.slane %v4963, %v5208
    %v5210 = vmul.f32 %v5209, %v4954
    %v5211 = vmul.f32 %v5209, %v4955
    %v5212 = vmul.f32 %v5209, %v4958
    %v5213 = vmul.f32 %v5209, %v4959
    %v5214 = vadd.f32 %v5202, %v5210
    %v5215 = vadd.f32 %v5203, %v5211
    %v5216 = vadd.f32 %v5204, %v5212
    %v5217 = vadd.f32 %v5205, %v5213
    %v5218 = vlaneseq
    %v5219 = vshrl.u32 %v5218, 7
    %v5220 = vsub.s32 1, %v5219
    %v5221 = vrot.slane %v4963, %v5220
    %v5222 = vmul.f32 %v5221, %v4954
    %v5223 = vmul.f32 %v5221, %v4955
    %v5224 = vmul.f32 %v5221, %v4958
    %v5225 = vmul.f32 %v5221, %v4959
    %v5230 = vrot.slane %v5222, 1
    %v5231 = vrot.slane %v5223, 1
    %v5232 = vsel %vm316, %v5230, %v5231
    %v5233 = vrot.slane %v5224, 1
    %v5234 = vrot.slane %v5225, 1
    %v5235 = vsel %vm316, %v5233, %v5234
    %v5240 = vadd.f32 %v5214, %v5232
    %v5241 = vadd.f32 %v5215, %v5231
    %v5242 = vadd.f32 %v5216, %v5235
    %v5243 = vadd.f32 %v5217, %v5234
    %v5244 = vlaneseq
    %v5245 = vshrl.u32 %v5244, 7
    %v5246 = vsub.s32 2, %v5245
    %v5247 = vrot.slane %v4963, %v5246
    %v5248 = vmul.f32 %v5247, %v4954
    %v5249 = vmul.f32 %v5247, %v4955
    %v5250 = vmul.f32 %v5247, %v4956
    %v5251 = vmul.f32 %v5247, %v4958
    %v5252 = vmul.f32 %v5247, %v4959
    %v5253 = vmul.f32 %v5247, %v4960
    %v5260 = vrot.slane %v5248, 2
    %v5261 = vrot.slane %v5249, 2
    %v5262 = vsel %vm223, %v5260, %v5261
    %v5263 = vrot.slane %v5250, 2
    %v5264 = vsel %vm223, %v5261, %v5263
    %v5265 = vrot.slane %v5251, 2
    %v5266 = vrot.slane %v5252, 2
    %v5267 = vsel %vm223, %v5265, %v5266
    %v5268 = vrot.slane %v5253, 2
    %v5269 = vsel %vm223, %v5266, %v5268
    %v5274 = vadd.f32 %v5240, %v5262
    %v5275 = vadd.f32 %v5241, %v5264
    %v5276 = vadd.f32 %v5242, %v5267
    %v5277 = vadd.f32 %v5243, %v5269
    %v5278 = vlaneseq
    %v5279 = vshrl.u32 %v5278, 7
    %v5280 = vsub.s32 3, %v5279
    %v5281 = vrot.slane %v4963, %v5280
    %v5282 = vmul.f32 %v5281, %v4954
    %v5283 = vmul.f32 %v5281, %v4955
    %v5284 = vmul.f32 %v5281, %v4956
    %v5285 = vmul.f32 %v5281, %v4958
    %v5286 = vmul.f32 %v5281, %v4959
    %v5287 = vmul.f32 %v5281, %v4960
    %v5294 = vrot.slane %v5282, 3
    %v5295 = vrot.slane %v5283, 3
    %v5296 = vsel %vm2511, %v5294, %v5295
    %v5297 = vrot.slane %v5284, 3
    %v5298 = vsel %vm2511, %v5295, %v5297
    %v5299 = vrot.slane %v5285, 3
    %v5300 = vrot.slane %v5286, 3
    %v5301 = vsel %vm2511, %v5299, %v5300
    %v5302 = vrot.slane %v5287, 3
    %v5303 = vsel %vm2511, %v5300, %v5302
    %v5308 = vadd.f32 %v5274, %v5296
    %v5309 = vadd.f32 %v5275, %v5298
    %v5310 = vadd.f32 %v5276, %v5301
    %v5311 = vadd.f32 %v5277, %v5303
    %v5312 = vlaneseq
    %v5313 = vshrl.u32 %v5312, 7
    %v5314 = vsub.s32 4, %v5313
    %v5315 = vrot.slane %v4963, %v5314
    %v5316 = vmul.f32 %v5315, %v4954
    %v5317 = vmul.f32 %v5315, %v4955
    %v5318 = vmul.f32 %v5315, %v4956
    %v5319 = vmul.f32 %v5315, %v4958
    %v5320 = vmul.f32 %v5315, %v4959
    %v5321 = vmul.f32 %v5315, %v4960
    %v5328 = vrot.slane %v5316, 4
    %v5329 = vrot.slane %v5317, 4
    %v5330 = vsel %vm3598, %v5328, %v5329
    %v5331 = vrot.slane %v5318, 4
    %v5332 = vsel %vm3598, %v5329, %v5331
    %v5333 = vrot.slane %v5319, 4
    %v5334 = vrot.slane %v5320, 4
    %v5335 = vsel %vm3598, %v5333, %v5334
    %v5336 = vrot.slane %v5321, 4
    %v5337 = vsel %vm3598, %v5334, %v5336
    %v5342 = vadd.f32 %v5308, %v5330
    %v5343 = vadd.f32 %v5309, %v5332
    %v5344 = vadd.f32 %v5310, %v5335
    %v5345 = vadd.f32 %v5311, %v5337
    %v5346 = vlaneseq
    %v5347 = vshrl.u32 %v5346, 7
    %v5348 = vsub.s32 5, %v5347
    %v5349 = vrot.slane %v4963, %v5348
    %v5350 = vmul.f32 %v5349, %v4954
    %v5351 = vmul.f32 %v5349, %v4955
    %v5352 = vmul.f32 %v5349, %v4956
    %v5353 = vmul.f32 %v5349, %v4958
    %v5354 = vmul.f32 %v5349, %v4959
    %v5355 = vmul.f32 %v5349, %v4960
    %v5362 = vrot.slane %v5350, 5
    %v5363 = vrot.slane %v5351, 5
    %v5364 = vsel %vm2603, %v5362, %v5363
    %v5365 = vrot.slane %v5352, 5
    %v5366 = vsel %vm2603, %v5363, %v5365
    %v5367 = vrot.slane %v5353, 5
    %v5368 = vrot.slane %v5354, 5
    %v5369 = vsel %vm2603, %v5367, %v5368
    %v5370 = vrot.slane %v5355, 5
    %v5371 = vsel %vm2603, %v5368, %v5370
    %v5376 = vadd.f32 %v5342, %v5364
    %v5377 = vadd.f32 %v5343, %v5366
    %v5378 = vadd.f32 %v5344, %v5369
    %v5379 = vadd.f32 %v5345, %v5371
    %v5380 = vlaneseq
    %v5381 = vshrl.u32 %v5380, 7
    %v5382 = vsub.s32 6, %v5381
    %v5383 = vrot.slane %v4963, %v5382
    %v5384 = vmul.f32 %v5383, %v4954
    %v5385 = vmul.f32 %v5383, %v4955
    %v5386 = vmul.f32 %v5383, %v4956
    %v5387 = vmul.f32 %v5383, %v4958
    %v5388 = vmul.f32 %v5383, %v4959
    %v5389 = vmul.f32 %v5383, %v4960
    %v5396 = vrot.slane %v5384, 6
    %v5397 = vrot.slane %v5385, 6
    %v5398 = vsel %vm3667, %v5396, %v5397
    %v5399 = vrot.slane %v5386, 6
    %v5400 = vsel %vm3667, %v5397, %v5399
    %v5401 = vrot.slane %v5387, 6
    %v5402 = vrot.slane %v5388, 6
    %v5403 = vsel %vm3667, %v5401, %v5402
    %v5404 = vrot.slane %v5389, 6
    %v5405 = vsel %vm3667, %v5402, %v5404
    %v5410 = vadd.f32 %v5376, %v5398
    %v5411 = vadd.f32 %v5377, %v5400
    %v5412 = vadd.f32 %v5378, %v5403
    %v5413 = vadd.f32 %v5379, %v5405
    %v5414 = vlaneseq
    %v5415 = vshrl.u32 %v5414, 7
    %v5416 = vsub.s32 7, %v5415
    %v5417 = vrot.slane %v4963, %v5416
    %v5418 = vmul.f32 %v5417, %v4954
    %v5419 = vmul.f32 %v5417, %v4955
    %v5420 = vmul.f32 %v5417, %v4956
    %v5421 = vmul.f32 %v5417, %v4958
    %v5422 = vmul.f32 %v5417, %v4959
    %v5423 = vmul.f32 %v5417, %v4960
    %v5430 = vrot.slane %v5418, 7
    %v5431 = vrot.slane %v5419, 7
    %v5432 = vsel %vm3702, %v5430, %v5431
    %v5433 = vrot.slane %v5420, 7
    %v5434 = vsel %vm3702, %v5431, %v5433
    %v5435 = vrot.slane %v5421, 7
    %v5436 = vrot.slane %v5422, 7
    %v5437 = vsel %vm3702, %v5435, %v5436
    %v5438 = vrot.slane %v5423, 7
    %v5439 = vsel %vm3702, %v5436, %v5438
    %v5444 = vadd.f32 %v5410, %v5432
    %v5445 = vadd.f32 %v5411, %v5434
    %v5446 = vadd.f32 %v5412, %v5437
    %v5447 = vadd.f32 %v5413, %v5439
    %v5448 = vld [vmem:[%s3411] sm:$0xff]
    %v5449 = vld [vmem:[%s3411 + $0x8] sm:$0xff]
    %v5450 = vld [vmem:[%s3411 + $0x10] sm:$0xff]
    %v5451 = vld [vmem:[%s3411 + $0x18] sm:$0x3f]
    %v5452 = vld [vmem:[%s3411 + $0xa0] sm:$0xff]
    %v5453 = vld [vmem:[%s3411 + $0xa8] sm:$0xff]
    %v5454 = vld [vmem:[%s3411 + $0xb0] sm:$0xff]
    %v5455 = vld [vmem:[%s3411 + $0xb8] sm:$0x3f]
    %s5456 = scalar_lea.vmem %s10, 64
    %v5457 = vld [vmem:[%s5456] sm:$0xff]
    %v5458 = vld [vmem:[%s5456 + $0x8] sm:$0xff]
    %v5459 = vlaneseq
    %v5460 = vshrl.u32 %v5459, 7
    %v5461 = vsub.s32 0, %v5460
    %v5462 = vrot.slane %v5457, %v5461
    %v5463 = vmul.f32 %v5462, %v5448
    %v5464 = vmul.f32 %v5462, %v5449
    %v5465 = vmul.f32 %v5462, %v5452
    %v5466 = vmul.f32 %v5462, %v5453
    %v5467 = vadd.f32 %v5444, %v5463
    %v5468 = vadd.f32 %v5445, %v5464
    %v5469 = vadd.f32 %v5446, %v5465
    %v5470 = vadd.f32 %v5447, %v5466
    %v5471 = vlaneseq
    %v5472 = vshrl.u32 %v5471, 7
    %v5473 = vsub.s32 1, %v5472
    %v5474 = vrot.slane %v5457, %v5473
    %v5475 = vmul.f32 %v5474, %v5448
    %v5476 = vmul.f32 %v5474, %v5449
    %v5477 = vmul.f32 %v5474, %v5452
    %v5478 = vmul.f32 %v5474, %v5453
    %v5483 = vrot.slane %v5475, 1
    %v5484 = vrot.slane %v5476, 1
    %v5485 = vsel %vm316, %v5483, %v5484
    %v5486 = vrot.slane %v5477, 1
    %v5487 = vrot.slane %v5478, 1
    %v5488 = vsel %vm316, %v5486, %v5487
    %v5493 = vadd.f32 %v5467, %v5485
    %v5494 = vadd.f32 %v5468, %v5484
    %v5495 = vadd.f32 %v5469, %v5488
    %v5496 = vadd.f32 %v5470, %v5487
    %v5497 = vlaneseq
    %v5498 = vshrl.u32 %v5497, 7
    %v5499 = vsub.s32 2, %v5498
    %v5500 = vrot.slane %v5457, %v5499
    %v5501 = vmul.f32 %v5500, %v5448
    %v5502 = vmul.f32 %v5500, %v5449
    %v5503 = vmul.f32 %v5500, %v5450
    %v5504 = vmul.f32 %v5500, %v5452
    %v5505 = vmul.f32 %v5500, %v5453
    %v5506 = vmul.f32 %v5500, %v5454
    %v5513 = vrot.slane %v5501, 2
    %v5514 = vrot.slane %v5502, 2
    %v5515 = vsel %vm223, %v5513, %v5514
    %v5516 = vrot.slane %v5503, 2
    %v5517 = vsel %vm223, %v5514, %v5516
    %v5518 = vrot.slane %v5504, 2
    %v5519 = vrot.slane %v5505, 2
    %v5520 = vsel %vm223, %v5518, %v5519
    %v5521 = vrot.slane %v5506, 2
    %v5522 = vsel %vm223, %v5519, %v5521
    %v5527 = vadd.f32 %v5493, %v5515
    %v5528 = vadd.f32 %v5494, %v5517
    %v5529 = vadd.f32 %v5495, %v5520
    %v5530 = vadd.f32 %v5496, %v5522
    %v5531 = vlaneseq
    %v5532 = vshrl.u32 %v5531, 7
    %v5533 = vsub.s32 3, %v5532
    %v5534 = vrot.slane %v5457, %v5533
    %v5535 = vmul.f32 %v5534, %v5448
    %v5536 = vmul.f32 %v5534, %v5449
    %v5537 = vmul.f32 %v5534, %v5450
    %v5538 = vmul.f32 %v5534, %v5452
    %v5539 = vmul.f32 %v5534, %v5453
    %v5540 = vmul.f32 %v5534, %v5454
    %v5547 = vrot.slane %v5535, 3
    %v5548 = vrot.slane %v5536, 3
    %v5549 = vsel %vm2511, %v5547, %v5548
    %v5550 = vrot.slane %v5537, 3
    %v5551 = vsel %vm2511, %v5548, %v5550
    %v5552 = vrot.slane %v5538, 3
    %v5553 = vrot.slane %v5539, 3
    %v5554 = vsel %vm2511, %v5552, %v5553
    %v5555 = vrot.slane %v5540, 3
    %v5556 = vsel %vm2511, %v5553, %v5555
    %v5561 = vadd.f32 %v5527, %v5549
    %v5562 = vadd.f32 %v5528, %v5551
    %v5563 = vadd.f32 %v5529, %v5554
    %v5564 = vadd.f32 %v5530, %v5556
    %v5565 = vlaneseq
    %v5566 = vshrl.u32 %v5565, 7
    %v5567 = vsub.s32 4, %v5566
    %v5568 = vrot.slane %v5457, %v5567
    %v5569 = vmul.f32 %v5568, %v5448
    %v5570 = vmul.f32 %v5568, %v5449
    %v5571 = vmul.f32 %v5568, %v5450
    %v5572 = vmul.f32 %v5568, %v5452
    %v5573 = vmul.f32 %v5568, %v5453
    %v5574 = vmul.f32 %v5568, %v5454
    %v5581 = vrot.slane %v5569, 4
    %v5582 = vrot.slane %v5570, 4
    %v5583 = vsel %vm3598, %v5581, %v5582
    %v5584 = vrot.slane %v5571, 4
    %v5585 = vsel %vm3598, %v5582, %v5584
    %v5586 = vrot.slane %v5572, 4
    %v5587 = vrot.slane %v5573, 4
    %v5588 = vsel %vm3598, %v5586, %v5587
    %v5589 = vrot.slane %v5574, 4
    %v5590 = vsel %vm3598, %v5587, %v5589
    %v5595 = vadd.f32 %v5561, %v5583
    %v5596 = vadd.f32 %v5562, %v5585
    %v5597 = vadd.f32 %v5563, %v5588
    %v5598 = vadd.f32 %v5564, %v5590
    %v5599 = vlaneseq
    %v5600 = vshrl.u32 %v5599, 7
    %v5601 = vsub.s32 5, %v5600
    %v5602 = vrot.slane %v5457, %v5601
    %v5603 = vmul.f32 %v5602, %v5448
    %v5604 = vmul.f32 %v5602, %v5449
    %v5605 = vmul.f32 %v5602, %v5450
    %v5606 = vmul.f32 %v5602, %v5452
    %v5607 = vmul.f32 %v5602, %v5453
    %v5608 = vmul.f32 %v5602, %v5454
    %v5615 = vrot.slane %v5603, 5
    %v5616 = vrot.slane %v5604, 5
    %v5617 = vsel %vm2603, %v5615, %v5616
    %v5618 = vrot.slane %v5605, 5
    %v5619 = vsel %vm2603, %v5616, %v5618
    %v5620 = vrot.slane %v5606, 5
    %v5621 = vrot.slane %v5607, 5
    %v5622 = vsel %vm2603, %v5620, %v5621
    %v5623 = vrot.slane %v5608, 5
    %v5624 = vsel %vm2603, %v5621, %v5623
    %v5629 = vadd.f32 %v5595, %v5617
    %v5630 = vadd.f32 %v5596, %v5619
    %v5631 = vadd.f32 %v5597, %v5622
    %v5632 = vadd.f32 %v5598, %v5624
    %v5633 = vlaneseq
    %v5634 = vshrl.u32 %v5633, 7
    %v5635 = vsub.s32 6, %v5634
    %v5636 = vrot.slane %v5457, %v5635
    %v5637 = vmul.f32 %v5636, %v5448
    %v5638 = vmul.f32 %v5636, %v5449
    %v5639 = vmul.f32 %v5636, %v5450
    %v5640 = vmul.f32 %v5636, %v5452
    %v5641 = vmul.f32 %v5636, %v5453
    %v5642 = vmul.f32 %v5636, %v5454
    %v5649 = vrot.slane %v5637, 6
    %v5650 = vrot.slane %v5638, 6
    %v5651 = vsel %vm3667, %v5649, %v5650
    %v5652 = vrot.slane %v5639, 6
    %v5653 = vsel %vm3667, %v5650, %v5652
    %v5654 = vrot.slane %v5640, 6
    %v5655 = vrot.slane %v5641, 6
    %v5656 = vsel %vm3667, %v5654, %v5655
    %v5657 = vrot.slane %v5642, 6
    %v5658 = vsel %vm3667, %v5655, %v5657
    %v5663 = vadd.f32 %v5629, %v5651
    %v5664 = vadd.f32 %v5630, %v5653
    %v5665 = vadd.f32 %v5631, %v5656
    %v5666 = vadd.f32 %v5632, %v5658
    %v5667 = vlaneseq
    %v5668 = vshrl.u32 %v5667, 7
    %v5669 = vsub.s32 7, %v5668
    %v5670 = vrot.slane %v5457, %v5669
    %v5671 = vmul.f32 %v5670, %v5448
    %v5672 = vmul.f32 %v5670, %v5449
    %v5673 = vmul.f32 %v5670, %v5450
    %v5674 = vmul.f32 %v5670, %v5452
    %v5675 = vmul.f32 %v5670, %v5453
    %v5676 = vmul.f32 %v5670, %v5454
    %v5683 = vrot.slane %v5671, 7
    %v5684 = vrot.slane %v5672, 7
    %v5685 = vsel %vm3702, %v5683, %v5684
    %v5686 = vrot.slane %v5673, 7
    %v5687 = vsel %vm3702, %v5684, %v5686
    %v5688 = vrot.slane %v5674, 7
    %v5689 = vrot.slane %v5675, 7
    %v5690 = vsel %vm3702, %v5688, %v5689
    %v5691 = vrot.slane %v5676, 7
    %v5692 = vsel %vm3702, %v5689, %v5691
    %v5697 = vadd.f32 %v5663, %v5685
    %v5698 = vadd.f32 %v5664, %v5687
    %v5699 = vadd.f32 %v5665, %v5690
    %v5700 = vadd.f32 %v5666, %v5692
    %v5701 = vlaneseq
    %v5702 = vshrl.u32 %v5701, 7
    %v5703 = vsub.s32 0, %v5702
    %v5704 = vrot.slane %v5458, %v5703
    %v5705 = vmul.f32 %v5704, %v5449
    %v5706 = vmul.f32 %v5704, %v5450
    %v5707 = vmul.f32 %v5704, %v5453
    %v5708 = vmul.f32 %v5704, %v5454
    %v5709 = vadd.f32 %v5697, %v5705
    %v5710 = vadd.f32 %v5698, %v5706
    %v5711 = vadd.f32 %v5699, %v5707
    %v5712 = vadd.f32 %v5700, %v5708
    %v5713 = vlaneseq
    %v5714 = vshrl.u32 %v5713, 7
    %v5715 = vsub.s32 1, %v5714
    %v5716 = vrot.slane %v5458, %v5715
    %v5717 = vmul.f32 %v5716, %v5449
    %v5718 = vmul.f32 %v5716, %v5450
    %v5719 = vmul.f32 %v5716, %v5453
    %v5720 = vmul.f32 %v5716, %v5454
    %v5725 = vrot.slane %v5717, 1
    %v5726 = vrot.slane %v5718, 1
    %v5727 = vsel %vm316, %v5725, %v5726
    %v5728 = vrot.slane %v5719, 1
    %v5729 = vrot.slane %v5720, 1
    %v5730 = vsel %vm316, %v5728, %v5729
    %v5735 = vadd.f32 %v5709, %v5727
    %v5736 = vadd.f32 %v5710, %v5726
    %v5737 = vadd.f32 %v5711, %v5730
    %v5738 = vadd.f32 %v5712, %v5729
    %v5739 = vlaneseq
    %v5740 = vshrl.u32 %v5739, 7
    %v5741 = vsub.s32 2, %v5740
    %v5742 = vrot.slane %v5458, %v5741
    %v5743 = vmul.f32 %v5742, %v5449
    %v5744 = vmul.f32 %v5742, %v5450
    %v5745 = vmul.f32 %v5742, %v5451
    %v5746 = vmul.f32 %v5742, %v5453
    %v5747 = vmul.f32 %v5742, %v5454
    %v5748 = vmul.f32 %v5742, %v5455
    %v5755 = vrot.slane %v5743, 2
    %v5756 = vrot.slane %v5744, 2
    %v5757 = vsel %vm223, %v5755, %v5756
    %v5758 = vrot.slane %v5745, 2
    %v5759 = vsel %vm223, %v5756, %v5758
    %v5760 = vrot.slane %v5746, 2
    %v5761 = vrot.slane %v5747, 2
    %v5762 = vsel %vm223, %v5760, %v5761
    %v5763 = vrot.slane %v5748, 2
    %v5764 = vsel %vm223, %v5761, %v5763
    %v5769 = vadd.f32 %v5735, %v5757
    %v5770 = vadd.f32 %v5736, %v5759
    %v5771 = vadd.f32 %v5737, %v5762
    %v5772 = vadd.f32 %v5738, %v5764
    %v5773 = vlaneseq
    %v5774 = vshrl.u32 %v5773, 7
    %v5775 = vsub.s32 3, %v5774
    %v5776 = vrot.slane %v5458, %v5775
    %v5777 = vmul.f32 %v5776, %v5449
    %v5778 = vmul.f32 %v5776, %v5450
    %v5779 = vmul.f32 %v5776, %v5451
    %v5780 = vmul.f32 %v5776, %v5453
    %v5781 = vmul.f32 %v5776, %v5454
    %v5782 = vmul.f32 %v5776, %v5455
    %v5789 = vrot.slane %v5777, 3
    %v5790 = vrot.slane %v5778, 3
    %v5791 = vsel %vm2511, %v5789, %v5790
    %v5792 = vrot.slane %v5779, 3
    %v5793 = vsel %vm2511, %v5790, %v5792
    %v5794 = vrot.slane %v5780, 3
    %v5795 = vrot.slane %v5781, 3
    %v5796 = vsel %vm2511, %v5794, %v5795
    %v5797 = vrot.slane %v5782, 3
    %v5798 = vsel %vm2511, %v5795, %v5797
    %v5803 = vadd.f32 %v5769, %v5791
    %v5804 = vadd.f32 %v5770, %v5793
    %v5805 = vadd.f32 %v5771, %v5796
    %v5806 = vadd.f32 %v5772, %v5798
    %v5807 = vlaneseq
    %v5808 = vshrl.u32 %v5807, 7
    %v5809 = vsub.s32 4, %v5808
    %v5810 = vrot.slane %v5458, %v5809
    %v5811 = vmul.f32 %v5810, %v5449
    %v5812 = vmul.f32 %v5810, %v5450
    %v5813 = vmul.f32 %v5810, %v5451
    %v5814 = vmul.f32 %v5810, %v5453
    %v5815 = vmul.f32 %v5810, %v5454
    %v5816 = vmul.f32 %v5810, %v5455
    %v5823 = vrot.slane %v5811, 4
    %v5824 = vrot.slane %v5812, 4
    %v5825 = vsel %vm3598, %v5823, %v5824
    %v5826 = vrot.slane %v5813, 4
    %v5827 = vsel %vm3598, %v5824, %v5826
    %v5828 = vrot.slane %v5814, 4
    %v5829 = vrot.slane %v5815, 4
    %v5830 = vsel %vm3598, %v5828, %v5829
    %v5831 = vrot.slane %v5816, 4
    %v5832 = vsel %vm3598, %v5829, %v5831
    %v5837 = vadd.f32 %v5803, %v5825
    %v5838 = vadd.f32 %v5804, %v5827
    %v5839 = vadd.f32 %v5805, %v5830
    %v5840 = vadd.f32 %v5806, %v5832
    %v5841 = vlaneseq
    %v5842 = vshrl.u32 %v5841, 7
    %v5843 = vsub.s32 5, %v5842
    %v5844 = vrot.slane %v5458, %v5843
    %v5845 = vmul.f32 %v5844, %v5449
    %v5846 = vmul.f32 %v5844, %v5450
    %v5847 = vmul.f32 %v5844, %v5451
    %v5848 = vmul.f32 %v5844, %v5453
    %v5849 = vmul.f32 %v5844, %v5454
    %v5850 = vmul.f32 %v5844, %v5455
    %v5857 = vrot.slane %v5845, 5
    %v5858 = vrot.slane %v5846, 5
    %v5859 = vsel %vm2603, %v5857, %v5858
    %v5860 = vrot.slane %v5847, 5
    %v5861 = vsel %vm2603, %v5858, %v5860
    %v5862 = vrot.slane %v5848, 5
    %v5863 = vrot.slane %v5849, 5
    %v5864 = vsel %vm2603, %v5862, %v5863
    %v5865 = vrot.slane %v5850, 5
    %v5866 = vsel %vm2603, %v5863, %v5865
    %v5871 = vadd.f32 %v5837, %v5859
    %v5872 = vadd.f32 %v5838, %v5861
    %v5873 = vadd.f32 %v5839, %v5864
    %v5874 = vadd.f32 %v5840, %v5866
    %v5875 = vlaneseq
    %v5876 = vshrl.u32 %v5875, 7
    %v5877 = vsub.s32 6, %v5876
    %v5878 = vrot.slane %v5458, %v5877
    %v5879 = vmul.f32 %v5878, %v5449
    %v5880 = vmul.f32 %v5878, %v5450
    %v5881 = vmul.f32 %v5878, %v5451
    %v5882 = vmul.f32 %v5878, %v5453
    %v5883 = vmul.f32 %v5878, %v5454
    %v5884 = vmul.f32 %v5878, %v5455
    %v5891 = vrot.slane %v5879, 6
    %v5892 = vrot.slane %v5880, 6
    %v5893 = vsel %vm3667, %v5891, %v5892
    %v5894 = vrot.slane %v5881, 6
    %v5895 = vsel %vm3667, %v5892, %v5894
    %v5896 = vrot.slane %v5882, 6
    %v5897 = vrot.slane %v5883, 6
    %v5898 = vsel %vm3667, %v5896, %v5897
    %v5899 = vrot.slane %v5884, 6
    %v5900 = vsel %vm3667, %v5897, %v5899
    %v5905 = vadd.f32 %v5871, %v5893
    %v5906 = vadd.f32 %v5872, %v5895
    %v5907 = vadd.f32 %v5873, %v5898
    %v5908 = vadd.f32 %v5874, %v5900
    %v5909 = vlaneseq
    %v5910 = vshrl.u32 %v5909, 7
    %v5911 = vsub.s32 7, %v5910
    %v5912 = vrot.slane %v5458, %v5911
    %v5913 = vmul.f32 %v5912, %v5449
    %v5914 = vmul.f32 %v5912, %v5450
    %v5915 = vmul.f32 %v5912, %v5451
    %v5916 = vmul.f32 %v5912, %v5453
    %v5917 = vmul.f32 %v5912, %v5454
    %v5918 = vmul.f32 %v5912, %v5455
    %v5925 = vrot.slane %v5913, 7
    %v5926 = vrot.slane %v5914, 7
    %v5927 = vsel %vm3702, %v5925, %v5926
    %v5928 = vrot.slane %v5915, 7
    %v5929 = vsel %vm3702, %v5926, %v5928
    %v5930 = vrot.slane %v5916, 7
    %v5931 = vrot.slane %v5917, 7
    %v5932 = vsel %vm3702, %v5930, %v5931
    %v5933 = vrot.slane %v5918, 7
    %v5934 = vsel %vm3702, %v5931, %v5933
    %v5939 = vadd.f32 %v5905, %v5927
    %v5940 = vadd.f32 %v5906, %v5929
    %v5941 = vadd.f32 %v5907, %v5932
    %v5942 = vadd.f32 %v5908, %v5934
    %s5943 = sld [smem:[#allocation4 + $0x14]]
    %v5944 = vstv %s5943
    %v5945 = vmul.f32 %v5939, %v5944
    %v5946 = vmul.f32 %v5940, %v5944
    %v5947 = vmul.f32 %v5941, %v5944
    %v5948 = vmul.f32 %v5942, %v5944
    %s5949 = sld [smem:[#allocation4 + $0x15]]
    %v5950 = vstv %s5949
    %v5951 = vadd.f32 %v5945, %v5950
    %v5952 = vadd.f32 %v5946, %v5950
    %v5953 = vadd.f32 %v5947, %v5950
    %v5954 = vadd.f32 %v5948, %v5950
    %vm5955 = vcmp.gt.f32.partialorder %v5951, 0.0
    %vm5956 = vcmp.gt.f32.partialorder %v5952, 0.0
    %vm5957 = vcmp.gt.f32.partialorder %v5953, 0.0
    %vm5958 = vcmp.gt.f32.partialorder %v5954, 0.0
    %v5959 = vmin.f32 %v5951, 0.0
    %v5960 = vmin.f32 %v5952, 0.0
    %v5961 = vmin.f32 %v5953, 0.0
    %v5962 = vmin.f32 %v5954, 0.0
    %v5963 = vmul.f32 %v5959, 1.442695
    %v5964 = vpow.pop %v5963
    %v5965 = vmul.f32 %v5960, 1.442695
    %v5966 = vpow.pop %v5965
    %v5967 = vmul.f32 %v5961, 1.442695
    %v5968 = vpow.pop %v5967
    %v5969 = vmul.f32 %v5962, 1.442695
    %v5970 = vpow.pop %v5969
    %v5971 = vsub.f32 %v5964, 1.0
    %v5972 = vsub.f32 %v5966, 1.0
    %v5973 = vsub.f32 %v5968, 1.0
    %v5974 = vsub.f32 %v5970, 1.0
    %v5975 = vsel %vm5955, %v5951, %v5971
    %v5976 = vsel %vm5956, %v5952, %v5972
    %v5977 = vsel %vm5957, %v5953, %v5973
    %v5978 = vsel %vm5958, %v5954, %v5974
    %v5979 = vadd.f32 %v5975, 0.0
    %v5980 = vadd.f32 %v5977, 0.0
    %v5981 = vld [vmem:[%s11] sm:$0xff]
    %v5982 = vld [vmem:[%s11 + $0x8] sm:$0xff]
    %v5983 = vld [vmem:[%s11 + $0x10] sm:$0xff]
    %v5984 = vld [vmem:[%s11 + $0x18] sm:$0x1]
    %v5985 = vld [vmem:[%s11 + $0x19] sm:$0xff]
    %v5986 = vld [vmem:[%s11 + $0x21] sm:$0xff]
    %v5987 = vld [vmem:[%s11 + $0x29] sm:$0xff]
    %v5988 = vld [vmem:[%s11 + $0x31] sm:$0x1]
    %v5991 = vrot.slane %v5979, 1
    %v5992 = vsel %vm218, %v5980, %v5991
    %v5993 = vsel %vm70, %v5992, 0
    %v5996 = vsel %vm3702, %v5988, 0
    %5998 = vmatprep.subr.mxu0 0.0
    %5999 = vmatpush1.msra.mxu0 %v5985
    %6000 = vmatprep.subr.mxu0 0.0
    %6001 = vmatpush1.msra.mxu0 %v5986
    %6002 = vmatprep.subr.mxu0 0.0
    %6003 = vmatpush1.msra.mxu0 %v5987
    %6004 = vmatprep.subr.mxu0 0.0
    %6005 = vmatpush1.msra.mxu0 %v5996
    %6006 = vmatprep.subr.mxu0 0.0
    %6007 = vmatpush1.msra.mxu0 0.0
    %6008 = vmatprep.subr.mxu0 0.0
    %6009 = vmatpush1.msra.mxu0 0.0
    %6010 = vmatprep.subr.mxu0 0.0
    %6011 = vmatpush1.msra.mxu0 0.0
    %6012 = vmatprep.subr.mxu0 0.0
    %6013 = vmatpush1.msra.mxu0 0.0
    %6014 = vmatprep.subr.mxu0 0.0
    %6015 = vmatpush1.msra.mxu0 0.0
    %6016 = vmatprep.subr.mxu0 0.0
    %6017 = vmatpush1.msra.mxu0 0.0
    %6018 = vmatprep.subr.mxu0 0.0
    %6019 = vmatpush1.msra.mxu0 0.0
    %6020 = vmatprep.subr.mxu0 0.0
    %6021 = vmatpush1.msra.mxu0 0.0
    %6022 = vmatprep.subr.mxu0 0.0
    %6023 = vmatpush1.msra.mxu0 0.0
    %6024 = vmatprep.subr.mxu0 0.0
    %6025 = vmatpush1.msra.mxu0 0.0
    %6026 = vmatprep.subr.mxu0 0.0
    %6027 = vmatpush1.msra.mxu0 0.0
    %6028 = vmatprep.subr.mxu0 0.0
    %6029 = vmatpush1.msra.mxu0 0.0
    %6030 = vmatprep.subr.mxu0 0.0
    %6031 = vmatpush1.msra.mxu0 0.0
    %6032 = vmatprep.subr.mxu0 0.0
    %6033 = vmatpush1.msra.mxu0 0.0
    %6034 = vmatprep.subr.mxu0 0.0
    %6035 = vmatpush1.msra.mxu0 0.0
    %6036 = vmatprep.subr.mxu0 0.0
    %6037 = vmatpush1.msra.mxu0 0.0
    %6038 = vmatprep.subr.mxu0 0.0
    %6039 = vmatpush1.msra.mxu0 0.0
    %6040 = vmatprep.subr.mxu0 0.0
    %6041 = vmatpush1.msra.mxu0 0.0
    %6042 = vmatprep.subr.mxu0 0.0
    %6043 = vmatpush1.msra.mxu0 0.0
    %6044 = vmatprep.subr.mxu0 0.0
    %6045 = vmatpush1.msra.mxu0 0.0
    %6046 = vmatprep.subr.mxu0 0.0
    %6047 = vmatpush1.msra.mxu0 0.0
    %6048 = vmatprep.subr.mxu0 0.0
    %6049 = vmatpush1.msra.mxu0 0.0
    %6050 = vmatprep.subr.mxu0 0.0
    %6051 = vmatpush1.msra.mxu0 0.0
    %6052 = vmatprep.subr.mxu0 0.0
    %6053 = vmatpush1.msra.mxu0 0.0
    %6054 = vmatprep.subr.mxu0 0.0
    %6055 = vmatpush1.msra.mxu0 0.0
    %6056 = vmatprep.subr.mxu0 0.0
    %6057 = vmatpush1.msra.mxu0 0.0
    %6058 = vmatprep.subr.mxu0 0.0
    %6059 = vmatpush1.msra.mxu0 0.0
    %6060 = vmatprep.subr.mxu0 0.0
    %6061 = vmatpush1.msra.mxu0 0.0
    %6062 = vmatprep.mubr.f32.mxu0 0.0
    %6063 = vmatmul.mubr.f32.gmra.mrb[0].mxu0 %v5993
    %v6064 = vpop.f32.mrb[0].mxu0
    %v6065 = vadd.f32 0.0, %v6064
    %v6066 = vpop.f32.mrb[0].mxu0
    %6067 = vdwg.mxu0
    %v6068 = vrot.slane %v5980, 7
    %v6069 = vsel %vm218, %v6068, %v5979
    %v6070 = vsel %vm70, %v6069, 0
    %v6073 = vsel %vm3702, %v5984, 0
    %6075 = vmatprep.subr.mxu0 0.0
    %6076 = vmatpush1.msra.mxu0 %v5981
    %6077 = vmatprep.subr.mxu0 0.0
    %6078 = vmatpush1.msra.mxu0 %v5982
    %6079 = vmatprep.subr.mxu0 0.0
    %6080 = vmatpush1.msra.mxu0 %v5983
    %6081 = vmatprep.subr.mxu0 0.0
    %6082 = vmatpush1.msra.mxu0 %v6073
    %6083 = vmatprep.subr.mxu0 0.0
    %6084 = vmatpush1.msra.mxu0 0.0
    %6085 = vmatprep.subr.mxu0 0.0
    %6086 = vmatpush1.msra.mxu0 0.0
    %6087 = vmatprep.subr.mxu0 0.0
    %6088 = vmatpush1.msra.mxu0 0.0
    %6089 = vmatprep.subr.mxu0 0.0
    %6090 = vmatpush1.msra.mxu0 0.0
    %6091 = vmatprep.subr.mxu0 0.0
    %6092 = vmatpush1.msra.mxu0 0.0
    %6093 = vmatprep.subr.mxu0 0.0
    %6094 = vmatpush1.msra.mxu0 0.0
    %6095 = vmatprep.subr.mxu0 0.0
    %6096 = vmatpush1.msra.mxu0 0.0
    %6097 = vmatprep.subr.mxu0 0.0
    %6098 = vmatpush1.msra.mxu0 0.0
    %6099 = vmatprep.subr.mxu0 0.0
    %6100 = vmatpush1.msra.mxu0 0.0
    %6101 = vmatprep.subr.mxu0 0.0
    %6102 = vmatpush1.msra.mxu0 0.0
    %6103 = vmatprep.subr.mxu0 0.0
    %6104 = vmatpush1.msra.mxu0 0.0
    %6105 = vmatprep.subr.mxu0 0.0
    %6106 = vmatpush1.msra.mxu0 0.0
    %6107 = vmatprep.subr.mxu0 0.0
    %6108 = vmatpush1.msra.mxu0 0.0
    %6109 = vmatprep.subr.mxu0 0.0
    %6110 = vmatpush1.msra.mxu0 0.0
    %6111 = vmatprep.subr.mxu0 0.0
    %6112 = vmatpush1.msra.mxu0 0.0
    %6113 = vmatprep.subr.mxu0 0.0
    %6114 = vmatpush1.msra.mxu0 0.0
    %6115 = vmatprep.subr.mxu0 0.0
    %6116 = vmatpush1.msra.mxu0 0.0
    %6117 = vmatprep.subr.mxu0 0.0
    %6118 = vmatpush1.msra.mxu0 0.0
    %6119 = vmatprep.subr.mxu0 0.0
    %6120 = vmatpush1.msra.mxu0 0.0
    %6121 = vmatprep.subr.mxu0 0.0
    %6122 = vmatpush1.msra.mxu0 0.0
    %6123 = vmatprep.subr.mxu0 0.0
    %6124 = vmatpush1.msra.mxu0 0.0
    %6125 = vmatprep.subr.mxu0 0.0
    %6126 = vmatpush1.msra.mxu0 0.0
    %6127 = vmatprep.subr.mxu0 0.0
    %6128 = vmatpush1.msra.mxu0 0.0
    %6129 = vmatprep.subr.mxu0 0.0
    %6130 = vmatpush1.msra.mxu0 0.0
    %6131 = vmatprep.subr.mxu0 0.0
    %6132 = vmatpush1.msra.mxu0 0.0
    %6133 = vmatprep.subr.mxu0 0.0
    %6134 = vmatpush1.msra.mxu0 0.0
    %6135 = vmatprep.subr.mxu0 0.0
    %6136 = vmatpush1.msra.mxu0 0.0
    %6137 = vmatprep.subr.mxu0 0.0
    %6138 = vmatpush1.msra.mxu0 0.0
    %6139 = vmatprep.mubr.f32.mxu0 0.0
    %6140 = vmatmul.mubr.f32.gmra.mrb[0].mxu0 %v6070
    %v6141 = vpop.f32.mrb[0].mxu0
    %v6142 = vadd.f32 %v6065, %v6141
    %v6143 = vpop.f32.mrb[0].mxu0
    %6144 = vdwg.mxu0
    %v6145 = vld [vmem:[%s11 + $0x32] sm:$0xff]
    %v6146 = vld [vmem:[%s11 + $0x3a] sm:$0xff]
    %v6147 = vld [vmem:[%s11 + $0x42] sm:$0xff]
    %v6148 = vld [vmem:[%s11 + $0x4a] sm:$0x1]
    %v6149 = vrot.slane %v5979, 2
    %v6150 = vrot.slane %v5980, 1
    %v6151 = vsel %vm218, %v6150, %v6149
    %v6152 = vsel %vm70, %v6151, 0
    %v6155 = vsel %vm3702, %v6148, 0
    %6157 = vmatprep.subr.mxu0 0.0
    %6158 = vmatpush1.msra.mxu0 %v6145
    %6159 = vmatprep.subr.mxu0 0.0
    %6160 = vmatpush1.msra.mxu0 %v6146
    %6161 = vmatprep.subr.mxu0 0.0
    %6162 = vmatpush1.msra.mxu0 %v6147
    %6163 = vmatprep.subr.mxu0 0.0
    %6164 = vmatpush1.msra.mxu0 %v6155
    %6165 = vmatprep.subr.mxu0 0.0
    %6166 = vmatpush1.msra.mxu0 0.0
    %6167 = vmatprep.subr.mxu0 0.0
    %6168 = vmatpush1.msra.mxu0 0.0
    %6169 = vmatprep.subr.mxu0 0.0
    %6170 = vmatpush1.msra.mxu0 0.0
    %6171 = vmatprep.subr.mxu0 0.0
    %6172 = vmatpush1.msra.mxu0 0.0
    %6173 = vmatprep.subr.mxu0 0.0
    %6174 = vmatpush1.msra.mxu0 0.0
    %6175 = vmatprep.subr.mxu0 0.0
    %6176 = vmatpush1.msra.mxu0 0.0
    %6177 = vmatprep.subr.mxu0 0.0
    %6178 = vmatpush1.msra.mxu0 0.0
    %6179 = vmatprep.subr.mxu0 0.0
    %6180 = vmatpush1.msra.mxu0 0.0
    %6181 = vmatprep.subr.mxu0 0.0
    %6182 = vmatpush1.msra.mxu0 0.0
    %6183 = vmatprep.subr.mxu0 0.0
    %6184 = vmatpush1.msra.mxu0 0.0
    %6185 = vmatprep.subr.mxu0 0.0
    %6186 = vmatpush1.msra.mxu0 0.0
    %6187 = vmatprep.subr.mxu0 0.0
    %6188 = vmatpush1.msra.mxu0 0.0
    %6189 = vmatprep.subr.mxu0 0.0
    %6190 = vmatpush1.msra.mxu0 0.0
    %6191 = vmatprep.subr.mxu0 0.0
    %6192 = vmatpush1.msra.mxu0 0.0
    %6193 = vmatprep.subr.mxu0 0.0
    %6194 = vmatpush1.msra.mxu0 0.0
    %6195 = vmatprep.subr.mxu0 0.0
    %6196 = vmatpush1.msra.mxu0 0.0
    %6197 = vmatprep.subr.mxu0 0.0
    %6198 = vmatpush1.msra.mxu0 0.0
    %6199 = vmatprep.subr.mxu0 0.0
    %6200 = vmatpush1.msra.mxu0 0.0
    %6201 = vmatprep.subr.mxu0 0.0
    %6202 = vmatpush1.msra.mxu0 0.0
    %6203 = vmatprep.subr.mxu0 0.0
    %6204 = vmatpush1.msra.mxu0 0.0
    %6205 = vmatprep.subr.mxu0 0.0
    %6206 = vmatpush1.msra.mxu0 0.0
    %6207 = vmatprep.subr.mxu0 0.0
    %6208 = vmatpush1.msra.mxu0 0.0
    %6209 = vmatprep.subr.mxu0 0.0
    %6210 = vmatpush1.msra.mxu0 0.0
    %6211 = vmatprep.subr.mxu0 0.0
    %6212 = vmatpush1.msra.mxu0 0.0
    %6213 = vmatprep.subr.mxu0 0.0
    %6214 = vmatpush1.msra.mxu0 0.0
    %6215 = vmatprep.subr.mxu0 0.0
    %6216 = vmatpush1.msra.mxu0 0.0
    %6217 = vmatprep.subr.mxu0 0.0
    %6218 = vmatpush1.msra.mxu0 0.0
    %6219 = vmatprep.subr.mxu0 0.0
    %6220 = vmatpush1.msra.mxu0 0.0
    %6221 = vmatprep.mubr.f32.mxu0 0.0
    %6222 = vmatmul.mubr.f32.gmra.mrb[0].mxu0 %v6152
    %v6223 = vpop.f32.mrb[0].mxu0
    %v6224 = vadd.f32 0.0, %v6223
    %v6225 = vpop.f32.mrb[0].mxu0
    %6226 = vdwg.mxu0
    %v6227 = vadd.f32 %v6142, %v6224
    %v6228 = vld [vmem:[%s11 + $0x4b] sm:$0xff]
    %v6229 = vld [vmem:[%s11 + $0x53] sm:$0xff]
    %v6230 = vld [vmem:[%s11 + $0x5b] sm:$0xff]
    %v6231 = vld [vmem:[%s11 + $0x63] sm:$0x1]
    %v6232 = vrot.slane %v5979, 3
    %v6233 = vrot.slane %v5980, 2
    %v6234 = vsel %vm218, %v6233, %v6232
    %v6235 = vsel %vm70, %v6234, 0
    %v6238 = vsel %vm3702, %v6231, 0
    %6240 = vmatprep.subr.mxu0 0.0
    %6241 = vmatpush1.msra.mxu0 %v6228
    %6242 = vmatprep.subr.mxu0 0.0
    %6243 = vmatpush1.msra.mxu0 %v6229
    %6244 = vmatprep.subr.mxu0 0.0
    %6245 = vmatpush1.msra.mxu0 %v6230
    %6246 = vmatprep.subr.mxu0 0.0
    %6247 = vmatpush1.msra.mxu0 %v6238
    %6248 = vmatprep.subr.mxu0 0.0
    %6249 = vmatpush1.msra.mxu0 0.0
    %6250 = vmatprep.subr.mxu0 0.0
    %6251 = vmatpush1.msra.mxu0 0.0
    %6252 = vmatprep.subr.mxu0 0.0
    %6253 = vmatpush1.msra.mxu0 0.0
    %6254 = vmatprep.subr.mxu0 0.0
    %6255 = vmatpush1.msra.mxu0 0.0
    %6256 = vmatprep.subr.mxu0 0.0
    %6257 = vmatpush1.msra.mxu0 0.0
    %6258 = vmatprep.subr.mxu0 0.0
    %6259 = vmatpush1.msra.mxu0 0.0
    %6260 = vmatprep.subr.mxu0 0.0
    %6261 = vmatpush1.msra.mxu0 0.0
    %6262 = vmatprep.subr.mxu0 0.0
    %6263 = vmatpush1.msra.mxu0 0.0
    %6264 = vmatprep.subr.mxu0 0.0
    %6265 = vmatpush1.msra.mxu0 0.0
    %6266 = vmatprep.subr.mxu0 0.0
    %6267 = vmatpush1.msra.mxu0 0.0
    %6268 = vmatprep.subr.mxu0 0.0
    %6269 = vmatpush1.msra.mxu0 0.0
    %6270 = vmatprep.subr.mxu0 0.0
    %6271 = vmatpush1.msra.mxu0 0.0
    %6272 = vmatprep.subr.mxu0 0.0
    %6273 = vmatpush1.msra.mxu0 0.0
    %6274 = vmatprep.subr.mxu0 0.0
    %6275 = vmatpush1.msra.mxu0 0.0
    %6276 = vmatprep.subr.mxu0 0.0
    %6277 = vmatpush1.msra.mxu0 0.0
    %6278 = vmatprep.subr.mxu0 0.0
    %6279 = vmatpush1.msra.mxu0 0.0
    %6280 = vmatprep.subr.mxu0 0.0
    %6281 = vmatpush1.msra.mxu0 0.0
    %6282 = vmatprep.subr.mxu0 0.0
    %6283 = vmatpush1.msra.mxu0 0.0
    %6284 = vmatprep.subr.mxu0 0.0
    %6285 = vmatpush1.msra.mxu0 0.0
    %6286 = vmatprep.subr.mxu0 0.0
    %6287 = vmatpush1.msra.mxu0 0.0
    %6288 = vmatprep.subr.mxu0 0.0
    %6289 = vmatpush1.msra.mxu0 0.0
    %6290 = vmatprep.subr.mxu0 0.0
    %6291 = vmatpush1.msra.mxu0 0.0
    %6292 = vmatprep.subr.mxu0 0.0
    %6293 = vmatpush1.msra.mxu0 0.0
    %6294 = vmatprep.subr.mxu0 0.0
    %6295 = vmatpush1.msra.mxu0 0.0
    %6296 = vmatprep.subr.mxu0 0.0
    %6297 = vmatpush1.msra.mxu0 0.0
    %6298 = vmatprep.subr.mxu0 0.0
    %6299 = vmatpush1.msra.mxu0 0.0
    %6300 = vmatprep.subr.mxu0 0.0
    %6301 = vmatpush1.msra.mxu0 0.0
    %6302 = vmatprep.subr.mxu0 0.0
    %6303 = vmatpush1.msra.mxu0 0.0
    %6304 = vmatprep.mubr.f32.mxu0 0.0
    %6305 = vmatmul.mubr.f32.gmra.mrb[0].mxu0 %v6235
    %v6306 = vpop.f32.mrb[0].mxu0
    %v6307 = vadd.f32 0.0, %v6306
    %v6308 = vpop.f32.mrb[0].mxu0
    %6309 = vdwg.mxu0
    %v6310 = vadd.f32 %v6227, %v6307
    %v6311 = vld [vmem:[%s11 + $0x64] sm:$0xff]
    %v6312 = vld [vmem:[%s11 + $0x6c] sm:$0xff]
    %v6313 = vld [vmem:[%s11 + $0x74] sm:$0xff]
    %v6314 = vld [vmem:[%s11 + $0x7c] sm:$0x1]
    %v6315 = vrot.slane %v5979, 4
    %v6316 = vrot.slane %v5980, 3
    %v6317 = vsel %vm218, %v6316, %v6315
    %v6318 = vsel %vm70, %v6317, 0
    %v6321 = vsel %vm3702, %v6314, 0
    %6323 = vmatprep.subr.mxu0 0.0
    %6324 = vmatpush1.msra.mxu0 %v6311
    %6325 = vmatprep.subr.mxu0 0.0
    %6326 = vmatpush1.msra.mxu0 %v6312
    %6327 = vmatprep.subr.mxu0 0.0
    %6328 = vmatpush1.msra.mxu0 %v6313
    %6329 = vmatprep.subr.mxu0 0.0
    %6330 = vmatpush1.msra.mxu0 %v6321
    %6331 = vmatprep.subr.mxu0 0.0
    %6332 = vmatpush1.msra.mxu0 0.0
    %6333 = vmatprep.subr.mxu0 0.0
    %6334 = vmatpush1.msra.mxu0 0.0
    %6335 = vmatprep.subr.mxu0 0.0
    %6336 = vmatpush1.msra.mxu0 0.0
    %6337 = vmatprep.subr.mxu0 0.0
    %6338 = vmatpush1.msra.mxu0 0.0
    %6339 = vmatprep.subr.mxu0 0.0
    %6340 = vmatpush1.msra.mxu0 0.0
    %6341 = vmatprep.subr.mxu0 0.0
    %6342 = vmatpush1.msra.mxu0 0.0
    %6343 = vmatprep.subr.mxu0 0.0
    %6344 = vmatpush1.msra.mxu0 0.0
    %6345 = vmatprep.subr.mxu0 0.0
    %6346 = vmatpush1.msra.mxu0 0.0
    %6347 = vmatprep.subr.mxu0 0.0
    %6348 = vmatpush1.msra.mxu0 0.0
    %6349 = vmatprep.subr.mxu0 0.0
    %6350 = vmatpush1.msra.mxu0 0.0
    %6351 = vmatprep.subr.mxu0 0.0
    %6352 = vmatpush1.msra.mxu0 0.0
    %6353 = vmatprep.subr.mxu0 0.0
    %6354 = vmatpush1.msra.mxu0 0.0
    %6355 = vmatprep.subr.mxu0 0.0
    %6356 = vmatpush1.msra.mxu0 0.0
    %6357 = vmatprep.subr.mxu0 0.0
    %6358 = vmatpush1.msra.mxu0 0.0
    %6359 = vmatprep.subr.mxu0 0.0
    %6360 = vmatpush1.msra.mxu0 0.0
    %6361 = vmatprep.subr.mxu0 0.0
    %6362 = vmatpush1.msra.mxu0 0.0
    %6363 = vmatprep.subr.mxu0 0.0
    %6364 = vmatpush1.msra.mxu0 0.0
    %6365 = vmatprep.subr.mxu0 0.0
    %6366 = vmatpush1.msra.mxu0 0.0
    %6367 = vmatprep.subr.mxu0 0.0
    %6368 = vmatpush1.msra.mxu0 0.0
    %6369 = vmatprep.subr.mxu0 0.0
    %6370 = vmatpush1.msra.mxu0 0.0
    %6371 = vmatprep.subr.mxu0 0.0
    %6372 = vmatpush1.msra.mxu0 0.0
    %6373 = vmatprep.subr.mxu0 0.0
    %6374 = vmatpush1.msra.mxu0 0.0
    %6375 = vmatprep.subr.mxu0 0.0
    %6376 = vmatpush1.msra.mxu0 0.0
    %6377 = vmatprep.subr.mxu0 0.0
    %6378 = vmatpush1.msra.mxu0 0.0
    %6379 = vmatprep.subr.mxu0 0.0
    %6380 = vmatpush1.msra.mxu0 0.0
    %6381 = vmatprep.subr.mxu0 0.0
    %6382 = vmatpush1.msra.mxu0 0.0
    %6383 = vmatprep.subr.mxu0 0.0
    %6384 = vmatpush1.msra.mxu0 0.0
    %6385 = vmatprep.subr.mxu0 0.0
    %6386 = vmatpush1.msra.mxu0 0.0
    %6387 = vmatprep.mubr.f32.mxu0 0.0
    %6388 = vmatmul.mubr.f32.gmra.mrb[0].mxu0 %v6318
    %v6389 = vpop.f32.mrb[0].mxu0
    %v6390 = vadd.f32 0.0, %v6389
    %v6391 = vpop.f32.mrb[0].mxu0
    %6392 = vdwg.mxu0
    %v6393 = vadd.f32 %v6310, %v6390
    %v6394 = vld [vmem:[%s11 + $0x7d] sm:$0xff]
    %v6395 = vld [vmem:[%s11 + $0x85] sm:$0xff]
    %v6396 = vld [vmem:[%s11 + $0x8d] sm:$0xff]
    %v6397 = vld [vmem:[%s11 + $0x95] sm:$0x1]
    %v6398 = vrot.slane %v5979, 5
    %v6399 = vrot.slane %v5980, 4
    %v6400 = vsel %vm218, %v6399, %v6398
    %v6401 = vsel %vm70, %v6400, 0
    %v6404 = vsel %vm3702, %v6397, 0
    %6406 = vmatprep.subr.mxu0 0.0
    %6407 = vmatpush1.msra.mxu0 %v6394
    %6408 = vmatprep.subr.mxu0 0.0
    %6409 = vmatpush1.msra.mxu0 %v6395
    %6410 = vmatprep.subr.mxu0 0.0
    %6411 = vmatpush1.msra.mxu0 %v6396
    %6412 = vmatprep.subr.mxu0 0.0
    %6413 = vmatpush1.msra.mxu0 %v6404
    %6414 = vmatprep.subr.mxu0 0.0
    %6415 = vmatpush1.msra.mxu0 0.0
    %6416 = vmatprep.subr.mxu0 0.0
    %6417 = vmatpush1.msra.mxu0 0.0
    %6418 = vmatprep.subr.mxu0 0.0
    %6419 = vmatpush1.msra.mxu0 0.0
    %6420 = vmatprep.subr.mxu0 0.0
    %6421 = vmatpush1.msra.mxu0 0.0
    %6422 = vmatprep.subr.mxu0 0.0
    %6423 = vmatpush1.msra.mxu0 0.0
    %6424 = vmatprep.subr.mxu0 0.0
    %6425 = vmatpush1.msra.mxu0 0.0
    %6426 = vmatprep.subr.mxu0 0.0
    %6427 = vmatpush1.msra.mxu0 0.0
    %6428 = vmatprep.subr.mxu0 0.0
    %6429 = vmatpush1.msra.mxu0 0.0
    %6430 = vmatprep.subr.mxu0 0.0
    %6431 = vmatpush1.msra.mxu0 0.0
    %6432 = vmatprep.subr.mxu0 0.0
    %6433 = vmatpush1.msra.mxu0 0.0
    %6434 = vmatprep.subr.mxu0 0.0
    %6435 = vmatpush1.msra.mxu0 0.0
    %6436 = vmatprep.subr.mxu0 0.0
    %6437 = vmatpush1.msra.mxu0 0.0
    %6438 = vmatprep.subr.mxu0 0.0
    %6439 = vmatpush1.msra.mxu0 0.0
    %6440 = vmatprep.subr.mxu0 0.0
    %6441 = vmatpush1.msra.mxu0 0.0
    %6442 = vmatprep.subr.mxu0 0.0
    %6443 = vmatpush1.msra.mxu0 0.0
    %6444 = vmatprep.subr.mxu0 0.0
    %6445 = vmatpush1.msra.mxu0 0.0
    %6446 = vmatprep.subr.mxu0 0.0
    %6447 = vmatpush1.msra.mxu0 0.0
    %6448 = vmatprep.subr.mxu0 0.0
    %6449 = vmatpush1.msra.mxu0 0.0
    %6450 = vmatprep.subr.mxu0 0.0
    %6451 = vmatpush1.msra.mxu0 0.0
    %6452 = vmatprep.subr.mxu0 0.0
    %6453 = vmatpush1.msra.mxu0 0.0
    %6454 = vmatprep.subr.mxu0 0.0
    %6455 = vmatpush1.msra.mxu0 0.0
    %6456 = vmatprep.subr.mxu0 0.0
    %6457 = vmatpush1.msra.mxu0 0.0
    %6458 = vmatprep.subr.mxu0 0.0
    %6459 = vmatpush1.msra.mxu0 0.0
    %6460 = vmatprep.subr.mxu0 0.0
    %6461 = vmatpush1.msra.mxu0 0.0
    %6462 = vmatprep.subr.mxu0 0.0
    %6463 = vmatpush1.msra.mxu0 0.0
    %6464 = vmatprep.subr.mxu0 0.0
    %6465 = vmatpush1.msra.mxu0 0.0
    %6466 = vmatprep.subr.mxu0 0.0
    %6467 = vmatpush1.msra.mxu0 0.0
    %6468 = vmatprep.subr.mxu0 0.0
    %6469 = vmatpush1.msra.mxu0 0.0
    %6470 = vmatprep.mubr.f32.mxu0 0.0
    %6471 = vmatmul.mubr.f32.gmra.mrb[0].mxu0 %v6401
    %v6472 = vpop.f32.mrb[0].mxu0
    %v6473 = vadd.f32 0.0, %v6472
    %v6474 = vpop.f32.mrb[0].mxu0
    %6475 = vdwg.mxu0
    %v6476 = vadd.f32 %v6393, %v6473
    %v6477 = vld [vmem:[%s11 + $0x96] sm:$0xff]
    %v6478 = vld [vmem:[%s11 + $0x9e] sm:$0xff]
    %v6479 = vld [vmem:[%s11 + $0xa6] sm:$0xff]
    %v6480 = vld [vmem:[%s11 + $0xae] sm:$0x1]
    %v6481 = vrot.slane %v5979, 6
    %v6482 = vrot.slane %v5980, 5
    %v6483 = vsel %vm218, %v6482, %v6481
    %v6484 = vsel %vm70, %v6483, 0
    %v6487 = vsel %vm3702, %v6480, 0
    %6489 = vmatprep.subr.mxu0 0.0
    %6490 = vmatpush1.msra.mxu0 %v6477
    %6491 = vmatprep.subr.mxu0 0.0
    %6492 = vmatpush1.msra.mxu0 %v6478
    %6493 = vmatprep.subr.mxu0 0.0
    %6494 = vmatpush1.msra.mxu0 %v6479
    %6495 = vmatprep.subr.mxu0 0.0
    %6496 = vmatpush1.msra.mxu0 %v6487
    %6497 = vmatprep.subr.mxu0 0.0
    %6498 = vmatpush1.msra.mxu0 0.0
    %6499 = vmatprep.subr.mxu0 0.0
    %6500 = vmatpush1.msra.mxu0 0.0
    %6501 = vmatprep.subr.mxu0 0.0
    %6502 = vmatpush1.msra.mxu0 0.0
    %6503 = vmatprep.subr.mxu0 0.0
    %6504 = vmatpush1.msra.mxu0 0.0
    %6505 = vmatprep.subr.mxu0 0.0
    %6506 = vmatpush1.msra.mxu0 0.0
    %6507 = vmatprep.subr.mxu0 0.0
    %6508 = vmatpush1.msra.mxu0 0.0
    %6509 = vmatprep.subr.mxu0 0.0
    %6510 = vmatpush1.msra.mxu0 0.0
    %6511 = vmatprep.subr.mxu0 0.0
    %6512 = vmatpush1.msra.mxu0 0.0
    %6513 = vmatprep.subr.mxu0 0.0
    %6514 = vmatpush1.msra.mxu0 0.0
    %6515 = vmatprep.subr.mxu0 0.0
    %6516 = vmatpush1.msra.mxu0 0.0
    %6517 = vmatprep.subr.mxu0 0.0
    %6518 = vmatpush1.msra.mxu0 0.0
    %6519 = vmatprep.subr.mxu0 0.0
    %6520 = vmatpush1.msra.mxu0 0.0
    %6521 = vmatprep.subr.mxu0 0.0
    %6522 = vmatpush1.msra.mxu0 0.0
    %6523 = vmatprep.subr.mxu0 0.0
    %6524 = vmatpush1.msra.mxu0 0.0
    %6525 = vmatprep.subr.mxu0 0.0
    %6526 = vmatpush1.msra.mxu0 0.0
    %6527 = vmatprep.subr.mxu0 0.0
    %6528 = vmatpush1.msra.mxu0 0.0
    %6529 = vmatprep.subr.mxu0 0.0
    %6530 = vmatpush1.msra.mxu0 0.0
    %6531 = vmatprep.subr.mxu0 0.0
    %6532 = vmatpush1.msra.mxu0 0.0
    %6533 = vmatprep.subr.mxu0 0.0
    %6534 = vmatpush1.msra.mxu0 0.0
    %6535 = vmatprep.subr.mxu0 0.0
    %6536 = vmatpush1.msra.mxu0 0.0
    %6537 = vmatprep.subr.mxu0 0.0
    %6538 = vmatpush1.msra.mxu0 0.0
    %6539 = vmatprep.subr.mxu0 0.0
    %6540 = vmatpush1.msra.mxu0 0.0
    %6541 = vmatprep.subr.mxu0 0.0
    %6542 = vmatpush1.msra.mxu0 0.0
    %6543 = vmatprep.subr.mxu0 0.0
    %6544 = vmatpush1.msra.mxu0 0.0
    %6545 = vmatprep.subr.mxu0 0.0
    %6546 = vmatpush1.msra.mxu0 0.0
    %6547 = vmatprep.subr.mxu0 0.0
    %6548 = vmatpush1.msra.mxu0 0.0
    %6549 = vmatprep.subr.mxu0 0.0
    %6550 = vmatpush1.msra.mxu0 0.0
    %6551 = vmatprep.subr.mxu0 0.0
    %6552 = vmatpush1.msra.mxu0 0.0
    %6553 = vmatprep.mubr.f32.mxu0 0.0
    %6554 = vmatmul.mubr.f32.gmra.mrb[0].mxu0 %v6484
    %v6555 = vpop.f32.mrb[0].mxu0
    %v6556 = vadd.f32 0.0, %v6555
    %v6557 = vpop.f32.mrb[0].mxu0
    %6558 = vdwg.mxu0
    %v6559 = vadd.f32 %v6476, %v6556
    %v6560 = vld [vmem:[%s11 + $0xaf] sm:$0xff]
    %v6561 = vld [vmem:[%s11 + $0xb7] sm:$0xff]
    %v6562 = vld [vmem:[%s11 + $0xbf] sm:$0xff]
    %v6563 = vld [vmem:[%s11 + $0xc7] sm:$0x1]
    %v6564 = vrot.slane %v5979, 7
    %v6565 = vrot.slane %v5980, 6
    %v6566 = vsel %vm218, %v6565, %v6564
    %v6567 = vsel %vm70, %v6566, 0
    %v6570 = vsel %vm3702, %v6563, 0
    %6572 = vmatprep.subr.mxu0 0.0
    %6573 = vmatpush1.msra.mxu0 %v6560
    %6574 = vmatprep.subr.mxu0 0.0
    %6575 = vmatpush1.msra.mxu0 %v6561
    %6576 = vmatprep.subr.mxu0 0.0
    %6577 = vmatpush1.msra.mxu0 %v6562
    %6578 = vmatprep.subr.mxu0 0.0
    %6579 = vmatpush1.msra.mxu0 %v6570
    %6580 = vmatprep.subr.mxu0 0.0
    %6581 = vmatpush1.msra.mxu0 0.0
    %6582 = vmatprep.subr.mxu0 0.0
    %6583 = vmatpush1.msra.mxu0 0.0
    %6584 = vmatprep.subr.mxu0 0.0
    %6585 = vmatpush1.msra.mxu0 0.0
    %6586 = vmatprep.subr.mxu0 0.0
    %6587 = vmatpush1.msra.mxu0 0.0
    %6588 = vmatprep.subr.mxu0 0.0
    %6589 = vmatpush1.msra.mxu0 0.0
    %6590 = vmatprep.subr.mxu0 0.0
    %6591 = vmatpush1.msra.mxu0 0.0
    %6592 = vmatprep.subr.mxu0 0.0
    %6593 = vmatpush1.msra.mxu0 0.0
    %6594 = vmatprep.subr.mxu0 0.0
    %6595 = vmatpush1.msra.mxu0 0.0
    %6596 = vmatprep.subr.mxu0 0.0
    %6597 = vmatpush1.msra.mxu0 0.0
    %6598 = vmatprep.subr.mxu0 0.0
    %6599 = vmatpush1.msra.mxu0 0.0
    %6600 = vmatprep.subr.mxu0 0.0
    %6601 = vmatpush1.msra.mxu0 0.0
    %6602 = vmatprep.subr.mxu0 0.0
    %6603 = vmatpush1.msra.mxu0 0.0
    %6604 = vmatprep.subr.mxu0 0.0
    %6605 = vmatpush1.msra.mxu0 0.0
    %6606 = vmatprep.subr.mxu0 0.0
    %6607 = vmatpush1.msra.mxu0 0.0
    %6608 = vmatprep.subr.mxu0 0.0
    %6609 = vmatpush1.msra.mxu0 0.0
    %6610 = vmatprep.subr.mxu0 0.0
    %6611 = vmatpush1.msra.mxu0 0.0
    %6612 = vmatprep.subr.mxu0 0.0
    %6613 = vmatpush1.msra.mxu0 0.0
    %6614 = vmatprep.subr.mxu0 0.0
    %6615 = vmatpush1.msra.mxu0 0.0
    %6616 = vmatprep.subr.mxu0 0.0
    %6617 = vmatpush1.msra.mxu0 0.0
    %6618 = vmatprep.subr.mxu0 0.0
    %6619 = vmatpush1.msra.mxu0 0.0
    %6620 = vmatprep.subr.mxu0 0.0
    %6621 = vmatpush1.msra.mxu0 0.0
    %6622 = vmatprep.subr.mxu0 0.0
    %6623 = vmatpush1.msra.mxu0 0.0
    %6624 = vmatprep.subr.mxu0 0.0
    %6625 = vmatpush1.msra.mxu0 0.0
    %6626 = vmatprep.subr.mxu0 0.0
    %6627 = vmatpush1.msra.mxu0 0.0
    %6628 = vmatprep.subr.mxu0 0.0
    %6629 = vmatpush1.msra.mxu0 0.0
    %6630 = vmatprep.subr.mxu0 0.0
    %6631 = vmatpush1.msra.mxu0 0.0
    %6632 = vmatprep.subr.mxu0 0.0
    %6633 = vmatpush1.msra.mxu0 0.0
    %6634 = vmatprep.subr.mxu0 0.0
    %6635 = vmatpush1.msra.mxu0 0.0
    %6636 = vmatprep.mubr.f32.mxu0 0.0
    %6637 = vmatmul.mubr.f32.gmra.mrb[0].mxu0 %v6567
    %v6638 = vpop.f32.mrb[0].mxu0
    %v6639 = vadd.f32 0.0, %v6638
    %v6640 = vpop.f32.mrb[0].mxu0
    %6641 = vdwg.mxu0
    %v6642 = vadd.f32 %v6559, %v6639
    %v6643 = vadd.f32 %v5976, 0.0
    %v6644 = vadd.f32 %v5978, 0.0
    %v6645 = vld [vmem:[%s11 + $0xc8] sm:$0xff]
    %v6646 = vld [vmem:[%s11 + $0xd0] sm:$0xff]
    %v6647 = vld [vmem:[%s11 + $0xd8] sm:$0xff]
    %v6648 = vld [vmem:[%s11 + $0xe0] sm:$0x1]
    %v6651 = vrot.slane %v6644, 7
    %v6652 = vsel %vm218, %v6651, %v6643
    %v6653 = vsel %vm70, %v6652, 0
    %v6656 = vsel %vm3702, %v6648, 0
    %6658 = vmatprep.subr.mxu0 0.0
    %6659 = vmatpush1.msra.mxu0 %v6645
    %6660 = vmatprep.subr.mxu0 0.0
    %6661 = vmatpush1.msra.mxu0 %v6646
    %6662 = vmatprep.subr.mxu0 0.0
    %6663 = vmatpush1.msra.mxu0 %v6647
    %6664 = vmatprep.subr.mxu0 0.0
    %6665 = vmatpush1.msra.mxu0 %v6656
    %6666 = vmatprep.subr.mxu0 0.0
    %6667 = vmatpush1.msra.mxu0 0.0
    %6668 = vmatprep.subr.mxu0 0.0
    %6669 = vmatpush1.msra.mxu0 0.0
    %6670 = vmatprep.subr.mxu0 0.0
    %6671 = vmatpush1.msra.mxu0 0.0
    %6672 = vmatprep.subr.mxu0 0.0
    %6673 = vmatpush1.msra.mxu0 0.0
    %6674 = vmatprep.subr.mxu0 0.0
    %6675 = vmatpush1.msra.mxu0 0.0
    %6676 = vmatprep.subr.mxu0 0.0
    %6677 = vmatpush1.msra.mxu0 0.0
    %6678 = vmatprep.subr.mxu0 0.0
    %6679 = vmatpush1.msra.mxu0 0.0
    %6680 = vmatprep.subr.mxu0 0.0
    %6681 = vmatpush1.msra.mxu0 0.0
    %6682 = vmatprep.subr.mxu0 0.0
    %6683 = vmatpush1.msra.mxu0 0.0
    %6684 = vmatprep.subr.mxu0 0.0
    %6685 = vmatpush1.msra.mxu0 0.0
    %6686 = vmatprep.subr.mxu0 0.0
    %6687 = vmatpush1.msra.mxu0 0.0
    %6688 = vmatprep.subr.mxu0 0.0
    %6689 = vmatpush1.msra.mxu0 0.0
    %6690 = vmatprep.subr.mxu0 0.0
    %6691 = vmatpush1.msra.mxu0 0.0
    %6692 = vmatprep.subr.mxu0 0.0
    %6693 = vmatpush1.msra.mxu0 0.0
    %6694 = vmatprep.subr.mxu0 0.0
    %6695 = vmatpush1.msra.mxu0 0.0
    %6696 = vmatprep.subr.mxu0 0.0
    %6697 = vmatpush1.msra.mxu0 0.0
    %6698 = vmatprep.subr.mxu0 0.0
    %6699 = vmatpush1.msra.mxu0 0.0
    %6700 = vmatprep.subr.mxu0 0.0
    %6701 = vmatpush1.msra.mxu0 0.0
    %6702 = vmatprep.subr.mxu0 0.0
    %6703 = vmatpush1.msra.mxu0 0.0
    %6704 = vmatprep.subr.mxu0 0.0
    %6705 = vmatpush1.msra.mxu0 0.0
    %6706 = vmatprep.subr.mxu0 0.0
    %6707 = vmatpush1.msra.mxu0 0.0
    %6708 = vmatprep.subr.mxu0 0.0
    %6709 = vmatpush1.msra.mxu0 0.0
    %6710 = vmatprep.subr.mxu0 0.0
    %6711 = vmatpush1.msra.mxu0 0.0
    %6712 = vmatprep.subr.mxu0 0.0
    %6713 = vmatpush1.msra.mxu0 0.0
    %6714 = vmatprep.subr.mxu0 0.0
    %6715 = vmatpush1.msra.mxu0 0.0
    %6716 = vmatprep.subr.mxu0 0.0
    %6717 = vmatpush1.msra.mxu0 0.0
    %6718 = vmatprep.subr.mxu0 0.0
    %6719 = vmatpush1.msra.mxu0 0.0
    %6720 = vmatprep.subr.mxu0 0.0
    %6721 = vmatpush1.msra.mxu0 0.0
    %6722 = vmatprep.mubr.f32.mxu0 0.0
    %6723 = vmatmul.mubr.f32.gmra.mrb[0].mxu0 %v6653
    %v6724 = vpop.f32.mrb[0].mxu0
    %v6725 = vadd.f32 0.0, %v6724
    %v6726 = vpop.f32.mrb[0].mxu0
    %6727 = vdwg.mxu0
    %v6728 = vadd.f32 %v6642, %v6725
    %v6729 = vld [vmem:[%s11 + $0xe1] sm:$0xff]
    %v6730 = vld [vmem:[%s11 + $0xe9] sm:$0xff]
    %v6731 = vld [vmem:[%s11 + $0xf1] sm:$0xff]
    %v6732 = vld [vmem:[%s11 + $0xf9] sm:$0x1]
    %v6733 = vrot.slane %v6643, 1
    %v6734 = vsel %vm218, %v6644, %v6733
    %v6735 = vsel %vm70, %v6734, 0
    %v6738 = vsel %vm3702, %v6732, 0
    %6740 = vmatprep.subr.mxu0 0.0
    %6741 = vmatpush1.msra.mxu0 %v6729
    %6742 = vmatprep.subr.mxu0 0.0
    %6743 = vmatpush1.msra.mxu0 %v6730
    %6744 = vmatprep.subr.mxu0 0.0
    %6745 = vmatpush1.msra.mxu0 %v6731
    %6746 = vmatprep.subr.mxu0 0.0
    %6747 = vmatpush1.msra.mxu0 %v6738
    %6748 = vmatprep.subr.mxu0 0.0
    %6749 = vmatpush1.msra.mxu0 0.0
    %6750 = vmatprep.subr.mxu0 0.0
    %6751 = vmatpush1.msra.mxu0 0.0
    %6752 = vmatprep.subr.mxu0 0.0
    %6753 = vmatpush1.msra.mxu0 0.0
    %6754 = vmatprep.subr.mxu0 0.0
    %6755 = vmatpush1.msra.mxu0 0.0
    %6756 = vmatprep.subr.mxu0 0.0
    %6757 = vmatpush1.msra.mxu0 0.0
    %6758 = vmatprep.subr.mxu0 0.0
    %6759 = vmatpush1.msra.mxu0 0.0
    %6760 = vmatprep.subr.mxu0 0.0
    %6761 = vmatpush1.msra.mxu0 0.0
    %6762 = vmatprep.subr.mxu0 0.0
    %6763 = vmatpush1.msra.mxu0 0.0
    %6764 = vmatprep.subr.mxu0 0.0
    %6765 = vmatpush1.msra.mxu0 0.0
    %6766 = vmatprep.subr.mxu0 0.0
    %6767 = vmatpush1.msra.mxu0 0.0
    %6768 = vmatprep.subr.mxu0 0.0
    %6769 = vmatpush1.msra.mxu0 0.0
    %6770 = vmatprep.subr.mxu0 0.0
    %6771 = vmatpush1.msra.mxu0 0.0
    %6772 = vmatprep.subr.mxu0 0.0
    %6773 = vmatpush1.msra.mxu0 0.0
    %6774 = vmatprep.subr.mxu0 0.0
    %6775 = vmatpush1.msra.mxu0 0.0
    %6776 = vmatprep.subr.mxu0 0.0
    %6777 = vmatpush1.msra.mxu0 0.0
    %6778 = vmatprep.subr.mxu0 0.0
    %6779 = vmatpush1.msra.mxu0 0.0
    %6780 = vmatprep.subr.mxu0 0.0
    %6781 = vmatpush1.msra.mxu0 0.0
    %6782 = vmatprep.subr.mxu0 0.0
    %6783 = vmatpush1.msra.mxu0 0.0
    %6784 = vmatprep.subr.mxu0 0.0
    %6785 = vmatpush1.msra.mxu0 0.0
    %6786 = vmatprep.subr.mxu0 0.0
    %6787 = vmatpush1.msra.mxu0 0.0
    %6788 = vmatprep.subr.mxu0 0.0
    %6789 = vmatpush1.msra.mxu0 0.0
    %6790 = vmatprep.subr.mxu0 0.0
    %6791 = vmatpush1.msra.mxu0 0.0
    %6792 = vmatprep.subr.mxu0 0.0
    %6793 = vmatpush1.msra.mxu0 0.0
    %6794 = vmatprep.subr.mxu0 0.0
    %6795 = vmatpush1.msra.mxu0 0.0
    %6796 = vmatprep.subr.mxu0 0.0
    %6797 = vmatpush1.msra.mxu0 0.0
    %6798 = vmatprep.subr.mxu0 0.0
    %6799 = vmatpush1.msra.mxu0 0.0
    %6800 = vmatprep.subr.mxu0 0.0
    %6801 = vmatpush1.msra.mxu0 0.0
    %6802 = vmatprep.subr.mxu0 0.0
    %6803 = vmatpush1.msra.mxu0 0.0
    %6804 = vmatprep.mubr.f32.mxu0 0.0
    %6805 = vmatmul.mubr.f32.gmra.mrb[0].mxu0 %v6735
    %v6806 = vpop.f32.mrb[0].mxu0
    %v6807 = vadd.f32 0.0, %v6806
    %v6808 = vpop.f32.mrb[0].mxu0
    %6809 = vdwg.mxu0
    %v6810 = vadd.f32 %v6728, %v6807
    %v6811 = vld [vmem:[%s11 + $0xfa] sm:$0xff]
    %v6812 = vld [vmem:[%s11 + $0x102] sm:$0xff]
    %v6813 = vld [vmem:[%s11 + $0x10a] sm:$0xff]
    %v6814 = vld [vmem:[%s11 + $0x112] sm:$0x1]
    %v6815 = vrot.slane %v6643, 2
    %v6816 = vrot.slane %v6644, 1
    %v6817 = vsel %vm218, %v6816, %v6815
    %v6818 = vsel %vm70, %v6817, 0
    %v6821 = vsel %vm3702, %v6814, 0
    %6823 = vmatprep.subr.mxu0 0.0
    %6824 = vmatpush1.msra.mxu0 %v6811
    %6825 = vmatprep.subr.mxu0 0.0
    %6826 = vmatpush1.msra.mxu0 %v6812
    %6827 = vmatprep.subr.mxu0 0.0
    %6828 = vmatpush1.msra.mxu0 %v6813
    %6829 = vmatprep.subr.mxu0 0.0
    %6830 = vmatpush1.msra.mxu0 %v6821
    %6831 = vmatprep.subr.mxu0 0.0
    %6832 = vmatpush1.msra.mxu0 0.0
    %6833 = vmatprep.subr.mxu0 0.0
    %6834 = vmatpush1.msra.mxu0 0.0
    %6835 = vmatprep.subr.mxu0 0.0
    %6836 = vmatpush1.msra.mxu0 0.0
    %6837 = vmatprep.subr.mxu0 0.0
    %6838 = vmatpush1.msra.mxu0 0.0
    %6839 = vmatprep.subr.mxu0 0.0
    %6840 = vmatpush1.msra.mxu0 0.0
    %6841 = vmatprep.subr.mxu0 0.0
    %6842 = vmatpush1.msra.mxu0 0.0
    %6843 = vmatprep.subr.mxu0 0.0
    %6844 = vmatpush1.msra.mxu0 0.0
    %6845 = vmatprep.subr.mxu0 0.0
    %6846 = vmatpush1.msra.mxu0 0.0
    %6847 = vmatprep.subr.mxu0 0.0
    %6848 = vmatpush1.msra.mxu0 0.0
    %6849 = vmatprep.subr.mxu0 0.0
    %6850 = vmatpush1.msra.mxu0 0.0
    %6851 = vmatprep.subr.mxu0 0.0
    %6852 = vmatpush1.msra.mxu0 0.0
    %6853 = vmatprep.subr.mxu0 0.0
    %6854 = vmatpush1.msra.mxu0 0.0
    %6855 = vmatprep.subr.mxu0 0.0
    %6856 = vmatpush1.msra.mxu0 0.0
    %6857 = vmatprep.subr.mxu0 0.0
    %6858 = vmatpush1.msra.mxu0 0.0
    %6859 = vmatprep.subr.mxu0 0.0
    %6860 = vmatpush1.msra.mxu0 0.0
    %6861 = vmatprep.subr.mxu0 0.0
    %6862 = vmatpush1.msra.mxu0 0.0
    %6863 = vmatprep.subr.mxu0 0.0
    %6864 = vmatpush1.msra.mxu0 0.0
    %6865 = vmatprep.subr.mxu0 0.0
    %6866 = vmatpush1.msra.mxu0 0.0
    %6867 = vmatprep.subr.mxu0 0.0
    %6868 = vmatpush1.msra.mxu0 0.0
    %6869 = vmatprep.subr.mxu0 0.0
    %6870 = vmatpush1.msra.mxu0 0.0
    %6871 = vmatprep.subr.mxu0 0.0
    %6872 = vmatpush1.msra.mxu0 0.0
    %6873 = vmatprep.subr.mxu0 0.0
    %6874 = vmatpush1.msra.mxu0 0.0
    %6875 = vmatprep.subr.mxu0 0.0
    %6876 = vmatpush1.msra.mxu0 0.0
    %6877 = vmatprep.subr.mxu0 0.0
    %6878 = vmatpush1.msra.mxu0 0.0
    %6879 = vmatprep.subr.mxu0 0.0
    %6880 = vmatpush1.msra.mxu0 0.0
    %6881 = vmatprep.subr.mxu0 0.0
    %6882 = vmatpush1.msra.mxu0 0.0
    %6883 = vmatprep.subr.mxu0 0.0
    %6884 = vmatpush1.msra.mxu0 0.0
    %6885 = vmatprep.subr.mxu0 0.0
    %6886 = vmatpush1.msra.mxu0 0.0
    %6887 = vmatprep.mubr.f32.mxu0 0.0
    %6888 = vmatmul.mubr.f32.gmra.mrb[0].mxu0 %v6818
    %v6889 = vpop.f32.mrb[0].mxu0
    %v6890 = vadd.f32 0.0, %v6889
    %v6891 = vpop.f32.mrb[0].mxu0
    %6892 = vdwg.mxu0
    %v6893 = vadd.f32 %v6810, %v6890
    %v6894 = vld [vmem:[%s11 + $0x113] sm:$0xff]
    %v6895 = vld [vmem:[%s11 + $0x11b] sm:$0xff]
    %v6896 = vld [vmem:[%s11 + $0x123] sm:$0xff]
    %v6897 = vld [vmem:[%s11 + $0x12b] sm:$0x1]
    %v6898 = vrot.slane %v6643, 3
    %v6899 = vrot.slane %v6644, 2
    %v6900 = vsel %vm218, %v6899, %v6898
    %v6901 = vsel %vm70, %v6900, 0
    %v6904 = vsel %vm3702, %v6897, 0
    %6906 = vmatprep.subr.mxu0 0.0
    %6907 = vmatpush1.msra.mxu0 %v6894
    %6908 = vmatprep.subr.mxu0 0.0
    %6909 = vmatpush1.msra.mxu0 %v6895
    %6910 = vmatprep.subr.mxu0 0.0
    %6911 = vmatpush1.msra.mxu0 %v6896
    %6912 = vmatprep.subr.mxu0 0.0
    %6913 = vmatpush1.msra.mxu0 %v6904
    %6914 = vmatprep.subr.mxu0 0.0
    %6915 = vmatpush1.msra.mxu0 0.0
    %6916 = vmatprep.subr.mxu0 0.0
    %6917 = vmatpush1.msra.mxu0 0.0
    %6918 = vmatprep.subr.mxu0 0.0
    %6919 = vmatpush1.msra.mxu0 0.0
    %6920 = vmatprep.subr.mxu0 0.0
    %6921 = vmatpush1.msra.mxu0 0.0
    %6922 = vmatprep.subr.mxu0 0.0
    %6923 = vmatpush1.msra.mxu0 0.0
    %6924 = vmatprep.subr.mxu0 0.0
    %6925 = vmatpush1.msra.mxu0 0.0
    %6926 = vmatprep.subr.mxu0 0.0
    %6927 = vmatpush1.msra.mxu0 0.0
    %6928 = vmatprep.subr.mxu0 0.0
    %6929 = vmatpush1.msra.mxu0 0.0
    %6930 = vmatprep.subr.mxu0 0.0
    %6931 = vmatpush1.msra.mxu0 0.0
    %6932 = vmatprep.subr.mxu0 0.0
    %6933 = vmatpush1.msra.mxu0 0.0
    %6934 = vmatprep.subr.mxu0 0.0
    %6935 = vmatpush1.msra.mxu0 0.0
    %6936 = vmatprep.subr.mxu0 0.0
    %6937 = vmatpush1.msra.mxu0 0.0
    %6938 = vmatprep.subr.mxu0 0.0
    %6939 = vmatpush1.msra.mxu0 0.0
    %6940 = vmatprep.subr.mxu0 0.0
    %6941 = vmatpush1.msra.mxu0 0.0
    %6942 = vmatprep.subr.mxu0 0.0
    %6943 = vmatpush1.msra.mxu0 0.0
    %6944 = vmatprep.subr.mxu0 0.0
    %6945 = vmatpush1.msra.mxu0 0.0
    %6946 = vmatprep.subr.mxu0 0.0
    %6947 = vmatpush1.msra.mxu0 0.0
    %6948 = vmatprep.subr.mxu0 0.0
    %6949 = vmatpush1.msra.mxu0 0.0
    %6950 = vmatprep.subr.mxu0 0.0
    %6951 = vmatpush1.msra.mxu0 0.0
    %6952 = vmatprep.subr.mxu0 0.0
    %6953 = vmatpush1.msra.mxu0 0.0
    %6954 = vmatprep.subr.mxu0 0.0
    %6955 = vmatpush1.msra.mxu0 0.0
    %6956 = vmatprep.subr.mxu0 0.0
    %6957 = vmatpush1.msra.mxu0 0.0
    %6958 = vmatprep.subr.mxu0 0.0
    %6959 = vmatpush1.msra.mxu0 0.0
    %6960 = vmatprep.subr.mxu0 0.0
    %6961 = vmatpush1.msra.mxu0 0.0
    %6962 = vmatprep.subr.mxu0 0.0
    %6963 = vmatpush1.msra.mxu0 0.0
    %6964 = vmatprep.subr.mxu0 0.0
    %6965 = vmatpush1.msra.mxu0 0.0
    %6966 = vmatprep.subr.mxu0 0.0
    %6967 = vmatpush1.msra.mxu0 0.0
    %6968 = vmatprep.subr.mxu0 0.0
    %6969 = vmatpush1.msra.mxu0 0.0
    %6970 = vmatprep.mubr.f32.mxu0 0.0
    %6971 = vmatmul.mubr.f32.gmra.mrb[0].mxu0 %v6901
    %v6972 = vpop.f32.mrb[0].mxu0
    %v6973 = vadd.f32 0.0, %v6972
    %v6974 = vpop.f32.mrb[0].mxu0
    %6975 = vdwg.mxu0
    %v6976 = vadd.f32 %v6893, %v6973
    %v6977 = vld [vmem:[%s11 + $0x12c] sm:$0xff]
    %v6978 = vld [vmem:[%s11 + $0x134] sm:$0xff]
    %v6979 = vld [vmem:[%s11 + $0x13c] sm:$0xff]
    %v6980 = vld [vmem:[%s11 + $0x144] sm:$0x1]
    %v6981 = vrot.slane %v6643, 4
    %v6982 = vrot.slane %v6644, 3
    %v6983 = vsel %vm218, %v6982, %v6981
    %v6984 = vsel %vm70, %v6983, 0
    %v6987 = vsel %vm3702, %v6980, 0
    %6989 = vmatprep.subr.mxu0 0.0
    %6990 = vmatpush1.msra.mxu0 %v6977
    %6991 = vmatprep.subr.mxu0 0.0
    %6992 = vmatpush1.msra.mxu0 %v6978
    %6993 = vmatprep.subr.mxu0 0.0
    %6994 = vmatpush1.msra.mxu0 %v6979
    %6995 = vmatprep.subr.mxu0 0.0
    %6996 = vmatpush1.msra.mxu0 %v6987
    %6997 = vmatprep.subr.mxu0 0.0
    %6998 = vmatpush1.msra.mxu0 0.0
    %6999 = vmatprep.subr.mxu0 0.0
    %7000 = vmatpush1.msra.mxu0 0.0
    %7001 = vmatprep.subr.mxu0 0.0
    %7002 = vmatpush1.msra.mxu0 0.0
    %7003 = vmatprep.subr.mxu0 0.0
    %7004 = vmatpush1.msra.mxu0 0.0
    %7005 = vmatprep.subr.mxu0 0.0
    %7006 = vmatpush1.msra.mxu0 0.0
    %7007 = vmatprep.subr.mxu0 0.0
    %7008 = vmatpush1.msra.mxu0 0.0
    %7009 = vmatprep.subr.mxu0 0.0
    %7010 = vmatpush1.msra.mxu0 0.0
    %7011 = vmatprep.subr.mxu0 0.0
    %7012 = vmatpush1.msra.mxu0 0.0
    %7013 = vmatprep.subr.mxu0 0.0
    %7014 = vmatpush1.msra.mxu0 0.0
    %7015 = vmatprep.subr.mxu0 0.0
    %7016 = vmatpush1.msra.mxu0 0.0
    %7017 = vmatprep.subr.mxu0 0.0
    %7018 = vmatpush1.msra.mxu0 0.0
    %7019 = vmatprep.subr.mxu0 0.0
    %7020 = vmatpush1.msra.mxu0 0.0
    %7021 = vmatprep.subr.mxu0 0.0
    %7022 = vmatpush1.msra.mxu0 0.0
    %7023 = vmatprep.subr.mxu0 0.0
    %7024 = vmatpush1.msra.mxu0 0.0
    %7025 = vmatprep.subr.mxu0 0.0
    %7026 = vmatpush1.msra.mxu0 0.0
    %7027 = vmatprep.subr.mxu0 0.0
    %7028 = vmatpush1.msra.mxu0 0.0
    %7029 = vmatprep.subr.mxu0 0.0
    %7030 = vmatpush1.msra.mxu0 0.0
    %7031 = vmatprep.subr.mxu0 0.0
    %7032 = vmatpush1.msra.mxu0 0.0
    %7033 = vmatprep.subr.mxu0 0.0
    %7034 = vmatpush1.msra.mxu0 0.0
    %7035 = vmatprep.subr.mxu0 0.0
    %7036 = vmatpush1.msra.mxu0 0.0
    %7037 = vmatprep.subr.mxu0 0.0
    %7038 = vmatpush1.msra.mxu0 0.0
    %7039 = vmatprep.subr.mxu0 0.0
    %7040 = vmatpush1.msra.mxu0 0.0
    %7041 = vmatprep.subr.mxu0 0.0
    %7042 = vmatpush1.msra.mxu0 0.0
    %7043 = vmatprep.subr.mxu0 0.0
    %7044 = vmatpush1.msra.mxu0 0.0
    %7045 = vmatprep.subr.mxu0 0.0
    %7046 = vmatpush1.msra.mxu0 0.0
    %7047 = vmatprep.subr.mxu0 0.0
    %7048 = vmatpush1.msra.mxu0 0.0
    %7049 = vmatprep.subr.mxu0 0.0
    %7050 = vmatpush1.msra.mxu0 0.0
    %7051 = vmatprep.subr.mxu0 0.0
    %7052 = vmatpush1.msra.mxu0 0.0
    %7053 = vmatprep.mubr.f32.mxu0 0.0
    %7054 = vmatmul.mubr.f32.gmra.mrb[0].mxu0 %v6984
    %v7055 = vpop.f32.mrb[0].mxu0
    %v7056 = vadd.f32 0.0, %v7055
    %v7057 = vpop.f32.mrb[0].mxu0
    %7058 = vdwg.mxu0
    %v7059 = vadd.f32 %v6976, %v7056
    %v7060 = vld [vmem:[%s11 + $0x145] sm:$0xff]
    %v7061 = vld [vmem:[%s11 + $0x14d] sm:$0xff]
    %v7062 = vld [vmem:[%s11 + $0x155] sm:$0xff]
    %v7063 = vld [vmem:[%s11 + $0x15d] sm:$0x1]
    %v7064 = vrot.slane %v6643, 5
    %v7065 = vrot.slane %v6644, 4
    %v7066 = vsel %vm218, %v7065, %v7064
    %v7067 = vsel %vm70, %v7066, 0
    %v7070 = vsel %vm3702, %v7063, 0
    %7072 = vmatprep.subr.mxu0 0.0
    %7073 = vmatpush1.msra.mxu0 %v7060
    %7074 = vmatprep.subr.mxu0 0.0
    %7075 = vmatpush1.msra.mxu0 %v7061
    %7076 = vmatprep.subr.mxu0 0.0
    %7077 = vmatpush1.msra.mxu0 %v7062
    %7078 = vmatprep.subr.mxu0 0.0
    %7079 = vmatpush1.msra.mxu0 %v7070
    %7080 = vmatprep.subr.mxu0 0.0
    %7081 = vmatpush1.msra.mxu0 0.0
    %7082 = vmatprep.subr.mxu0 0.0
    %7083 = vmatpush1.msra.mxu0 0.0
    %7084 = vmatprep.subr.mxu0 0.0
    %7085 = vmatpush1.msra.mxu0 0.0
    %7086 = vmatprep.subr.mxu0 0.0
    %7087 = vmatpush1.msra.mxu0 0.0
    %7088 = vmatprep.subr.mxu0 0.0
    %7089 = vmatpush1.msra.mxu0 0.0
    %7090 = vmatprep.subr.mxu0 0.0
    %7091 = vmatpush1.msra.mxu0 0.0
    %7092 = vmatprep.subr.mxu0 0.0
    %7093 = vmatpush1.msra.mxu0 0.0
    %7094 = vmatprep.subr.mxu0 0.0
    %7095 = vmatpush1.msra.mxu0 0.0
    %7096 = vmatprep.subr.mxu0 0.0
    %7097 = vmatpush1.msra.mxu0 0.0
    %7098 = vmatprep.subr.mxu0 0.0
    %7099 = vmatpush1.msra.mxu0 0.0
    %7100 = vmatprep.subr.mxu0 0.0
    %7101 = vmatpush1.msra.mxu0 0.0
    %7102 = vmatprep.subr.mxu0 0.0
    %7103 = vmatpush1.msra.mxu0 0.0
    %7104 = vmatprep.subr.mxu0 0.0
    %7105 = vmatpush1.msra.mxu0 0.0
    %7106 = vmatprep.subr.mxu0 0.0
    %7107 = vmatpush1.msra.mxu0 0.0
    %7108 = vmatprep.subr.mxu0 0.0
    %7109 = vmatpush1.msra.mxu0 0.0
    %7110 = vmatprep.subr.mxu0 0.0
    %7111 = vmatpush1.msra.mxu0 0.0
    %7112 = vmatprep.subr.mxu0 0.0
    %7113 = vmatpush1.msra.mxu0 0.0
    %7114 = vmatprep.subr.mxu0 0.0
    %7115 = vmatpush1.msra.mxu0 0.0
    %7116 = vmatprep.subr.mxu0 0.0
    %7117 = vmatpush1.msra.mxu0 0.0
    %7118 = vmatprep.subr.mxu0 0.0
    %7119 = vmatpush1.msra.mxu0 0.0
    %7120 = vmatprep.subr.mxu0 0.0
    %7121 = vmatpush1.msra.mxu0 0.0
    %7122 = vmatprep.subr.mxu0 0.0
    %7123 = vmatpush1.msra.mxu0 0.0
    %7124 = vmatprep.subr.mxu0 0.0
    %7125 = vmatpush1.msra.mxu0 0.0
    %7126 = vmatprep.subr.mxu0 0.0
    %7127 = vmatpush1.msra.mxu0 0.0
    %7128 = vmatprep.subr.mxu0 0.0
    %7129 = vmatpush1.msra.mxu0 0.0
    %7130 = vmatprep.subr.mxu0 0.0
    %7131 = vmatpush1.msra.mxu0 0.0
    %7132 = vmatprep.subr.mxu0 0.0
    %7133 = vmatpush1.msra.mxu0 0.0
    %7134 = vmatprep.subr.mxu0 0.0
    %7135 = vmatpush1.msra.mxu0 0.0
    %7136 = vmatprep.mubr.f32.mxu0 0.0
    %7137 = vmatmul.mubr.f32.gmra.mrb[0].mxu0 %v7067
    %v7138 = vpop.f32.mrb[0].mxu0
    %v7139 = vadd.f32 0.0, %v7138
    %v7140 = vpop.f32.mrb[0].mxu0
    %7141 = vdwg.mxu0
    %v7142 = vadd.f32 %v7059, %v7139
    %v7143 = vld [vmem:[%s11 + $0x15e] sm:$0xff]
    %v7144 = vld [vmem:[%s11 + $0x166] sm:$0xff]
    %v7145 = vld [vmem:[%s11 + $0x16e] sm:$0xff]
    %v7146 = vld [vmem:[%s11 + $0x176] sm:$0x1]
    %v7147 = vrot.slane %v6643, 6
    %v7148 = vrot.slane %v6644, 5
    %v7149 = vsel %vm218, %v7148, %v7147
    %v7150 = vsel %vm70, %v7149, 0
    %v7153 = vsel %vm3702, %v7146, 0
    %7155 = vmatprep.subr.mxu0 0.0
    %7156 = vmatpush1.msra.mxu0 %v7143
    %7157 = vmatprep.subr.mxu0 0.0
    %7158 = vmatpush1.msra.mxu0 %v7144
    %7159 = vmatprep.subr.mxu0 0.0
    %7160 = vmatpush1.msra.mxu0 %v7145
    %7161 = vmatprep.subr.mxu0 0.0
    %7162 = vmatpush1.msra.mxu0 %v7153
    %7163 = vmatprep.subr.mxu0 0.0
    %7164 = vmatpush1.msra.mxu0 0.0
    %7165 = vmatprep.subr.mxu0 0.0
    %7166 = vmatpush1.msra.mxu0 0.0
    %7167 = vmatprep.subr.mxu0 0.0
    %7168 = vmatpush1.msra.mxu0 0.0
    %7169 = vmatprep.subr.mxu0 0.0
    %7170 = vmatpush1.msra.mxu0 0.0
    %7171 = vmatprep.subr.mxu0 0.0
    %7172 = vmatpush1.msra.mxu0 0.0
    %7173 = vmatprep.subr.mxu0 0.0
    %7174 = vmatpush1.msra.mxu0 0.0
    %7175 = vmatprep.subr.mxu0 0.0
    %7176 = vmatpush1.msra.mxu0 0.0
    %7177 = vmatprep.subr.mxu0 0.0
    %7178 = vmatpush1.msra.mxu0 0.0
    %7179 = vmatprep.subr.mxu0 0.0
    %7180 = vmatpush1.msra.mxu0 0.0
    %7181 = vmatprep.subr.mxu0 0.0
    %7182 = vmatpush1.msra.mxu0 0.0
    %7183 = vmatprep.subr.mxu0 0.0
    %7184 = vmatpush1.msra.mxu0 0.0
    %7185 = vmatprep.subr.mxu0 0.0
    %7186 = vmatpush1.msra.mxu0 0.0
    %7187 = vmatprep.subr.mxu0 0.0
    %7188 = vmatpush1.msra.mxu0 0.0
    %7189 = vmatprep.subr.mxu0 0.0
    %7190 = vmatpush1.msra.mxu0 0.0
    %7191 = vmatprep.subr.mxu0 0.0
    %7192 = vmatpush1.msra.mxu0 0.0
    %7193 = vmatprep.subr.mxu0 0.0
    %7194 = vmatpush1.msra.mxu0 0.0
    %7195 = vmatprep.subr.mxu0 0.0
    %7196 = vmatpush1.msra.mxu0 0.0
    %7197 = vmatprep.subr.mxu0 0.0
    %7198 = vmatpush1.msra.mxu0 0.0
    %7199 = vmatprep.subr.mxu0 0.0
    %7200 = vmatpush1.msra.mxu0 0.0
    %7201 = vmatprep.subr.mxu0 0.0
    %7202 = vmatpush1.msra.mxu0 0.0
    %7203 = vmatprep.subr.mxu0 0.0
    %7204 = vmatpush1.msra.mxu0 0.0
    %7205 = vmatprep.subr.mxu0 0.0
    %7206 = vmatpush1.msra.mxu0 0.0
    %7207 = vmatprep.subr.mxu0 0.0
    %7208 = vmatpush1.msra.mxu0 0.0
    %7209 = vmatprep.subr.mxu0 0.0
    %7210 = vmatpush1.msra.mxu0 0.0
    %7211 = vmatprep.subr.mxu0 0.0
    %7212 = vmatpush1.msra.mxu0 0.0
    %7213 = vmatprep.subr.mxu0 0.0
    %7214 = vmatpush1.msra.mxu0 0.0
    %7215 = vmatprep.subr.mxu0 0.0
    %7216 = vmatpush1.msra.mxu0 0.0
    %7217 = vmatprep.subr.mxu0 0.0
    %7218 = vmatpush1.msra.mxu0 0.0
    %7219 = vmatprep.mubr.f32.mxu0 0.0
    %7220 = vmatmul.mubr.f32.gmra.mrb[0].mxu0 %v7150
    %v7221 = vpop.f32.mrb[0].mxu0
    %v7222 = vadd.f32 0.0, %v7221
    %v7223 = vpop.f32.mrb[0].mxu0
    %7224 = vdwg.mxu0
    %v7225 = vadd.f32 %v7142, %v7222
    %v7226 = vld [vmem:[%s12] sm:$0x1]
    %v7228 = vlaneseq
    %v7229 = vshrl.u32 %v7228, 7
    %v7230 = vsub.s32 0, %v7229
    %v7231 = vrot.slane %v7226, %v7230
    %v7233 = vadd.f32 %v7225, %v7231
    %vm7234 = vcmp.gt.f32.partialorder %v7233, 0.0
    %v7235 = vmin.f32 %v7233, 0.0
    %v7236 = vmul.f32 %v7235, 1.442695
    %v7237 = vpow.pop %v7236
    %v7238 = vsub.f32 %v7237, 1.0
    %v7239 = vsel %vm7234, %v7233, %v7238
    %v7240 = vld [vmem:[%s13] sm:$0xff]
    %v7241 = vld [vmem:[%s13 + $0x8] sm:$0xff]
    %v7242 = vld [vmem:[%s13 + $0x10] sm:$0xff]
    %v7243 = vld [vmem:[%s13 + $0x18] sm:$0xff]
    %v7244 = vld [vmem:[%s13 + $0x20] sm:$0xff]
    %v7245 = vld [vmem:[%s13 + $0x28] sm:$0xff]
    %v7246 = vld [vmem:[%s13 + $0x30] sm:$0xff]
    %v7247 = vld [vmem:[%s13 + $0x38] sm:$0xff]
    %v7248 = vld [vmem:[%s13 + $0x40] sm:$0xff]
    %v7249 = vld [vmem:[%s13 + $0x48] sm:$0xff]
    %v7250 = vld [vmem:[%s13 + $0x50] sm:$0xff]
    %v7251 = vld [vmem:[%s13 + $0x58] sm:$0xff]
    %v7252 = vld [vmem:[%s13 + $0x60] sm:$0xf]
    %v7253 = vld [vmem:[%s14] sm:$0x1]
    %v7255 = vlaneseq
    %v7256 = vshrl.u32 %v7255, 7
    %v7257 = vsub.s32 0, %v7256
    %v7258 = vrot.slane %v7253, %v7257
    %vm7260 = vcmask 818176
    %v7262 = vsel %vm7260, %v7239, 0
    %v7265 = vsel %vm3598, %v7252, 0
    %7267 = vmatprep.subr.mxu0 0.0
    %7268 = vmatpush1.msra.mxu0 %v7240
    %7269 = vmatprep.subr.mxu0 0.0
    %7270 = vmatpush1.msra.mxu0 %v7241
    %7271 = vmatprep.subr.mxu0 0.0
    %7272 = vmatpush1.msra.mxu0 %v7242
    %7273 = vmatprep.subr.mxu0 0.0
    %7274 = vmatpush1.msra.mxu0 %v7243
    %7275 = vmatprep.subr.mxu0 0.0
    %7276 = vmatpush1.msra.mxu0 %v7244
    %7277 = vmatprep.subr.mxu0 0.0
    %7278 = vmatpush1.msra.mxu0 %v7245
    %7279 = vmatprep.subr.mxu0 0.0
    %7280 = vmatpush1.msra.mxu0 %v7246
    %7281 = vmatprep.subr.mxu0 0.0
    %7282 = vmatpush1.msra.mxu0 %v7247
    %7283 = vmatprep.subr.mxu0 0.0
    %7284 = vmatpush1.msra.mxu0 %v7248
    %7285 = vmatprep.subr.mxu0 0.0
    %7286 = vmatpush1.msra.mxu0 %v7249
    %7287 = vmatprep.subr.mxu0 0.0
    %7288 = vmatpush1.msra.mxu0 %v7250
    %7289 = vmatprep.subr.mxu0 0.0
    %7290 = vmatpush1.msra.mxu0 %v7251
    %7291 = vmatprep.subr.mxu0 0.0
    %7292 = vmatpush1.msra.mxu0 %v7265
    %7293 = vmatprep.subr.mxu0 0.0
    %7294 = vmatpush1.msra.mxu0 0.0
    %7295 = vmatprep.subr.mxu0 0.0
    %7296 = vmatpush1.msra.mxu0 0.0
    %7297 = vmatprep.subr.mxu0 0.0
    %7298 = vmatpush1.msra.mxu0 0.0
    %7299 = vmatprep.subr.mxu0 0.0
    %7300 = vmatpush1.msra.mxu0 0.0
    %7301 = vmatprep.subr.mxu0 0.0
    %7302 = vmatpush1.msra.mxu0 0.0
    %7303 = vmatprep.subr.mxu0 0.0
    %7304 = vmatpush1.msra.mxu0 0.0
    %7305 = vmatprep.subr.mxu0 0.0
    %7306 = vmatpush1.msra.mxu0 0.0
    %7307 = vmatprep.subr.mxu0 0.0
    %7308 = vmatpush1.msra.mxu0 0.0
    %7309 = vmatprep.subr.mxu0 0.0
    %7310 = vmatpush1.msra.mxu0 0.0
    %7311 = vmatprep.subr.mxu0 0.0
    %7312 = vmatpush1.msra.mxu0 0.0
    %7313 = vmatprep.subr.mxu0 0.0
    %7314 = vmatpush1.msra.mxu0 0.0
    %7315 = vmatprep.subr.mxu0 0.0
    %7316 = vmatpush1.msra.mxu0 0.0
    %7317 = vmatprep.subr.mxu0 0.0
    %7318 = vmatpush1.msra.mxu0 0.0
    %7319 = vmatprep.subr.mxu0 0.0
    %7320 = vmatpush1.msra.mxu0 0.0
    %7321 = vmatprep.subr.mxu0 0.0
    %7322 = vmatpush1.msra.mxu0 0.0
    %7323 = vmatprep.subr.mxu0 0.0
    %7324 = vmatpush1.msra.mxu0 0.0
    %7325 = vmatprep.subr.mxu0 0.0
    %7326 = vmatpush1.msra.mxu0 0.0
    %7327 = vmatprep.subr.mxu0 0.0
    %7328 = vmatpush1.msra.mxu0 0.0
    %7329 = vmatprep.subr.mxu0 0.0
    %7330 = vmatpush1.msra.mxu0 0.0
    %7331 = vmatprep.mubr.f32.mxu0 0.0
    %7332 = vmatmul.mubr.f32.gmra.mrb[0].mxu0 %v7262
    %v7333 = vpop.f32.mrb[0].mxu0
    %v7334 = vadd.f32 %v7258, %v7333
    %v7335 = vpop.f32.mrb[0].mxu0
    %7336 = vdwg.mxu0
    %vm7337 = vcmp.gt.f32.partialorder %v7334, 0.0
    %v7338 = vmin.f32 %v7334, 0.0
    %v7339 = vmul.f32 %v7338, 1.442695
    %v7340 = vpow.pop %v7339
    %v7341 = vsub.f32 %v7340, 1.0
    %v7342 = vsel %vm7337, %v7334, %v7341
    %v7343 = vld [vmem:[%s15] sm:$0xff]
    %v7344 = vld [vmem:[%s15 + $0x8] sm:$0x3]
    %v7345 = vld [vmem:[%s16] sm:$0x1]
    %v7347 = vlaneseq
    %v7348 = vshrl.u32 %v7347, 7
    %v7349 = vsub.s32 0, %v7348
    %v7350 = vrot.slane %v7345, %v7349
    %vm7352 = vcmask 80896
    %v7354 = vsel %vm7352, %v7342, 0
    %v7357 = vsel %vm3667, %v7344, 0
    %7359 = vmatprep.subr.mxu0 0.0
    %7360 = vmatpush1.msra.mxu0 %v7343
    %7361 = vmatprep.subr.mxu0 0.0
    %7362 = vmatpush1.msra.mxu0 %v7357
    %7363 = vmatprep.subr.mxu0 0.0
    %7364 = vmatpush1.msra.mxu0 0.0
    %7365 = vmatprep.subr.mxu0 0.0
    %7366 = vmatpush1.msra.mxu0 0.0
    %7367 = vmatprep.subr.mxu0 0.0
    %7368 = vmatpush1.msra.mxu0 0.0
    %7369 = vmatprep.subr.mxu0 0.0
    %7370 = vmatpush1.msra.mxu0 0.0
    %7371 = vmatprep.subr.mxu0 0.0
    %7372 = vmatpush1.msra.mxu0 0.0
    %7373 = vmatprep.subr.mxu0 0.0
    %7374 = vmatpush1.msra.mxu0 0.0
    %7375 = vmatprep.subr.mxu0 0.0
    %7376 = vmatpush1.msra.mxu0 0.0
    %7377 = vmatprep.subr.mxu0 0.0
    %7378 = vmatpush1.msra.mxu0 0.0
    %7379 = vmatprep.subr.mxu0 0.0
    %7380 = vmatpush1.msra.mxu0 0.0
    %7381 = vmatprep.subr.mxu0 0.0
    %7382 = vmatpush1.msra.mxu0 0.0
    %7383 = vmatprep.subr.mxu0 0.0
    %7384 = vmatpush1.msra.mxu0 0.0
    %7385 = vmatprep.subr.mxu0 0.0
    %7386 = vmatpush1.msra.mxu0 0.0
    %7387 = vmatprep.subr.mxu0 0.0
    %7388 = vmatpush1.msra.mxu0 0.0
    %7389 = vmatprep.subr.mxu0 0.0
    %7390 = vmatpush1.msra.mxu0 0.0
    %7391 = vmatprep.subr.mxu0 0.0
    %7392 = vmatpush1.msra.mxu0 0.0
    %7393 = vmatprep.subr.mxu0 0.0
    %7394 = vmatpush1.msra.mxu0 0.0
    %7395 = vmatprep.subr.mxu0 0.0
    %7396 = vmatpush1.msra.mxu0 0.0
    %7397 = vmatprep.subr.mxu0 0.0
    %7398 = vmatpush1.msra.mxu0 0.0
    %7399 = vmatprep.subr.mxu0 0.0
    %7400 = vmatpush1.msra.mxu0 0.0
    %7401 = vmatprep.subr.mxu0 0.0
    %7402 = vmatpush1.msra.mxu0 0.0
    %7403 = vmatprep.subr.mxu0 0.0
    %7404 = vmatpush1.msra.mxu0 0.0
    %7405 = vmatprep.subr.mxu0 0.0
    %7406 = vmatpush1.msra.mxu0 0.0
    %7407 = vmatprep.subr.mxu0 0.0
    %7408 = vmatpush1.msra.mxu0 0.0
    %7409 = vmatprep.subr.mxu0 0.0
    %7410 = vmatpush1.msra.mxu0 0.0
    %7411 = vmatprep.subr.mxu0 0.0
    %7412 = vmatpush1.msra.mxu0 0.0
    %7413 = vmatprep.subr.mxu0 0.0
    %7414 = vmatpush1.msra.mxu0 0.0
    %7415 = vmatprep.subr.mxu0 0.0
    %7416 = vmatpush1.msra.mxu0 0.0
    %7417 = vmatprep.subr.mxu0 0.0
    %7418 = vmatpush1.msra.mxu0 0.0
    %7419 = vmatprep.subr.mxu0 0.0
    %7420 = vmatpush1.msra.mxu0 0.0
    %7421 = vmatprep.subr.mxu0 0.0
    %7422 = vmatpush1.msra.mxu0 0.0
    %7423 = vmatprep.mubr.f32.mxu0 0.0
    %7424 = vmatmul.mubr.f32.gmra.mrb[0].mxu0 %v7354
    %v7425 = vpop.f32.mrb[0].mxu0
    %v7426 = vadd.f32 %v7350, %v7425
    %v7427 = vpop.f32.mrb[0].mxu0
    %7428 = vdwg.mxu0
    %vm7429 = vcmp.gt.f32.partialorder %v7426, 0.0
    %v7430 = vmin.f32 %v7426, 0.0
    %v7431 = vmul.f32 %v7430, 1.442695
    %v7432 = vpow.pop %v7431
    %v7433 = vsub.f32 %v7432, 1.0
    %v7434 = vsel %vm7429, %v7426, %v7433
    %vm7435 = vcmask 9216
    %7436 = vst.msk [vmem:[#allocation7] sm:$0x3] %vm7435, %v7434
    // Predicated region
    $region74: #{forward.1} parent=1 // pred_check
      _
    $region75: #{forward.1} parent=1 // pred_check_branch
      %7438 = sbr.rel (0) target = $region77
    $region76: #{forward.1} parent=1 // pred_region
      %s7440 = ssub.s32 32, 32
      %7441 = vsyncadd [#allocation5], %s7440
      %s7443 = sshll.u32 [#allocation7], 4
      %s7444 = int_to_ptr.vmem [resolvable:$true] %s7443
      %7446 = dma.vmem_to_hbm [thread:$0]  %s7444, 32, %s17, [#allocation5]
    $region77: #{forward.1} parent=1 // pred_fallthru
      _
    // Predicated region
    $region78: #{forward.1} parent=1 // pred_check
      _
    $region79: #{forward.1} parent=1 // pred_check_branch
      %7448 = sbr.rel (0) target = $region81
    $region80: #{forward.1} parent=1 // pred_region
      %7449 = dma.done [#allocation5], 32
    $region81: #{forward.1} parent=1 // pred_fallthru
      _
    %7450 = vsyncpa [#allocation5], 1
    %7451 = vsyncpa [#allocation6], 1

</llo_original>
